<compile_context>
chip_gen: v6e
topology: v6e:2x2x1
jax: 0.10.0
libtpu: 0.0.40
codegen_flags: <defaults>
</compile_context>

<pallas_src>
import functools

import jax
import jax.numpy as jnp
from jax.experimental import pallas as pl
from jax.experimental.pallas import tpu as pltpu

# Module defaults (class __init__ defaults: hidden_dim=256, latent_dim=256).
VISUAL_GOAL_DIM = 512
TEXT_DIM = 512
CURRENT_IMG_DIM = 512
GOAL_IMG_DIM = 512
HIDDEN_DIM = 256
LATENT_DIM = 256
COMBINED_DIM = TEXT_DIM + CURRENT_IMG_DIM + GOAL_IMG_DIM  # 1536
ENC_IN = VISUAL_GOAL_DIM + COMBINED_DIM                   # 2048
DEC_IN = LATENT_DIM + COMBINED_DIM                        # 1792
LN_EPS = 1e-5

# Positions of dw0/dw1/dw2/dw3 in the flat pallas_call input list
# (3 data inputs + 28 params; decoder weights are params[14], [18], [22], [26]).
_DEC_WEIGHT_INPUT_IDX = (3 + 14, 3 + 18, 3 + 22, 3 + 26)


def _layernorm(x, g, b):
    # torch.nn.LayerNorm semantics: biased variance over the last dim, eps=1e-5. (f32)
    mean = jnp.mean(x, axis=-1, keepdims=True)
    var = jnp.mean((x - mean) ** 2, axis=-1, keepdims=True)
    return (x - mean) * jax.lax.rsqrt(var + LN_EPS) * g + b


def _linear(h_f32, w_ref, b_ref):
    # bf16 operands on the MXU, f32 accumulation, f32 bias add.
    return jnp.dot(h_f32.astype(jnp.bfloat16), w_ref[...],
                   preferred_element_type=jnp.float32) + b_ref[...]


def cvae_forward_kernel(
    # inputs
    vg_ref, comb_ref, eps_ref,
    # encoder params: Linear0 / LN0 / Linear1 / LN1 / Linear2 / LN2 / Linear3
    ew0, eb0, eg0, ebe0,
    ew1, eb1, eg1, ebe1,
    ew2, eb2, eg2, ebe2,
    ew3, eb3,
    # decoder params: Linear0 / LN0 / Linear1 / LN1 / Linear2 / LN2 / Linear3
    # (the four weight matrices arrive as raw HBM refs, memory_space=pl.ANY)
    dw0_hbm, db0, dg0, dbe0,
    dw1_hbm, db1, dg1, dbe1,
    dw2_hbm, db2, dg2, dbe2,
    dw3_hbm, db3,
    # outputs
    pred_ref, enc_ref,
    # scratch: decoder-weight VMEM double of HBM + DMA semaphores
    dw0_buf, dw1_buf, dw2_buf, dw3_buf, dma_sem,
):
    # Kick off decoder-weight HBM->VMEM DMAs immediately so they overlap with the
    # encoder's MXU/VPU/EUP work; each is waited right before its decoder layer.
    cp0 = pltpu.make_async_copy(dw0_hbm, dw0_buf, dma_sem.at[0])
    cp1 = pltpu.make_async_copy(dw1_hbm, dw1_buf, dma_sem.at[1])
    cp2 = pltpu.make_async_copy(dw2_hbm, dw2_buf, dma_sem.at[2])
    cp3 = pltpu.make_async_copy(dw3_hbm, dw3_buf, dma_sem.at[3])
    cp0.start()
    cp1.start()
    cp2.start()
    cp3.start()

    vg = vg_ref[...].astype(jnp.bfloat16)        # [B, 512]
    comb = comb_ref[...].astype(jnp.bfloat16)    # [B, 1536]

    # ----------------- encoder -----------------
    # concat([vg, comb], 1) @ ew0  ==  vg @ ew0[:512] + comb @ ew0[512:]
    h0 = (jnp.dot(vg, ew0[:VISUAL_GOAL_DIM, :], preferred_element_type=jnp.float32)
          + jnp.dot(comb, ew0[VISUAL_GOAL_DIM:, :], preferred_element_type=jnp.float32)
          + eb0[...])
    h = jnp.maximum(_layernorm(h0, eg0[...], ebe0[...]), 0.0)
    h = jnp.maximum(_layernorm(_linear(h, ew1, eb1), eg1[...], ebe1[...]), 0.0)
    h = jnp.maximum(_layernorm(_linear(h, ew2, eb2), eg2[...], ebe2[...]), 0.0)
    enc = _linear(h, ew3, eb3)                                               # [B, 2*latent]
    enc_ref[...] = enc            # single contiguous lane-dense store; caller slices mu/logvar
    mu = enc[:, :LATENT_DIM]
    logvar = enc[:, LATENT_DIM:]

    # ----------------- sample (reparameterization, f32) -----------------
    std = jnp.exp(0.5 * logvar)
    latent = (mu + eps_ref[...] * std).astype(jnp.bfloat16)                  # [B, 256]

    # ----------------- decoder -----------------
    # concat([latent, comb], 1) @ dw0  ==  latent @ dw0[:256] + comb @ dw0[256:]
    cp0.wait()
    d0 = (jnp.dot(latent, dw0_buf[:LATENT_DIM, :], preferred_element_type=jnp.float32)
          + jnp.dot(comb, dw0_buf[LATENT_DIM:, :], preferred_element_type=jnp.float32)
          + db0[...])
    h = jnp.maximum(_layernorm(d0, dg0[...], dbe0[...]), 0.0)
    cp1.wait()
    h = jnp.maximum(_layernorm(_linear(h, dw1_buf, db1), dg1[...], dbe1[...]), 0.0)
    cp2.wait()
    h = jnp.maximum(_layernorm(_linear(h, dw2_buf, db2), dg2[...], dbe2[...]), 0.0)
    cp3.wait()
    pred_ref[...] = _linear(h, dw3_buf, db3)                                 # [B, 512] f32


def init_params(key):
    """Deterministic synthetic parameters matching the PyTorch module's shapes.

    Linear weights are bf16 ([in, out]); biases and LayerNorm params are f32."""
    def linear_params(k, fan_in, fan_out):
        kw, kb = jax.random.split(k)
        scale = 1.0 / jnp.sqrt(jnp.float32(fan_in))
        w = jax.random.uniform(kw, (fan_in, fan_out), jnp.float32, -scale, scale)
        b = jax.random.uniform(kb, (1, fan_out), jnp.float32, -scale, scale)
        return w.astype(jnp.bfloat16), b

    def ln_params(dim):
        return jnp.ones((1, dim), jnp.float32), jnp.zeros((1, dim), jnp.float32)

    keys = jax.random.split(key, 8)
    params = []

    # encoder: 2048 -> 512 -> 256 -> 256 -> 512
    enc_dims = [(ENC_IN, 2 * HIDDEN_DIM), (2 * HIDDEN_DIM, HIDDEN_DIM),
                (HIDDEN_DIM, HIDDEN_DIM), (HIDDEN_DIM, 2 * LATENT_DIM)]
    for i, (fi, fo) in enumerate(enc_dims):
        w, b = linear_params(keys[i], fi, fo)
        params.extend([w, b])
        if i < 3:
            g, be = ln_params(fo)
            params.extend([g, be])

    # decoder: 1792 -> 512 -> 256 -> 256 -> 512
    dec_dims = [(DEC_IN, 2 * HIDDEN_DIM), (2 * HIDDEN_DIM, HIDDEN_DIM),
                (HIDDEN_DIM, HIDDEN_DIM), (HIDDEN_DIM, VISUAL_GOAL_DIM)]
    for i, (fi, fo) in enumerate(dec_dims):
        w, b = linear_params(keys[4 + i], fi, fo)
        params.extend([w, b])
        if i < 3:
            g, be = ln_params(fo)
            params.extend([g, be])

    return params  # 28 arrays, in kernel argument order


@functools.partial(jax.jit, static_argnames=("batch",))
def cvae_forward(visual_goal, combined, eps, params, *, batch):
    n_inputs = 3 + len(params)
    vmem_spec = pl.BlockSpec(memory_space=pltpu.MemorySpace.VMEM)
    any_spec = pl.BlockSpec(memory_space=pl.ANY)

    # Everything lands in VMEM before the body EXCEPT the four decoder weight
    # matrices, which stay in HBM (pl.ANY) and are DMA'd manually inside the
    # kernel so the copy overlaps the encoder compute.
    in_specs = [vmem_spec] * n_inputs
    for idx in _DEC_WEIGHT_INPUT_IDX:
        in_specs[idx] = any_spec

    # Advisory cost estimate so XLA overlaps neighbors with this DMA-bound call.
    macs = batch * (ENC_IN * 2 * HIDDEN_DIM + 2 * HIDDEN_DIM * HIDDEN_DIM
                    + HIDDEN_DIM * HIDDEN_DIM + HIDDEN_DIM * 2 * LATENT_DIM
                    + DEC_IN * 2 * HIDDEN_DIM + 2 * HIDDEN_DIM * HIDDEN_DIM
                    + HIDDEN_DIM * HIDDEN_DIM + HIDDEN_DIM * VISUAL_GOAL_DIM)
    in_bytes = sum(int(a.size) * a.dtype.itemsize
                   for a in (visual_goal, combined, eps, *params))
    out_bytes = 4 * batch * (VISUAL_GOAL_DIM + 2 * LATENT_DIM)
    cost = pl.CostEstimate(
        flops=2 * macs,
        transcendentals=batch * (6 + LATENT_DIM),  # 6 LN rsqrt rows + exp(0.5*logvar)
        bytes_accessed=in_bytes + out_bytes,
    )

    pred, enc = pl.pallas_call(
        cvae_forward_kernel,
        out_shape=(
            jax.ShapeDtypeStruct((batch, VISUAL_GOAL_DIM), jnp.float32),   # pred
            jax.ShapeDtypeStruct((batch, 2 * LATENT_DIM), jnp.float32),    # enc = [mu | logvar]
        ),
        in_specs=in_specs,
        out_specs=(vmem_spec, vmem_spec),
        scratch_shapes=[
            pltpu.VMEM((DEC_IN, 2 * HIDDEN_DIM), jnp.bfloat16),            # dw0 buffer
            pltpu.VMEM((2 * HIDDEN_DIM, HIDDEN_DIM), jnp.bfloat16),        # dw1 buffer
            pltpu.VMEM((HIDDEN_DIM, HIDDEN_DIM), jnp.bfloat16),            # dw2 buffer
            pltpu.VMEM((HIDDEN_DIM, VISUAL_GOAL_DIM), jnp.bfloat16),       # dw3 buffer
            pltpu.SemaphoreType.DMA((4,)),
        ],
        compiler_params=pltpu.CompilerParams(vmem_limit_bytes=12 << 20),
        cost_estimate=cost,
    )(visual_goal, combined, eps, *params)

    # Slice the contiguous encoder output into (mu, logvar) outside the kernel
    # (torch.chunk(encoded, 2, dim=1) semantics).
    mu = enc[:, :LATENT_DIM]
    logvar = enc[:, LATENT_DIM:]
    return pred, mu, logvar


if __name__ == "__main__":
    B = 16  # batch: multiple of 16 so bf16 activation vregs / MXU issues are full

    key = jax.random.PRNGKey(0)
    k_vg, k_comb, k_eps, k_params = jax.random.split(key, 4)

    visual_goal = jax.random.normal(k_vg, (B, VISUAL_GOAL_DIM), jnp.float32)
    combined = jax.random.normal(k_comb, (B, COMBINED_DIM), jnp.float32)
    # torch.randn_like(std) in CVAE.sample() -> provided as an explicit input.
    eps = jax.random.normal(k_eps, (B, LATENT_DIM), jnp.float32)

    params = init_params(k_params)

    pred, mu, logvar = cvae_forward(visual_goal, combined, eps, params, batch=B)
    jax.block_until_ready((pred, mu, logvar))

    assert pred.shape == (B, VISUAL_GOAL_DIM)
    assert mu.shape == (B, LATENT_DIM)
    assert logvar.shape == (B, LATENT_DIM)

    # Cross-check against a pure-JAX reference of the same (bf16-matmul) math.
    def ref_forward(vg, comb, eps_, p):
        def ln(x, g, b):
            m = x.mean(-1, keepdims=True)
            v = ((x - m) ** 2).mean(-1, keepdims=True)
            return (x - m) / jnp.sqrt(v + LN_EPS) * g + b

        def lin(x, w, b):
            return jnp.dot(x.astype(jnp.bfloat16), w,
                           preferred_element_type=jnp.float32) + b

        (ew0, eb0, eg0, ebe0, ew1, eb1, eg1, ebe1, ew2, eb2, eg2, ebe2, ew3, eb3,
         dw0, db0, dg0, dbe0, dw1, db1, dg1, dbe1, dw2, db2, dg2, dbe2, dw3, db3) = p
        x = jnp.concatenate([vg, comb], axis=1)
        h = jnp.maximum(ln(lin(x, ew0, eb0), eg0, ebe0), 0.0)
        h = jnp.maximum(ln(lin(h, ew1, eb1), eg1, ebe1), 0.0)
        h = jnp.maximum(ln(lin(h, ew2, eb2), eg2, ebe2), 0.0)
        enc = lin(h, ew3, eb3)
        mu_r, logvar_r = enc[:, :LATENT_DIM], enc[:, LATENT_DIM:]
        latent = mu_r + eps_ * jnp.exp(0.5 * logvar_r)
        y = jnp.concatenate([latent, comb], axis=1)
        h = jnp.maximum(ln(lin(y, dw0, db0), dg0, dbe0), 0.0)
        h = jnp.maximum(ln(lin(h, dw1, db1), dg1, dbe1), 0.0)
        h = jnp.maximum(ln(lin(h, dw2, db2), dg2, dbe2), 0.0)
        return lin(h, dw3, db3), mu_r, logvar_r

    pred_ref_, mu_ref_, logvar_ref_ = ref_forward(visual_goal, combined, eps, params)
    assert jnp.allclose(pred, pred_ref_, atol=1e-2, rtol=1e-2)
    assert jnp.allclose(mu, mu_ref_, atol=1e-2, rtol=1e-2)
    assert jnp.allclose(logvar, logvar_ref_, atol=1e-2, rtol=1e-2)

    print("KERNEL_OK")
</pallas_src>

<mosaic_0001>
module attributes {stable_mosaic.version = 11 : i64} {
  func.func @cvae_forward_kernel(%arg0: memref<16x512xf32, #tpu.memory_space<vmem>>, %arg1: memref<16x1536xf32, #tpu.memory_space<vmem>>, %arg2: memref<16x256xf32, #tpu.memory_space<vmem>>, %arg3: memref<2048x512xbf16, #tpu.memory_space<vmem>>, %arg4: memref<1x512xf32, #tpu.memory_space<vmem>>, %arg5: memref<1x512xf32, #tpu.memory_space<vmem>>, %arg6: memref<1x512xf32, #tpu.memory_space<vmem>>, %arg7: memref<512x256xbf16, #tpu.memory_space<vmem>>, %arg8: memref<1x256xf32, #tpu.memory_space<vmem>>, %arg9: memref<1x256xf32, #tpu.memory_space<vmem>>, %arg10: memref<1x256xf32, #tpu.memory_space<vmem>>, %arg11: memref<256x256xbf16, #tpu.memory_space<vmem>>, %arg12: memref<1x256xf32, #tpu.memory_space<vmem>>, %arg13: memref<1x256xf32, #tpu.memory_space<vmem>>, %arg14: memref<1x256xf32, #tpu.memory_space<vmem>>, %arg15: memref<256x512xbf16, #tpu.memory_space<vmem>>, %arg16: memref<1x512xf32, #tpu.memory_space<vmem>>, %arg17: memref<1792x512xbf16, #tpu.memory_space<any>>, %arg18: memref<1x512xf32, #tpu.memory_space<vmem>>, %arg19: memref<1x512xf32, #tpu.memory_space<vmem>>, %arg20: memref<1x512xf32, #tpu.memory_space<vmem>>, %arg21: memref<512x256xbf16, #tpu.memory_space<any>>, %arg22: memref<1x256xf32, #tpu.memory_space<vmem>>, %arg23: memref<1x256xf32, #tpu.memory_space<vmem>>, %arg24: memref<1x256xf32, #tpu.memory_space<vmem>>, %arg25: memref<256x256xbf16, #tpu.memory_space<any>>, %arg26: memref<1x256xf32, #tpu.memory_space<vmem>>, %arg27: memref<1x256xf32, #tpu.memory_space<vmem>>, %arg28: memref<1x256xf32, #tpu.memory_space<vmem>>, %arg29: memref<256x512xbf16, #tpu.memory_space<any>>, %arg30: memref<1x512xf32, #tpu.memory_space<vmem>>, %arg31: memref<16x512xf32, #tpu.memory_space<vmem>>, %arg32: memref<16x512xf32, #tpu.memory_space<vmem>>, %arg33: memref<1792x512xbf16, #tpu.memory_space<vmem>>, %arg34: memref<512x256xbf16, #tpu.memory_space<vmem>>, %arg35: memref<256x256xbf16, #tpu.memory_space<vmem>>, %arg36: memref<256x512xbf16, #tpu.memory_space<vmem>>, %arg37: memref<4x!tpu.dma_semaphore, #tpu.memory_space<semaphore_mem>>) attributes {dimension_semantics = [], scalar_prefetch = 0 : i64, scratch_operands = 5 : i64, tpu.core_type = #tpu.core_type<tc>} {
    %c0_i32 = arith.constant 0 : i32
    %0 = tpu.memref_slice %arg37[%c0_i32] : memref<4x!tpu.dma_semaphore, #tpu.memory_space<semaphore_mem>> -> memref<1x!tpu.dma_semaphore, #tpu.memory_space<semaphore_mem>>
    %1 = tpu.memref_squeeze %0 : memref<1x!tpu.dma_semaphore, #tpu.memory_space<semaphore_mem>> -> memref<!tpu.dma_semaphore, #tpu.memory_space<semaphore_mem>>
    tpu.enqueue_dma source(%arg17 : memref<1792x512xbf16, #tpu.memory_space<any>>) target(%arg33 : memref<1792x512xbf16, #tpu.memory_space<vmem>>) target_semaphore(%1 : memref<!tpu.dma_semaphore, #tpu.memory_space<semaphore_mem>>)
    %c1_i32 = arith.constant 1 : i32
    %2 = tpu.memref_slice %arg37[%c1_i32] : memref<4x!tpu.dma_semaphore, #tpu.memory_space<semaphore_mem>> -> memref<1x!tpu.dma_semaphore, #tpu.memory_space<semaphore_mem>>
    %3 = tpu.memref_squeeze %2 : memref<1x!tpu.dma_semaphore, #tpu.memory_space<semaphore_mem>> -> memref<!tpu.dma_semaphore, #tpu.memory_space<semaphore_mem>>
    tpu.enqueue_dma source(%arg21 : memref<512x256xbf16, #tpu.memory_space<any>>) target(%arg34 : memref<512x256xbf16, #tpu.memory_space<vmem>>) target_semaphore(%3 : memref<!tpu.dma_semaphore, #tpu.memory_space<semaphore_mem>>)
    %c2_i32 = arith.constant 2 : i32
    %4 = tpu.memref_slice %arg37[%c2_i32] : memref<4x!tpu.dma_semaphore, #tpu.memory_space<semaphore_mem>> -> memref<1x!tpu.dma_semaphore, #tpu.memory_space<semaphore_mem>>
    %5 = tpu.memref_squeeze %4 : memref<1x!tpu.dma_semaphore, #tpu.memory_space<semaphore_mem>> -> memref<!tpu.dma_semaphore, #tpu.memory_space<semaphore_mem>>
    tpu.enqueue_dma source(%arg25 : memref<256x256xbf16, #tpu.memory_space<any>>) target(%arg35 : memref<256x256xbf16, #tpu.memory_space<vmem>>) target_semaphore(%5 : memref<!tpu.dma_semaphore, #tpu.memory_space<semaphore_mem>>)
    %c3_i32 = arith.constant 3 : i32
    %6 = tpu.memref_slice %arg37[%c3_i32] : memref<4x!tpu.dma_semaphore, #tpu.memory_space<semaphore_mem>> -> memref<1x!tpu.dma_semaphore, #tpu.memory_space<semaphore_mem>>
    %7 = tpu.memref_squeeze %6 : memref<1x!tpu.dma_semaphore, #tpu.memory_space<semaphore_mem>> -> memref<!tpu.dma_semaphore, #tpu.memory_space<semaphore_mem>>
    tpu.enqueue_dma source(%arg29 : memref<256x512xbf16, #tpu.memory_space<any>>) target(%arg36 : memref<256x512xbf16, #tpu.memory_space<vmem>>) target_semaphore(%7 : memref<!tpu.dma_semaphore, #tpu.memory_space<semaphore_mem>>)
    %c0 = arith.constant 0 : index
    %c0_0 = arith.constant 0 : index
    %8 = vector.load %arg0[%c0, %c0_0] : memref<16x512xf32, #tpu.memory_space<vmem>>, vector<16x512xf32>
    %9 = arith.truncf %8 : vector<16x512xf32> to vector<16x512xbf16>
    %c0_1 = arith.constant 0 : index
    %c0_2 = arith.constant 0 : index
    %10 = vector.load %arg1[%c0_1, %c0_2] : memref<16x1536xf32, #tpu.memory_space<vmem>>, vector<16x1536xf32>
    %11 = arith.truncf %10 : vector<16x1536xf32> to vector<16x1536xbf16>
    %c0_3 = arith.constant 0 : index
    %c0_4 = arith.constant 0 : index
    %12 = vector.load %arg3[%c0_3, %c0_4] : memref<2048x512xbf16, #tpu.memory_space<vmem>>, vector<512x512xbf16>
    %cst = arith.constant dense<0.000000e+00> : vector<16x512xf32>
    %13 = tpu.matmul %9, %12, %cst {dimension_numbers = #tpu.dot_dimension_numbers<[1], [0], [0], [1], [0, 0, 1, 1], [], []>} : vector<16x512xbf16>, vector<512x512xbf16>, vector<16x512xf32> -> vector<16x512xf32>
    %c512 = arith.constant 512 : index
    %c0_5 = arith.constant 0 : index
    %14 = vector.load %arg3[%c512, %c0_5] : memref<2048x512xbf16, #tpu.memory_space<vmem>>, vector<1536x512xbf16>
    %cst_6 = arith.constant dense<0.000000e+00> : vector<16x512xf32>
    %15 = tpu.matmul %11, %14, %cst_6 {dimension_numbers = #tpu.dot_dimension_numbers<[1], [0], [0], [1], [0, 0, 1, 1], [], []>} : vector<16x1536xbf16>, vector<1536x512xbf16>, vector<16x512xf32> -> vector<16x512xf32>
    %16 = arith.addf %13, %15 : vector<16x512xf32>
    %c0_7 = arith.constant 0 : index
    %c0_8 = arith.constant 0 : index
    %17 = vector.load %arg4[%c0_7, %c0_8] : memref<1x512xf32, #tpu.memory_space<vmem>>, vector<1x512xf32>
    %18 = vector.broadcast %17 : vector<1x512xf32> to vector<16x512xf32>
    %19 = arith.addf %16, %18 : vector<16x512xf32>
    %c0_9 = arith.constant 0 : index
    %c0_10 = arith.constant 0 : index
    %20 = vector.load %arg5[%c0_9, %c0_10] : memref<1x512xf32, #tpu.memory_space<vmem>>, vector<1x512xf32>
    %c0_11 = arith.constant 0 : index
    %c0_12 = arith.constant 0 : index
    %21 = vector.load %arg6[%c0_11, %c0_12] : memref<1x512xf32, #tpu.memory_space<vmem>>, vector<1x512xf32>
    %cst_13 = arith.constant dense<0.000000e+00> : vector<16xf32>
    %22 = vector.multi_reduction <add>, %19, %cst_13 [1] : vector<16x512xf32> to vector<16xf32>
    %23 = vector.shape_cast %22 : vector<16xf32> to vector<16x1xf32>
    %cst_14 = arith.constant 5.120000e+02 : f32
    %24 = vector.broadcast %cst_14 : f32 to vector<16x1xf32>
    %25 = arith.divf %23, %24 : vector<16x1xf32>
    %26 = vector.broadcast %25 : vector<16x1xf32> to vector<16x512xf32>
    %27 = arith.subf %19, %26 : vector<16x512xf32>
    %28 = arith.mulf %27, %27 : vector<16x512xf32>
    %cst_15 = arith.constant dense<0.000000e+00> : vector<16xf32>
    %29 = vector.multi_reduction <add>, %28, %cst_15 [1] : vector<16x512xf32> to vector<16xf32>
    %30 = vector.shape_cast %29 : vector<16xf32> to vector<16x1xf32>
    %cst_16 = arith.constant 5.120000e+02 : f32
    %31 = vector.broadcast %cst_16 : f32 to vector<16x1xf32>
    %32 = arith.divf %30, %31 : vector<16x1xf32>
    %33 = vector.broadcast %25 : vector<16x1xf32> to vector<16x512xf32>
    %34 = arith.subf %19, %33 : vector<16x512xf32>
    %cst_17 = arith.constant 9.99999974E-6 : f32
    %35 = vector.broadcast %cst_17 : f32 to vector<16x1xf32>
    %36 = arith.addf %32, %35 : vector<16x1xf32>
    %37 = math.rsqrt %36 : vector<16x1xf32>
    %38 = vector.broadcast %37 : vector<16x1xf32> to vector<16x512xf32>
    %39 = arith.mulf %34, %38 : vector<16x512xf32>
    %40 = vector.broadcast %20 : vector<1x512xf32> to vector<16x512xf32>
    %41 = arith.mulf %39, %40 : vector<16x512xf32>
    %42 = vector.broadcast %21 : vector<1x512xf32> to vector<16x512xf32>
    %43 = arith.addf %41, %42 : vector<16x512xf32>
    %cst_18 = arith.constant 0.000000e+00 : f32
    %44 = vector.broadcast %cst_18 : f32 to vector<16x512xf32>
    %45 = arith.maximumf %43, %44 : vector<16x512xf32>
    %46 = arith.truncf %45 : vector<16x512xf32> to vector<16x512xbf16>
    %c0_19 = arith.constant 0 : index
    %c0_20 = arith.constant 0 : index
    %47 = vector.load %arg7[%c0_19, %c0_20] : memref<512x256xbf16, #tpu.memory_space<vmem>>, vector<512x256xbf16>
    %cst_21 = arith.constant dense<0.000000e+00> : vector<16x256xf32>
    %48 = tpu.matmul %46, %47, %cst_21 {dimension_numbers = #tpu.dot_dimension_numbers<[1], [0], [0], [1], [0, 0, 1, 1], [], []>} : vector<16x512xbf16>, vector<512x256xbf16>, vector<16x256xf32> -> vector<16x256xf32>
    %c0_22 = arith.constant 0 : index
    %c0_23 = arith.constant 0 : index
    %49 = vector.load %arg8[%c0_22, %c0_23] : memref<1x256xf32, #tpu.memory_space<vmem>>, vector<1x256xf32>
    %50 = vector.broadcast %49 : vector<1x256xf32> to vector<16x256xf32>
    %51 = arith.addf %48, %50 : vector<16x256xf32>
    %c0_24 = arith.constant 0 : index
    %c0_25 = arith.constant 0 : index
    %52 = vector.load %arg9[%c0_24, %c0_25] : memref<1x256xf32, #tpu.memory_space<vmem>>, vector<1x256xf32>
    %c0_26 = arith.constant 0 : index
    %c0_27 = arith.constant 0 : index
    %53 = vector.load %arg10[%c0_26, %c0_27] : memref<1x256xf32, #tpu.memory_space<vmem>>, vector<1x256xf32>
    %cst_28 = arith.constant dense<0.000000e+00> : vector<16xf32>
    %54 = vector.multi_reduction <add>, %51, %cst_28 [1] : vector<16x256xf32> to vector<16xf32>
    %55 = vector.shape_cast %54 : vector<16xf32> to vector<16x1xf32>
    %cst_29 = arith.constant 2.560000e+02 : f32
    %56 = vector.broadcast %cst_29 : f32 to vector<16x1xf32>
    %57 = arith.divf %55, %56 : vector<16x1xf32>
    %58 = vector.broadcast %57 : vector<16x1xf32> to vector<16x256xf32>
    %59 = arith.subf %51, %58 : vector<16x256xf32>
    %60 = arith.mulf %59, %59 : vector<16x256xf32>
    %cst_30 = arith.constant dense<0.000000e+00> : vector<16xf32>
    %61 = vector.multi_reduction <add>, %60, %cst_30 [1] : vector<16x256xf32> to vector<16xf32>
    %62 = vector.shape_cast %61 : vector<16xf32> to vector<16x1xf32>
    %cst_31 = arith.constant 2.560000e+02 : f32
    %63 = vector.broadcast %cst_31 : f32 to vector<16x1xf32>
    %64 = arith.divf %62, %63 : vector<16x1xf32>
    %65 = vector.broadcast %57 : vector<16x1xf32> to vector<16x256xf32>
    %66 = arith.subf %51, %65 : vector<16x256xf32>
    %cst_32 = arith.constant 9.99999974E-6 : f32
    %67 = vector.broadcast %cst_32 : f32 to vector<16x1xf32>
    %68 = arith.addf %64, %67 : vector<16x1xf32>
    %69 = math.rsqrt %68 : vector<16x1xf32>
    %70 = vector.broadcast %69 : vector<16x1xf32> to vector<16x256xf32>
    %71 = arith.mulf %66, %70 : vector<16x256xf32>
    %72 = vector.broadcast %52 : vector<1x256xf32> to vector<16x256xf32>
    %73 = arith.mulf %71, %72 : vector<16x256xf32>
    %74 = vector.broadcast %53 : vector<1x256xf32> to vector<16x256xf32>
    %75 = arith.addf %73, %74 : vector<16x256xf32>
    %cst_33 = arith.constant 0.000000e+00 : f32
    %76 = vector.broadcast %cst_33 : f32 to vector<16x256xf32>
    %77 = arith.maximumf %75, %76 : vector<16x256xf32>
    %78 = arith.truncf %77 : vector<16x256xf32> to vector<16x256xbf16>
    %c0_34 = arith.constant 0 : index
    %c0_35 = arith.constant 0 : index
    %79 = vector.load %arg11[%c0_34, %c0_35] : memref<256x256xbf16, #tpu.memory_space<vmem>>, vector<256x256xbf16>
    %cst_36 = arith.constant dense<0.000000e+00> : vector<16x256xf32>
    %80 = tpu.matmul %78, %79, %cst_36 {dimension_numbers = #tpu.dot_dimension_numbers<[1], [0], [0], [1], [0, 0, 1, 1], [], []>} : vector<16x256xbf16>, vector<256x256xbf16>, vector<16x256xf32> -> vector<16x256xf32>
    %c0_37 = arith.constant 0 : index
    %c0_38 = arith.constant 0 : index
    %81 = vector.load %arg12[%c0_37, %c0_38] : memref<1x256xf32, #tpu.memory_space<vmem>>, vector<1x256xf32>
    %82 = vector.broadcast %81 : vector<1x256xf32> to vector<16x256xf32>
    %83 = arith.addf %80, %82 : vector<16x256xf32>
    %c0_39 = arith.constant 0 : index
    %c0_40 = arith.constant 0 : index
    %84 = vector.load %arg13[%c0_39, %c0_40] : memref<1x256xf32, #tpu.memory_space<vmem>>, vector<1x256xf32>
    %c0_41 = arith.constant 0 : index
    %c0_42 = arith.constant 0 : index
    %85 = vector.load %arg14[%c0_41, %c0_42] : memref<1x256xf32, #tpu.memory_space<vmem>>, vector<1x256xf32>
    %cst_43 = arith.constant dense<0.000000e+00> : vector<16xf32>
    %86 = vector.multi_reduction <add>, %83, %cst_43 [1] : vector<16x256xf32> to vector<16xf32>
    %87 = vector.shape_cast %86 : vector<16xf32> to vector<16x1xf32>
    %cst_44 = arith.constant 2.560000e+02 : f32
    %88 = vector.broadcast %cst_44 : f32 to vector<16x1xf32>
    %89 = arith.divf %87, %88 : vector<16x1xf32>
    %90 = vector.broadcast %89 : vector<16x1xf32> to vector<16x256xf32>
    %91 = arith.subf %83, %90 : vector<16x256xf32>
    %92 = arith.mulf %91, %91 : vector<16x256xf32>
    %cst_45 = arith.constant dense<0.000000e+00> : vector<16xf32>
    %93 = vector.multi_reduction <add>, %92, %cst_45 [1] : vector<16x256xf32> to vector<16xf32>
    %94 = vector.shape_cast %93 : vector<16xf32> to vector<16x1xf32>
    %cst_46 = arith.constant 2.560000e+02 : f32
    %95 = vector.broadcast %cst_46 : f32 to vector<16x1xf32>
    %96 = arith.divf %94, %95 : vector<16x1xf32>
    %97 = vector.broadcast %89 : vector<16x1xf32> to vector<16x256xf32>
    %98 = arith.subf %83, %97 : vector<16x256xf32>
    %cst_47 = arith.constant 9.99999974E-6 : f32
    %99 = vector.broadcast %cst_47 : f32 to vector<16x1xf32>
    %100 = arith.addf %96, %99 : vector<16x1xf32>
    %101 = math.rsqrt %100 : vector<16x1xf32>
    %102 = vector.broadcast %101 : vector<16x1xf32> to vector<16x256xf32>
    %103 = arith.mulf %98, %102 : vector<16x256xf32>
    %104 = vector.broadcast %84 : vector<1x256xf32> to vector<16x256xf32>
    %105 = arith.mulf %103, %104 : vector<16x256xf32>
    %106 = vector.broadcast %85 : vector<1x256xf32> to vector<16x256xf32>
    %107 = arith.addf %105, %106 : vector<16x256xf32>
    %cst_48 = arith.constant 0.000000e+00 : f32
    %108 = vector.broadcast %cst_48 : f32 to vector<16x256xf32>
    %109 = arith.maximumf %107, %108 : vector<16x256xf32>
    %110 = arith.truncf %109 : vector<16x256xf32> to vector<16x256xbf16>
    %c0_49 = arith.constant 0 : index
    %c0_50 = arith.constant 0 : index
    %111 = vector.load %arg15[%c0_49, %c0_50] : memref<256x512xbf16, #tpu.memory_space<vmem>>, vector<256x512xbf16>
    %cst_51 = arith.constant dense<0.000000e+00> : vector<16x512xf32>
    %112 = tpu.matmul %110, %111, %cst_51 {dimension_numbers = #tpu.dot_dimension_numbers<[1], [0], [0], [1], [0, 0, 1, 1], [], []>} : vector<16x256xbf16>, vector<256x512xbf16>, vector<16x512xf32> -> vector<16x512xf32>
    %c0_52 = arith.constant 0 : index
    %c0_53 = arith.constant 0 : index
    %113 = vector.load %arg16[%c0_52, %c0_53] : memref<1x512xf32, #tpu.memory_space<vmem>>, vector<1x512xf32>
    %114 = vector.broadcast %113 : vector<1x512xf32> to vector<16x512xf32>
    %115 = arith.addf %112, %114 : vector<16x512xf32>
    %c0_54 = arith.constant 0 : index
    %c0_55 = arith.constant 0 : index
    %116 = vector.load %arg32[%c0_54, %c0_55] : memref<16x512xf32, #tpu.memory_space<vmem>>, vector<16x512xf32>
    tpu.vector_store %arg32[%c0_54, %c0_55], %115 {strides = array<i32>} : memref<16x512xf32, #tpu.memory_space<vmem>>, vector<16x512xf32>,
    %117 = vector.extract_strided_slice %115 {offsets = [0, 0], sizes = [16, 256], strides = [1, 1]} : vector<16x512xf32> to vector<16x256xf32>
    %118 = vector.extract_strided_slice %115 {offsets = [0, 256], sizes = [16, 256], strides = [1, 1]} : vector<16x512xf32> to vector<16x256xf32>
    %cst_56 = arith.constant 5.000000e-01 : f32
    %119 = vector.broadcast %cst_56 : f32 to vector<16x256xf32>
    %120 = arith.mulf %119, %118 : vector<16x256xf32>
    %121 = math.exp %120 : vector<16x256xf32>
    %c0_57 = arith.constant 0 : index
    %c0_58 = arith.constant 0 : index
    %122 = vector.load %arg2[%c0_57, %c0_58] : memref<16x256xf32, #tpu.memory_space<vmem>>, vector<16x256xf32>
    %123 = arith.mulf %122, %121 : vector<16x256xf32>
    %124 = arith.addf %117, %123 : vector<16x256xf32>
    %125 = arith.truncf %124 : vector<16x256xf32> to vector<16x256xbf16>
    %c0_i32_59 = arith.constant 0 : i32
    %126 = tpu.memref_slice %arg37[%c0_i32_59] : memref<4x!tpu.dma_semaphore, #tpu.memory_space<semaphore_mem>> -> memref<1x!tpu.dma_semaphore, #tpu.memory_space<semaphore_mem>>
    %127 = tpu.memref_squeeze %126 : memref<1x!tpu.dma_semaphore, #tpu.memory_space<semaphore_mem>> -> memref<!tpu.dma_semaphore, #tpu.memory_space<semaphore_mem>>
    tpu.wait_dma2 semaphore(%127 : memref<!tpu.dma_semaphore, #tpu.memory_space<semaphore_mem>>) src(%arg17 : memref<1792x512xbf16, #tpu.memory_space<any>>) dst(%arg33 : memref<1792x512xbf16, #tpu.memory_space<vmem>>)
    %c0_60 = arith.constant 0 : index
    %c0_61 = arith.constant 0 : index
    %128 = vector.load %arg33[%c0_60, %c0_61] : memref<1792x512xbf16, #tpu.memory_space<vmem>>, vector<256x512xbf16>
    %cst_62 = arith.constant dense<0.000000e+00> : vector<16x512xf32>
    %129 = tpu.matmul %125, %128, %cst_62 {dimension_numbers = #tpu.dot_dimension_numbers<[1], [0], [0], [1], [0, 0, 1, 1], [], []>} : vector<16x256xbf16>, vector<256x512xbf16>, vector<16x512xf32> -> vector<16x512xf32>
    %c256 = arith.constant 256 : index
    %c0_63 = arith.constant 0 : index
    %130 = vector.load %arg33[%c256, %c0_63] : memref<1792x512xbf16, #tpu.memory_space<vmem>>, vector<1536x512xbf16>
    %cst_64 = arith.constant dense<0.000000e+00> : vector<16x512xf32>
    %131 = tpu.matmul %11, %130, %cst_64 {dimension_numbers = #tpu.dot_dimension_numbers<[1], [0], [0], [1], [0, 0, 1, 1], [], []>} : vector<16x1536xbf16>, vector<1536x512xbf16>, vector<16x512xf32> -> vector<16x512xf32>
    %132 = arith.addf %129, %131 : vector<16x512xf32>
    %c0_65 = arith.constant 0 : index
    %c0_66 = arith.constant 0 : index
    %133 = vector.load %arg18[%c0_65, %c0_66] : memref<1x512xf32, #tpu.memory_space<vmem>>, vector<1x512xf32>
    %134 = vector.broadcast %133 : vector<1x512xf32> to vector<16x512xf32>
    %135 = arith.addf %132, %134 : vector<16x512xf32>
    %c0_67 = arith.constant 0 : index
    %c0_68 = arith.constant 0 : index
    %136 = vector.load %arg19[%c0_67, %c0_68] : memref<1x512xf32, #tpu.memory_space<vmem>>, vector<1x512xf32>
    %c0_69 = arith.constant 0 : index
    %c0_70 = arith.constant 0 : index
    %137 = vector.load %arg20[%c0_69, %c0_70] : memref<1x512xf32, #tpu.memory_space<vmem>>, vector<1x512xf32>
    %cst_71 = arith.constant dense<0.000000e+00> : vector<16xf32>
    %138 = vector.multi_reduction <add>, %135, %cst_71 [1] : vector<16x512xf32> to vector<16xf32>
    %139 = vector.shape_cast %138 : vector<16xf32> to vector<16x1xf32>
    %cst_72 = arith.constant 5.120000e+02 : f32
    %140 = vector.broadcast %cst_72 : f32 to vector<16x1xf32>
    %141 = arith.divf %139, %140 : vector<16x1xf32>
    %142 = vector.broadcast %141 : vector<16x1xf32> to vector<16x512xf32>
    %143 = arith.subf %135, %142 : vector<16x512xf32>
    %144 = arith.mulf %143, %143 : vector<16x512xf32>
    %cst_73 = arith.constant dense<0.000000e+00> : vector<16xf32>
    %145 = vector.multi_reduction <add>, %144, %cst_73 [1] : vector<16x512xf32> to vector<16xf32>
    %146 = vector.shape_cast %145 : vector<16xf32> to vector<16x1xf32>
    %cst_74 = arith.constant 5.120000e+02 : f32
    %147 = vector.broadcast %cst_74 : f32 to vector<16x1xf32>
    %148 = arith.divf %146, %147 : vector<16x1xf32>
    %149 = vector.broadcast %141 : vector<16x1xf32> to vector<16x512xf32>
    %150 = arith.subf %135, %149 : vector<16x512xf32>
    %cst_75 = arith.constant 9.99999974E-6 : f32
    %151 = vector.broadcast %cst_75 : f32 to vector<16x1xf32>
    %152 = arith.addf %148, %151 : vector<16x1xf32>
    %153 = math.rsqrt %152 : vector<16x1xf32>
    %154 = vector.broadcast %153 : vector<16x1xf32> to vector<16x512xf32>
    %155 = arith.mulf %150, %154 : vector<16x512xf32>
    %156 = vector.broadcast %136 : vector<1x512xf32> to vector<16x512xf32>
    %157 = arith.mulf %155, %156 : vector<16x512xf32>
    %158 = vector.broadcast %137 : vector<1x512xf32> to vector<16x512xf32>
    %159 = arith.addf %157, %158 : vector<16x512xf32>
    %cst_76 = arith.constant 0.000000e+00 : f32
    %160 = vector.broadcast %cst_76 : f32 to vector<16x512xf32>
    %161 = arith.maximumf %159, %160 : vector<16x512xf32>
    %c1_i32_77 = arith.constant 1 : i32
    %162 = tpu.memref_slice %arg37[%c1_i32_77] : memref<4x!tpu.dma_semaphore, #tpu.memory_space<semaphore_mem>> -> memref<1x!tpu.dma_semaphore, #tpu.memory_space<semaphore_mem>>
    %163 = tpu.memref_squeeze %162 : memref<1x!tpu.dma_semaphore, #tpu.memory_space<semaphore_mem>> -> memref<!tpu.dma_semaphore, #tpu.memory_space<semaphore_mem>>
    tpu.wait_dma2 semaphore(%163 : memref<!tpu.dma_semaphore, #tpu.memory_space<semaphore_mem>>) src(%arg21 : memref<512x256xbf16, #tpu.memory_space<any>>) dst(%arg34 : memref<512x256xbf16, #tpu.memory_space<vmem>>)
    %164 = arith.truncf %161 : vector<16x512xf32> to vector<16x512xbf16>
    %c0_78 = arith.constant 0 : index
    %c0_79 = arith.constant 0 : index
    %165 = vector.load %arg34[%c0_78, %c0_79] : memref<512x256xbf16, #tpu.memory_space<vmem>>, vector<512x256xbf16>
    %cst_80 = arith.constant dense<0.000000e+00> : vector<16x256xf32>
    %166 = tpu.matmul %164, %165, %cst_80 {dimension_numbers = #tpu.dot_dimension_numbers<[1], [0], [0], [1], [0, 0, 1, 1], [], []>} : vector<16x512xbf16>, vector<512x256xbf16>, vector<16x256xf32> -> vector<16x256xf32>
    %c0_81 = arith.constant 0 : index
    %c0_82 = arith.constant 0 : index
    %167 = vector.load %arg22[%c0_81, %c0_82] : memref<1x256xf32, #tpu.memory_space<vmem>>, vector<1x256xf32>
    %168 = vector.broadcast %167 : vector<1x256xf32> to vector<16x256xf32>
    %169 = arith.addf %166, %168 : vector<16x256xf32>
    %c0_83 = arith.constant 0 : index
    %c0_84 = arith.constant 0 : index
    %170 = vector.load %arg23[%c0_83, %c0_84] : memref<1x256xf32, #tpu.memory_space<vmem>>, vector<1x256xf32>
    %c0_85 = arith.constant 0 : index
    %c0_86 = arith.constant 0 : index
    %171 = vector.load %arg24[%c0_85, %c0_86] : memref<1x256xf32, #tpu.memory_space<vmem>>, vector<1x256xf32>
    %cst_87 = arith.constant dense<0.000000e+00> : vector<16xf32>
    %172 = vector.multi_reduction <add>, %169, %cst_87 [1] : vector<16x256xf32> to vector<16xf32>
    %173 = vector.shape_cast %172 : vector<16xf32> to vector<16x1xf32>
    %cst_88 = arith.constant 2.560000e+02 : f32
    %174 = vector.broadcast %cst_88 : f32 to vector<16x1xf32>
    %175 = arith.divf %173, %174 : vector<16x1xf32>
    %176 = vector.broadcast %175 : vector<16x1xf32> to vector<16x256xf32>
    %177 = arith.subf %169, %176 : vector<16x256xf32>
    %178 = arith.mulf %177, %177 : vector<16x256xf32>
    %cst_89 = arith.constant dense<0.000000e+00> : vector<16xf32>
    %179 = vector.multi_reduction <add>, %178, %cst_89 [1] : vector<16x256xf32> to vector<16xf32>
    %180 = vector.shape_cast %179 : vector<16xf32> to vector<16x1xf32>
    %cst_90 = arith.constant 2.560000e+02 : f32
    %181 = vector.broadcast %cst_90 : f32 to vector<16x1xf32>
    %182 = arith.divf %180, %181 : vector<16x1xf32>
    %183 = vector.broadcast %175 : vector<16x1xf32> to vector<16x256xf32>
    %184 = arith.subf %169, %183 : vector<16x256xf32>
    %cst_91 = arith.constant 9.99999974E-6 : f32
    %185 = vector.broadcast %cst_91 : f32 to vector<16x1xf32>
    %186 = arith.addf %182, %185 : vector<16x1xf32>
    %187 = math.rsqrt %186 : vector<16x1xf32>
    %188 = vector.broadcast %187 : vector<16x1xf32> to vector<16x256xf32>
    %189 = arith.mulf %184, %188 : vector<16x256xf32>
    %190 = vector.broadcast %170 : vector<1x256xf32> to vector<16x256xf32>
    %191 = arith.mulf %189, %190 : vector<16x256xf32>
    %192 = vector.broadcast %171 : vector<1x256xf32> to vector<16x256xf32>
    %193 = arith.addf %191, %192 : vector<16x256xf32>
    %cst_92 = arith.constant 0.000000e+00 : f32
    %194 = vector.broadcast %cst_92 : f32 to vector<16x256xf32>
    %195 = arith.maximumf %193, %194 : vector<16x256xf32>
    %c2_i32_93 = arith.constant 2 : i32
    %196 = tpu.memref_slice %arg37[%c2_i32_93] : memref<4x!tpu.dma_semaphore, #tpu.memory_space<semaphore_mem>> -> memref<1x!tpu.dma_semaphore, #tpu.memory_space<semaphore_mem>>
    %197 = tpu.memref_squeeze %196 : memref<1x!tpu.dma_semaphore, #tpu.memory_space<semaphore_mem>> -> memref<!tpu.dma_semaphore, #tpu.memory_space<semaphore_mem>>
    tpu.wait_dma2 semaphore(%197 : memref<!tpu.dma_semaphore, #tpu.memory_space<semaphore_mem>>) src(%arg25 : memref<256x256xbf16, #tpu.memory_space<any>>) dst(%arg35 : memref<256x256xbf16, #tpu.memory_space<vmem>>)
    %198 = arith.truncf %195 : vector<16x256xf32> to vector<16x256xbf16>
    %c0_94 = arith.constant 0 : index
    %c0_95 = arith.constant 0 : index
    %199 = vector.load %arg35[%c0_94, %c0_95] : memref<256x256xbf16, #tpu.memory_space<vmem>>, vector<256x256xbf16>
    %cst_96 = arith.constant dense<0.000000e+00> : vector<16x256xf32>
    %200 = tpu.matmul %198, %199, %cst_96 {dimension_numbers = #tpu.dot_dimension_numbers<[1], [0], [0], [1], [0, 0, 1, 1], [], []>} : vector<16x256xbf16>, vector<256x256xbf16>, vector<16x256xf32> -> vector<16x256xf32>
    %c0_97 = arith.constant 0 : index
    %c0_98 = arith.constant 0 : index
    %201 = vector.load %arg26[%c0_97, %c0_98] : memref<1x256xf32, #tpu.memory_space<vmem>>, vector<1x256xf32>
    %202 = vector.broadcast %201 : vector<1x256xf32> to vector<16x256xf32>
    %203 = arith.addf %200, %202 : vector<16x256xf32>
    %c0_99 = arith.constant 0 : index
    %c0_100 = arith.constant 0 : index
    %204 = vector.load %arg27[%c0_99, %c0_100] : memref<1x256xf32, #tpu.memory_space<vmem>>, vector<1x256xf32>
    %c0_101 = arith.constant 0 : index
    %c0_102 = arith.constant 0 : index
    %205 = vector.load %arg28[%c0_101, %c0_102] : memref<1x256xf32, #tpu.memory_space<vmem>>, vector<1x256xf32>
    %cst_103 = arith.constant dense<0.000000e+00> : vector<16xf32>
    %206 = vector.multi_reduction <add>, %203, %cst_103 [1] : vector<16x256xf32> to vector<16xf32>
    %207 = vector.shape_cast %206 : vector<16xf32> to vector<16x1xf32>
    %cst_104 = arith.constant 2.560000e+02 : f32
    %208 = vector.broadcast %cst_104 : f32 to vector<16x1xf32>
    %209 = arith.divf %207, %208 : vector<16x1xf32>
    %210 = vector.broadcast %209 : vector<16x1xf32> to vector<16x256xf32>
    %211 = arith.subf %203, %210 : vector<16x256xf32>
    %212 = arith.mulf %211, %211 : vector<16x256xf32>
    %cst_105 = arith.constant dense<0.000000e+00> : vector<16xf32>
    %213 = vector.multi_reduction <add>, %212, %cst_105 [1] : vector<16x256xf32> to vector<16xf32>
    %214 = vector.shape_cast %213 : vector<16xf32> to vector<16x1xf32>
    %cst_106 = arith.constant 2.560000e+02 : f32
    %215 = vector.broadcast %cst_106 : f32 to vector<16x1xf32>
    %216 = arith.divf %214, %215 : vector<16x1xf32>
    %217 = vector.broadcast %209 : vector<16x1xf32> to vector<16x256xf32>
    %218 = arith.subf %203, %217 : vector<16x256xf32>
    %cst_107 = arith.constant 9.99999974E-6 : f32
    %219 = vector.broadcast %cst_107 : f32 to vector<16x1xf32>
    %220 = arith.addf %216, %219 : vector<16x1xf32>
    %221 = math.rsqrt %220 : vector<16x1xf32>
    %222 = vector.broadcast %221 : vector<16x1xf32> to vector<16x256xf32>
    %223 = arith.mulf %218, %222 : vector<16x256xf32>
    %224 = vector.broadcast %204 : vector<1x256xf32> to vector<16x256xf32>
    %225 = arith.mulf %223, %224 : vector<16x256xf32>
    %226 = vector.broadcast %205 : vector<1x256xf32> to vector<16x256xf32>
    %227 = arith.addf %225, %226 : vector<16x256xf32>
    %cst_108 = arith.constant 0.000000e+00 : f32
    %228 = vector.broadcast %cst_108 : f32 to vector<16x256xf32>
    %229 = arith.maximumf %227, %228 : vector<16x256xf32>
    %c3_i32_109 = arith.constant 3 : i32
    %230 = tpu.memref_slice %arg37[%c3_i32_109] : memref<4x!tpu.dma_semaphore, #tpu.memory_space<semaphore_mem>> -> memref<1x!tpu.dma_semaphore, #tpu.memory_space<semaphore_mem>>
    %231 = tpu.memref_squeeze %230 : memref<1x!tpu.dma_semaphore, #tpu.memory_space<semaphore_mem>> -> memref<!tpu.dma_semaphore, #tpu.memory_space<semaphore_mem>>
    tpu.wait_dma2 semaphore(%231 : memref<!tpu.dma_semaphore, #tpu.memory_space<semaphore_mem>>) src(%arg29 : memref<256x512xbf16, #tpu.memory_space<any>>) dst(%arg36 : memref<256x512xbf16, #tpu.memory_space<vmem>>)
    %232 = arith.truncf %229 : vector<16x256xf32> to vector<16x256xbf16>
    %c0_110 = arith.constant 0 : index
    %c0_111 = arith.constant 0 : index
    %233 = vector.load %arg36[%c0_110, %c0_111] : memref<256x512xbf16, #tpu.memory_space<vmem>>, vector<256x512xbf16>
    %cst_112 = arith.constant dense<0.000000e+00> : vector<16x512xf32>
    %234 = tpu.matmul %232, %233, %cst_112 {dimension_numbers = #tpu.dot_dimension_numbers<[1], [0], [0], [1], [0, 0, 1, 1], [], []>} : vector<16x256xbf16>, vector<256x512xbf16>, vector<16x512xf32> -> vector<16x512xf32>
    %c0_113 = arith.constant 0 : index
    %c0_114 = arith.constant 0 : index
    %235 = vector.load %arg30[%c0_113, %c0_114] : memref<1x512xf32, #tpu.memory_space<vmem>>, vector<1x512xf32>
    %236 = vector.broadcast %235 : vector<1x512xf32> to vector<16x512xf32>
    %237 = arith.addf %234, %236 : vector<16x512xf32>
    %c0_115 = arith.constant 0 : index
    %c0_116 = arith.constant 0 : index
    %238 = vector.load %arg31[%c0_115, %c0_116] : memref<16x512xf32, #tpu.memory_space<vmem>>, vector<16x512xf32>
    tpu.vector_store %arg31[%c0_115, %c0_116], %237 {strides = array<i32>} : memref<16x512xf32, #tpu.memory_space<vmem>>, vector<16x512xf32>,
    return
  }
}

</mosaic_0001>

<llo_original>
// kernel: cvae_forward.1
$region0: #{cvae_forward.1}
  #allocation0 [shape = 'u32[]', space=smem, size = 0x4, offset = 0x4, fixed_abs, tag = 'smem constant byte address 0x4 - core index']
  #allocation1 [shape = 'u32[144,128]{1,0:T(1,128)}', space=vmem, size = 0x12000, scoped, tag = 'internal scratch']
  #allocation2 [shape = 'bf16[1792,512]{1,0:T(8,128)(2,1)}', space=vmem, size = 0x1c0000, scoped, tag = 'scratch operand']
  #allocation3 [shape = 'bf16[512,256]{1,0:T(8,128)(2,1)}', space=vmem, size = 0x40000, scoped, tag = 'scratch operand']
  #allocation4 [shape = 'bf16[256,256]{1,0:T(8,128)(2,1)}', space=vmem, size = 0x20000, scoped, tag = 'scratch operand']
  #allocation5 [shape = 'bf16[256,512]{1,0:T(8,128)(2,1)}', space=vmem, size = 0x40000, scoped, tag = 'scratch operand']
  #allocation6 [shape = 's32[4]{0}', space=sflag, size = 0x10, scoped, tag = 'scratch operand']
  #allocation50 [shape = 's32[]', space=sflag, size = 0x4, offset = 0, fixed_abs, tag = 'sflag constant byte address 0x0 - dummy sync flag']
  #allocation51 [shape = 's32[]', space=sflag, size = 0x4, offset = 0, fixed_abs, tag = 'sflag constant byte address 0x0 - dummy sync flag']
  #allocation52 [shape = 'u32[]', space=smem, size = 0x4, offset = 0x44, fixed_abs, tag = 'smem constant byte address 0x44 - assertion arg 0']
  #allocation53 [shape = 'u32[]', space=smem, size = 0x4, offset = 0x48, fixed_abs, tag = 'smem constant byte address 0x48 - assertion arg 1']
  #allocation54 [shape = 's32[]', space=sflag, size = 0x4, offset = 0, fixed_abs, tag = 'sflag constant byte address 0x0 - dummy sync flag']
  #allocation55 [shape = 's32[]', space=sflag, size = 0x4, offset = 0, fixed_abs, tag = 'sflag constant byte address 0x0 - dummy sync flag']
  #allocation56 [shape = 's32[]', space=sflag, size = 0x4, offset = 0, fixed_abs, tag = 'sflag constant byte address 0x0 - dummy sync flag']
  #allocation57 [shape = 's32[]', space=sflag, size = 0x4, offset = 0, fixed_abs, tag = 'sflag constant byte address 0x0 - dummy sync flag']
  #allocation58 [shape = 's32[]', space=sflag, size = 0x4, offset = 0, fixed_abs, tag = 'sflag constant byte address 0x0 - dummy sync flag']
  #allocation59 [shape = 's32[]', space=sflag, size = 0x4, offset = 0, fixed_abs, tag = 'sflag constant byte address 0x0 - dummy sync flag']
  %s0 = inlined_call_operand.smem [shape: u32[33], index: -1, kind: input, shape index: {}]
  %s1 = sld [smem:[%s0]]
  %s2 = scalar_lea.smem %s0, 1
  %s3 = sld [smem:[%s2]]
  %s4 = scalar_lea.smem %s0, 2
  %s5 = sld [smem:[%s4]]
  %s6 = scalar_lea.smem %s0, 3
  %s7 = sld [smem:[%s6]]
  %s8 = scalar_lea.smem %s0, 4
  %s9 = sld [smem:[%s8]]
  %s10 = scalar_lea.smem %s0, 5
  %s11 = sld [smem:[%s10]]
  %s12 = scalar_lea.smem %s0, 6
  %s13 = sld [smem:[%s12]]
  %s14 = scalar_lea.smem %s0, 7
  %s15 = sld [smem:[%s14]]
  %s16 = scalar_lea.smem %s0, 8
  %s17 = sld [smem:[%s16]]
  %s18 = scalar_lea.smem %s0, 9
  %s19 = sld [smem:[%s18]]
  %s20 = scalar_lea.smem %s0, 10
  %s21 = sld [smem:[%s20]]
  %s22 = scalar_lea.smem %s0, 11
  %s23 = sld [smem:[%s22]]
  %s24 = scalar_lea.smem %s0, 12
  %s25 = sld [smem:[%s24]]
  %s26 = scalar_lea.smem %s0, 13
  %s27 = sld [smem:[%s26]]
  %s28 = scalar_lea.smem %s0, 14
  %s29 = sld [smem:[%s28]]
  %s30 = scalar_lea.smem %s0, 15
  %s31 = sld [smem:[%s30]]
  %s32 = scalar_lea.smem %s0, 16
  %s33 = sld [smem:[%s32]]
  %s34 = scalar_lea.smem %s0, 17
  %s35 = sld [smem:[%s34]]
  %s36 = scalar_lea.smem %s0, 18
  %s37 = sld [smem:[%s36]]
  %s38 = scalar_lea.smem %s0, 19
  %s39 = sld [smem:[%s38]]
  %s40 = scalar_lea.smem %s0, 20
  %s41 = sld [smem:[%s40]]
  %s42 = scalar_lea.smem %s0, 21
  %s43 = sld [smem:[%s42]]
  %s44 = scalar_lea.smem %s0, 22
  %s45 = sld [smem:[%s44]]
  %s46 = scalar_lea.smem %s0, 23
  %s47 = sld [smem:[%s46]]
  %s48 = scalar_lea.smem %s0, 24
  %s49 = sld [smem:[%s48]]
  %s50 = scalar_lea.smem %s0, 25
  %s51 = sld [smem:[%s50]]
  %s52 = scalar_lea.smem %s0, 26
  %s53 = sld [smem:[%s52]]
  %s54 = scalar_lea.smem %s0, 27
  %s55 = sld [smem:[%s54]]
  %s56 = scalar_lea.smem %s0, 28
  %s57 = sld [smem:[%s56]]
  %s58 = scalar_lea.smem %s0, 29
  %s59 = sld [smem:[%s58]]
  %s60 = scalar_lea.smem %s0, 30
  %s61 = sld [smem:[%s60]]
  %s62 = scalar_lea.smem %s0, 31
  %s63 = sld [smem:[%s62]]
  %s64 = scalar_lea.smem %s0, 32
  %s65 = sld [smem:[%s64]]
  %66 = xla_tuple %s63, %s65
  %s67 = sld [smem:[#allocation0]]
  $region250: #{cvae_forward.1} parent=0
    _
  %s69 = ssub.s32 1, %s67
  %s70 = scalar_select 0, %s69, %s67
  $region1: #{cvae_forward.1} parent=0
    #allocation7 [shape = 'u8[32768]{0}', space=vmem, size = 0x8000, scoped, tag = 'input window, operand 0, single buffered']
    #allocation8 [shape = 's32[1]{0}', space=sflag, size = 0x4, scoped, tag = 'scoped memory for cvae_forward.1']
    #allocation9 [shape = 's32[1]{0}', space=sflag, size = 0x4, scoped, tag = 'scoped memory for cvae_forward.1']
    #allocation10 [shape = 'u8[98304]{0}', space=vmem, size = 0x18000, scoped, tag = 'input window, operand 1, single buffered']
    #allocation11 [shape = 's32[1]{0}', space=sflag, size = 0x4, scoped, tag = 'scoped memory for cvae_forward.1']
    #allocation12 [shape = 'u8[16384]{0}', space=vmem, size = 0x4000, scoped, tag = 'input window, operand 2, single buffered']
    #allocation13 [shape = 'u8[2097152]{0}', space=vmem, size = 0x200000, scoped, tag = 'input window, operand 3, single buffered']
    #allocation14 [shape = 's32[1]{0}', space=sflag, size = 0x4, scoped, tag = 'scoped memory for cvae_forward.1']
    #allocation15 [shape = 'u8[2048]{0}', space=vmem, size = 0x800, scoped, tag = 'input window, operand 4, single buffered']
    #allocation16 [shape = 'u8[2048]{0}', space=vmem, size = 0x800, scoped, tag = 'input window, operand 5, single buffered']
    #allocation17 [shape = 's32[1]{0}', space=sflag, size = 0x4, scoped, tag = 'scoped memory for cvae_forward.1']
    #allocation18 [shape = 'u8[2048]{0}', space=vmem, size = 0x800, scoped, tag = 'input window, operand 6, single buffered']
    #allocation19 [shape = 'u8[262144]{0}', space=vmem, size = 0x40000, scoped, tag = 'input window, operand 7, single buffered']
    #allocation20 [shape = 's32[1]{0}', space=sflag, size = 0x4, scoped, tag = 'scoped memory for cvae_forward.1']
    #allocation21 [shape = 'u8[1024]{0}', space=vmem, size = 0x400, scoped, tag = 'input window, operand 8, single buffered']
    #allocation22 [shape = 'u8[1024]{0}', space=vmem, size = 0x400, scoped, tag = 'input window, operand 9, single buffered']
    #allocation23 [shape = 's32[1]{0}', space=sflag, size = 0x4, scoped, tag = 'scoped memory for cvae_forward.1']
    #allocation24 [shape = 'u8[1024]{0}', space=vmem, size = 0x400, scoped, tag = 'input window, operand 10, single buffered']
    #allocation25 [shape = 'u8[131072]{0}', space=vmem, size = 0x20000, scoped, tag = 'input window, operand 11, single buffered']
    #allocation26 [shape = 's32[1]{0}', space=sflag, size = 0x4, scoped, tag = 'scoped memory for cvae_forward.1']
    #allocation27 [shape = 'u8[1024]{0}', space=vmem, size = 0x400, scoped, tag = 'input window, operand 12, single buffered']
    #allocation28 [shape = 'u8[1024]{0}', space=vmem, size = 0x400, scoped, tag = 'input window, operand 13, single buffered']
    #allocation29 [shape = 's32[1]{0}', space=sflag, size = 0x4, scoped, tag = 'scoped memory for cvae_forward.1']
    #allocation30 [shape = 'u8[1024]{0}', space=vmem, size = 0x400, scoped, tag = 'input window, operand 14, single buffered']
    #allocation31 [shape = 'u8[262144]{0}', space=vmem, size = 0x40000, scoped, tag = 'input window, operand 15, single buffered']
    #allocation32 [shape = 's32[1]{0}', space=sflag, size = 0x4, scoped, tag = 'scoped memory for cvae_forward.1']
    #allocation33 [shape = 'u8[2048]{0}', space=vmem, size = 0x800, scoped, tag = 'input window, operand 16, single buffered']
    #allocation34 [shape = 'u8[2048]{0}', space=vmem, size = 0x800, scoped, tag = 'input window, operand 18, single buffered']
    #allocation35 [shape = 's32[1]{0}', space=sflag, size = 0x4, scoped, tag = 'scoped memory for cvae_forward.1']
    #allocation36 [shape = 'u8[2048]{0}', space=vmem, size = 0x800, scoped, tag = 'input window, operand 19, single buffered']
    #allocation37 [shape = 'u8[2048]{0}', space=vmem, size = 0x800, scoped, tag = 'input window, operand 20, single buffered']
    #allocation38 [shape = 's32[1]{0}', space=sflag, size = 0x4, scoped, tag = 'scoped memory for cvae_forward.1']
    #allocation39 [shape = 'u8[1024]{0}', space=vmem, size = 0x400, scoped, tag = 'input window, operand 22, single buffered']
    #allocation40 [shape = 'u8[1024]{0}', space=vmem, size = 0x400, scoped, tag = 'input window, operand 23, single buffered']
    #allocation41 [shape = 's32[1]{0}', space=sflag, size = 0x4, scoped, tag = 'scoped memory for cvae_forward.1']
    #allocation42 [shape = 'u8[1024]{0}', space=vmem, size = 0x400, scoped, tag = 'input window, operand 24, single buffered']
    #allocation43 [shape = 'u8[1024]{0}', space=vmem, size = 0x400, scoped, tag = 'input window, operand 26, single buffered']
    #allocation44 [shape = 's32[1]{0}', space=sflag, size = 0x4, scoped, tag = 'scoped memory for cvae_forward.1']
    #allocation45 [shape = 'u8[1024]{0}', space=vmem, size = 0x400, scoped, tag = 'input window, operand 27, single buffered']
    #allocation46 [shape = 'u8[1024]{0}', space=vmem, size = 0x400, scoped, tag = 'input window, operand 28, single buffered']
    #allocation47 [shape = 's32[1]{0}', space=sflag, size = 0x4, scoped, tag = 'scoped memory for cvae_forward.1']
    #allocation48 [shape = 'u8[2048]{0}', space=vmem, size = 0x800, scoped, tag = 'input window, operand 30, single buffered']
    #allocation49 [shape = 'u8[32768]{0}', space=vmem, size = 0x8000, scoped, tag = 'output window, operand 0, single buffered']
    %71 = vsyncpa [#allocation8], 0
    %72 = vsyncpa [#allocation11], 0
    %73 = vsyncpa [#allocation14], 0
    %74 = vsyncpa [#allocation17], 0
    %75 = vsyncpa [#allocation20], 0
    %76 = vsyncpa [#allocation23], 0
    %77 = vsyncpa [#allocation26], 0
    %78 = vsyncpa [#allocation29], 0
    %79 = vsyncpa [#allocation32], 0
    %80 = vsyncpa [#allocation35], 0
    %81 = vsyncpa [#allocation38], 0
    %82 = vsyncpa [#allocation41], 0
    %83 = vsyncpa [#allocation44], 0
    %84 = vsyncpa [#allocation47], 0
    %85 = vsyncpa [#allocation9], 0
    // Predicated region
    $region2: #{cvae_forward.1} parent=1 // pred_check
      _
    $region3: #{cvae_forward.1} parent=1 // pred_check_branch
      %87 = sbr.rel (0) target = $region5
    $region4: #{cvae_forward.1} parent=1 // pred_region
      %s89 = ssub.s32 1024, 1024
      %90 = vsyncadd [#allocation8], %s89
      %s91 = sshll.u32 [#allocation7], 4
      %s92 = int_to_ptr.vmem [resolvable:$true] %s91
      %97 = dma.hbm_to_vmem [thread:$0]  %s1, 1024, %s92, [#allocation8], 512, 512, 32
    $region5: #{cvae_forward.1} parent=1 // pred_fallthru
      _
    // Predicated region
    $region6: #{cvae_forward.1} parent=1 // pred_check
      _
    $region7: #{cvae_forward.1} parent=1 // pred_check_branch
      %99 = sbr.rel (0) target = $region9
    $region8: #{cvae_forward.1} parent=1 // pred_region
      %s101 = ssub.s32 3072, 3072
      %102 = vsyncadd [#allocation11], %s101
      %s103 = sshll.u32 [#allocation10], 4
      %s104 = int_to_ptr.vmem [resolvable:$true] %s103
      %109 = dma.hbm_to_vmem [thread:$0]  %s3, 3072, %s104, [#allocation11], 1536, 1536, 96
    $region9: #{cvae_forward.1} parent=1 // pred_fallthru
      _
    // Predicated region
    $region10: #{cvae_forward.1} parent=1 // pred_check
      _
    $region11: #{cvae_forward.1} parent=1 // pred_check_branch
      %111 = sbr.rel (0) target = $region13
    $region12: #{cvae_forward.1} parent=1 // pred_region
      %s113 = ssub.s32 512, 512
      %114 = vsyncadd [#allocation11], %s113
      %s115 = sshll.u32 [#allocation12], 4
      %s116 = int_to_ptr.vmem [resolvable:$true] %s115
      %121 = dma.hbm_to_vmem [thread:$0]  %s5, 512, %s116, [#allocation11], 256, 256, 16
    $region13: #{cvae_forward.1} parent=1 // pred_fallthru
      _
    // Predicated region
    $region14: #{cvae_forward.1} parent=1 // pred_check
      _
    $region15: #{cvae_forward.1} parent=1 // pred_check_branch
      %123 = sbr.rel (0) target = $region17
    $region16: #{cvae_forward.1} parent=1 // pred_region
      %s125 = ssub.s32 65536, 65536
      %126 = vsyncadd [#allocation14], %s125
      %s127 = sshll.u32 [#allocation13], 4
      %s128 = int_to_ptr.vmem [resolvable:$true] %s127
      %133 = dma.hbm_to_vmem [thread:$0]  %s7, 65536, %s128, [#allocation14], 256, 256, 16
    $region17: #{cvae_forward.1} parent=1 // pred_fallthru
      _
    // Predicated region
    $region18: #{cvae_forward.1} parent=1 // pred_check
      _
    $region19: #{cvae_forward.1} parent=1 // pred_check_branch
      %135 = sbr.rel (0) target = $region21
    $region20: #{cvae_forward.1} parent=1 // pred_region
      %s137 = ssub.s32 64, 64
      %138 = vsyncadd [#allocation14], %s137
      %s140 = sshll.u32 [#allocation15], 4
      %s141 = int_to_ptr.vmem [resolvable:$true] %s140
      %143 = dma.hbm_to_vmem [thread:$0]  %s9, 64, %s141, [#allocation14]
    $region21: #{cvae_forward.1} parent=1 // pred_fallthru
      _
    // Predicated region
    $region22: #{cvae_forward.1} parent=1 // pred_check
      _
    $region23: #{cvae_forward.1} parent=1 // pred_check_branch
      %145 = sbr.rel (0) target = $region25
    $region24: #{cvae_forward.1} parent=1 // pred_region
      %s147 = ssub.s32 64, 64
      %148 = vsyncadd [#allocation17], %s147
      %s150 = sshll.u32 [#allocation16], 4
      %s151 = int_to_ptr.vmem [resolvable:$true] %s150
      %153 = dma.hbm_to_vmem [thread:$0]  %s11, 64, %s151, [#allocation17]
    $region25: #{cvae_forward.1} parent=1 // pred_fallthru
      _
    // Predicated region
    $region26: #{cvae_forward.1} parent=1 // pred_check
      _
    $region27: #{cvae_forward.1} parent=1 // pred_check_branch
      %155 = sbr.rel (0) target = $region29
    $region28: #{cvae_forward.1} parent=1 // pred_region
      %s157 = ssub.s32 64, 64
      %158 = vsyncadd [#allocation17], %s157
      %s160 = sshll.u32 [#allocation18], 4
      %s161 = int_to_ptr.vmem [resolvable:$true] %s160
      %163 = dma.hbm_to_vmem [thread:$0]  %s13, 64, %s161, [#allocation17]
    $region29: #{cvae_forward.1} parent=1 // pred_fallthru
      _
    // Predicated region
    $region30: #{cvae_forward.1} parent=1 // pred_check
      _
    $region31: #{cvae_forward.1} parent=1 // pred_check_branch
      %165 = sbr.rel (0) target = $region33
    $region32: #{cvae_forward.1} parent=1 // pred_region
      %s167 = ssub.s32 8192, 8192
      %168 = vsyncadd [#allocation20], %s167
      %s169 = sshll.u32 [#allocation19], 4
      %s170 = int_to_ptr.vmem [resolvable:$true] %s169
      %175 = dma.hbm_to_vmem [thread:$0]  %s15, 8192, %s170, [#allocation20], 128, 128, 8
    $region33: #{cvae_forward.1} parent=1 // pred_fallthru
      _
    // Predicated region
    $region34: #{cvae_forward.1} parent=1 // pred_check
      _
    $region35: #{cvae_forward.1} parent=1 // pred_check_branch
      %177 = sbr.rel (0) target = $region37
    $region36: #{cvae_forward.1} parent=1 // pred_region
      %s179 = ssub.s32 32, 32
      %180 = vsyncadd [#allocation20], %s179
      %s182 = sshll.u32 [#allocation21], 4
      %s183 = int_to_ptr.vmem [resolvable:$true] %s182
      %185 = dma.hbm_to_vmem [thread:$0]  %s17, 32, %s183, [#allocation20]
    $region37: #{cvae_forward.1} parent=1 // pred_fallthru
      _
    // Predicated region
    $region38: #{cvae_forward.1} parent=1 // pred_check
      _
    $region39: #{cvae_forward.1} parent=1 // pred_check_branch
      %187 = sbr.rel (0) target = $region41
    $region40: #{cvae_forward.1} parent=1 // pred_region
      %s189 = ssub.s32 32, 32
      %190 = vsyncadd [#allocation23], %s189
      %s192 = sshll.u32 [#allocation22], 4
      %s193 = int_to_ptr.vmem [resolvable:$true] %s192
      %195 = dma.hbm_to_vmem [thread:$0]  %s19, 32, %s193, [#allocation23]
    $region41: #{cvae_forward.1} parent=1 // pred_fallthru
      _
    // Predicated region
    $region42: #{cvae_forward.1} parent=1 // pred_check
      _
    $region43: #{cvae_forward.1} parent=1 // pred_check_branch
      %197 = sbr.rel (0) target = $region45
    $region44: #{cvae_forward.1} parent=1 // pred_region
      %s199 = ssub.s32 32, 32
      %200 = vsyncadd [#allocation23], %s199
      %s202 = sshll.u32 [#allocation24], 4
      %s203 = int_to_ptr.vmem [resolvable:$true] %s202
      %205 = dma.hbm_to_vmem [thread:$0]  %s21, 32, %s203, [#allocation23]
    $region45: #{cvae_forward.1} parent=1 // pred_fallthru
      _
    // Predicated region
    $region46: #{cvae_forward.1} parent=1 // pred_check
      _
    $region47: #{cvae_forward.1} parent=1 // pred_check_branch
      %207 = sbr.rel (0) target = $region49
    $region48: #{cvae_forward.1} parent=1 // pred_region
      %s209 = ssub.s32 4096, 4096
      %210 = vsyncadd [#allocation26], %s209
      %s211 = sshll.u32 [#allocation25], 4
      %s212 = int_to_ptr.vmem [resolvable:$true] %s211
      %217 = dma.hbm_to_vmem [thread:$0]  %s23, 4096, %s212, [#allocation26], 128, 128, 8
    $region49: #{cvae_forward.1} parent=1 // pred_fallthru
      _
    // Predicated region
    $region50: #{cvae_forward.1} parent=1 // pred_check
      _
    $region51: #{cvae_forward.1} parent=1 // pred_check_branch
      %219 = sbr.rel (0) target = $region53
    $region52: #{cvae_forward.1} parent=1 // pred_region
      %s221 = ssub.s32 32, 32
      %222 = vsyncadd [#allocation26], %s221
      %s224 = sshll.u32 [#allocation27], 4
      %s225 = int_to_ptr.vmem [resolvable:$true] %s224
      %227 = dma.hbm_to_vmem [thread:$0]  %s25, 32, %s225, [#allocation26]
    $region53: #{cvae_forward.1} parent=1 // pred_fallthru
      _
    // Predicated region
    $region54: #{cvae_forward.1} parent=1 // pred_check
      _
    $region55: #{cvae_forward.1} parent=1 // pred_check_branch
      %229 = sbr.rel (0) target = $region57
    $region56: #{cvae_forward.1} parent=1 // pred_region
      %s231 = ssub.s32 32, 32
      %232 = vsyncadd [#allocation29], %s231
      %s234 = sshll.u32 [#allocation28], 4
      %s235 = int_to_ptr.vmem [resolvable:$true] %s234
      %237 = dma.hbm_to_vmem [thread:$0]  %s27, 32, %s235, [#allocation29]
    $region57: #{cvae_forward.1} parent=1 // pred_fallthru
      _
    // Predicated region
    $region58: #{cvae_forward.1} parent=1 // pred_check
      _
    $region59: #{cvae_forward.1} parent=1 // pred_check_branch
      %239 = sbr.rel (0) target = $region61
    $region60: #{cvae_forward.1} parent=1 // pred_region
      %s241 = ssub.s32 32, 32
      %242 = vsyncadd [#allocation29], %s241
      %s244 = sshll.u32 [#allocation30], 4
      %s245 = int_to_ptr.vmem [resolvable:$true] %s244
      %247 = dma.hbm_to_vmem [thread:$0]  %s29, 32, %s245, [#allocation29]
    $region61: #{cvae_forward.1} parent=1 // pred_fallthru
      _
    // Predicated region
    $region62: #{cvae_forward.1} parent=1 // pred_check
      _
    $region63: #{cvae_forward.1} parent=1 // pred_check_branch
      %249 = sbr.rel (0) target = $region65
    $region64: #{cvae_forward.1} parent=1 // pred_region
      %s251 = ssub.s32 8192, 8192
      %252 = vsyncadd [#allocation32], %s251
      %s253 = sshll.u32 [#allocation31], 4
      %s254 = int_to_ptr.vmem [resolvable:$true] %s253
      %259 = dma.hbm_to_vmem [thread:$0]  %s31, 8192, %s254, [#allocation32], 256, 256, 16
    $region65: #{cvae_forward.1} parent=1 // pred_fallthru
      _
    // Predicated region
    $region66: #{cvae_forward.1} parent=1 // pred_check
      _
    $region67: #{cvae_forward.1} parent=1 // pred_check_branch
      %261 = sbr.rel (0) target = $region69
    $region68: #{cvae_forward.1} parent=1 // pred_region
      %s263 = ssub.s32 64, 64
      %264 = vsyncadd [#allocation32], %s263
      %s266 = sshll.u32 [#allocation33], 4
      %s267 = int_to_ptr.vmem [resolvable:$true] %s266
      %269 = dma.hbm_to_vmem [thread:$0]  %s33, 64, %s267, [#allocation32]
    $region69: #{cvae_forward.1} parent=1 // pred_fallthru
      _
    // Predicated region
    $region70: #{cvae_forward.1} parent=1 // pred_check
      _
    $region71: #{cvae_forward.1} parent=1 // pred_check_branch
      %271 = sbr.rel (0) target = $region73
    $region72: #{cvae_forward.1} parent=1 // pred_region
      %s273 = ssub.s32 64, 64
      %274 = vsyncadd [#allocation35], %s273
      %s276 = sshll.u32 [#allocation34], 4
      %s277 = int_to_ptr.vmem [resolvable:$true] %s276
      %279 = dma.hbm_to_vmem [thread:$0]  %s37, 64, %s277, [#allocation35]
    $region73: #{cvae_forward.1} parent=1 // pred_fallthru
      _
    // Predicated region
    $region74: #{cvae_forward.1} parent=1 // pred_check
      _
    $region75: #{cvae_forward.1} parent=1 // pred_check_branch
      %281 = sbr.rel (0) target = $region77
    $region76: #{cvae_forward.1} parent=1 // pred_region
      %s283 = ssub.s32 64, 64
      %284 = vsyncadd [#allocation35], %s283
      %s286 = sshll.u32 [#allocation36], 4
      %s287 = int_to_ptr.vmem [resolvable:$true] %s286
      %289 = dma.hbm_to_vmem [thread:$0]  %s39, 64, %s287, [#allocation35]
    $region77: #{cvae_forward.1} parent=1 // pred_fallthru
      _
    // Predicated region
    $region78: #{cvae_forward.1} parent=1 // pred_check
      _
    $region79: #{cvae_forward.1} parent=1 // pred_check_branch
      %291 = sbr.rel (0) target = $region81
    $region80: #{cvae_forward.1} parent=1 // pred_region
      %s293 = ssub.s32 64, 64
      %294 = vsyncadd [#allocation38], %s293
      %s296 = sshll.u32 [#allocation37], 4
      %s297 = int_to_ptr.vmem [resolvable:$true] %s296
      %299 = dma.hbm_to_vmem [thread:$0]  %s41, 64, %s297, [#allocation38]
    $region81: #{cvae_forward.1} parent=1 // pred_fallthru
      _
    // Predicated region
    $region82: #{cvae_forward.1} parent=1 // pred_check
      _
    $region83: #{cvae_forward.1} parent=1 // pred_check_branch
      %301 = sbr.rel (0) target = $region85
    $region84: #{cvae_forward.1} parent=1 // pred_region
      %s303 = ssub.s32 32, 32
      %304 = vsyncadd [#allocation38], %s303
      %s306 = sshll.u32 [#allocation39], 4
      %s307 = int_to_ptr.vmem [resolvable:$true] %s306
      %309 = dma.hbm_to_vmem [thread:$0]  %s45, 32, %s307, [#allocation38]
    $region85: #{cvae_forward.1} parent=1 // pred_fallthru
      _
    // Predicated region
    $region86: #{cvae_forward.1} parent=1 // pred_check
      _
    $region87: #{cvae_forward.1} parent=1 // pred_check_branch
      %311 = sbr.rel (0) target = $region89
    $region88: #{cvae_forward.1} parent=1 // pred_region
      %s313 = ssub.s32 32, 32
      %314 = vsyncadd [#allocation41], %s313
      %s316 = sshll.u32 [#allocation40], 4
      %s317 = int_to_ptr.vmem [resolvable:$true] %s316
      %319 = dma.hbm_to_vmem [thread:$0]  %s47, 32, %s317, [#allocation41]
    $region89: #{cvae_forward.1} parent=1 // pred_fallthru
      _
    // Predicated region
    $region90: #{cvae_forward.1} parent=1 // pred_check
      _
    $region91: #{cvae_forward.1} parent=1 // pred_check_branch
      %321 = sbr.rel (0) target = $region93
    $region92: #{cvae_forward.1} parent=1 // pred_region
      %s323 = ssub.s32 32, 32
      %324 = vsyncadd [#allocation41], %s323
      %s326 = sshll.u32 [#allocation42], 4
      %s327 = int_to_ptr.vmem [resolvable:$true] %s326
      %329 = dma.hbm_to_vmem [thread:$0]  %s49, 32, %s327, [#allocation41]
    $region93: #{cvae_forward.1} parent=1 // pred_fallthru
      _
    // Predicated region
    $region94: #{cvae_forward.1} parent=1 // pred_check
      _
    $region95: #{cvae_forward.1} parent=1 // pred_check_branch
      %331 = sbr.rel (0) target = $region97
    $region96: #{cvae_forward.1} parent=1 // pred_region
      %s333 = ssub.s32 32, 32
      %334 = vsyncadd [#allocation44], %s333
      %s336 = sshll.u32 [#allocation43], 4
      %s337 = int_to_ptr.vmem [resolvable:$true] %s336
      %339 = dma.hbm_to_vmem [thread:$0]  %s53, 32, %s337, [#allocation44]
    $region97: #{cvae_forward.1} parent=1 // pred_fallthru
      _
    // Predicated region
    $region98: #{cvae_forward.1} parent=1 // pred_check
      _
    $region99: #{cvae_forward.1} parent=1 // pred_check_branch
      %341 = sbr.rel (0) target = $region101
    $region100: #{cvae_forward.1} parent=1 // pred_region
      %s343 = ssub.s32 32, 32
      %344 = vsyncadd [#allocation44], %s343
      %s346 = sshll.u32 [#allocation45], 4
      %s347 = int_to_ptr.vmem [resolvable:$true] %s346
      %349 = dma.hbm_to_vmem [thread:$0]  %s55, 32, %s347, [#allocation44]
    $region101: #{cvae_forward.1} parent=1 // pred_fallthru
      _
    // Predicated region
    $region102: #{cvae_forward.1} parent=1 // pred_check
      _
    $region103: #{cvae_forward.1} parent=1 // pred_check_branch
      %351 = sbr.rel (0) target = $region105
    $region104: #{cvae_forward.1} parent=1 // pred_region
      %s353 = ssub.s32 32, 32
      %354 = vsyncadd [#allocation47], %s353
      %s356 = sshll.u32 [#allocation46], 4
      %s357 = int_to_ptr.vmem [resolvable:$true] %s356
      %359 = dma.hbm_to_vmem [thread:$0]  %s57, 32, %s357, [#allocation47]
    $region105: #{cvae_forward.1} parent=1 // pred_fallthru
      _
    // Predicated region
    $region106: #{cvae_forward.1} parent=1 // pred_check
      _
    $region107: #{cvae_forward.1} parent=1 // pred_check_branch
      %361 = sbr.rel (0) target = $region109
    $region108: #{cvae_forward.1} parent=1 // pred_region
      %s363 = ssub.s32 64, 64
      %364 = vsyncadd [#allocation47], %s363
      %s366 = sshll.u32 [#allocation48], 4
      %s367 = int_to_ptr.vmem [resolvable:$true] %s366
      %369 = dma.hbm_to_vmem [thread:$0]  %s61, 64, %s367, [#allocation47]
    $region109: #{cvae_forward.1} parent=1 // pred_fallthru
      _
    // Predicated region
    $region110: #{cvae_forward.1} parent=1 // pred_check
      _
    $region111: #{cvae_forward.1} parent=1 // pred_check_branch
      %371 = sbr.rel (0) target = $region113
    $region112: #{cvae_forward.1} parent=1 // pred_region
      %372 = dma.done [#allocation8], 1024
    $region113: #{cvae_forward.1} parent=1 // pred_fallthru
      _
    // Predicated region
    $region114: #{cvae_forward.1} parent=1 // pred_check
      _
    $region115: #{cvae_forward.1} parent=1 // pred_check_branch
      %374 = sbr.rel (0) target = $region117
    $region116: #{cvae_forward.1} parent=1 // pred_region
      %375 = dma.done [#allocation11], 3072
    $region117: #{cvae_forward.1} parent=1 // pred_fallthru
      _
    // Predicated region
    $region118: #{cvae_forward.1} parent=1 // pred_check
      _
    $region119: #{cvae_forward.1} parent=1 // pred_check_branch
      %377 = sbr.rel (0) target = $region121
    $region120: #{cvae_forward.1} parent=1 // pred_region
      %378 = dma.done [#allocation11], 512
    $region121: #{cvae_forward.1} parent=1 // pred_fallthru
      _
    // Predicated region
    $region122: #{cvae_forward.1} parent=1 // pred_check
      _
    $region123: #{cvae_forward.1} parent=1 // pred_check_branch
      %380 = sbr.rel (0) target = $region125
    $region124: #{cvae_forward.1} parent=1 // pred_region
      %381 = dma.done [#allocation14], 65536
    $region125: #{cvae_forward.1} parent=1 // pred_fallthru
      _
    // Predicated region
    $region126: #{cvae_forward.1} parent=1 // pred_check
      _
    $region127: #{cvae_forward.1} parent=1 // pred_check_branch
      %383 = sbr.rel (0) target = $region129
    $region128: #{cvae_forward.1} parent=1 // pred_region
      %384 = dma.done [#allocation14], 64
    $region129: #{cvae_forward.1} parent=1 // pred_fallthru
      _
    // Predicated region
    $region130: #{cvae_forward.1} parent=1 // pred_check
      _
    $region131: #{cvae_forward.1} parent=1 // pred_check_branch
      %386 = sbr.rel (0) target = $region133
    $region132: #{cvae_forward.1} parent=1 // pred_region
      %387 = dma.done [#allocation17], 64
    $region133: #{cvae_forward.1} parent=1 // pred_fallthru
      _
    // Predicated region
    $region134: #{cvae_forward.1} parent=1 // pred_check
      _
    $region135: #{cvae_forward.1} parent=1 // pred_check_branch
      %389 = sbr.rel (0) target = $region137
    $region136: #{cvae_forward.1} parent=1 // pred_region
      %390 = dma.done [#allocation17], 64
    $region137: #{cvae_forward.1} parent=1 // pred_fallthru
      _
    // Predicated region
    $region138: #{cvae_forward.1} parent=1 // pred_check
      _
    $region139: #{cvae_forward.1} parent=1 // pred_check_branch
      %392 = sbr.rel (0) target = $region141
    $region140: #{cvae_forward.1} parent=1 // pred_region
      %393 = dma.done [#allocation20], 8192
    $region141: #{cvae_forward.1} parent=1 // pred_fallthru
      _
    // Predicated region
    $region142: #{cvae_forward.1} parent=1 // pred_check
      _
    $region143: #{cvae_forward.1} parent=1 // pred_check_branch
      %395 = sbr.rel (0) target = $region145
    $region144: #{cvae_forward.1} parent=1 // pred_region
      %396 = dma.done [#allocation20], 32
    $region145: #{cvae_forward.1} parent=1 // pred_fallthru
      _
    // Predicated region
    $region146: #{cvae_forward.1} parent=1 // pred_check
      _
    $region147: #{cvae_forward.1} parent=1 // pred_check_branch
      %398 = sbr.rel (0) target = $region149
    $region148: #{cvae_forward.1} parent=1 // pred_region
      %399 = dma.done [#allocation23], 32
    $region149: #{cvae_forward.1} parent=1 // pred_fallthru
      _
    // Predicated region
    $region150: #{cvae_forward.1} parent=1 // pred_check
      _
    $region151: #{cvae_forward.1} parent=1 // pred_check_branch
      %401 = sbr.rel (0) target = $region153
    $region152: #{cvae_forward.1} parent=1 // pred_region
      %402 = dma.done [#allocation23], 32
    $region153: #{cvae_forward.1} parent=1 // pred_fallthru
      _
    // Predicated region
    $region154: #{cvae_forward.1} parent=1 // pred_check
      _
    $region155: #{cvae_forward.1} parent=1 // pred_check_branch
      %404 = sbr.rel (0) target = $region157
    $region156: #{cvae_forward.1} parent=1 // pred_region
      %405 = dma.done [#allocation26], 4096
    $region157: #{cvae_forward.1} parent=1 // pred_fallthru
      _
    // Predicated region
    $region158: #{cvae_forward.1} parent=1 // pred_check
      _
    $region159: #{cvae_forward.1} parent=1 // pred_check_branch
      %407 = sbr.rel (0) target = $region161
    $region160: #{cvae_forward.1} parent=1 // pred_region
      %408 = dma.done [#allocation26], 32
    $region161: #{cvae_forward.1} parent=1 // pred_fallthru
      _
    // Predicated region
    $region162: #{cvae_forward.1} parent=1 // pred_check
      _
    $region163: #{cvae_forward.1} parent=1 // pred_check_branch
      %410 = sbr.rel (0) target = $region165
    $region164: #{cvae_forward.1} parent=1 // pred_region
      %411 = dma.done [#allocation29], 32
    $region165: #{cvae_forward.1} parent=1 // pred_fallthru
      _
    // Predicated region
    $region166: #{cvae_forward.1} parent=1 // pred_check
      _
    $region167: #{cvae_forward.1} parent=1 // pred_check_branch
      %413 = sbr.rel (0) target = $region169
    $region168: #{cvae_forward.1} parent=1 // pred_region
      %414 = dma.done [#allocation29], 32
    $region169: #{cvae_forward.1} parent=1 // pred_fallthru
      _
    // Predicated region
    $region170: #{cvae_forward.1} parent=1 // pred_check
      _
    $region171: #{cvae_forward.1} parent=1 // pred_check_branch
      %416 = sbr.rel (0) target = $region173
    $region172: #{cvae_forward.1} parent=1 // pred_region
      %417 = dma.done [#allocation32], 8192
    $region173: #{cvae_forward.1} parent=1 // pred_fallthru
      _
    // Predicated region
    $region174: #{cvae_forward.1} parent=1 // pred_check
      _
    $region175: #{cvae_forward.1} parent=1 // pred_check_branch
      %419 = sbr.rel (0) target = $region177
    $region176: #{cvae_forward.1} parent=1 // pred_region
      %420 = dma.done [#allocation32], 64
    $region177: #{cvae_forward.1} parent=1 // pred_fallthru
      _
    // Predicated region
    $region178: #{cvae_forward.1} parent=1 // pred_check
      _
    $region179: #{cvae_forward.1} parent=1 // pred_check_branch
      %422 = sbr.rel (0) target = $region181
    $region180: #{cvae_forward.1} parent=1 // pred_region
      %423 = dma.done [#allocation35], 64
    $region181: #{cvae_forward.1} parent=1 // pred_fallthru
      _
    // Predicated region
    $region182: #{cvae_forward.1} parent=1 // pred_check
      _
    $region183: #{cvae_forward.1} parent=1 // pred_check_branch
      %425 = sbr.rel (0) target = $region185
    $region184: #{cvae_forward.1} parent=1 // pred_region
      %426 = dma.done [#allocation35], 64
    $region185: #{cvae_forward.1} parent=1 // pred_fallthru
      _
    // Predicated region
    $region186: #{cvae_forward.1} parent=1 // pred_check
      _
    $region187: #{cvae_forward.1} parent=1 // pred_check_branch
      %428 = sbr.rel (0) target = $region189
    $region188: #{cvae_forward.1} parent=1 // pred_region
      %429 = dma.done [#allocation38], 64
    $region189: #{cvae_forward.1} parent=1 // pred_fallthru
      _
    // Predicated region
    $region190: #{cvae_forward.1} parent=1 // pred_check
      _
    $region191: #{cvae_forward.1} parent=1 // pred_check_branch
      %431 = sbr.rel (0) target = $region193
    $region192: #{cvae_forward.1} parent=1 // pred_region
      %432 = dma.done [#allocation38], 32
    $region193: #{cvae_forward.1} parent=1 // pred_fallthru
      _
    // Predicated region
    $region194: #{cvae_forward.1} parent=1 // pred_check
      _
    $region195: #{cvae_forward.1} parent=1 // pred_check_branch
      %434 = sbr.rel (0) target = $region197
    $region196: #{cvae_forward.1} parent=1 // pred_region
      %435 = dma.done [#allocation41], 32
    $region197: #{cvae_forward.1} parent=1 // pred_fallthru
      _
    // Predicated region
    $region198: #{cvae_forward.1} parent=1 // pred_check
      _
    $region199: #{cvae_forward.1} parent=1 // pred_check_branch
      %437 = sbr.rel (0) target = $region201
    $region200: #{cvae_forward.1} parent=1 // pred_region
      %438 = dma.done [#allocation41], 32
    $region201: #{cvae_forward.1} parent=1 // pred_fallthru
      _
    // Predicated region
    $region202: #{cvae_forward.1} parent=1 // pred_check
      _
    $region203: #{cvae_forward.1} parent=1 // pred_check_branch
      %440 = sbr.rel (0) target = $region205
    $region204: #{cvae_forward.1} parent=1 // pred_region
      %441 = dma.done [#allocation44], 32
    $region205: #{cvae_forward.1} parent=1 // pred_fallthru
      _
    // Predicated region
    $region206: #{cvae_forward.1} parent=1 // pred_check
      _
    $region207: #{cvae_forward.1} parent=1 // pred_check_branch
      %443 = sbr.rel (0) target = $region209
    $region208: #{cvae_forward.1} parent=1 // pred_region
      %444 = dma.done [#allocation44], 32
    $region209: #{cvae_forward.1} parent=1 // pred_fallthru
      _
    // Predicated region
    $region210: #{cvae_forward.1} parent=1 // pred_check
      _
    $region211: #{cvae_forward.1} parent=1 // pred_check_branch
      %446 = sbr.rel (0) target = $region213
    $region212: #{cvae_forward.1} parent=1 // pred_region
      %447 = dma.done [#allocation47], 32
    $region213: #{cvae_forward.1} parent=1 // pred_fallthru
      _
    // Predicated region
    $region214: #{cvae_forward.1} parent=1 // pred_check
      _
    $region215: #{cvae_forward.1} parent=1 // pred_check_branch
      %449 = sbr.rel (0) target = $region217
    $region216: #{cvae_forward.1} parent=1 // pred_region
      %450 = dma.done [#allocation47], 64
    $region217: #{cvae_forward.1} parent=1 // pred_fallthru
      _
    // Predicated region
    $region218: #{cvae_forward.1} parent=1 // pred_check
      _
    $region219: #{cvae_forward.1} parent=1 // pred_check_branch
      %452 = sbr.rel target = $region221
    $region220: #{cvae_forward.1} parent=1 // pred_region
      %453 = sst [smem:[#allocation52]] [#allocation51]
      %454 = sst [smem:[#allocation53]] [#allocation50]
    $region221: #{cvae_forward.1} parent=1 // pred_fallthru
      _
    %456 = shalt.err (0)
    %s458 = sshll.u32 [#allocation2], 4
    %s459 = int_to_ptr.vmem [resolvable:$true] %s458
    %461 = dma.hbm_to_vmem [thread:$0]  %s35, 57344, %s459, [#allocation6]
    %s462 = scalar_lea.sflag [#allocation6], 1
    // Predicated region
    $region222: #{cvae_forward.1} parent=1 // pred_check
      _
    $region223: #{cvae_forward.1} parent=1 // pred_check_branch
      %464 = sbr.rel target = $region225
    $region224: #{cvae_forward.1} parent=1 // pred_region
      %465 = sst [smem:[#allocation52]] [#allocation55]
      %466 = sst [smem:[#allocation53]] [#allocation54]
    $region225: #{cvae_forward.1} parent=1 // pred_fallthru
      _
    %468 = shalt.err (0)
    %s470 = sshll.u32 [#allocation3], 4
    %s471 = int_to_ptr.vmem [resolvable:$true] %s470
    %473 = dma.hbm_to_vmem [thread:$0]  %s43, 8192, %s471, %s462
    %s474 = scalar_lea.sflag [#allocation6], 2
    // Predicated region
    $region226: #{cvae_forward.1} parent=1 // pred_check
      _
    $region227: #{cvae_forward.1} parent=1 // pred_check_branch
      %476 = sbr.rel target = $region229
    $region228: #{cvae_forward.1} parent=1 // pred_region
      %477 = sst [smem:[#allocation52]] [#allocation57]
      %478 = sst [smem:[#allocation53]] [#allocation56]
    $region229: #{cvae_forward.1} parent=1 // pred_fallthru
      _
    %480 = shalt.err (0)
    %s482 = sshll.u32 [#allocation4], 4
    %s483 = int_to_ptr.vmem [resolvable:$true] %s482
    %485 = dma.hbm_to_vmem [thread:$0]  %s51, 4096, %s483, %s474
    %s486 = scalar_lea.sflag [#allocation6], 3
    // Predicated region
    $region230: #{cvae_forward.1} parent=1 // pred_check
      _
    $region231: #{cvae_forward.1} parent=1 // pred_check_branch
      %488 = sbr.rel target = $region233
    $region232: #{cvae_forward.1} parent=1 // pred_region
      %489 = sst [smem:[#allocation52]] [#allocation59]
      %490 = sst [smem:[#allocation53]] [#allocation58]
    $region233: #{cvae_forward.1} parent=1 // pred_fallthru
      _
    %492 = shalt.err (0)
    %s494 = sshll.u32 [#allocation5], 4
    %s495 = int_to_ptr.vmem [resolvable:$true] %s494
    %497 = dma.hbm_to_vmem [thread:$0]  %s59, 8192, %s495, %s486
    %v498 = vld [vmem:[#allocation7] sm:$0xff]
    %v499 = vld [vmem:[#allocation7 + $0x8] sm:$0xff]
    %v500 = vld [vmem:[#allocation7 + $0x10] sm:$0xff]
    %v501 = vld [vmem:[#allocation7 + $0x18] sm:$0xff]
    %v502 = vld [vmem:[#allocation7 + $0x20] sm:$0xff]
    %v503 = vld [vmem:[#allocation7 + $0x28] sm:$0xff]
    %v504 = vld [vmem:[#allocation7 + $0x30] sm:$0xff]
    %v505 = vld [vmem:[#allocation7 + $0x38] sm:$0xff]
    %v506 = vpack.c.bf16 %v502, %v498
    %v507 = vpack.c.bf16 %v503, %v499
    %v508 = vpack.c.bf16 %v504, %v500
    %v509 = vpack.c.bf16 %v505, %v501
    %v510 = vld [vmem:[#allocation10] sm:$0xff]
    %v511 = vld [vmem:[#allocation10 + $0x8] sm:$0xff]
    %v512 = vld [vmem:[#allocation10 + $0x10] sm:$0xff]
    %v513 = vld [vmem:[#allocation10 + $0x18] sm:$0xff]
    %v514 = vld [vmem:[#allocation10 + $0x20] sm:$0xff]
    %v515 = vld [vmem:[#allocation10 + $0x28] sm:$0xff]
    %v516 = vld [vmem:[#allocation10 + $0x30] sm:$0xff]
    %v517 = vld [vmem:[#allocation10 + $0x38] sm:$0xff]
    %v518 = vld [vmem:[#allocation10 + $0x40] sm:$0xff]
    %v519 = vld [vmem:[#allocation10 + $0x48] sm:$0xff]
    %v520 = vld [vmem:[#allocation10 + $0x50] sm:$0xff]
    %v521 = vld [vmem:[#allocation10 + $0x58] sm:$0xff]
    %v522 = vld [vmem:[#allocation10 + $0x60] sm:$0xff]
    %v523 = vld [vmem:[#allocation10 + $0x68] sm:$0xff]
    %v524 = vld [vmem:[#allocation10 + $0x70] sm:$0xff]
    %v525 = vld [vmem:[#allocation10 + $0x78] sm:$0xff]
    %v526 = vld [vmem:[#allocation10 + $0x80] sm:$0xff]
    %v527 = vld [vmem:[#allocation10 + $0x88] sm:$0xff]
    %v528 = vld [vmem:[#allocation10 + $0x90] sm:$0xff]
    %v529 = vld [vmem:[#allocation10 + $0x98] sm:$0xff]
    %v530 = vld [vmem:[#allocation10 + $0xa0] sm:$0xff]
    %v531 = vld [vmem:[#allocation10 + $0xa8] sm:$0xff]
    %v532 = vld [vmem:[#allocation10 + $0xb0] sm:$0xff]
    %v533 = vld [vmem:[#allocation10 + $0xb8] sm:$0xff]
    %v534 = vpack.c.bf16 %v522, %v510
    %v535 = vpack.c.bf16 %v523, %v511
    %v536 = vpack.c.bf16 %v524, %v512
    %v537 = vpack.c.bf16 %v525, %v513
    %v538 = vpack.c.bf16 %v526, %v514
    %v539 = vpack.c.bf16 %v527, %v515
    %v540 = vpack.c.bf16 %v528, %v516
    %v541 = vpack.c.bf16 %v529, %v517
    %v542 = vpack.c.bf16 %v530, %v518
    %v543 = vpack.c.bf16 %v531, %v519
    %v544 = vpack.c.bf16 %v532, %v520
    %v545 = vpack.c.bf16 %v533, %v521
    %v546 = vld [vmem:[#allocation13] sm:$0xff]
    %v547 = vld [vmem:[#allocation13 + $0x8] sm:$0xff]
    %v548 = vld [vmem:[#allocation13 + $0x10] sm:$0xff]
    %v549 = vld [vmem:[#allocation13 + $0x18] sm:$0xff]
    %v550 = vld [vmem:[#allocation13 + $0x20] sm:$0xff]
    %v551 = vld [vmem:[#allocation13 + $0x28] sm:$0xff]
    %v552 = vld [vmem:[#allocation13 + $0x30] sm:$0xff]
    %v553 = vld [vmem:[#allocation13 + $0x38] sm:$0xff]
    %v554 = vld [vmem:[#allocation13 + $0x40] sm:$0xff]
    %v555 = vld [vmem:[#allocation13 + $0x48] sm:$0xff]
    %v556 = vld [vmem:[#allocation13 + $0x50] sm:$0xff]
    %v557 = vld [vmem:[#allocation13 + $0x58] sm:$0xff]
    %v558 = vld [vmem:[#allocation13 + $0x60] sm:$0xff]
    %v559 = vld [vmem:[#allocation13 + $0x68] sm:$0xff]
    %v560 = vld [vmem:[#allocation13 + $0x70] sm:$0xff]
    %v561 = vld [vmem:[#allocation13 + $0x78] sm:$0xff]
    %v562 = vld [vmem:[#allocation13 + $0x80] sm:$0xff]
    %v563 = vld [vmem:[#allocation13 + $0x88] sm:$0xff]
    %v564 = vld [vmem:[#allocation13 + $0x90] sm:$0xff]
    %v565 = vld [vmem:[#allocation13 + $0x98] sm:$0xff]
    %v566 = vld [vmem:[#allocation13 + $0xa0] sm:$0xff]
    %v567 = vld [vmem:[#allocation13 + $0xa8] sm:$0xff]
    %v568 = vld [vmem:[#allocation13 + $0xb0] sm:$0xff]
    %v569 = vld [vmem:[#allocation13 + $0xb8] sm:$0xff]
    %v570 = vld [vmem:[#allocation13 + $0xc0] sm:$0xff]
    %v571 = vld [vmem:[#allocation13 + $0xc8] sm:$0xff]
    %v572 = vld [vmem:[#allocation13 + $0xd0] sm:$0xff]
    %v573 = vld [vmem:[#allocation13 + $0xd8] sm:$0xff]
    %v574 = vld [vmem:[#allocation13 + $0xe0] sm:$0xff]
    %v575 = vld [vmem:[#allocation13 + $0xe8] sm:$0xff]
    %v576 = vld [vmem:[#allocation13 + $0xf0] sm:$0xff]
    %v577 = vld [vmem:[#allocation13 + $0xf8] sm:$0xff]
    %v578 = vld [vmem:[#allocation13 + $0x100] sm:$0xff]
    %v579 = vld [vmem:[#allocation13 + $0x108] sm:$0xff]
    %v580 = vld [vmem:[#allocation13 + $0x110] sm:$0xff]
    %v581 = vld [vmem:[#allocation13 + $0x118] sm:$0xff]
    %v582 = vld [vmem:[#allocation13 + $0x120] sm:$0xff]
    %v583 = vld [vmem:[#allocation13 + $0x128] sm:$0xff]
    %v584 = vld [vmem:[#allocation13 + $0x130] sm:$0xff]
    %v585 = vld [vmem:[#allocation13 + $0x138] sm:$0xff]
    %v586 = vld [vmem:[#allocation13 + $0x140] sm:$0xff]
    %v587 = vld [vmem:[#allocation13 + $0x148] sm:$0xff]
    %v588 = vld [vmem:[#allocation13 + $0x150] sm:$0xff]
    %v589 = vld [vmem:[#allocation13 + $0x158] sm:$0xff]
    %v590 = vld [vmem:[#allocation13 + $0x160] sm:$0xff]
    %v591 = vld [vmem:[#allocation13 + $0x168] sm:$0xff]
    %v592 = vld [vmem:[#allocation13 + $0x170] sm:$0xff]
    %v593 = vld [vmem:[#allocation13 + $0x178] sm:$0xff]
    %v594 = vld [vmem:[#allocation13 + $0x180] sm:$0xff]
    %v595 = vld [vmem:[#allocation13 + $0x188] sm:$0xff]
    %v596 = vld [vmem:[#allocation13 + $0x190] sm:$0xff]
    %v597 = vld [vmem:[#allocation13 + $0x198] sm:$0xff]
    %v598 = vld [vmem:[#allocation13 + $0x1a0] sm:$0xff]
    %v599 = vld [vmem:[#allocation13 + $0x1a8] sm:$0xff]
    %v600 = vld [vmem:[#allocation13 + $0x1b0] sm:$0xff]
    %v601 = vld [vmem:[#allocation13 + $0x1b8] sm:$0xff]
    %v602 = vld [vmem:[#allocation13 + $0x1c0] sm:$0xff]
    %v603 = vld [vmem:[#allocation13 + $0x1c8] sm:$0xff]
    %v604 = vld [vmem:[#allocation13 + $0x1d0] sm:$0xff]
    %v605 = vld [vmem:[#allocation13 + $0x1d8] sm:$0xff]
    %v606 = vld [vmem:[#allocation13 + $0x1e0] sm:$0xff]
    %v607 = vld [vmem:[#allocation13 + $0x1e8] sm:$0xff]
    %v608 = vld [vmem:[#allocation13 + $0x1f0] sm:$0xff]
    %v609 = vld [vmem:[#allocation13 + $0x1f8] sm:$0xff]
    %v610 = vld [vmem:[#allocation13 + $0x200] sm:$0xff]
    %v611 = vld [vmem:[#allocation13 + $0x208] sm:$0xff]
    %v612 = vld [vmem:[#allocation13 + $0x210] sm:$0xff]
    %v613 = vld [vmem:[#allocation13 + $0x218] sm:$0xff]
    %v614 = vld [vmem:[#allocation13 + $0x220] sm:$0xff]
    %v615 = vld [vmem:[#allocation13 + $0x228] sm:$0xff]
    %v616 = vld [vmem:[#allocation13 + $0x230] sm:$0xff]
    %v617 = vld [vmem:[#allocation13 + $0x238] sm:$0xff]
    %v618 = vld [vmem:[#allocation13 + $0x240] sm:$0xff]
    %v619 = vld [vmem:[#allocation13 + $0x248] sm:$0xff]
    %v620 = vld [vmem:[#allocation13 + $0x250] sm:$0xff]
    %v621 = vld [vmem:[#allocation13 + $0x258] sm:$0xff]
    %v622 = vld [vmem:[#allocation13 + $0x260] sm:$0xff]
    %v623 = vld [vmem:[#allocation13 + $0x268] sm:$0xff]
    %v624 = vld [vmem:[#allocation13 + $0x270] sm:$0xff]
    %v625 = vld [vmem:[#allocation13 + $0x278] sm:$0xff]
    %v626 = vld [vmem:[#allocation13 + $0x280] sm:$0xff]
    %v627 = vld [vmem:[#allocation13 + $0x288] sm:$0xff]
    %v628 = vld [vmem:[#allocation13 + $0x290] sm:$0xff]
    %v629 = vld [vmem:[#allocation13 + $0x298] sm:$0xff]
    %v630 = vld [vmem:[#allocation13 + $0x2a0] sm:$0xff]
    %v631 = vld [vmem:[#allocation13 + $0x2a8] sm:$0xff]
    %v632 = vld [vmem:[#allocation13 + $0x2b0] sm:$0xff]
    %v633 = vld [vmem:[#allocation13 + $0x2b8] sm:$0xff]
    %v634 = vld [vmem:[#allocation13 + $0x2c0] sm:$0xff]
    %v635 = vld [vmem:[#allocation13 + $0x2c8] sm:$0xff]
    %v636 = vld [vmem:[#allocation13 + $0x2d0] sm:$0xff]
    %v637 = vld [vmem:[#allocation13 + $0x2d8] sm:$0xff]
    %v638 = vld [vmem:[#allocation13 + $0x2e0] sm:$0xff]
    %v639 = vld [vmem:[#allocation13 + $0x2e8] sm:$0xff]
    %v640 = vld [vmem:[#allocation13 + $0x2f0] sm:$0xff]
    %v641 = vld [vmem:[#allocation13 + $0x2f8] sm:$0xff]
    %v642 = vld [vmem:[#allocation13 + $0x300] sm:$0xff]
    %v643 = vld [vmem:[#allocation13 + $0x308] sm:$0xff]
    %v644 = vld [vmem:[#allocation13 + $0x310] sm:$0xff]
    %v645 = vld [vmem:[#allocation13 + $0x318] sm:$0xff]
    %v646 = vld [vmem:[#allocation13 + $0x320] sm:$0xff]
    %v647 = vld [vmem:[#allocation13 + $0x328] sm:$0xff]
    %v648 = vld [vmem:[#allocation13 + $0x330] sm:$0xff]
    %v649 = vld [vmem:[#allocation13 + $0x338] sm:$0xff]
    %v650 = vld [vmem:[#allocation13 + $0x340] sm:$0xff]
    %v651 = vld [vmem:[#allocation13 + $0x348] sm:$0xff]
    %v652 = vld [vmem:[#allocation13 + $0x350] sm:$0xff]
    %v653 = vld [vmem:[#allocation13 + $0x358] sm:$0xff]
    %v654 = vld [vmem:[#allocation13 + $0x360] sm:$0xff]
    %v655 = vld [vmem:[#allocation13 + $0x368] sm:$0xff]
    %v656 = vld [vmem:[#allocation13 + $0x370] sm:$0xff]
    %v657 = vld [vmem:[#allocation13 + $0x378] sm:$0xff]
    %v658 = vld [vmem:[#allocation13 + $0x380] sm:$0xff]
    %v659 = vld [vmem:[#allocation13 + $0x388] sm:$0xff]
    %v660 = vld [vmem:[#allocation13 + $0x390] sm:$0xff]
    %v661 = vld [vmem:[#allocation13 + $0x398] sm:$0xff]
    %v662 = vld [vmem:[#allocation13 + $0x3a0] sm:$0xff]
    %v663 = vld [vmem:[#allocation13 + $0x3a8] sm:$0xff]
    %v664 = vld [vmem:[#allocation13 + $0x3b0] sm:$0xff]
    %v665 = vld [vmem:[#allocation13 + $0x3b8] sm:$0xff]
    %v666 = vld [vmem:[#allocation13 + $0x3c0] sm:$0xff]
    %v667 = vld [vmem:[#allocation13 + $0x3c8] sm:$0xff]
    %v668 = vld [vmem:[#allocation13 + $0x3d0] sm:$0xff]
    %v669 = vld [vmem:[#allocation13 + $0x3d8] sm:$0xff]
    %v670 = vld [vmem:[#allocation13 + $0x3e0] sm:$0xff]
    %v671 = vld [vmem:[#allocation13 + $0x3e8] sm:$0xff]
    %v672 = vld [vmem:[#allocation13 + $0x3f0] sm:$0xff]
    %v673 = vld [vmem:[#allocation13 + $0x3f8] sm:$0xff]
    %v674 = vld [vmem:[#allocation13 + $0x400] sm:$0xff]
    %v675 = vld [vmem:[#allocation13 + $0x408] sm:$0xff]
    %v676 = vld [vmem:[#allocation13 + $0x410] sm:$0xff]
    %v677 = vld [vmem:[#allocation13 + $0x418] sm:$0xff]
    %v678 = vld [vmem:[#allocation13 + $0x420] sm:$0xff]
    %v679 = vld [vmem:[#allocation13 + $0x428] sm:$0xff]
    %v680 = vld [vmem:[#allocation13 + $0x430] sm:$0xff]
    %v681 = vld [vmem:[#allocation13 + $0x438] sm:$0xff]
    %v682 = vld [vmem:[#allocation13 + $0x440] sm:$0xff]
    %v683 = vld [vmem:[#allocation13 + $0x448] sm:$0xff]
    %v684 = vld [vmem:[#allocation13 + $0x450] sm:$0xff]
    %v685 = vld [vmem:[#allocation13 + $0x458] sm:$0xff]
    %v686 = vld [vmem:[#allocation13 + $0x460] sm:$0xff]
    %v687 = vld [vmem:[#allocation13 + $0x468] sm:$0xff]
    %v688 = vld [vmem:[#allocation13 + $0x470] sm:$0xff]
    %v689 = vld [vmem:[#allocation13 + $0x478] sm:$0xff]
    %v690 = vld [vmem:[#allocation13 + $0x480] sm:$0xff]
    %v691 = vld [vmem:[#allocation13 + $0x488] sm:$0xff]
    %v692 = vld [vmem:[#allocation13 + $0x490] sm:$0xff]
    %v693 = vld [vmem:[#allocation13 + $0x498] sm:$0xff]
    %v694 = vld [vmem:[#allocation13 + $0x4a0] sm:$0xff]
    %v695 = vld [vmem:[#allocation13 + $0x4a8] sm:$0xff]
    %v696 = vld [vmem:[#allocation13 + $0x4b0] sm:$0xff]
    %v697 = vld [vmem:[#allocation13 + $0x4b8] sm:$0xff]
    %v698 = vld [vmem:[#allocation13 + $0x4c0] sm:$0xff]
    %v699 = vld [vmem:[#allocation13 + $0x4c8] sm:$0xff]
    %v700 = vld [vmem:[#allocation13 + $0x4d0] sm:$0xff]
    %v701 = vld [vmem:[#allocation13 + $0x4d8] sm:$0xff]
    %v702 = vld [vmem:[#allocation13 + $0x4e0] sm:$0xff]
    %v703 = vld [vmem:[#allocation13 + $0x4e8] sm:$0xff]
    %v704 = vld [vmem:[#allocation13 + $0x4f0] sm:$0xff]
    %v705 = vld [vmem:[#allocation13 + $0x4f8] sm:$0xff]
    %v706 = vld [vmem:[#allocation13 + $0x500] sm:$0xff]
    %v707 = vld [vmem:[#allocation13 + $0x508] sm:$0xff]
    %v708 = vld [vmem:[#allocation13 + $0x510] sm:$0xff]
    %v709 = vld [vmem:[#allocation13 + $0x518] sm:$0xff]
    %v710 = vld [vmem:[#allocation13 + $0x520] sm:$0xff]
    %v711 = vld [vmem:[#allocation13 + $0x528] sm:$0xff]
    %v712 = vld [vmem:[#allocation13 + $0x530] sm:$0xff]
    %v713 = vld [vmem:[#allocation13 + $0x538] sm:$0xff]
    %v714 = vld [vmem:[#allocation13 + $0x540] sm:$0xff]
    %v715 = vld [vmem:[#allocation13 + $0x548] sm:$0xff]
    %v716 = vld [vmem:[#allocation13 + $0x550] sm:$0xff]
    %v717 = vld [vmem:[#allocation13 + $0x558] sm:$0xff]
    %v718 = vld [vmem:[#allocation13 + $0x560] sm:$0xff]
    %v719 = vld [vmem:[#allocation13 + $0x568] sm:$0xff]
    %v720 = vld [vmem:[#allocation13 + $0x570] sm:$0xff]
    %v721 = vld [vmem:[#allocation13 + $0x578] sm:$0xff]
    %v722 = vld [vmem:[#allocation13 + $0x580] sm:$0xff]
    %v723 = vld [vmem:[#allocation13 + $0x588] sm:$0xff]
    %v724 = vld [vmem:[#allocation13 + $0x590] sm:$0xff]
    %v725 = vld [vmem:[#allocation13 + $0x598] sm:$0xff]
    %v726 = vld [vmem:[#allocation13 + $0x5a0] sm:$0xff]
    %v727 = vld [vmem:[#allocation13 + $0x5a8] sm:$0xff]
    %v728 = vld [vmem:[#allocation13 + $0x5b0] sm:$0xff]
    %v729 = vld [vmem:[#allocation13 + $0x5b8] sm:$0xff]
    %v730 = vld [vmem:[#allocation13 + $0x5c0] sm:$0xff]
    %v731 = vld [vmem:[#allocation13 + $0x5c8] sm:$0xff]
    %v732 = vld [vmem:[#allocation13 + $0x5d0] sm:$0xff]
    %v733 = vld [vmem:[#allocation13 + $0x5d8] sm:$0xff]
    %v734 = vld [vmem:[#allocation13 + $0x5e0] sm:$0xff]
    %v735 = vld [vmem:[#allocation13 + $0x5e8] sm:$0xff]
    %v736 = vld [vmem:[#allocation13 + $0x5f0] sm:$0xff]
    %v737 = vld [vmem:[#allocation13 + $0x5f8] sm:$0xff]
    %v738 = vld [vmem:[#allocation13 + $0x600] sm:$0xff]
    %v739 = vld [vmem:[#allocation13 + $0x608] sm:$0xff]
    %v740 = vld [vmem:[#allocation13 + $0x610] sm:$0xff]
    %v741 = vld [vmem:[#allocation13 + $0x618] sm:$0xff]
    %v742 = vld [vmem:[#allocation13 + $0x620] sm:$0xff]
    %v743 = vld [vmem:[#allocation13 + $0x628] sm:$0xff]
    %v744 = vld [vmem:[#allocation13 + $0x630] sm:$0xff]
    %v745 = vld [vmem:[#allocation13 + $0x638] sm:$0xff]
    %v746 = vld [vmem:[#allocation13 + $0x640] sm:$0xff]
    %v747 = vld [vmem:[#allocation13 + $0x648] sm:$0xff]
    %v748 = vld [vmem:[#allocation13 + $0x650] sm:$0xff]
    %v749 = vld [vmem:[#allocation13 + $0x658] sm:$0xff]
    %v750 = vld [vmem:[#allocation13 + $0x660] sm:$0xff]
    %v751 = vld [vmem:[#allocation13 + $0x668] sm:$0xff]
    %v752 = vld [vmem:[#allocation13 + $0x670] sm:$0xff]
    %v753 = vld [vmem:[#allocation13 + $0x678] sm:$0xff]
    %v754 = vld [vmem:[#allocation13 + $0x680] sm:$0xff]
    %v755 = vld [vmem:[#allocation13 + $0x688] sm:$0xff]
    %v756 = vld [vmem:[#allocation13 + $0x690] sm:$0xff]
    %v757 = vld [vmem:[#allocation13 + $0x698] sm:$0xff]
    %v758 = vld [vmem:[#allocation13 + $0x6a0] sm:$0xff]
    %v759 = vld [vmem:[#allocation13 + $0x6a8] sm:$0xff]
    %v760 = vld [vmem:[#allocation13 + $0x6b0] sm:$0xff]
    %v761 = vld [vmem:[#allocation13 + $0x6b8] sm:$0xff]
    %v762 = vld [vmem:[#allocation13 + $0x6c0] sm:$0xff]
    %v763 = vld [vmem:[#allocation13 + $0x6c8] sm:$0xff]
    %v764 = vld [vmem:[#allocation13 + $0x6d0] sm:$0xff]
    %v765 = vld [vmem:[#allocation13 + $0x6d8] sm:$0xff]
    %v766 = vld [vmem:[#allocation13 + $0x6e0] sm:$0xff]
    %v767 = vld [vmem:[#allocation13 + $0x6e8] sm:$0xff]
    %v768 = vld [vmem:[#allocation13 + $0x6f0] sm:$0xff]
    %v769 = vld [vmem:[#allocation13 + $0x6f8] sm:$0xff]
    %v770 = vld [vmem:[#allocation13 + $0x700] sm:$0xff]
    %v771 = vld [vmem:[#allocation13 + $0x708] sm:$0xff]
    %v772 = vld [vmem:[#allocation13 + $0x710] sm:$0xff]
    %v773 = vld [vmem:[#allocation13 + $0x718] sm:$0xff]
    %v774 = vld [vmem:[#allocation13 + $0x720] sm:$0xff]
    %v775 = vld [vmem:[#allocation13 + $0x728] sm:$0xff]
    %v776 = vld [vmem:[#allocation13 + $0x730] sm:$0xff]
    %v777 = vld [vmem:[#allocation13 + $0x738] sm:$0xff]
    %v778 = vld [vmem:[#allocation13 + $0x740] sm:$0xff]
    %v779 = vld [vmem:[#allocation13 + $0x748] sm:$0xff]
    %v780 = vld [vmem:[#allocation13 + $0x750] sm:$0xff]
    %v781 = vld [vmem:[#allocation13 + $0x758] sm:$0xff]
    %v782 = vld [vmem:[#allocation13 + $0x760] sm:$0xff]
    %v783 = vld [vmem:[#allocation13 + $0x768] sm:$0xff]
    %v784 = vld [vmem:[#allocation13 + $0x770] sm:$0xff]
    %v785 = vld [vmem:[#allocation13 + $0x778] sm:$0xff]
    %v786 = vld [vmem:[#allocation13 + $0x780] sm:$0xff]
    %v787 = vld [vmem:[#allocation13 + $0x788] sm:$0xff]
    %v788 = vld [vmem:[#allocation13 + $0x790] sm:$0xff]
    %v789 = vld [vmem:[#allocation13 + $0x798] sm:$0xff]
    %v790 = vld [vmem:[#allocation13 + $0x7a0] sm:$0xff]
    %v791 = vld [vmem:[#allocation13 + $0x7a8] sm:$0xff]
    %v792 = vld [vmem:[#allocation13 + $0x7b0] sm:$0xff]
    %v793 = vld [vmem:[#allocation13 + $0x7b8] sm:$0xff]
    %v794 = vld [vmem:[#allocation13 + $0x7c0] sm:$0xff]
    %v795 = vld [vmem:[#allocation13 + $0x7c8] sm:$0xff]
    %v796 = vld [vmem:[#allocation13 + $0x7d0] sm:$0xff]
    %v797 = vld [vmem:[#allocation13 + $0x7d8] sm:$0xff]
    %v798 = vld [vmem:[#allocation13 + $0x7e0] sm:$0xff]
    %v799 = vld [vmem:[#allocation13 + $0x7e8] sm:$0xff]
    %v800 = vld [vmem:[#allocation13 + $0x7f0] sm:$0xff]
    %v801 = vld [vmem:[#allocation13 + $0x7f8] sm:$0xff]
    %v802 = vld [vmem:[#allocation13 + $0x800] sm:$0xff]
    %v803 = vld [vmem:[#allocation13 + $0x808] sm:$0xff]
    %v804 = vld [vmem:[#allocation13 + $0x810] sm:$0xff]
    %v805 = vld [vmem:[#allocation13 + $0x818] sm:$0xff]
    %v806 = vld [vmem:[#allocation13 + $0x820] sm:$0xff]
    %v807 = vld [vmem:[#allocation13 + $0x828] sm:$0xff]
    %v808 = vld [vmem:[#allocation13 + $0x830] sm:$0xff]
    %v809 = vld [vmem:[#allocation13 + $0x838] sm:$0xff]
    %v810 = vld [vmem:[#allocation13 + $0x840] sm:$0xff]
    %v811 = vld [vmem:[#allocation13 + $0x848] sm:$0xff]
    %v812 = vld [vmem:[#allocation13 + $0x850] sm:$0xff]
    %v813 = vld [vmem:[#allocation13 + $0x858] sm:$0xff]
    %v814 = vld [vmem:[#allocation13 + $0x860] sm:$0xff]
    %v815 = vld [vmem:[#allocation13 + $0x868] sm:$0xff]
    %v816 = vld [vmem:[#allocation13 + $0x870] sm:$0xff]
    %v817 = vld [vmem:[#allocation13 + $0x878] sm:$0xff]
    %v818 = vld [vmem:[#allocation13 + $0x880] sm:$0xff]
    %v819 = vld [vmem:[#allocation13 + $0x888] sm:$0xff]
    %v820 = vld [vmem:[#allocation13 + $0x890] sm:$0xff]
    %v821 = vld [vmem:[#allocation13 + $0x898] sm:$0xff]
    %v822 = vld [vmem:[#allocation13 + $0x8a0] sm:$0xff]
    %v823 = vld [vmem:[#allocation13 + $0x8a8] sm:$0xff]
    %v824 = vld [vmem:[#allocation13 + $0x8b0] sm:$0xff]
    %v825 = vld [vmem:[#allocation13 + $0x8b8] sm:$0xff]
    %v826 = vld [vmem:[#allocation13 + $0x8c0] sm:$0xff]
    %v827 = vld [vmem:[#allocation13 + $0x8c8] sm:$0xff]
    %v828 = vld [vmem:[#allocation13 + $0x8d0] sm:$0xff]
    %v829 = vld [vmem:[#allocation13 + $0x8d8] sm:$0xff]
    %v830 = vld [vmem:[#allocation13 + $0x8e0] sm:$0xff]
    %v831 = vld [vmem:[#allocation13 + $0x8e8] sm:$0xff]
    %v832 = vld [vmem:[#allocation13 + $0x8f0] sm:$0xff]
    %v833 = vld [vmem:[#allocation13 + $0x8f8] sm:$0xff]
    %v834 = vld [vmem:[#allocation13 + $0x900] sm:$0xff]
    %v835 = vld [vmem:[#allocation13 + $0x908] sm:$0xff]
    %v836 = vld [vmem:[#allocation13 + $0x910] sm:$0xff]
    %v837 = vld [vmem:[#allocation13 + $0x918] sm:$0xff]
    %v838 = vld [vmem:[#allocation13 + $0x920] sm:$0xff]
    %v839 = vld [vmem:[#allocation13 + $0x928] sm:$0xff]
    %v840 = vld [vmem:[#allocation13 + $0x930] sm:$0xff]
    %v841 = vld [vmem:[#allocation13 + $0x938] sm:$0xff]
    %v842 = vld [vmem:[#allocation13 + $0x940] sm:$0xff]
    %v843 = vld [vmem:[#allocation13 + $0x948] sm:$0xff]
    %v844 = vld [vmem:[#allocation13 + $0x950] sm:$0xff]
    %v845 = vld [vmem:[#allocation13 + $0x958] sm:$0xff]
    %v846 = vld [vmem:[#allocation13 + $0x960] sm:$0xff]
    %v847 = vld [vmem:[#allocation13 + $0x968] sm:$0xff]
    %v848 = vld [vmem:[#allocation13 + $0x970] sm:$0xff]
    %v849 = vld [vmem:[#allocation13 + $0x978] sm:$0xff]
    %v850 = vld [vmem:[#allocation13 + $0x980] sm:$0xff]
    %v851 = vld [vmem:[#allocation13 + $0x988] sm:$0xff]
    %v852 = vld [vmem:[#allocation13 + $0x990] sm:$0xff]
    %v853 = vld [vmem:[#allocation13 + $0x998] sm:$0xff]
    %v854 = vld [vmem:[#allocation13 + $0x9a0] sm:$0xff]
    %v855 = vld [vmem:[#allocation13 + $0x9a8] sm:$0xff]
    %v856 = vld [vmem:[#allocation13 + $0x9b0] sm:$0xff]
    %v857 = vld [vmem:[#allocation13 + $0x9b8] sm:$0xff]
    %v858 = vld [vmem:[#allocation13 + $0x9c0] sm:$0xff]
    %v859 = vld [vmem:[#allocation13 + $0x9c8] sm:$0xff]
    %v860 = vld [vmem:[#allocation13 + $0x9d0] sm:$0xff]
    %v861 = vld [vmem:[#allocation13 + $0x9d8] sm:$0xff]
    %v862 = vld [vmem:[#allocation13 + $0x9e0] sm:$0xff]
    %v863 = vld [vmem:[#allocation13 + $0x9e8] sm:$0xff]
    %v864 = vld [vmem:[#allocation13 + $0x9f0] sm:$0xff]
    %v865 = vld [vmem:[#allocation13 + $0x9f8] sm:$0xff]
    %v866 = vld [vmem:[#allocation13 + $0xa00] sm:$0xff]
    %v867 = vld [vmem:[#allocation13 + $0xa08] sm:$0xff]
    %v868 = vld [vmem:[#allocation13 + $0xa10] sm:$0xff]
    %v869 = vld [vmem:[#allocation13 + $0xa18] sm:$0xff]
    %v870 = vld [vmem:[#allocation13 + $0xa20] sm:$0xff]
    %v871 = vld [vmem:[#allocation13 + $0xa28] sm:$0xff]
    %v872 = vld [vmem:[#allocation13 + $0xa30] sm:$0xff]
    %v873 = vld [vmem:[#allocation13 + $0xa38] sm:$0xff]
    %v874 = vld [vmem:[#allocation13 + $0xa40] sm:$0xff]
    %v875 = vld [vmem:[#allocation13 + $0xa48] sm:$0xff]
    %v876 = vld [vmem:[#allocation13 + $0xa50] sm:$0xff]
    %v877 = vld [vmem:[#allocation13 + $0xa58] sm:$0xff]
    %v878 = vld [vmem:[#allocation13 + $0xa60] sm:$0xff]
    %v879 = vld [vmem:[#allocation13 + $0xa68] sm:$0xff]
    %v880 = vld [vmem:[#allocation13 + $0xa70] sm:$0xff]
    %v881 = vld [vmem:[#allocation13 + $0xa78] sm:$0xff]
    %v882 = vld [vmem:[#allocation13 + $0xa80] sm:$0xff]
    %v883 = vld [vmem:[#allocation13 + $0xa88] sm:$0xff]
    %v884 = vld [vmem:[#allocation13 + $0xa90] sm:$0xff]
    %v885 = vld [vmem:[#allocation13 + $0xa98] sm:$0xff]
    %v886 = vld [vmem:[#allocation13 + $0xaa0] sm:$0xff]
    %v887 = vld [vmem:[#allocation13 + $0xaa8] sm:$0xff]
    %v888 = vld [vmem:[#allocation13 + $0xab0] sm:$0xff]
    %v889 = vld [vmem:[#allocation13 + $0xab8] sm:$0xff]
    %v890 = vld [vmem:[#allocation13 + $0xac0] sm:$0xff]
    %v891 = vld [vmem:[#allocation13 + $0xac8] sm:$0xff]
    %v892 = vld [vmem:[#allocation13 + $0xad0] sm:$0xff]
    %v893 = vld [vmem:[#allocation13 + $0xad8] sm:$0xff]
    %v894 = vld [vmem:[#allocation13 + $0xae0] sm:$0xff]
    %v895 = vld [vmem:[#allocation13 + $0xae8] sm:$0xff]
    %v896 = vld [vmem:[#allocation13 + $0xaf0] sm:$0xff]
    %v897 = vld [vmem:[#allocation13 + $0xaf8] sm:$0xff]
    %v898 = vld [vmem:[#allocation13 + $0xb00] sm:$0xff]
    %v899 = vld [vmem:[#allocation13 + $0xb08] sm:$0xff]
    %v900 = vld [vmem:[#allocation13 + $0xb10] sm:$0xff]
    %v901 = vld [vmem:[#allocation13 + $0xb18] sm:$0xff]
    %v902 = vld [vmem:[#allocation13 + $0xb20] sm:$0xff]
    %v903 = vld [vmem:[#allocation13 + $0xb28] sm:$0xff]
    %v904 = vld [vmem:[#allocation13 + $0xb30] sm:$0xff]
    %v905 = vld [vmem:[#allocation13 + $0xb38] sm:$0xff]
    %v906 = vld [vmem:[#allocation13 + $0xb40] sm:$0xff]
    %v907 = vld [vmem:[#allocation13 + $0xb48] sm:$0xff]
    %v908 = vld [vmem:[#allocation13 + $0xb50] sm:$0xff]
    %v909 = vld [vmem:[#allocation13 + $0xb58] sm:$0xff]
    %v910 = vld [vmem:[#allocation13 + $0xb60] sm:$0xff]
    %v911 = vld [vmem:[#allocation13 + $0xb68] sm:$0xff]
    %v912 = vld [vmem:[#allocation13 + $0xb70] sm:$0xff]
    %v913 = vld [vmem:[#allocation13 + $0xb78] sm:$0xff]
    %v914 = vld [vmem:[#allocation13 + $0xb80] sm:$0xff]
    %v915 = vld [vmem:[#allocation13 + $0xb88] sm:$0xff]
    %v916 = vld [vmem:[#allocation13 + $0xb90] sm:$0xff]
    %v917 = vld [vmem:[#allocation13 + $0xb98] sm:$0xff]
    %v918 = vld [vmem:[#allocation13 + $0xba0] sm:$0xff]
    %v919 = vld [vmem:[#allocation13 + $0xba8] sm:$0xff]
    %v920 = vld [vmem:[#allocation13 + $0xbb0] sm:$0xff]
    %v921 = vld [vmem:[#allocation13 + $0xbb8] sm:$0xff]
    %v922 = vld [vmem:[#allocation13 + $0xbc0] sm:$0xff]
    %v923 = vld [vmem:[#allocation13 + $0xbc8] sm:$0xff]
    %v924 = vld [vmem:[#allocation13 + $0xbd0] sm:$0xff]
    %v925 = vld [vmem:[#allocation13 + $0xbd8] sm:$0xff]
    %v926 = vld [vmem:[#allocation13 + $0xbe0] sm:$0xff]
    %v927 = vld [vmem:[#allocation13 + $0xbe8] sm:$0xff]
    %v928 = vld [vmem:[#allocation13 + $0xbf0] sm:$0xff]
    %v929 = vld [vmem:[#allocation13 + $0xbf8] sm:$0xff]
    %v930 = vld [vmem:[#allocation13 + $0xc00] sm:$0xff]
    %v931 = vld [vmem:[#allocation13 + $0xc08] sm:$0xff]
    %v932 = vld [vmem:[#allocation13 + $0xc10] sm:$0xff]
    %v933 = vld [vmem:[#allocation13 + $0xc18] sm:$0xff]
    %v934 = vld [vmem:[#allocation13 + $0xc20] sm:$0xff]
    %v935 = vld [vmem:[#allocation13 + $0xc28] sm:$0xff]
    %v936 = vld [vmem:[#allocation13 + $0xc30] sm:$0xff]
    %v937 = vld [vmem:[#allocation13 + $0xc38] sm:$0xff]
    %v938 = vld [vmem:[#allocation13 + $0xc40] sm:$0xff]
    %v939 = vld [vmem:[#allocation13 + $0xc48] sm:$0xff]
    %v940 = vld [vmem:[#allocation13 + $0xc50] sm:$0xff]
    %v941 = vld [vmem:[#allocation13 + $0xc58] sm:$0xff]
    %v942 = vld [vmem:[#allocation13 + $0xc60] sm:$0xff]
    %v943 = vld [vmem:[#allocation13 + $0xc68] sm:$0xff]
    %v944 = vld [vmem:[#allocation13 + $0xc70] sm:$0xff]
    %v945 = vld [vmem:[#allocation13 + $0xc78] sm:$0xff]
    %v946 = vld [vmem:[#allocation13 + $0xc80] sm:$0xff]
    %v947 = vld [vmem:[#allocation13 + $0xc88] sm:$0xff]
    %v948 = vld [vmem:[#allocation13 + $0xc90] sm:$0xff]
    %v949 = vld [vmem:[#allocation13 + $0xc98] sm:$0xff]
    %v950 = vld [vmem:[#allocation13 + $0xca0] sm:$0xff]
    %v951 = vld [vmem:[#allocation13 + $0xca8] sm:$0xff]
    %v952 = vld [vmem:[#allocation13 + $0xcb0] sm:$0xff]
    %v953 = vld [vmem:[#allocation13 + $0xcb8] sm:$0xff]
    %v954 = vld [vmem:[#allocation13 + $0xcc0] sm:$0xff]
    %v955 = vld [vmem:[#allocation13 + $0xcc8] sm:$0xff]
    %v956 = vld [vmem:[#allocation13 + $0xcd0] sm:$0xff]
    %v957 = vld [vmem:[#allocation13 + $0xcd8] sm:$0xff]
    %v958 = vld [vmem:[#allocation13 + $0xce0] sm:$0xff]
    %v959 = vld [vmem:[#allocation13 + $0xce8] sm:$0xff]
    %v960 = vld [vmem:[#allocation13 + $0xcf0] sm:$0xff]
    %v961 = vld [vmem:[#allocation13 + $0xcf8] sm:$0xff]
    %v962 = vld [vmem:[#allocation13 + $0xd00] sm:$0xff]
    %v963 = vld [vmem:[#allocation13 + $0xd08] sm:$0xff]
    %v964 = vld [vmem:[#allocation13 + $0xd10] sm:$0xff]
    %v965 = vld [vmem:[#allocation13 + $0xd18] sm:$0xff]
    %v966 = vld [vmem:[#allocation13 + $0xd20] sm:$0xff]
    %v967 = vld [vmem:[#allocation13 + $0xd28] sm:$0xff]
    %v968 = vld [vmem:[#allocation13 + $0xd30] sm:$0xff]
    %v969 = vld [vmem:[#allocation13 + $0xd38] sm:$0xff]
    %v970 = vld [vmem:[#allocation13 + $0xd40] sm:$0xff]
    %v971 = vld [vmem:[#allocation13 + $0xd48] sm:$0xff]
    %v972 = vld [vmem:[#allocation13 + $0xd50] sm:$0xff]
    %v973 = vld [vmem:[#allocation13 + $0xd58] sm:$0xff]
    %v974 = vld [vmem:[#allocation13 + $0xd60] sm:$0xff]
    %v975 = vld [vmem:[#allocation13 + $0xd68] sm:$0xff]
    %v976 = vld [vmem:[#allocation13 + $0xd70] sm:$0xff]
    %v977 = vld [vmem:[#allocation13 + $0xd78] sm:$0xff]
    %v978 = vld [vmem:[#allocation13 + $0xd80] sm:$0xff]
    %v979 = vld [vmem:[#allocation13 + $0xd88] sm:$0xff]
    %v980 = vld [vmem:[#allocation13 + $0xd90] sm:$0xff]
    %v981 = vld [vmem:[#allocation13 + $0xd98] sm:$0xff]
    %v982 = vld [vmem:[#allocation13 + $0xda0] sm:$0xff]
    %v983 = vld [vmem:[#allocation13 + $0xda8] sm:$0xff]
    %v984 = vld [vmem:[#allocation13 + $0xdb0] sm:$0xff]
    %v985 = vld [vmem:[#allocation13 + $0xdb8] sm:$0xff]
    %v986 = vld [vmem:[#allocation13 + $0xdc0] sm:$0xff]
    %v987 = vld [vmem:[#allocation13 + $0xdc8] sm:$0xff]
    %v988 = vld [vmem:[#allocation13 + $0xdd0] sm:$0xff]
    %v989 = vld [vmem:[#allocation13 + $0xdd8] sm:$0xff]
    %v990 = vld [vmem:[#allocation13 + $0xde0] sm:$0xff]
    %v991 = vld [vmem:[#allocation13 + $0xde8] sm:$0xff]
    %v992 = vld [vmem:[#allocation13 + $0xdf0] sm:$0xff]
    %v993 = vld [vmem:[#allocation13 + $0xdf8] sm:$0xff]
    %v994 = vld [vmem:[#allocation13 + $0xe00] sm:$0xff]
    %v995 = vld [vmem:[#allocation13 + $0xe08] sm:$0xff]
    %v996 = vld [vmem:[#allocation13 + $0xe10] sm:$0xff]
    %v997 = vld [vmem:[#allocation13 + $0xe18] sm:$0xff]
    %v998 = vld [vmem:[#allocation13 + $0xe20] sm:$0xff]
    %v999 = vld [vmem:[#allocation13 + $0xe28] sm:$0xff]
    %v1000 = vld [vmem:[#allocation13 + $0xe30] sm:$0xff]
    %v1001 = vld [vmem:[#allocation13 + $0xe38] sm:$0xff]
    %v1002 = vld [vmem:[#allocation13 + $0xe40] sm:$0xff]
    %v1003 = vld [vmem:[#allocation13 + $0xe48] sm:$0xff]
    %v1004 = vld [vmem:[#allocation13 + $0xe50] sm:$0xff]
    %v1005 = vld [vmem:[#allocation13 + $0xe58] sm:$0xff]
    %v1006 = vld [vmem:[#allocation13 + $0xe60] sm:$0xff]
    %v1007 = vld [vmem:[#allocation13 + $0xe68] sm:$0xff]
    %v1008 = vld [vmem:[#allocation13 + $0xe70] sm:$0xff]
    %v1009 = vld [vmem:[#allocation13 + $0xe78] sm:$0xff]
    %v1010 = vld [vmem:[#allocation13 + $0xe80] sm:$0xff]
    %v1011 = vld [vmem:[#allocation13 + $0xe88] sm:$0xff]
    %v1012 = vld [vmem:[#allocation13 + $0xe90] sm:$0xff]
    %v1013 = vld [vmem:[#allocation13 + $0xe98] sm:$0xff]
    %v1014 = vld [vmem:[#allocation13 + $0xea0] sm:$0xff]
    %v1015 = vld [vmem:[#allocation13 + $0xea8] sm:$0xff]
    %v1016 = vld [vmem:[#allocation13 + $0xeb0] sm:$0xff]
    %v1017 = vld [vmem:[#allocation13 + $0xeb8] sm:$0xff]
    %v1018 = vld [vmem:[#allocation13 + $0xec0] sm:$0xff]
    %v1019 = vld [vmem:[#allocation13 + $0xec8] sm:$0xff]
    %v1020 = vld [vmem:[#allocation13 + $0xed0] sm:$0xff]
    %v1021 = vld [vmem:[#allocation13 + $0xed8] sm:$0xff]
    %v1022 = vld [vmem:[#allocation13 + $0xee0] sm:$0xff]
    %v1023 = vld [vmem:[#allocation13 + $0xee8] sm:$0xff]
    %v1024 = vld [vmem:[#allocation13 + $0xef0] sm:$0xff]
    %v1025 = vld [vmem:[#allocation13 + $0xef8] sm:$0xff]
    %v1026 = vld [vmem:[#allocation13 + $0xf00] sm:$0xff]
    %v1027 = vld [vmem:[#allocation13 + $0xf08] sm:$0xff]
    %v1028 = vld [vmem:[#allocation13 + $0xf10] sm:$0xff]
    %v1029 = vld [vmem:[#allocation13 + $0xf18] sm:$0xff]
    %v1030 = vld [vmem:[#allocation13 + $0xf20] sm:$0xff]
    %v1031 = vld [vmem:[#allocation13 + $0xf28] sm:$0xff]
    %v1032 = vld [vmem:[#allocation13 + $0xf30] sm:$0xff]
    %v1033 = vld [vmem:[#allocation13 + $0xf38] sm:$0xff]
    %v1034 = vld [vmem:[#allocation13 + $0xf40] sm:$0xff]
    %v1035 = vld [vmem:[#allocation13 + $0xf48] sm:$0xff]
    %v1036 = vld [vmem:[#allocation13 + $0xf50] sm:$0xff]
    %v1037 = vld [vmem:[#allocation13 + $0xf58] sm:$0xff]
    %v1038 = vld [vmem:[#allocation13 + $0xf60] sm:$0xff]
    %v1039 = vld [vmem:[#allocation13 + $0xf68] sm:$0xff]
    %v1040 = vld [vmem:[#allocation13 + $0xf70] sm:$0xff]
    %v1041 = vld [vmem:[#allocation13 + $0xf78] sm:$0xff]
    %v1042 = vld [vmem:[#allocation13 + $0xf80] sm:$0xff]
    %v1043 = vld [vmem:[#allocation13 + $0xf88] sm:$0xff]
    %v1044 = vld [vmem:[#allocation13 + $0xf90] sm:$0xff]
    %v1045 = vld [vmem:[#allocation13 + $0xf98] sm:$0xff]
    %v1046 = vld [vmem:[#allocation13 + $0xfa0] sm:$0xff]
    %v1047 = vld [vmem:[#allocation13 + $0xfa8] sm:$0xff]
    %v1048 = vld [vmem:[#allocation13 + $0xfb0] sm:$0xff]
    %v1049 = vld [vmem:[#allocation13 + $0xfb8] sm:$0xff]
    %v1050 = vld [vmem:[#allocation13 + $0xfc0] sm:$0xff]
    %v1051 = vld [vmem:[#allocation13 + $0xfc8] sm:$0xff]
    %v1052 = vld [vmem:[#allocation13 + $0xfd0] sm:$0xff]
    %v1053 = vld [vmem:[#allocation13 + $0xfd8] sm:$0xff]
    %v1054 = vld [vmem:[#allocation13 + $0xfe0] sm:$0xff]
    %v1055 = vld [vmem:[#allocation13 + $0xfe8] sm:$0xff]
    %v1056 = vld [vmem:[#allocation13 + $0xff0] sm:$0xff]
    %v1057 = vld [vmem:[#allocation13 + $0xff8] sm:$0xff]
    %v1442 = vunpack.c.l.b16 %v674
    %v1443 = vunpack.c.h.b16 %v674
    %v1444 = vunpack.c.l.b16 %v675
    %v1445 = vunpack.c.h.b16 %v675
    %v1446 = vunpack.c.l.b16 %v676
    %v1447 = vunpack.c.h.b16 %v676
    %v1448 = vunpack.c.l.b16 %v677
    %v1449 = vunpack.c.h.b16 %v677
    %v1450 = vunpack.c.l.b16 %v678
    %v1451 = vunpack.c.h.b16 %v678
    %v1452 = vunpack.c.l.b16 %v679
    %v1453 = vunpack.c.h.b16 %v679
    %v1454 = vunpack.c.l.b16 %v680
    %v1455 = vunpack.c.h.b16 %v680
    %v1456 = vunpack.c.l.b16 %v681
    %v1457 = vunpack.c.h.b16 %v681
    %v1458 = vunpack.c.l.b16 %v682
    %v1459 = vunpack.c.h.b16 %v682
    %v1460 = vunpack.c.l.b16 %v683
    %v1461 = vunpack.c.h.b16 %v683
    %v1462 = vunpack.c.l.b16 %v684
    %v1463 = vunpack.c.h.b16 %v684
    %v1464 = vunpack.c.l.b16 %v685
    %v1465 = vunpack.c.h.b16 %v685
    %v1466 = vunpack.c.l.b16 %v686
    %v1467 = vunpack.c.h.b16 %v686
    %v1468 = vunpack.c.l.b16 %v687
    %v1469 = vunpack.c.h.b16 %v687
    %v1470 = vunpack.c.l.b16 %v688
    %v1471 = vunpack.c.h.b16 %v688
    %v1472 = vunpack.c.l.b16 %v689
    %v1473 = vunpack.c.h.b16 %v689
    %v1474 = vunpack.c.l.b16 %v690
    %v1475 = vunpack.c.h.b16 %v690
    %v1476 = vunpack.c.l.b16 %v691
    %v1477 = vunpack.c.h.b16 %v691
    %v1478 = vunpack.c.l.b16 %v692
    %v1479 = vunpack.c.h.b16 %v692
    %v1480 = vunpack.c.l.b16 %v693
    %v1481 = vunpack.c.h.b16 %v693
    %v1482 = vunpack.c.l.b16 %v694
    %v1483 = vunpack.c.h.b16 %v694
    %v1484 = vunpack.c.l.b16 %v695
    %v1485 = vunpack.c.h.b16 %v695
    %v1486 = vunpack.c.l.b16 %v696
    %v1487 = vunpack.c.h.b16 %v696
    %v1488 = vunpack.c.l.b16 %v697
    %v1489 = vunpack.c.h.b16 %v697
    %v1490 = vunpack.c.l.b16 %v698
    %v1491 = vunpack.c.h.b16 %v698
    %v1492 = vunpack.c.l.b16 %v699
    %v1493 = vunpack.c.h.b16 %v699
    %v1494 = vunpack.c.l.b16 %v700
    %v1495 = vunpack.c.h.b16 %v700
    %v1496 = vunpack.c.l.b16 %v701
    %v1497 = vunpack.c.h.b16 %v701
    %v1498 = vunpack.c.l.b16 %v702
    %v1499 = vunpack.c.h.b16 %v702
    %v1500 = vunpack.c.l.b16 %v703
    %v1501 = vunpack.c.h.b16 %v703
    %v1502 = vunpack.c.l.b16 %v704
    %v1503 = vunpack.c.h.b16 %v704
    %v1504 = vunpack.c.l.b16 %v705
    %v1505 = vunpack.c.h.b16 %v705
    %v1506 = vunpack.c.l.b16 %v706
    %v1507 = vunpack.c.h.b16 %v706
    %v1508 = vunpack.c.l.b16 %v707
    %v1509 = vunpack.c.h.b16 %v707
    %v1510 = vunpack.c.l.b16 %v708
    %v1511 = vunpack.c.h.b16 %v708
    %v1512 = vunpack.c.l.b16 %v709
    %v1513 = vunpack.c.h.b16 %v709
    %v1514 = vunpack.c.l.b16 %v710
    %v1515 = vunpack.c.h.b16 %v710
    %v1516 = vunpack.c.l.b16 %v711
    %v1517 = vunpack.c.h.b16 %v711
    %v1518 = vunpack.c.l.b16 %v712
    %v1519 = vunpack.c.h.b16 %v712
    %v1520 = vunpack.c.l.b16 %v713
    %v1521 = vunpack.c.h.b16 %v713
    %v1522 = vunpack.c.l.b16 %v714
    %v1523 = vunpack.c.h.b16 %v714
    %v1524 = vunpack.c.l.b16 %v715
    %v1525 = vunpack.c.h.b16 %v715
    %v1526 = vunpack.c.l.b16 %v716
    %v1527 = vunpack.c.h.b16 %v716
    %v1528 = vunpack.c.l.b16 %v717
    %v1529 = vunpack.c.h.b16 %v717
    %v1530 = vunpack.c.l.b16 %v718
    %v1531 = vunpack.c.h.b16 %v718
    %v1532 = vunpack.c.l.b16 %v719
    %v1533 = vunpack.c.h.b16 %v719
    %v1534 = vunpack.c.l.b16 %v720
    %v1535 = vunpack.c.h.b16 %v720
    %v1536 = vunpack.c.l.b16 %v721
    %v1537 = vunpack.c.h.b16 %v721
    %v1538 = vunpack.c.l.b16 %v722
    %v1539 = vunpack.c.h.b16 %v722
    %v1540 = vunpack.c.l.b16 %v723
    %v1541 = vunpack.c.h.b16 %v723
    %v1542 = vunpack.c.l.b16 %v724
    %v1543 = vunpack.c.h.b16 %v724
    %v1544 = vunpack.c.l.b16 %v725
    %v1545 = vunpack.c.h.b16 %v725
    %v1546 = vunpack.c.l.b16 %v726
    %v1547 = vunpack.c.h.b16 %v726
    %v1548 = vunpack.c.l.b16 %v727
    %v1549 = vunpack.c.h.b16 %v727
    %v1550 = vunpack.c.l.b16 %v728
    %v1551 = vunpack.c.h.b16 %v728
    %v1552 = vunpack.c.l.b16 %v729
    %v1553 = vunpack.c.h.b16 %v729
    %v1554 = vunpack.c.l.b16 %v730
    %v1555 = vunpack.c.h.b16 %v730
    %v1556 = vunpack.c.l.b16 %v731
    %v1557 = vunpack.c.h.b16 %v731
    %v1558 = vunpack.c.l.b16 %v732
    %v1559 = vunpack.c.h.b16 %v732
    %v1560 = vunpack.c.l.b16 %v733
    %v1561 = vunpack.c.h.b16 %v733
    %v1562 = vunpack.c.l.b16 %v734
    %v1563 = vunpack.c.h.b16 %v734
    %v1564 = vunpack.c.l.b16 %v735
    %v1565 = vunpack.c.h.b16 %v735
    %v1566 = vunpack.c.l.b16 %v736
    %v1567 = vunpack.c.h.b16 %v736
    %v1568 = vunpack.c.l.b16 %v737
    %v1569 = vunpack.c.h.b16 %v737
    %v1570 = vunpack.c.l.b16 %v738
    %v1571 = vunpack.c.h.b16 %v738
    %v1572 = vunpack.c.l.b16 %v739
    %v1573 = vunpack.c.h.b16 %v739
    %v1574 = vunpack.c.l.b16 %v740
    %v1575 = vunpack.c.h.b16 %v740
    %v1576 = vunpack.c.l.b16 %v741
    %v1577 = vunpack.c.h.b16 %v741
    %v1578 = vunpack.c.l.b16 %v742
    %v1579 = vunpack.c.h.b16 %v742
    %v1580 = vunpack.c.l.b16 %v743
    %v1581 = vunpack.c.h.b16 %v743
    %v1582 = vunpack.c.l.b16 %v744
    %v1583 = vunpack.c.h.b16 %v744
    %v1584 = vunpack.c.l.b16 %v745
    %v1585 = vunpack.c.h.b16 %v745
    %v1586 = vunpack.c.l.b16 %v746
    %v1587 = vunpack.c.h.b16 %v746
    %v1588 = vunpack.c.l.b16 %v747
    %v1589 = vunpack.c.h.b16 %v747
    %v1590 = vunpack.c.l.b16 %v748
    %v1591 = vunpack.c.h.b16 %v748
    %v1592 = vunpack.c.l.b16 %v749
    %v1593 = vunpack.c.h.b16 %v749
    %v1594 = vunpack.c.l.b16 %v750
    %v1595 = vunpack.c.h.b16 %v750
    %v1596 = vunpack.c.l.b16 %v751
    %v1597 = vunpack.c.h.b16 %v751
    %v1598 = vunpack.c.l.b16 %v752
    %v1599 = vunpack.c.h.b16 %v752
    %v1600 = vunpack.c.l.b16 %v753
    %v1601 = vunpack.c.h.b16 %v753
    %v1602 = vunpack.c.l.b16 %v754
    %v1603 = vunpack.c.h.b16 %v754
    %v1604 = vunpack.c.l.b16 %v755
    %v1605 = vunpack.c.h.b16 %v755
    %v1606 = vunpack.c.l.b16 %v756
    %v1607 = vunpack.c.h.b16 %v756
    %v1608 = vunpack.c.l.b16 %v757
    %v1609 = vunpack.c.h.b16 %v757
    %v1610 = vunpack.c.l.b16 %v758
    %v1611 = vunpack.c.h.b16 %v758
    %v1612 = vunpack.c.l.b16 %v759
    %v1613 = vunpack.c.h.b16 %v759
    %v1614 = vunpack.c.l.b16 %v760
    %v1615 = vunpack.c.h.b16 %v760
    %v1616 = vunpack.c.l.b16 %v761
    %v1617 = vunpack.c.h.b16 %v761
    %v1618 = vunpack.c.l.b16 %v762
    %v1619 = vunpack.c.h.b16 %v762
    %v1620 = vunpack.c.l.b16 %v763
    %v1621 = vunpack.c.h.b16 %v763
    %v1622 = vunpack.c.l.b16 %v764
    %v1623 = vunpack.c.h.b16 %v764
    %v1624 = vunpack.c.l.b16 %v765
    %v1625 = vunpack.c.h.b16 %v765
    %v1626 = vunpack.c.l.b16 %v766
    %v1627 = vunpack.c.h.b16 %v766
    %v1628 = vunpack.c.l.b16 %v767
    %v1629 = vunpack.c.h.b16 %v767
    %v1630 = vunpack.c.l.b16 %v768
    %v1631 = vunpack.c.h.b16 %v768
    %v1632 = vunpack.c.l.b16 %v769
    %v1633 = vunpack.c.h.b16 %v769
    %v1634 = vunpack.c.l.b16 %v770
    %v1635 = vunpack.c.h.b16 %v770
    %v1636 = vunpack.c.l.b16 %v771
    %v1637 = vunpack.c.h.b16 %v771
    %v1638 = vunpack.c.l.b16 %v772
    %v1639 = vunpack.c.h.b16 %v772
    %v1640 = vunpack.c.l.b16 %v773
    %v1641 = vunpack.c.h.b16 %v773
    %v1642 = vunpack.c.l.b16 %v774
    %v1643 = vunpack.c.h.b16 %v774
    %v1644 = vunpack.c.l.b16 %v775
    %v1645 = vunpack.c.h.b16 %v775
    %v1646 = vunpack.c.l.b16 %v776
    %v1647 = vunpack.c.h.b16 %v776
    %v1648 = vunpack.c.l.b16 %v777
    %v1649 = vunpack.c.h.b16 %v777
    %v1650 = vunpack.c.l.b16 %v778
    %v1651 = vunpack.c.h.b16 %v778
    %v1652 = vunpack.c.l.b16 %v779
    %v1653 = vunpack.c.h.b16 %v779
    %v1654 = vunpack.c.l.b16 %v780
    %v1655 = vunpack.c.h.b16 %v780
    %v1656 = vunpack.c.l.b16 %v781
    %v1657 = vunpack.c.h.b16 %v781
    %v1658 = vunpack.c.l.b16 %v782
    %v1659 = vunpack.c.h.b16 %v782
    %v1660 = vunpack.c.l.b16 %v783
    %v1661 = vunpack.c.h.b16 %v783
    %v1662 = vunpack.c.l.b16 %v784
    %v1663 = vunpack.c.h.b16 %v784
    %v1664 = vunpack.c.l.b16 %v785
    %v1665 = vunpack.c.h.b16 %v785
    %v1666 = vunpack.c.l.b16 %v786
    %v1667 = vunpack.c.h.b16 %v786
    %v1668 = vunpack.c.l.b16 %v787
    %v1669 = vunpack.c.h.b16 %v787
    %v1670 = vunpack.c.l.b16 %v788
    %v1671 = vunpack.c.h.b16 %v788
    %v1672 = vunpack.c.l.b16 %v789
    %v1673 = vunpack.c.h.b16 %v789
    %v1674 = vunpack.c.l.b16 %v790
    %v1675 = vunpack.c.h.b16 %v790
    %v1676 = vunpack.c.l.b16 %v791
    %v1677 = vunpack.c.h.b16 %v791
    %v1678 = vunpack.c.l.b16 %v792
    %v1679 = vunpack.c.h.b16 %v792
    %v1680 = vunpack.c.l.b16 %v793
    %v1681 = vunpack.c.h.b16 %v793
    %v1682 = vunpack.c.l.b16 %v794
    %v1683 = vunpack.c.h.b16 %v794
    %v1684 = vunpack.c.l.b16 %v795
    %v1685 = vunpack.c.h.b16 %v795
    %v1686 = vunpack.c.l.b16 %v796
    %v1687 = vunpack.c.h.b16 %v796
    %v1688 = vunpack.c.l.b16 %v797
    %v1689 = vunpack.c.h.b16 %v797
    %v1690 = vunpack.c.l.b16 %v798
    %v1691 = vunpack.c.h.b16 %v798
    %v1692 = vunpack.c.l.b16 %v799
    %v1693 = vunpack.c.h.b16 %v799
    %v1694 = vunpack.c.l.b16 %v800
    %v1695 = vunpack.c.h.b16 %v800
    %v1696 = vunpack.c.l.b16 %v801
    %v1697 = vunpack.c.h.b16 %v801
    %v1698 = vunpack.c.l.b16 %v802
    %v1699 = vunpack.c.h.b16 %v802
    %v1700 = vunpack.c.l.b16 %v803
    %v1701 = vunpack.c.h.b16 %v803
    %v1702 = vunpack.c.l.b16 %v804
    %v1703 = vunpack.c.h.b16 %v804
    %v1704 = vunpack.c.l.b16 %v805
    %v1705 = vunpack.c.h.b16 %v805
    %v1706 = vunpack.c.l.b16 %v806
    %v1707 = vunpack.c.h.b16 %v806
    %v1708 = vunpack.c.l.b16 %v807
    %v1709 = vunpack.c.h.b16 %v807
    %v1710 = vunpack.c.l.b16 %v808
    %v1711 = vunpack.c.h.b16 %v808
    %v1712 = vunpack.c.l.b16 %v809
    %v1713 = vunpack.c.h.b16 %v809
    %v1714 = vunpack.c.l.b16 %v810
    %v1715 = vunpack.c.h.b16 %v810
    %v1716 = vunpack.c.l.b16 %v811
    %v1717 = vunpack.c.h.b16 %v811
    %v1718 = vunpack.c.l.b16 %v812
    %v1719 = vunpack.c.h.b16 %v812
    %v1720 = vunpack.c.l.b16 %v813
    %v1721 = vunpack.c.h.b16 %v813
    %v1722 = vunpack.c.l.b16 %v814
    %v1723 = vunpack.c.h.b16 %v814
    %v1724 = vunpack.c.l.b16 %v815
    %v1725 = vunpack.c.h.b16 %v815
    %v1726 = vunpack.c.l.b16 %v816
    %v1727 = vunpack.c.h.b16 %v816
    %v1728 = vunpack.c.l.b16 %v817
    %v1729 = vunpack.c.h.b16 %v817
    %v1730 = vunpack.c.l.b16 %v818
    %v1731 = vunpack.c.h.b16 %v818
    %v1732 = vunpack.c.l.b16 %v819
    %v1733 = vunpack.c.h.b16 %v819
    %v1734 = vunpack.c.l.b16 %v820
    %v1735 = vunpack.c.h.b16 %v820
    %v1736 = vunpack.c.l.b16 %v821
    %v1737 = vunpack.c.h.b16 %v821
    %v1738 = vunpack.c.l.b16 %v822
    %v1739 = vunpack.c.h.b16 %v822
    %v1740 = vunpack.c.l.b16 %v823
    %v1741 = vunpack.c.h.b16 %v823
    %v1742 = vunpack.c.l.b16 %v824
    %v1743 = vunpack.c.h.b16 %v824
    %v1744 = vunpack.c.l.b16 %v825
    %v1745 = vunpack.c.h.b16 %v825
    %v1746 = vunpack.c.l.b16 %v826
    %v1747 = vunpack.c.h.b16 %v826
    %v1748 = vunpack.c.l.b16 %v827
    %v1749 = vunpack.c.h.b16 %v827
    %v1750 = vunpack.c.l.b16 %v828
    %v1751 = vunpack.c.h.b16 %v828
    %v1752 = vunpack.c.l.b16 %v829
    %v1753 = vunpack.c.h.b16 %v829
    %v1754 = vunpack.c.l.b16 %v830
    %v1755 = vunpack.c.h.b16 %v830
    %v1756 = vunpack.c.l.b16 %v831
    %v1757 = vunpack.c.h.b16 %v831
    %v1758 = vunpack.c.l.b16 %v832
    %v1759 = vunpack.c.h.b16 %v832
    %v1760 = vunpack.c.l.b16 %v833
    %v1761 = vunpack.c.h.b16 %v833
    %v1762 = vunpack.c.l.b16 %v834
    %v1763 = vunpack.c.h.b16 %v834
    %v1764 = vunpack.c.l.b16 %v835
    %v1765 = vunpack.c.h.b16 %v835
    %v1766 = vunpack.c.l.b16 %v836
    %v1767 = vunpack.c.h.b16 %v836
    %v1768 = vunpack.c.l.b16 %v837
    %v1769 = vunpack.c.h.b16 %v837
    %v1770 = vunpack.c.l.b16 %v838
    %v1771 = vunpack.c.h.b16 %v838
    %v1772 = vunpack.c.l.b16 %v839
    %v1773 = vunpack.c.h.b16 %v839
    %v1774 = vunpack.c.l.b16 %v840
    %v1775 = vunpack.c.h.b16 %v840
    %v1776 = vunpack.c.l.b16 %v841
    %v1777 = vunpack.c.h.b16 %v841
    %v1778 = vunpack.c.l.b16 %v842
    %v1779 = vunpack.c.h.b16 %v842
    %v1780 = vunpack.c.l.b16 %v843
    %v1781 = vunpack.c.h.b16 %v843
    %v1782 = vunpack.c.l.b16 %v844
    %v1783 = vunpack.c.h.b16 %v844
    %v1784 = vunpack.c.l.b16 %v845
    %v1785 = vunpack.c.h.b16 %v845
    %v1786 = vunpack.c.l.b16 %v846
    %v1787 = vunpack.c.h.b16 %v846
    %v1788 = vunpack.c.l.b16 %v847
    %v1789 = vunpack.c.h.b16 %v847
    %v1790 = vunpack.c.l.b16 %v848
    %v1791 = vunpack.c.h.b16 %v848
    %v1792 = vunpack.c.l.b16 %v849
    %v1793 = vunpack.c.h.b16 %v849
    %v1794 = vunpack.c.l.b16 %v850
    %v1795 = vunpack.c.h.b16 %v850
    %v1796 = vunpack.c.l.b16 %v851
    %v1797 = vunpack.c.h.b16 %v851
    %v1798 = vunpack.c.l.b16 %v852
    %v1799 = vunpack.c.h.b16 %v852
    %v1800 = vunpack.c.l.b16 %v853
    %v1801 = vunpack.c.h.b16 %v853
    %v1802 = vunpack.c.l.b16 %v854
    %v1803 = vunpack.c.h.b16 %v854
    %v1804 = vunpack.c.l.b16 %v855
    %v1805 = vunpack.c.h.b16 %v855
    %v1806 = vunpack.c.l.b16 %v856
    %v1807 = vunpack.c.h.b16 %v856
    %v1808 = vunpack.c.l.b16 %v857
    %v1809 = vunpack.c.h.b16 %v857
    %v1810 = vunpack.c.l.b16 %v858
    %v1811 = vunpack.c.h.b16 %v858
    %v1812 = vunpack.c.l.b16 %v859
    %v1813 = vunpack.c.h.b16 %v859
    %v1814 = vunpack.c.l.b16 %v860
    %v1815 = vunpack.c.h.b16 %v860
    %v1816 = vunpack.c.l.b16 %v861
    %v1817 = vunpack.c.h.b16 %v861
    %v1818 = vunpack.c.l.b16 %v862
    %v1819 = vunpack.c.h.b16 %v862
    %v1820 = vunpack.c.l.b16 %v863
    %v1821 = vunpack.c.h.b16 %v863
    %v1822 = vunpack.c.l.b16 %v864
    %v1823 = vunpack.c.h.b16 %v864
    %v1824 = vunpack.c.l.b16 %v865
    %v1825 = vunpack.c.h.b16 %v865
    %v1826 = vunpack.c.l.b16 %v866
    %v1827 = vunpack.c.h.b16 %v866
    %v1828 = vunpack.c.l.b16 %v867
    %v1829 = vunpack.c.h.b16 %v867
    %v1830 = vunpack.c.l.b16 %v868
    %v1831 = vunpack.c.h.b16 %v868
    %v1832 = vunpack.c.l.b16 %v869
    %v1833 = vunpack.c.h.b16 %v869
    %v1834 = vunpack.c.l.b16 %v870
    %v1835 = vunpack.c.h.b16 %v870
    %v1836 = vunpack.c.l.b16 %v871
    %v1837 = vunpack.c.h.b16 %v871
    %v1838 = vunpack.c.l.b16 %v872
    %v1839 = vunpack.c.h.b16 %v872
    %v1840 = vunpack.c.l.b16 %v873
    %v1841 = vunpack.c.h.b16 %v873
    %v1842 = vunpack.c.l.b16 %v874
    %v1843 = vunpack.c.h.b16 %v874
    %v1844 = vunpack.c.l.b16 %v875
    %v1845 = vunpack.c.h.b16 %v875
    %v1846 = vunpack.c.l.b16 %v876
    %v1847 = vunpack.c.h.b16 %v876
    %v1848 = vunpack.c.l.b16 %v877
    %v1849 = vunpack.c.h.b16 %v877
    %v1850 = vunpack.c.l.b16 %v878
    %v1851 = vunpack.c.h.b16 %v878
    %v1852 = vunpack.c.l.b16 %v879
    %v1853 = vunpack.c.h.b16 %v879
    %v1854 = vunpack.c.l.b16 %v880
    %v1855 = vunpack.c.h.b16 %v880
    %v1856 = vunpack.c.l.b16 %v881
    %v1857 = vunpack.c.h.b16 %v881
    %v1858 = vunpack.c.l.b16 %v882
    %v1859 = vunpack.c.h.b16 %v882
    %v1860 = vunpack.c.l.b16 %v883
    %v1861 = vunpack.c.h.b16 %v883
    %v1862 = vunpack.c.l.b16 %v884
    %v1863 = vunpack.c.h.b16 %v884
    %v1864 = vunpack.c.l.b16 %v885
    %v1865 = vunpack.c.h.b16 %v885
    %v1866 = vunpack.c.l.b16 %v886
    %v1867 = vunpack.c.h.b16 %v886
    %v1868 = vunpack.c.l.b16 %v887
    %v1869 = vunpack.c.h.b16 %v887
    %v1870 = vunpack.c.l.b16 %v888
    %v1871 = vunpack.c.h.b16 %v888
    %v1872 = vunpack.c.l.b16 %v889
    %v1873 = vunpack.c.h.b16 %v889
    %v1874 = vunpack.c.l.b16 %v890
    %v1875 = vunpack.c.h.b16 %v890
    %v1876 = vunpack.c.l.b16 %v891
    %v1877 = vunpack.c.h.b16 %v891
    %v1878 = vunpack.c.l.b16 %v892
    %v1879 = vunpack.c.h.b16 %v892
    %v1880 = vunpack.c.l.b16 %v893
    %v1881 = vunpack.c.h.b16 %v893
    %v1882 = vunpack.c.l.b16 %v894
    %v1883 = vunpack.c.h.b16 %v894
    %v1884 = vunpack.c.l.b16 %v895
    %v1885 = vunpack.c.h.b16 %v895
    %v1886 = vunpack.c.l.b16 %v896
    %v1887 = vunpack.c.h.b16 %v896
    %v1888 = vunpack.c.l.b16 %v897
    %v1889 = vunpack.c.h.b16 %v897
    %v1890 = vunpack.c.l.b16 %v898
    %v1891 = vunpack.c.h.b16 %v898
    %v1892 = vunpack.c.l.b16 %v899
    %v1893 = vunpack.c.h.b16 %v899
    %v1894 = vunpack.c.l.b16 %v900
    %v1895 = vunpack.c.h.b16 %v900
    %v1896 = vunpack.c.l.b16 %v901
    %v1897 = vunpack.c.h.b16 %v901
    %v1898 = vunpack.c.l.b16 %v902
    %v1899 = vunpack.c.h.b16 %v902
    %v1900 = vunpack.c.l.b16 %v903
    %v1901 = vunpack.c.h.b16 %v903
    %v1902 = vunpack.c.l.b16 %v904
    %v1903 = vunpack.c.h.b16 %v904
    %v1904 = vunpack.c.l.b16 %v905
    %v1905 = vunpack.c.h.b16 %v905
    %v1906 = vunpack.c.l.b16 %v906
    %v1907 = vunpack.c.h.b16 %v906
    %v1908 = vunpack.c.l.b16 %v907
    %v1909 = vunpack.c.h.b16 %v907
    %v1910 = vunpack.c.l.b16 %v908
    %v1911 = vunpack.c.h.b16 %v908
    %v1912 = vunpack.c.l.b16 %v909
    %v1913 = vunpack.c.h.b16 %v909
    %v1914 = vunpack.c.l.b16 %v910
    %v1915 = vunpack.c.h.b16 %v910
    %v1916 = vunpack.c.l.b16 %v911
    %v1917 = vunpack.c.h.b16 %v911
    %v1918 = vunpack.c.l.b16 %v912
    %v1919 = vunpack.c.h.b16 %v912
    %v1920 = vunpack.c.l.b16 %v913
    %v1921 = vunpack.c.h.b16 %v913
    %v1922 = vunpack.c.l.b16 %v914
    %v1923 = vunpack.c.h.b16 %v914
    %v1924 = vunpack.c.l.b16 %v915
    %v1925 = vunpack.c.h.b16 %v915
    %v1926 = vunpack.c.l.b16 %v916
    %v1927 = vunpack.c.h.b16 %v916
    %v1928 = vunpack.c.l.b16 %v917
    %v1929 = vunpack.c.h.b16 %v917
    %v1930 = vunpack.c.l.b16 %v918
    %v1931 = vunpack.c.h.b16 %v918
    %v1932 = vunpack.c.l.b16 %v919
    %v1933 = vunpack.c.h.b16 %v919
    %v1934 = vunpack.c.l.b16 %v920
    %v1935 = vunpack.c.h.b16 %v920
    %v1936 = vunpack.c.l.b16 %v921
    %v1937 = vunpack.c.h.b16 %v921
    %v1938 = vunpack.c.l.b16 %v922
    %v1939 = vunpack.c.h.b16 %v922
    %v1940 = vunpack.c.l.b16 %v923
    %v1941 = vunpack.c.h.b16 %v923
    %v1942 = vunpack.c.l.b16 %v924
    %v1943 = vunpack.c.h.b16 %v924
    %v1944 = vunpack.c.l.b16 %v925
    %v1945 = vunpack.c.h.b16 %v925
    %v1946 = vunpack.c.l.b16 %v926
    %v1947 = vunpack.c.h.b16 %v926
    %v1948 = vunpack.c.l.b16 %v927
    %v1949 = vunpack.c.h.b16 %v927
    %v1950 = vunpack.c.l.b16 %v928
    %v1951 = vunpack.c.h.b16 %v928
    %v1952 = vunpack.c.l.b16 %v929
    %v1953 = vunpack.c.h.b16 %v929
    %v1954 = vunpack.c.l.b16 %v930
    %v1955 = vunpack.c.h.b16 %v930
    %v1956 = vunpack.c.l.b16 %v931
    %v1957 = vunpack.c.h.b16 %v931
    %v1958 = vunpack.c.l.b16 %v932
    %v1959 = vunpack.c.h.b16 %v932
    %v1960 = vunpack.c.l.b16 %v933
    %v1961 = vunpack.c.h.b16 %v933
    %v1962 = vunpack.c.l.b16 %v934
    %v1963 = vunpack.c.h.b16 %v934
    %v1964 = vunpack.c.l.b16 %v935
    %v1965 = vunpack.c.h.b16 %v935
    %v1966 = vunpack.c.l.b16 %v936
    %v1967 = vunpack.c.h.b16 %v936
    %v1968 = vunpack.c.l.b16 %v937
    %v1969 = vunpack.c.h.b16 %v937
    %v1970 = vunpack.c.l.b16 %v938
    %v1971 = vunpack.c.h.b16 %v938
    %v1972 = vunpack.c.l.b16 %v939
    %v1973 = vunpack.c.h.b16 %v939
    %v1974 = vunpack.c.l.b16 %v940
    %v1975 = vunpack.c.h.b16 %v940
    %v1976 = vunpack.c.l.b16 %v941
    %v1977 = vunpack.c.h.b16 %v941
    %v1978 = vunpack.c.l.b16 %v942
    %v1979 = vunpack.c.h.b16 %v942
    %v1980 = vunpack.c.l.b16 %v943
    %v1981 = vunpack.c.h.b16 %v943
    %v1982 = vunpack.c.l.b16 %v944
    %v1983 = vunpack.c.h.b16 %v944
    %v1984 = vunpack.c.l.b16 %v945
    %v1985 = vunpack.c.h.b16 %v945
    %v1986 = vunpack.c.l.b16 %v946
    %v1987 = vunpack.c.h.b16 %v946
    %v1988 = vunpack.c.l.b16 %v947
    %v1989 = vunpack.c.h.b16 %v947
    %v1990 = vunpack.c.l.b16 %v948
    %v1991 = vunpack.c.h.b16 %v948
    %v1992 = vunpack.c.l.b16 %v949
    %v1993 = vunpack.c.h.b16 %v949
    %v1994 = vunpack.c.l.b16 %v950
    %v1995 = vunpack.c.h.b16 %v950
    %v1996 = vunpack.c.l.b16 %v951
    %v1997 = vunpack.c.h.b16 %v951
    %v1998 = vunpack.c.l.b16 %v952
    %v1999 = vunpack.c.h.b16 %v952
    %v2000 = vunpack.c.l.b16 %v953
    %v2001 = vunpack.c.h.b16 %v953
    %v2002 = vunpack.c.l.b16 %v954
    %v2003 = vunpack.c.h.b16 %v954
    %v2004 = vunpack.c.l.b16 %v955
    %v2005 = vunpack.c.h.b16 %v955
    %v2006 = vunpack.c.l.b16 %v956
    %v2007 = vunpack.c.h.b16 %v956
    %v2008 = vunpack.c.l.b16 %v957
    %v2009 = vunpack.c.h.b16 %v957
    %v2010 = vunpack.c.l.b16 %v958
    %v2011 = vunpack.c.h.b16 %v958
    %v2012 = vunpack.c.l.b16 %v959
    %v2013 = vunpack.c.h.b16 %v959
    %v2014 = vunpack.c.l.b16 %v960
    %v2015 = vunpack.c.h.b16 %v960
    %v2016 = vunpack.c.l.b16 %v961
    %v2017 = vunpack.c.h.b16 %v961
    %v2018 = vunpack.c.l.b16 %v962
    %v2019 = vunpack.c.h.b16 %v962
    %v2020 = vunpack.c.l.b16 %v963
    %v2021 = vunpack.c.h.b16 %v963
    %v2022 = vunpack.c.l.b16 %v964
    %v2023 = vunpack.c.h.b16 %v964
    %v2024 = vunpack.c.l.b16 %v965
    %v2025 = vunpack.c.h.b16 %v965
    %v2026 = vunpack.c.l.b16 %v966
    %v2027 = vunpack.c.h.b16 %v966
    %v2028 = vunpack.c.l.b16 %v967
    %v2029 = vunpack.c.h.b16 %v967
    %v2030 = vunpack.c.l.b16 %v968
    %v2031 = vunpack.c.h.b16 %v968
    %v2032 = vunpack.c.l.b16 %v969
    %v2033 = vunpack.c.h.b16 %v969
    %v2034 = vunpack.c.l.b16 %v970
    %v2035 = vunpack.c.h.b16 %v970
    %v2036 = vunpack.c.l.b16 %v971
    %v2037 = vunpack.c.h.b16 %v971
    %v2038 = vunpack.c.l.b16 %v972
    %v2039 = vunpack.c.h.b16 %v972
    %v2040 = vunpack.c.l.b16 %v973
    %v2041 = vunpack.c.h.b16 %v973
    %v2042 = vunpack.c.l.b16 %v974
    %v2043 = vunpack.c.h.b16 %v974
    %v2044 = vunpack.c.l.b16 %v975
    %v2045 = vunpack.c.h.b16 %v975
    %v2046 = vunpack.c.l.b16 %v976
    %v2047 = vunpack.c.h.b16 %v976
    %v2048 = vunpack.c.l.b16 %v977
    %v2049 = vunpack.c.h.b16 %v977
    %v2050 = vunpack.c.l.b16 %v978
    %v2051 = vunpack.c.h.b16 %v978
    %v2052 = vunpack.c.l.b16 %v979
    %v2053 = vunpack.c.h.b16 %v979
    %v2054 = vunpack.c.l.b16 %v980
    %v2055 = vunpack.c.h.b16 %v980
    %v2056 = vunpack.c.l.b16 %v981
    %v2057 = vunpack.c.h.b16 %v981
    %v2058 = vunpack.c.l.b16 %v982
    %v2059 = vunpack.c.h.b16 %v982
    %v2060 = vunpack.c.l.b16 %v983
    %v2061 = vunpack.c.h.b16 %v983
    %v2062 = vunpack.c.l.b16 %v984
    %v2063 = vunpack.c.h.b16 %v984
    %v2064 = vunpack.c.l.b16 %v985
    %v2065 = vunpack.c.h.b16 %v985
    %v2066 = vunpack.c.l.b16 %v986
    %v2067 = vunpack.c.h.b16 %v986
    %v2068 = vunpack.c.l.b16 %v987
    %v2069 = vunpack.c.h.b16 %v987
    %v2070 = vunpack.c.l.b16 %v988
    %v2071 = vunpack.c.h.b16 %v988
    %v2072 = vunpack.c.l.b16 %v989
    %v2073 = vunpack.c.h.b16 %v989
    %v2074 = vunpack.c.l.b16 %v990
    %v2075 = vunpack.c.h.b16 %v990
    %v2076 = vunpack.c.l.b16 %v991
    %v2077 = vunpack.c.h.b16 %v991
    %v2078 = vunpack.c.l.b16 %v992
    %v2079 = vunpack.c.h.b16 %v992
    %v2080 = vunpack.c.l.b16 %v993
    %v2081 = vunpack.c.h.b16 %v993
    %v2082 = vunpack.c.l.b16 %v994
    %v2083 = vunpack.c.h.b16 %v994
    %v2084 = vunpack.c.l.b16 %v995
    %v2085 = vunpack.c.h.b16 %v995
    %v2086 = vunpack.c.l.b16 %v996
    %v2087 = vunpack.c.h.b16 %v996
    %v2088 = vunpack.c.l.b16 %v997
    %v2089 = vunpack.c.h.b16 %v997
    %v2090 = vunpack.c.l.b16 %v998
    %v2091 = vunpack.c.h.b16 %v998
    %v2092 = vunpack.c.l.b16 %v999
    %v2093 = vunpack.c.h.b16 %v999
    %v2094 = vunpack.c.l.b16 %v1000
    %v2095 = vunpack.c.h.b16 %v1000
    %v2096 = vunpack.c.l.b16 %v1001
    %v2097 = vunpack.c.h.b16 %v1001
    %v2098 = vunpack.c.l.b16 %v1002
    %v2099 = vunpack.c.h.b16 %v1002
    %v2100 = vunpack.c.l.b16 %v1003
    %v2101 = vunpack.c.h.b16 %v1003
    %v2102 = vunpack.c.l.b16 %v1004
    %v2103 = vunpack.c.h.b16 %v1004
    %v2104 = vunpack.c.l.b16 %v1005
    %v2105 = vunpack.c.h.b16 %v1005
    %v2106 = vunpack.c.l.b16 %v1006
    %v2107 = vunpack.c.h.b16 %v1006
    %v2108 = vunpack.c.l.b16 %v1007
    %v2109 = vunpack.c.h.b16 %v1007
    %v2110 = vunpack.c.l.b16 %v1008
    %v2111 = vunpack.c.h.b16 %v1008
    %v2112 = vunpack.c.l.b16 %v1009
    %v2113 = vunpack.c.h.b16 %v1009
    %v2114 = vunpack.c.l.b16 %v1010
    %v2115 = vunpack.c.h.b16 %v1010
    %v2116 = vunpack.c.l.b16 %v1011
    %v2117 = vunpack.c.h.b16 %v1011
    %v2118 = vunpack.c.l.b16 %v1012
    %v2119 = vunpack.c.h.b16 %v1012
    %v2120 = vunpack.c.l.b16 %v1013
    %v2121 = vunpack.c.h.b16 %v1013
    %v2122 = vunpack.c.l.b16 %v1014
    %v2123 = vunpack.c.h.b16 %v1014
    %v2124 = vunpack.c.l.b16 %v1015
    %v2125 = vunpack.c.h.b16 %v1015
    %v2126 = vunpack.c.l.b16 %v1016
    %v2127 = vunpack.c.h.b16 %v1016
    %v2128 = vunpack.c.l.b16 %v1017
    %v2129 = vunpack.c.h.b16 %v1017
    %v2130 = vunpack.c.l.b16 %v1018
    %v2131 = vunpack.c.h.b16 %v1018
    %v2132 = vunpack.c.l.b16 %v1019
    %v2133 = vunpack.c.h.b16 %v1019
    %v2134 = vunpack.c.l.b16 %v1020
    %v2135 = vunpack.c.h.b16 %v1020
    %v2136 = vunpack.c.l.b16 %v1021
    %v2137 = vunpack.c.h.b16 %v1021
    %v2138 = vunpack.c.l.b16 %v1022
    %v2139 = vunpack.c.h.b16 %v1022
    %v2140 = vunpack.c.l.b16 %v1023
    %v2141 = vunpack.c.h.b16 %v1023
    %v2142 = vunpack.c.l.b16 %v1024
    %v2143 = vunpack.c.h.b16 %v1024
    %v2144 = vunpack.c.l.b16 %v1025
    %v2145 = vunpack.c.h.b16 %v1025
    %v2146 = vunpack.c.l.b16 %v1026
    %v2147 = vunpack.c.h.b16 %v1026
    %v2148 = vunpack.c.l.b16 %v1027
    %v2149 = vunpack.c.h.b16 %v1027
    %v2150 = vunpack.c.l.b16 %v1028
    %v2151 = vunpack.c.h.b16 %v1028
    %v2152 = vunpack.c.l.b16 %v1029
    %v2153 = vunpack.c.h.b16 %v1029
    %v2154 = vunpack.c.l.b16 %v1030
    %v2155 = vunpack.c.h.b16 %v1030
    %v2156 = vunpack.c.l.b16 %v1031
    %v2157 = vunpack.c.h.b16 %v1031
    %v2158 = vunpack.c.l.b16 %v1032
    %v2159 = vunpack.c.h.b16 %v1032
    %v2160 = vunpack.c.l.b16 %v1033
    %v2161 = vunpack.c.h.b16 %v1033
    %v2162 = vunpack.c.l.b16 %v1034
    %v2163 = vunpack.c.h.b16 %v1034
    %v2164 = vunpack.c.l.b16 %v1035
    %v2165 = vunpack.c.h.b16 %v1035
    %v2166 = vunpack.c.l.b16 %v1036
    %v2167 = vunpack.c.h.b16 %v1036
    %v2168 = vunpack.c.l.b16 %v1037
    %v2169 = vunpack.c.h.b16 %v1037
    %v2170 = vunpack.c.l.b16 %v1038
    %v2171 = vunpack.c.h.b16 %v1038
    %v2172 = vunpack.c.l.b16 %v1039
    %v2173 = vunpack.c.h.b16 %v1039
    %v2174 = vunpack.c.l.b16 %v1040
    %v2175 = vunpack.c.h.b16 %v1040
    %v2176 = vunpack.c.l.b16 %v1041
    %v2177 = vunpack.c.h.b16 %v1041
    %v2178 = vunpack.c.l.b16 %v1042
    %v2179 = vunpack.c.h.b16 %v1042
    %v2180 = vunpack.c.l.b16 %v1043
    %v2181 = vunpack.c.h.b16 %v1043
    %v2182 = vunpack.c.l.b16 %v1044
    %v2183 = vunpack.c.h.b16 %v1044
    %v2184 = vunpack.c.l.b16 %v1045
    %v2185 = vunpack.c.h.b16 %v1045
    %v2186 = vunpack.c.l.b16 %v1046
    %v2187 = vunpack.c.h.b16 %v1046
    %v2188 = vunpack.c.l.b16 %v1047
    %v2189 = vunpack.c.h.b16 %v1047
    %v2190 = vunpack.c.l.b16 %v1048
    %v2191 = vunpack.c.h.b16 %v1048
    %v2192 = vunpack.c.l.b16 %v1049
    %v2193 = vunpack.c.h.b16 %v1049
    %v2194 = vunpack.c.l.b16 %v1050
    %v2195 = vunpack.c.h.b16 %v1050
    %v2196 = vunpack.c.l.b16 %v1051
    %v2197 = vunpack.c.h.b16 %v1051
    %v2198 = vunpack.c.l.b16 %v1052
    %v2199 = vunpack.c.h.b16 %v1052
    %v2200 = vunpack.c.l.b16 %v1053
    %v2201 = vunpack.c.h.b16 %v1053
    %v2202 = vunpack.c.l.b16 %v1054
    %v2203 = vunpack.c.h.b16 %v1054
    %v2204 = vunpack.c.l.b16 %v1055
    %v2205 = vunpack.c.h.b16 %v1055
    %v2206 = vunpack.c.l.b16 %v1056
    %v2207 = vunpack.c.h.b16 %v1056
    %v2208 = vunpack.c.l.b16 %v1057
    %v2209 = vunpack.c.h.b16 %v1057
    %v2210 = vpack.c.b16 %v1446, %v1442
    %v2211 = vpack.c.b16 %v1447, %v1443
    %v2212 = vpack.c.b16 %v1448, %v1444
    %v2213 = vpack.c.b16 %v1449, %v1445
    %v2214 = vpack.c.b16 %v1454, %v1450
    %v2215 = vpack.c.b16 %v1455, %v1451
    %v2216 = vpack.c.b16 %v1456, %v1452
    %v2217 = vpack.c.b16 %v1457, %v1453
    %v2218 = vpack.c.b16 %v1462, %v1458
    %v2219 = vpack.c.b16 %v1463, %v1459
    %v2220 = vpack.c.b16 %v1464, %v1460
    %v2221 = vpack.c.b16 %v1465, %v1461
    %v2222 = vpack.c.b16 %v1470, %v1466
    %v2223 = vpack.c.b16 %v1471, %v1467
    %v2224 = vpack.c.b16 %v1472, %v1468
    %v2225 = vpack.c.b16 %v1473, %v1469
    %v2226 = vpack.c.b16 %v1478, %v1474
    %v2227 = vpack.c.b16 %v1479, %v1475
    %v2228 = vpack.c.b16 %v1480, %v1476
    %v2229 = vpack.c.b16 %v1481, %v1477
    %v2230 = vpack.c.b16 %v1486, %v1482
    %v2231 = vpack.c.b16 %v1487, %v1483
    %v2232 = vpack.c.b16 %v1488, %v1484
    %v2233 = vpack.c.b16 %v1489, %v1485
    %v2234 = vpack.c.b16 %v1494, %v1490
    %v2235 = vpack.c.b16 %v1495, %v1491
    %v2236 = vpack.c.b16 %v1496, %v1492
    %v2237 = vpack.c.b16 %v1497, %v1493
    %v2238 = vpack.c.b16 %v1502, %v1498
    %v2239 = vpack.c.b16 %v1503, %v1499
    %v2240 = vpack.c.b16 %v1504, %v1500
    %v2241 = vpack.c.b16 %v1505, %v1501
    %v2242 = vpack.c.b16 %v1510, %v1506
    %v2243 = vpack.c.b16 %v1511, %v1507
    %v2244 = vpack.c.b16 %v1512, %v1508
    %v2245 = vpack.c.b16 %v1513, %v1509
    %v2246 = vpack.c.b16 %v1518, %v1514
    %v2247 = vpack.c.b16 %v1519, %v1515
    %v2248 = vpack.c.b16 %v1520, %v1516
    %v2249 = vpack.c.b16 %v1521, %v1517
    %v2250 = vpack.c.b16 %v1526, %v1522
    %v2251 = vpack.c.b16 %v1527, %v1523
    %v2252 = vpack.c.b16 %v1528, %v1524
    %v2253 = vpack.c.b16 %v1529, %v1525
    %v2254 = vpack.c.b16 %v1534, %v1530
    %v2255 = vpack.c.b16 %v1535, %v1531
    %v2256 = vpack.c.b16 %v1536, %v1532
    %v2257 = vpack.c.b16 %v1537, %v1533
    %v2258 = vpack.c.b16 %v1542, %v1538
    %v2259 = vpack.c.b16 %v1543, %v1539
    %v2260 = vpack.c.b16 %v1544, %v1540
    %v2261 = vpack.c.b16 %v1545, %v1541
    %v2262 = vpack.c.b16 %v1550, %v1546
    %v2263 = vpack.c.b16 %v1551, %v1547
    %v2264 = vpack.c.b16 %v1552, %v1548
    %v2265 = vpack.c.b16 %v1553, %v1549
    %v2266 = vpack.c.b16 %v1558, %v1554
    %v2267 = vpack.c.b16 %v1559, %v1555
    %v2268 = vpack.c.b16 %v1560, %v1556
    %v2269 = vpack.c.b16 %v1561, %v1557
    %v2270 = vpack.c.b16 %v1566, %v1562
    %v2271 = vpack.c.b16 %v1567, %v1563
    %v2272 = vpack.c.b16 %v1568, %v1564
    %v2273 = vpack.c.b16 %v1569, %v1565
    %v2274 = vpack.c.b16 %v1574, %v1570
    %v2275 = vpack.c.b16 %v1575, %v1571
    %v2276 = vpack.c.b16 %v1576, %v1572
    %v2277 = vpack.c.b16 %v1577, %v1573
    %v2278 = vpack.c.b16 %v1582, %v1578
    %v2279 = vpack.c.b16 %v1583, %v1579
    %v2280 = vpack.c.b16 %v1584, %v1580
    %v2281 = vpack.c.b16 %v1585, %v1581
    %v2282 = vpack.c.b16 %v1590, %v1586
    %v2283 = vpack.c.b16 %v1591, %v1587
    %v2284 = vpack.c.b16 %v1592, %v1588
    %v2285 = vpack.c.b16 %v1593, %v1589
    %v2286 = vpack.c.b16 %v1598, %v1594
    %v2287 = vpack.c.b16 %v1599, %v1595
    %v2288 = vpack.c.b16 %v1600, %v1596
    %v2289 = vpack.c.b16 %v1601, %v1597
    %v2290 = vpack.c.b16 %v1606, %v1602
    %v2291 = vpack.c.b16 %v1607, %v1603
    %v2292 = vpack.c.b16 %v1608, %v1604
    %v2293 = vpack.c.b16 %v1609, %v1605
    %v2294 = vpack.c.b16 %v1614, %v1610
    %v2295 = vpack.c.b16 %v1615, %v1611
    %v2296 = vpack.c.b16 %v1616, %v1612
    %v2297 = vpack.c.b16 %v1617, %v1613
    %v2298 = vpack.c.b16 %v1622, %v1618
    %v2299 = vpack.c.b16 %v1623, %v1619
    %v2300 = vpack.c.b16 %v1624, %v1620
    %v2301 = vpack.c.b16 %v1625, %v1621
    %v2302 = vpack.c.b16 %v1630, %v1626
    %v2303 = vpack.c.b16 %v1631, %v1627
    %v2304 = vpack.c.b16 %v1632, %v1628
    %v2305 = vpack.c.b16 %v1633, %v1629
    %v2306 = vpack.c.b16 %v1638, %v1634
    %v2307 = vpack.c.b16 %v1639, %v1635
    %v2308 = vpack.c.b16 %v1640, %v1636
    %v2309 = vpack.c.b16 %v1641, %v1637
    %v2310 = vpack.c.b16 %v1646, %v1642
    %v2311 = vpack.c.b16 %v1647, %v1643
    %v2312 = vpack.c.b16 %v1648, %v1644
    %v2313 = vpack.c.b16 %v1649, %v1645
    %v2314 = vpack.c.b16 %v1654, %v1650
    %v2315 = vpack.c.b16 %v1655, %v1651
    %v2316 = vpack.c.b16 %v1656, %v1652
    %v2317 = vpack.c.b16 %v1657, %v1653
    %v2318 = vpack.c.b16 %v1662, %v1658
    %v2319 = vpack.c.b16 %v1663, %v1659
    %v2320 = vpack.c.b16 %v1664, %v1660
    %v2321 = vpack.c.b16 %v1665, %v1661
    %v2322 = vpack.c.b16 %v1670, %v1666
    %v2323 = vpack.c.b16 %v1671, %v1667
    %v2324 = vpack.c.b16 %v1672, %v1668
    %v2325 = vpack.c.b16 %v1673, %v1669
    %v2326 = vpack.c.b16 %v1678, %v1674
    %v2327 = vpack.c.b16 %v1679, %v1675
    %v2328 = vpack.c.b16 %v1680, %v1676
    %v2329 = vpack.c.b16 %v1681, %v1677
    %v2330 = vpack.c.b16 %v1686, %v1682
    %v2331 = vpack.c.b16 %v1687, %v1683
    %v2332 = vpack.c.b16 %v1688, %v1684
    %v2333 = vpack.c.b16 %v1689, %v1685
    %v2334 = vpack.c.b16 %v1694, %v1690
    %v2335 = vpack.c.b16 %v1695, %v1691
    %v2336 = vpack.c.b16 %v1696, %v1692
    %v2337 = vpack.c.b16 %v1697, %v1693
    %v2338 = vpack.c.b16 %v1702, %v1698
    %v2339 = vpack.c.b16 %v1703, %v1699
    %v2340 = vpack.c.b16 %v1704, %v1700
    %v2341 = vpack.c.b16 %v1705, %v1701
    %v2342 = vpack.c.b16 %v1710, %v1706
    %v2343 = vpack.c.b16 %v1711, %v1707
    %v2344 = vpack.c.b16 %v1712, %v1708
    %v2345 = vpack.c.b16 %v1713, %v1709
    %v2346 = vpack.c.b16 %v1718, %v1714
    %v2347 = vpack.c.b16 %v1719, %v1715
    %v2348 = vpack.c.b16 %v1720, %v1716
    %v2349 = vpack.c.b16 %v1721, %v1717
    %v2350 = vpack.c.b16 %v1726, %v1722
    %v2351 = vpack.c.b16 %v1727, %v1723
    %v2352 = vpack.c.b16 %v1728, %v1724
    %v2353 = vpack.c.b16 %v1729, %v1725
    %v2354 = vpack.c.b16 %v1734, %v1730
    %v2355 = vpack.c.b16 %v1735, %v1731
    %v2356 = vpack.c.b16 %v1736, %v1732
    %v2357 = vpack.c.b16 %v1737, %v1733
    %v2358 = vpack.c.b16 %v1742, %v1738
    %v2359 = vpack.c.b16 %v1743, %v1739
    %v2360 = vpack.c.b16 %v1744, %v1740
    %v2361 = vpack.c.b16 %v1745, %v1741
    %v2362 = vpack.c.b16 %v1750, %v1746
    %v2363 = vpack.c.b16 %v1751, %v1747
    %v2364 = vpack.c.b16 %v1752, %v1748
    %v2365 = vpack.c.b16 %v1753, %v1749
    %v2366 = vpack.c.b16 %v1758, %v1754
    %v2367 = vpack.c.b16 %v1759, %v1755
    %v2368 = vpack.c.b16 %v1760, %v1756
    %v2369 = vpack.c.b16 %v1761, %v1757
    %v2370 = vpack.c.b16 %v1766, %v1762
    %v2371 = vpack.c.b16 %v1767, %v1763
    %v2372 = vpack.c.b16 %v1768, %v1764
    %v2373 = vpack.c.b16 %v1769, %v1765
    %v2374 = vpack.c.b16 %v1774, %v1770
    %v2375 = vpack.c.b16 %v1775, %v1771
    %v2376 = vpack.c.b16 %v1776, %v1772
    %v2377 = vpack.c.b16 %v1777, %v1773
    %v2378 = vpack.c.b16 %v1782, %v1778
    %v2379 = vpack.c.b16 %v1783, %v1779
    %v2380 = vpack.c.b16 %v1784, %v1780
    %v2381 = vpack.c.b16 %v1785, %v1781
    %v2382 = vpack.c.b16 %v1790, %v1786
    %v2383 = vpack.c.b16 %v1791, %v1787
    %v2384 = vpack.c.b16 %v1792, %v1788
    %v2385 = vpack.c.b16 %v1793, %v1789
    %v2386 = vpack.c.b16 %v1798, %v1794
    %v2387 = vpack.c.b16 %v1799, %v1795
    %v2388 = vpack.c.b16 %v1800, %v1796
    %v2389 = vpack.c.b16 %v1801, %v1797
    %v2390 = vpack.c.b16 %v1806, %v1802
    %v2391 = vpack.c.b16 %v1807, %v1803
    %v2392 = vpack.c.b16 %v1808, %v1804
    %v2393 = vpack.c.b16 %v1809, %v1805
    %v2394 = vpack.c.b16 %v1814, %v1810
    %v2395 = vpack.c.b16 %v1815, %v1811
    %v2396 = vpack.c.b16 %v1816, %v1812
    %v2397 = vpack.c.b16 %v1817, %v1813
    %v2398 = vpack.c.b16 %v1822, %v1818
    %v2399 = vpack.c.b16 %v1823, %v1819
    %v2400 = vpack.c.b16 %v1824, %v1820
    %v2401 = vpack.c.b16 %v1825, %v1821
    %v2402 = vpack.c.b16 %v1830, %v1826
    %v2403 = vpack.c.b16 %v1831, %v1827
    %v2404 = vpack.c.b16 %v1832, %v1828
    %v2405 = vpack.c.b16 %v1833, %v1829
    %v2406 = vpack.c.b16 %v1838, %v1834
    %v2407 = vpack.c.b16 %v1839, %v1835
    %v2408 = vpack.c.b16 %v1840, %v1836
    %v2409 = vpack.c.b16 %v1841, %v1837
    %v2410 = vpack.c.b16 %v1846, %v1842
    %v2411 = vpack.c.b16 %v1847, %v1843
    %v2412 = vpack.c.b16 %v1848, %v1844
    %v2413 = vpack.c.b16 %v1849, %v1845
    %v2414 = vpack.c.b16 %v1854, %v1850
    %v2415 = vpack.c.b16 %v1855, %v1851
    %v2416 = vpack.c.b16 %v1856, %v1852
    %v2417 = vpack.c.b16 %v1857, %v1853
    %v2418 = vpack.c.b16 %v1862, %v1858
    %v2419 = vpack.c.b16 %v1863, %v1859
    %v2420 = vpack.c.b16 %v1864, %v1860
    %v2421 = vpack.c.b16 %v1865, %v1861
    %v2422 = vpack.c.b16 %v1870, %v1866
    %v2423 = vpack.c.b16 %v1871, %v1867
    %v2424 = vpack.c.b16 %v1872, %v1868
    %v2425 = vpack.c.b16 %v1873, %v1869
    %v2426 = vpack.c.b16 %v1878, %v1874
    %v2427 = vpack.c.b16 %v1879, %v1875
    %v2428 = vpack.c.b16 %v1880, %v1876
    %v2429 = vpack.c.b16 %v1881, %v1877
    %v2430 = vpack.c.b16 %v1886, %v1882
    %v2431 = vpack.c.b16 %v1887, %v1883
    %v2432 = vpack.c.b16 %v1888, %v1884
    %v2433 = vpack.c.b16 %v1889, %v1885
    %v2434 = vpack.c.b16 %v1894, %v1890
    %v2435 = vpack.c.b16 %v1895, %v1891
    %v2436 = vpack.c.b16 %v1896, %v1892
    %v2437 = vpack.c.b16 %v1897, %v1893
    %v2438 = vpack.c.b16 %v1902, %v1898
    %v2439 = vpack.c.b16 %v1903, %v1899
    %v2440 = vpack.c.b16 %v1904, %v1900
    %v2441 = vpack.c.b16 %v1905, %v1901
    %v2442 = vpack.c.b16 %v1910, %v1906
    %v2443 = vpack.c.b16 %v1911, %v1907
    %v2444 = vpack.c.b16 %v1912, %v1908
    %v2445 = vpack.c.b16 %v1913, %v1909
    %v2446 = vpack.c.b16 %v1918, %v1914
    %v2447 = vpack.c.b16 %v1919, %v1915
    %v2448 = vpack.c.b16 %v1920, %v1916
    %v2449 = vpack.c.b16 %v1921, %v1917
    %v2450 = vpack.c.b16 %v1926, %v1922
    %v2451 = vpack.c.b16 %v1927, %v1923
    %v2452 = vpack.c.b16 %v1928, %v1924
    %v2453 = vpack.c.b16 %v1929, %v1925
    %v2454 = vpack.c.b16 %v1934, %v1930
    %v2455 = vpack.c.b16 %v1935, %v1931
    %v2456 = vpack.c.b16 %v1936, %v1932
    %v2457 = vpack.c.b16 %v1937, %v1933
    %v2458 = vpack.c.b16 %v1942, %v1938
    %v2459 = vpack.c.b16 %v1943, %v1939
    %v2460 = vpack.c.b16 %v1944, %v1940
    %v2461 = vpack.c.b16 %v1945, %v1941
    %v2462 = vpack.c.b16 %v1950, %v1946
    %v2463 = vpack.c.b16 %v1951, %v1947
    %v2464 = vpack.c.b16 %v1952, %v1948
    %v2465 = vpack.c.b16 %v1953, %v1949
    %v2466 = vpack.c.b16 %v1958, %v1954
    %v2467 = vpack.c.b16 %v1959, %v1955
    %v2468 = vpack.c.b16 %v1960, %v1956
    %v2469 = vpack.c.b16 %v1961, %v1957
    %v2470 = vpack.c.b16 %v1966, %v1962
    %v2471 = vpack.c.b16 %v1967, %v1963
    %v2472 = vpack.c.b16 %v1968, %v1964
    %v2473 = vpack.c.b16 %v1969, %v1965
    %v2474 = vpack.c.b16 %v1974, %v1970
    %v2475 = vpack.c.b16 %v1975, %v1971
    %v2476 = vpack.c.b16 %v1976, %v1972
    %v2477 = vpack.c.b16 %v1977, %v1973
    %v2478 = vpack.c.b16 %v1982, %v1978
    %v2479 = vpack.c.b16 %v1983, %v1979
    %v2480 = vpack.c.b16 %v1984, %v1980
    %v2481 = vpack.c.b16 %v1985, %v1981
    %v2482 = vpack.c.b16 %v1990, %v1986
    %v2483 = vpack.c.b16 %v1991, %v1987
    %v2484 = vpack.c.b16 %v1992, %v1988
    %v2485 = vpack.c.b16 %v1993, %v1989
    %v2486 = vpack.c.b16 %v1998, %v1994
    %v2487 = vpack.c.b16 %v1999, %v1995
    %v2488 = vpack.c.b16 %v2000, %v1996
    %v2489 = vpack.c.b16 %v2001, %v1997
    %v2490 = vpack.c.b16 %v2006, %v2002
    %v2491 = vpack.c.b16 %v2007, %v2003
    %v2492 = vpack.c.b16 %v2008, %v2004
    %v2493 = vpack.c.b16 %v2009, %v2005
    %v2494 = vpack.c.b16 %v2014, %v2010
    %v2495 = vpack.c.b16 %v2015, %v2011
    %v2496 = vpack.c.b16 %v2016, %v2012
    %v2497 = vpack.c.b16 %v2017, %v2013
    %v2498 = vpack.c.b16 %v2022, %v2018
    %v2499 = vpack.c.b16 %v2023, %v2019
    %v2500 = vpack.c.b16 %v2024, %v2020
    %v2501 = vpack.c.b16 %v2025, %v2021
    %v2502 = vpack.c.b16 %v2030, %v2026
    %v2503 = vpack.c.b16 %v2031, %v2027
    %v2504 = vpack.c.b16 %v2032, %v2028
    %v2505 = vpack.c.b16 %v2033, %v2029
    %v2506 = vpack.c.b16 %v2038, %v2034
    %v2507 = vpack.c.b16 %v2039, %v2035
    %v2508 = vpack.c.b16 %v2040, %v2036
    %v2509 = vpack.c.b16 %v2041, %v2037
    %v2510 = vpack.c.b16 %v2046, %v2042
    %v2511 = vpack.c.b16 %v2047, %v2043
    %v2512 = vpack.c.b16 %v2048, %v2044
    %v2513 = vpack.c.b16 %v2049, %v2045
    %v2514 = vpack.c.b16 %v2054, %v2050
    %v2515 = vpack.c.b16 %v2055, %v2051
    %v2516 = vpack.c.b16 %v2056, %v2052
    %v2517 = vpack.c.b16 %v2057, %v2053
    %v2518 = vpack.c.b16 %v2062, %v2058
    %v2519 = vpack.c.b16 %v2063, %v2059
    %v2520 = vpack.c.b16 %v2064, %v2060
    %v2521 = vpack.c.b16 %v2065, %v2061
    %v2522 = vpack.c.b16 %v2070, %v2066
    %v2523 = vpack.c.b16 %v2071, %v2067
    %v2524 = vpack.c.b16 %v2072, %v2068
    %v2525 = vpack.c.b16 %v2073, %v2069
    %v2526 = vpack.c.b16 %v2078, %v2074
    %v2527 = vpack.c.b16 %v2079, %v2075
    %v2528 = vpack.c.b16 %v2080, %v2076
    %v2529 = vpack.c.b16 %v2081, %v2077
    %v2530 = vpack.c.b16 %v2086, %v2082
    %v2531 = vpack.c.b16 %v2087, %v2083
    %v2532 = vpack.c.b16 %v2088, %v2084
    %v2533 = vpack.c.b16 %v2089, %v2085
    %v2534 = vpack.c.b16 %v2094, %v2090
    %v2535 = vpack.c.b16 %v2095, %v2091
    %v2536 = vpack.c.b16 %v2096, %v2092
    %v2537 = vpack.c.b16 %v2097, %v2093
    %v2538 = vpack.c.b16 %v2102, %v2098
    %v2539 = vpack.c.b16 %v2103, %v2099
    %v2540 = vpack.c.b16 %v2104, %v2100
    %v2541 = vpack.c.b16 %v2105, %v2101
    %v2542 = vpack.c.b16 %v2110, %v2106
    %v2543 = vpack.c.b16 %v2111, %v2107
    %v2544 = vpack.c.b16 %v2112, %v2108
    %v2545 = vpack.c.b16 %v2113, %v2109
    %v2546 = vpack.c.b16 %v2118, %v2114
    %v2547 = vpack.c.b16 %v2119, %v2115
    %v2548 = vpack.c.b16 %v2120, %v2116
    %v2549 = vpack.c.b16 %v2121, %v2117
    %v2550 = vpack.c.b16 %v2126, %v2122
    %v2551 = vpack.c.b16 %v2127, %v2123
    %v2552 = vpack.c.b16 %v2128, %v2124
    %v2553 = vpack.c.b16 %v2129, %v2125
    %v2554 = vpack.c.b16 %v2134, %v2130
    %v2555 = vpack.c.b16 %v2135, %v2131
    %v2556 = vpack.c.b16 %v2136, %v2132
    %v2557 = vpack.c.b16 %v2137, %v2133
    %v2558 = vpack.c.b16 %v2142, %v2138
    %v2559 = vpack.c.b16 %v2143, %v2139
    %v2560 = vpack.c.b16 %v2144, %v2140
    %v2561 = vpack.c.b16 %v2145, %v2141
    %v2562 = vpack.c.b16 %v2150, %v2146
    %v2563 = vpack.c.b16 %v2151, %v2147
    %v2564 = vpack.c.b16 %v2152, %v2148
    %v2565 = vpack.c.b16 %v2153, %v2149
    %v2566 = vpack.c.b16 %v2158, %v2154
    %v2567 = vpack.c.b16 %v2159, %v2155
    %v2568 = vpack.c.b16 %v2160, %v2156
    %v2569 = vpack.c.b16 %v2161, %v2157
    %v2570 = vpack.c.b16 %v2166, %v2162
    %v2571 = vpack.c.b16 %v2167, %v2163
    %v2572 = vpack.c.b16 %v2168, %v2164
    %v2573 = vpack.c.b16 %v2169, %v2165
    %v2574 = vpack.c.b16 %v2174, %v2170
    %v2575 = vpack.c.b16 %v2175, %v2171
    %v2576 = vpack.c.b16 %v2176, %v2172
    %v2577 = vpack.c.b16 %v2177, %v2173
    %v2578 = vpack.c.b16 %v2182, %v2178
    %v2579 = vpack.c.b16 %v2183, %v2179
    %v2580 = vpack.c.b16 %v2184, %v2180
    %v2581 = vpack.c.b16 %v2185, %v2181
    %v2582 = vpack.c.b16 %v2190, %v2186
    %v2583 = vpack.c.b16 %v2191, %v2187
    %v2584 = vpack.c.b16 %v2192, %v2188
    %v2585 = vpack.c.b16 %v2193, %v2189
    %v2586 = vpack.c.b16 %v2198, %v2194
    %v2587 = vpack.c.b16 %v2199, %v2195
    %v2588 = vpack.c.b16 %v2200, %v2196
    %v2589 = vpack.c.b16 %v2201, %v2197
    %v2590 = vpack.c.b16 %v2206, %v2202
    %v2591 = vpack.c.b16 %v2207, %v2203
    %v2592 = vpack.c.b16 %v2208, %v2204
    %v2593 = vpack.c.b16 %v2209, %v2205
    %2978 = vmatprep.subr.bf16.mxu0 %v2239
    %2979 = vmatpush1.bf16.msra.mxu0 %v2238
    %2980 = vmatprep.subr.bf16.mxu0 %v2235
    %2981 = vmatpush1.bf16.msra.mxu0 %v2234
    %2982 = vmatprep.subr.bf16.mxu0 %v2231
    %2983 = vmatpush1.bf16.msra.mxu0 %v2230
    %2984 = vmatprep.subr.bf16.mxu0 %v2227
    %2985 = vmatpush1.bf16.msra.mxu0 %v2226
    %2986 = vmatprep.subr.bf16.mxu0 %v2223
    %2987 = vmatpush1.bf16.msra.mxu0 %v2222
    %2988 = vmatprep.subr.bf16.mxu0 %v2219
    %2989 = vmatpush1.bf16.msra.mxu0 %v2218
    %2990 = vmatprep.subr.bf16.mxu0 %v2215
    %2991 = vmatpush1.bf16.msra.mxu0 %v2214
    %2992 = vmatprep.subr.bf16.mxu0 %v2211
    %2993 = vmatpush1.bf16.msra.mxu0 %v2210
    %2994 = vmatprep.subr.bf16.mxu0 %v2271
    %2995 = vmatpush2.bf16.msra.mxu0 %v2270
    %2996 = vmatprep.subr.bf16.mxu0 %v2267
    %2997 = vmatpush2.bf16.msra.mxu0 %v2266
    %2998 = vmatprep.subr.bf16.mxu0 %v2263
    %2999 = vmatpush2.bf16.msra.mxu0 %v2262
    %3000 = vmatprep.subr.bf16.mxu0 %v2259
    %3001 = vmatpush2.bf16.msra.mxu0 %v2258
    %3002 = vmatprep.subr.bf16.mxu0 %v2255
    %3003 = vmatpush2.bf16.msra.mxu0 %v2254
    %3004 = vmatprep.subr.bf16.mxu0 %v2251
    %3005 = vmatpush2.bf16.msra.mxu0 %v2250
    %3006 = vmatprep.subr.bf16.mxu0 %v2247
    %3007 = vmatpush2.bf16.msra.mxu0 %v2246
    %3008 = vmatprep.subr.bf16.mxu0 %v2243
    %3009 = vmatpush2.bf16.msra.mxu0 %v2242
    %3010 = vmatprep.mubr.bf16.mxu0 %v535
    %3011 = vmatmul.mubr.bf16.gmra.mxu0 %v534
    %v3012 = vpop.f32.mrf.mxu0
    %v3013 = vadd.f32 0.0, %v3012
    %v3014 = vpop.f32.mrf.mxu0
    %v3015 = vadd.f32 0.0, %v3014
    %v3016 = vpop.f32.mrf.mxu0
    %v3017 = vadd.f32 0.0, %v3016
    %v3018 = vpop.f32.mrf.mxu0
    %v3019 = vadd.f32 0.0, %v3018
    %3020 = vdwg.mxu0
    %3021 = vmatprep.subr.bf16.mxu0 %v2303
    %3022 = vmatpush1.bf16.msra.mxu0 %v2302
    %3023 = vmatprep.subr.bf16.mxu0 %v2299
    %3024 = vmatpush1.bf16.msra.mxu0 %v2298
    %3025 = vmatprep.subr.bf16.mxu0 %v2295
    %3026 = vmatpush1.bf16.msra.mxu0 %v2294
    %3027 = vmatprep.subr.bf16.mxu0 %v2291
    %3028 = vmatpush1.bf16.msra.mxu0 %v2290
    %3029 = vmatprep.subr.bf16.mxu0 %v2287
    %3030 = vmatpush1.bf16.msra.mxu0 %v2286
    %3031 = vmatprep.subr.bf16.mxu0 %v2283
    %3032 = vmatpush1.bf16.msra.mxu0 %v2282
    %3033 = vmatprep.subr.bf16.mxu0 %v2279
    %3034 = vmatpush1.bf16.msra.mxu0 %v2278
    %3035 = vmatprep.subr.bf16.mxu0 %v2275
    %3036 = vmatpush1.bf16.msra.mxu0 %v2274
    %3037 = vmatprep.subr.bf16.mxu0 %v2335
    %3038 = vmatpush2.bf16.msra.mxu0 %v2334
    %3039 = vmatprep.subr.bf16.mxu0 %v2331
    %3040 = vmatpush2.bf16.msra.mxu0 %v2330
    %3041 = vmatprep.subr.bf16.mxu0 %v2327
    %3042 = vmatpush2.bf16.msra.mxu0 %v2326
    %3043 = vmatprep.subr.bf16.mxu0 %v2323
    %3044 = vmatpush2.bf16.msra.mxu0 %v2322
    %3045 = vmatprep.subr.bf16.mxu0 %v2319
    %3046 = vmatpush2.bf16.msra.mxu0 %v2318
    %3047 = vmatprep.subr.bf16.mxu0 %v2315
    %3048 = vmatpush2.bf16.msra.mxu0 %v2314
    %3049 = vmatprep.subr.bf16.mxu0 %v2311
    %3050 = vmatpush2.bf16.msra.mxu0 %v2310
    %3051 = vmatprep.subr.bf16.mxu0 %v2307
    %3052 = vmatpush2.bf16.msra.mxu0 %v2306
    %3053 = vmatprep.mubr.bf16.mxu0 %v537
    %3054 = vmatmul.mubr.bf16.gmra.mxu0 %v536
    %v3055 = vpop.f32.mrf.mxu0
    %v3056 = vadd.f32 %v3013, %v3055
    %v3057 = vpop.f32.mrf.mxu0
    %v3058 = vadd.f32 %v3015, %v3057
    %v3059 = vpop.f32.mrf.mxu0
    %v3060 = vadd.f32 %v3017, %v3059
    %v3061 = vpop.f32.mrf.mxu0
    %v3062 = vadd.f32 %v3019, %v3061
    %3063 = vdwg.mxu0
    %3064 = vmatprep.subr.bf16.mxu0 %v2367
    %3065 = vmatpush1.bf16.msra.mxu0 %v2366
    %3066 = vmatprep.subr.bf16.mxu0 %v2363
    %3067 = vmatpush1.bf16.msra.mxu0 %v2362
    %3068 = vmatprep.subr.bf16.mxu0 %v2359
    %3069 = vmatpush1.bf16.msra.mxu0 %v2358
    %3070 = vmatprep.subr.bf16.mxu0 %v2355
    %3071 = vmatpush1.bf16.msra.mxu0 %v2354
    %3072 = vmatprep.subr.bf16.mxu0 %v2351
    %3073 = vmatpush1.bf16.msra.mxu0 %v2350
    %3074 = vmatprep.subr.bf16.mxu0 %v2347
    %3075 = vmatpush1.bf16.msra.mxu0 %v2346
    %3076 = vmatprep.subr.bf16.mxu0 %v2343
    %3077 = vmatpush1.bf16.msra.mxu0 %v2342
    %3078 = vmatprep.subr.bf16.mxu0 %v2339
    %3079 = vmatpush1.bf16.msra.mxu0 %v2338
    %3080 = vmatprep.subr.bf16.mxu0 %v2399
    %3081 = vmatpush2.bf16.msra.mxu0 %v2398
    %3082 = vmatprep.subr.bf16.mxu0 %v2395
    %3083 = vmatpush2.bf16.msra.mxu0 %v2394
    %3084 = vmatprep.subr.bf16.mxu0 %v2391
    %3085 = vmatpush2.bf16.msra.mxu0 %v2390
    %3086 = vmatprep.subr.bf16.mxu0 %v2387
    %3087 = vmatpush2.bf16.msra.mxu0 %v2386
    %3088 = vmatprep.subr.bf16.mxu0 %v2383
    %3089 = vmatpush2.bf16.msra.mxu0 %v2382
    %3090 = vmatprep.subr.bf16.mxu0 %v2379
    %3091 = vmatpush2.bf16.msra.mxu0 %v2378
    %3092 = vmatprep.subr.bf16.mxu0 %v2375
    %3093 = vmatpush2.bf16.msra.mxu0 %v2374
    %3094 = vmatprep.subr.bf16.mxu0 %v2371
    %3095 = vmatpush2.bf16.msra.mxu0 %v2370
    %3096 = vmatprep.mubr.bf16.mxu0 %v539
    %3097 = vmatmul.mubr.bf16.gmra.mxu0 %v538
    %v3098 = vpop.f32.mrf.mxu0
    %v3099 = vadd.f32 %v3056, %v3098
    %v3100 = vpop.f32.mrf.mxu0
    %v3101 = vadd.f32 %v3058, %v3100
    %v3102 = vpop.f32.mrf.mxu0
    %v3103 = vadd.f32 %v3060, %v3102
    %v3104 = vpop.f32.mrf.mxu0
    %v3105 = vadd.f32 %v3062, %v3104
    %3106 = vdwg.mxu0
    %3107 = vmatprep.subr.bf16.mxu0 %v2431
    %3108 = vmatpush1.bf16.msra.mxu0 %v2430
    %3109 = vmatprep.subr.bf16.mxu0 %v2427
    %3110 = vmatpush1.bf16.msra.mxu0 %v2426
    %3111 = vmatprep.subr.bf16.mxu0 %v2423
    %3112 = vmatpush1.bf16.msra.mxu0 %v2422
    %3113 = vmatprep.subr.bf16.mxu0 %v2419
    %3114 = vmatpush1.bf16.msra.mxu0 %v2418
    %3115 = vmatprep.subr.bf16.mxu0 %v2415
    %3116 = vmatpush1.bf16.msra.mxu0 %v2414
    %3117 = vmatprep.subr.bf16.mxu0 %v2411
    %3118 = vmatpush1.bf16.msra.mxu0 %v2410
    %3119 = vmatprep.subr.bf16.mxu0 %v2407
    %3120 = vmatpush1.bf16.msra.mxu0 %v2406
    %3121 = vmatprep.subr.bf16.mxu0 %v2403
    %3122 = vmatpush1.bf16.msra.mxu0 %v2402
    %3123 = vmatprep.subr.bf16.mxu0 %v2463
    %3124 = vmatpush2.bf16.msra.mxu0 %v2462
    %3125 = vmatprep.subr.bf16.mxu0 %v2459
    %3126 = vmatpush2.bf16.msra.mxu0 %v2458
    %3127 = vmatprep.subr.bf16.mxu0 %v2455
    %3128 = vmatpush2.bf16.msra.mxu0 %v2454
    %3129 = vmatprep.subr.bf16.mxu0 %v2451
    %3130 = vmatpush2.bf16.msra.mxu0 %v2450
    %3131 = vmatprep.subr.bf16.mxu0 %v2447
    %3132 = vmatpush2.bf16.msra.mxu0 %v2446
    %3133 = vmatprep.subr.bf16.mxu0 %v2443
    %3134 = vmatpush2.bf16.msra.mxu0 %v2442
    %3135 = vmatprep.subr.bf16.mxu0 %v2439
    %3136 = vmatpush2.bf16.msra.mxu0 %v2438
    %3137 = vmatprep.subr.bf16.mxu0 %v2435
    %3138 = vmatpush2.bf16.msra.mxu0 %v2434
    %3139 = vmatprep.mubr.bf16.mxu0 %v541
    %3140 = vmatmul.mubr.bf16.gmra.mxu0 %v540
    %v3141 = vpop.f32.mrf.mxu0
    %v3142 = vadd.f32 %v3099, %v3141
    %v3143 = vpop.f32.mrf.mxu0
    %v3144 = vadd.f32 %v3101, %v3143
    %v3145 = vpop.f32.mrf.mxu0
    %v3146 = vadd.f32 %v3103, %v3145
    %v3147 = vpop.f32.mrf.mxu0
    %v3148 = vadd.f32 %v3105, %v3147
    %3149 = vdwg.mxu0
    %3150 = vmatprep.subr.bf16.mxu0 %v2495
    %3151 = vmatpush1.bf16.msra.mxu0 %v2494
    %3152 = vmatprep.subr.bf16.mxu0 %v2491
    %3153 = vmatpush1.bf16.msra.mxu0 %v2490
    %3154 = vmatprep.subr.bf16.mxu0 %v2487
    %3155 = vmatpush1.bf16.msra.mxu0 %v2486
    %3156 = vmatprep.subr.bf16.mxu0 %v2483
    %3157 = vmatpush1.bf16.msra.mxu0 %v2482
    %3158 = vmatprep.subr.bf16.mxu0 %v2479
    %3159 = vmatpush1.bf16.msra.mxu0 %v2478
    %3160 = vmatprep.subr.bf16.mxu0 %v2475
    %3161 = vmatpush1.bf16.msra.mxu0 %v2474
    %3162 = vmatprep.subr.bf16.mxu0 %v2471
    %3163 = vmatpush1.bf16.msra.mxu0 %v2470
    %3164 = vmatprep.subr.bf16.mxu0 %v2467
    %3165 = vmatpush1.bf16.msra.mxu0 %v2466
    %3166 = vmatprep.subr.bf16.mxu0 %v2527
    %3167 = vmatpush2.bf16.msra.mxu0 %v2526
    %3168 = vmatprep.subr.bf16.mxu0 %v2523
    %3169 = vmatpush2.bf16.msra.mxu0 %v2522
    %3170 = vmatprep.subr.bf16.mxu0 %v2519
    %3171 = vmatpush2.bf16.msra.mxu0 %v2518
    %3172 = vmatprep.subr.bf16.mxu0 %v2515
    %3173 = vmatpush2.bf16.msra.mxu0 %v2514
    %3174 = vmatprep.subr.bf16.mxu0 %v2511
    %3175 = vmatpush2.bf16.msra.mxu0 %v2510
    %3176 = vmatprep.subr.bf16.mxu0 %v2507
    %3177 = vmatpush2.bf16.msra.mxu0 %v2506
    %3178 = vmatprep.subr.bf16.mxu0 %v2503
    %3179 = vmatpush2.bf16.msra.mxu0 %v2502
    %3180 = vmatprep.subr.bf16.mxu0 %v2499
    %3181 = vmatpush2.bf16.msra.mxu0 %v2498
    %3182 = vmatprep.mubr.bf16.mxu0 %v543
    %3183 = vmatmul.mubr.bf16.gmra.mxu0 %v542
    %v3184 = vpop.f32.mrf.mxu0
    %v3185 = vadd.f32 %v3142, %v3184
    %v3186 = vpop.f32.mrf.mxu0
    %v3187 = vadd.f32 %v3144, %v3186
    %v3188 = vpop.f32.mrf.mxu0
    %v3189 = vadd.f32 %v3146, %v3188
    %v3190 = vpop.f32.mrf.mxu0
    %v3191 = vadd.f32 %v3148, %v3190
    %3192 = vdwg.mxu0
    %3193 = vmatprep.subr.bf16.mxu0 %v2559
    %3194 = vmatpush1.bf16.msra.mxu0 %v2558
    %3195 = vmatprep.subr.bf16.mxu0 %v2555
    %3196 = vmatpush1.bf16.msra.mxu0 %v2554
    %3197 = vmatprep.subr.bf16.mxu0 %v2551
    %3198 = vmatpush1.bf16.msra.mxu0 %v2550
    %3199 = vmatprep.subr.bf16.mxu0 %v2547
    %3200 = vmatpush1.bf16.msra.mxu0 %v2546
    %3201 = vmatprep.subr.bf16.mxu0 %v2543
    %3202 = vmatpush1.bf16.msra.mxu0 %v2542
    %3203 = vmatprep.subr.bf16.mxu0 %v2539
    %3204 = vmatpush1.bf16.msra.mxu0 %v2538
    %3205 = vmatprep.subr.bf16.mxu0 %v2535
    %3206 = vmatpush1.bf16.msra.mxu0 %v2534
    %3207 = vmatprep.subr.bf16.mxu0 %v2531
    %3208 = vmatpush1.bf16.msra.mxu0 %v2530
    %3209 = vmatprep.subr.bf16.mxu0 %v2591
    %3210 = vmatpush2.bf16.msra.mxu0 %v2590
    %3211 = vmatprep.subr.bf16.mxu0 %v2587
    %3212 = vmatpush2.bf16.msra.mxu0 %v2586
    %3213 = vmatprep.subr.bf16.mxu0 %v2583
    %3214 = vmatpush2.bf16.msra.mxu0 %v2582
    %3215 = vmatprep.subr.bf16.mxu0 %v2579
    %3216 = vmatpush2.bf16.msra.mxu0 %v2578
    %3217 = vmatprep.subr.bf16.mxu0 %v2575
    %3218 = vmatpush2.bf16.msra.mxu0 %v2574
    %3219 = vmatprep.subr.bf16.mxu0 %v2571
    %3220 = vmatpush2.bf16.msra.mxu0 %v2570
    %3221 = vmatprep.subr.bf16.mxu0 %v2567
    %3222 = vmatpush2.bf16.msra.mxu0 %v2566
    %3223 = vmatprep.subr.bf16.mxu0 %v2563
    %3224 = vmatpush2.bf16.msra.mxu0 %v2562
    %3225 = vmatprep.mubr.bf16.mxu0 %v545
    %3226 = vmatmul.mubr.bf16.gmra.mxu0 %v544
    %v3227 = vpop.f32.mrf.mxu0
    %v3228 = vadd.f32 %v3185, %v3227
    %v3229 = vpop.f32.mrf.mxu0
    %v3230 = vadd.f32 %v3187, %v3229
    %v3231 = vpop.f32.mrf.mxu0
    %v3232 = vadd.f32 %v3189, %v3231
    %v3233 = vpop.f32.mrf.mxu0
    %v3234 = vadd.f32 %v3191, %v3233
    %3235 = vdwg.mxu0
    %3236 = vmatprep.subr.bf16.mxu0 %v2241
    %3237 = vmatpush1.bf16.msra.mxu0 %v2240
    %3238 = vmatprep.subr.bf16.mxu0 %v2237
    %3239 = vmatpush1.bf16.msra.mxu0 %v2236
    %3240 = vmatprep.subr.bf16.mxu0 %v2233
    %3241 = vmatpush1.bf16.msra.mxu0 %v2232
    %3242 = vmatprep.subr.bf16.mxu0 %v2229
    %3243 = vmatpush1.bf16.msra.mxu0 %v2228
    %3244 = vmatprep.subr.bf16.mxu0 %v2225
    %3245 = vmatpush1.bf16.msra.mxu0 %v2224
    %3246 = vmatprep.subr.bf16.mxu0 %v2221
    %3247 = vmatpush1.bf16.msra.mxu0 %v2220
    %3248 = vmatprep.subr.bf16.mxu0 %v2217
    %3249 = vmatpush1.bf16.msra.mxu0 %v2216
    %3250 = vmatprep.subr.bf16.mxu0 %v2213
    %3251 = vmatpush1.bf16.msra.mxu0 %v2212
    %3252 = vmatprep.subr.bf16.mxu0 %v2273
    %3253 = vmatpush2.bf16.msra.mxu0 %v2272
    %3254 = vmatprep.subr.bf16.mxu0 %v2269
    %3255 = vmatpush2.bf16.msra.mxu0 %v2268
    %3256 = vmatprep.subr.bf16.mxu0 %v2265
    %3257 = vmatpush2.bf16.msra.mxu0 %v2264
    %3258 = vmatprep.subr.bf16.mxu0 %v2261
    %3259 = vmatpush2.bf16.msra.mxu0 %v2260
    %3260 = vmatprep.subr.bf16.mxu0 %v2257
    %3261 = vmatpush2.bf16.msra.mxu0 %v2256
    %3262 = vmatprep.subr.bf16.mxu0 %v2253
    %3263 = vmatpush2.bf16.msra.mxu0 %v2252
    %3264 = vmatprep.subr.bf16.mxu0 %v2249
    %3265 = vmatpush2.bf16.msra.mxu0 %v2248
    %3266 = vmatprep.subr.bf16.mxu0 %v2245
    %3267 = vmatpush2.bf16.msra.mxu0 %v2244
    %3268 = vmatprep.mubr.bf16.mxu0 %v535
    %3269 = vmatmul.mubr.bf16.gmra.mxu0 %v534
    %v3270 = vpop.f32.mrf.mxu0
    %v3271 = vadd.f32 0.0, %v3270
    %v3272 = vpop.f32.mrf.mxu0
    %v3273 = vadd.f32 0.0, %v3272
    %v3274 = vpop.f32.mrf.mxu0
    %v3275 = vadd.f32 0.0, %v3274
    %v3276 = vpop.f32.mrf.mxu0
    %v3277 = vadd.f32 0.0, %v3276
    %3278 = vdwg.mxu0
    %3279 = vmatprep.subr.bf16.mxu0 %v2305
    %3280 = vmatpush1.bf16.msra.mxu0 %v2304
    %3281 = vmatprep.subr.bf16.mxu0 %v2301
    %3282 = vmatpush1.bf16.msra.mxu0 %v2300
    %3283 = vmatprep.subr.bf16.mxu0 %v2297
    %3284 = vmatpush1.bf16.msra.mxu0 %v2296
    %3285 = vmatprep.subr.bf16.mxu0 %v2293
    %3286 = vmatpush1.bf16.msra.mxu0 %v2292
    %3287 = vmatprep.subr.bf16.mxu0 %v2289
    %3288 = vmatpush1.bf16.msra.mxu0 %v2288
    %3289 = vmatprep.subr.bf16.mxu0 %v2285
    %3290 = vmatpush1.bf16.msra.mxu0 %v2284
    %3291 = vmatprep.subr.bf16.mxu0 %v2281
    %3292 = vmatpush1.bf16.msra.mxu0 %v2280
    %3293 = vmatprep.subr.bf16.mxu0 %v2277
    %3294 = vmatpush1.bf16.msra.mxu0 %v2276
    %3295 = vmatprep.subr.bf16.mxu0 %v2337
    %3296 = vmatpush2.bf16.msra.mxu0 %v2336
    %3297 = vmatprep.subr.bf16.mxu0 %v2333
    %3298 = vmatpush2.bf16.msra.mxu0 %v2332
    %3299 = vmatprep.subr.bf16.mxu0 %v2329
    %3300 = vmatpush2.bf16.msra.mxu0 %v2328
    %3301 = vmatprep.subr.bf16.mxu0 %v2325
    %3302 = vmatpush2.bf16.msra.mxu0 %v2324
    %3303 = vmatprep.subr.bf16.mxu0 %v2321
    %3304 = vmatpush2.bf16.msra.mxu0 %v2320
    %3305 = vmatprep.subr.bf16.mxu0 %v2317
    %3306 = vmatpush2.bf16.msra.mxu0 %v2316
    %3307 = vmatprep.subr.bf16.mxu0 %v2313
    %3308 = vmatpush2.bf16.msra.mxu0 %v2312
    %3309 = vmatprep.subr.bf16.mxu0 %v2309
    %3310 = vmatpush2.bf16.msra.mxu0 %v2308
    %3311 = vmatprep.mubr.bf16.mxu0 %v537
    %3312 = vmatmul.mubr.bf16.gmra.mxu0 %v536
    %v3313 = vpop.f32.mrf.mxu0
    %v3314 = vadd.f32 %v3271, %v3313
    %v3315 = vpop.f32.mrf.mxu0
    %v3316 = vadd.f32 %v3273, %v3315
    %v3317 = vpop.f32.mrf.mxu0
    %v3318 = vadd.f32 %v3275, %v3317
    %v3319 = vpop.f32.mrf.mxu0
    %v3320 = vadd.f32 %v3277, %v3319
    %3321 = vdwg.mxu0
    %3322 = vmatprep.subr.bf16.mxu0 %v2369
    %3323 = vmatpush1.bf16.msra.mxu0 %v2368
    %3324 = vmatprep.subr.bf16.mxu0 %v2365
    %3325 = vmatpush1.bf16.msra.mxu0 %v2364
    %3326 = vmatprep.subr.bf16.mxu0 %v2361
    %3327 = vmatpush1.bf16.msra.mxu0 %v2360
    %3328 = vmatprep.subr.bf16.mxu0 %v2357
    %3329 = vmatpush1.bf16.msra.mxu0 %v2356
    %3330 = vmatprep.subr.bf16.mxu0 %v2353
    %3331 = vmatpush1.bf16.msra.mxu0 %v2352
    %3332 = vmatprep.subr.bf16.mxu0 %v2349
    %3333 = vmatpush1.bf16.msra.mxu0 %v2348
    %3334 = vmatprep.subr.bf16.mxu0 %v2345
    %3335 = vmatpush1.bf16.msra.mxu0 %v2344
    %3336 = vmatprep.subr.bf16.mxu0 %v2341
    %3337 = vmatpush1.bf16.msra.mxu0 %v2340
    %3338 = vmatprep.subr.bf16.mxu0 %v2401
    %3339 = vmatpush2.bf16.msra.mxu0 %v2400
    %3340 = vmatprep.subr.bf16.mxu0 %v2397
    %3341 = vmatpush2.bf16.msra.mxu0 %v2396
    %3342 = vmatprep.subr.bf16.mxu0 %v2393
    %3343 = vmatpush2.bf16.msra.mxu0 %v2392
    %3344 = vmatprep.subr.bf16.mxu0 %v2389
    %3345 = vmatpush2.bf16.msra.mxu0 %v2388
    %3346 = vmatprep.subr.bf16.mxu0 %v2385
    %3347 = vmatpush2.bf16.msra.mxu0 %v2384
    %3348 = vmatprep.subr.bf16.mxu0 %v2381
    %3349 = vmatpush2.bf16.msra.mxu0 %v2380
    %3350 = vmatprep.subr.bf16.mxu0 %v2377
    %3351 = vmatpush2.bf16.msra.mxu0 %v2376
    %3352 = vmatprep.subr.bf16.mxu0 %v2373
    %3353 = vmatpush2.bf16.msra.mxu0 %v2372
    %3354 = vmatprep.mubr.bf16.mxu0 %v539
    %3355 = vmatmul.mubr.bf16.gmra.mxu0 %v538
    %v3356 = vpop.f32.mrf.mxu0
    %v3357 = vadd.f32 %v3314, %v3356
    %v3358 = vpop.f32.mrf.mxu0
    %v3359 = vadd.f32 %v3316, %v3358
    %v3360 = vpop.f32.mrf.mxu0
    %v3361 = vadd.f32 %v3318, %v3360
    %v3362 = vpop.f32.mrf.mxu0
    %v3363 = vadd.f32 %v3320, %v3362
    %3364 = vdwg.mxu0
    %3365 = vmatprep.subr.bf16.mxu0 %v2433
    %3366 = vmatpush1.bf16.msra.mxu0 %v2432
    %3367 = vmatprep.subr.bf16.mxu0 %v2429
    %3368 = vmatpush1.bf16.msra.mxu0 %v2428
    %3369 = vmatprep.subr.bf16.mxu0 %v2425
    %3370 = vmatpush1.bf16.msra.mxu0 %v2424
    %3371 = vmatprep.subr.bf16.mxu0 %v2421
    %3372 = vmatpush1.bf16.msra.mxu0 %v2420
    %3373 = vmatprep.subr.bf16.mxu0 %v2417
    %3374 = vmatpush1.bf16.msra.mxu0 %v2416
    %3375 = vmatprep.subr.bf16.mxu0 %v2413
    %3376 = vmatpush1.bf16.msra.mxu0 %v2412
    %3377 = vmatprep.subr.bf16.mxu0 %v2409
    %3378 = vmatpush1.bf16.msra.mxu0 %v2408
    %3379 = vmatprep.subr.bf16.mxu0 %v2405
    %3380 = vmatpush1.bf16.msra.mxu0 %v2404
    %3381 = vmatprep.subr.bf16.mxu0 %v2465
    %3382 = vmatpush2.bf16.msra.mxu0 %v2464
    %3383 = vmatprep.subr.bf16.mxu0 %v2461
    %3384 = vmatpush2.bf16.msra.mxu0 %v2460
    %3385 = vmatprep.subr.bf16.mxu0 %v2457
    %3386 = vmatpush2.bf16.msra.mxu0 %v2456
    %3387 = vmatprep.subr.bf16.mxu0 %v2453
    %3388 = vmatpush2.bf16.msra.mxu0 %v2452
    %3389 = vmatprep.subr.bf16.mxu0 %v2449
    %3390 = vmatpush2.bf16.msra.mxu0 %v2448
    %3391 = vmatprep.subr.bf16.mxu0 %v2445
    %3392 = vmatpush2.bf16.msra.mxu0 %v2444
    %3393 = vmatprep.subr.bf16.mxu0 %v2441
    %3394 = vmatpush2.bf16.msra.mxu0 %v2440
    %3395 = vmatprep.subr.bf16.mxu0 %v2437
    %3396 = vmatpush2.bf16.msra.mxu0 %v2436
    %3397 = vmatprep.mubr.bf16.mxu0 %v541
    %3398 = vmatmul.mubr.bf16.gmra.mxu0 %v540
    %v3399 = vpop.f32.mrf.mxu0
    %v3400 = vadd.f32 %v3357, %v3399
    %v3401 = vpop.f32.mrf.mxu0
    %v3402 = vadd.f32 %v3359, %v3401
    %v3403 = vpop.f32.mrf.mxu0
    %v3404 = vadd.f32 %v3361, %v3403
    %v3405 = vpop.f32.mrf.mxu0
    %v3406 = vadd.f32 %v3363, %v3405
    %3407 = vdwg.mxu0
    %3408 = vmatprep.subr.bf16.mxu0 %v2497
    %3409 = vmatpush1.bf16.msra.mxu0 %v2496
    %3410 = vmatprep.subr.bf16.mxu0 %v2493
    %3411 = vmatpush1.bf16.msra.mxu0 %v2492
    %3412 = vmatprep.subr.bf16.mxu0 %v2489
    %3413 = vmatpush1.bf16.msra.mxu0 %v2488
    %3414 = vmatprep.subr.bf16.mxu0 %v2485
    %3415 = vmatpush1.bf16.msra.mxu0 %v2484
    %3416 = vmatprep.subr.bf16.mxu0 %v2481
    %3417 = vmatpush1.bf16.msra.mxu0 %v2480
    %3418 = vmatprep.subr.bf16.mxu0 %v2477
    %3419 = vmatpush1.bf16.msra.mxu0 %v2476
    %3420 = vmatprep.subr.bf16.mxu0 %v2473
    %3421 = vmatpush1.bf16.msra.mxu0 %v2472
    %3422 = vmatprep.subr.bf16.mxu0 %v2469
    %3423 = vmatpush1.bf16.msra.mxu0 %v2468
    %3424 = vmatprep.subr.bf16.mxu0 %v2529
    %3425 = vmatpush2.bf16.msra.mxu0 %v2528
    %3426 = vmatprep.subr.bf16.mxu0 %v2525
    %3427 = vmatpush2.bf16.msra.mxu0 %v2524
    %3428 = vmatprep.subr.bf16.mxu0 %v2521
    %3429 = vmatpush2.bf16.msra.mxu0 %v2520
    %3430 = vmatprep.subr.bf16.mxu0 %v2517
    %3431 = vmatpush2.bf16.msra.mxu0 %v2516
    %3432 = vmatprep.subr.bf16.mxu0 %v2513
    %3433 = vmatpush2.bf16.msra.mxu0 %v2512
    %3434 = vmatprep.subr.bf16.mxu0 %v2509
    %3435 = vmatpush2.bf16.msra.mxu0 %v2508
    %3436 = vmatprep.subr.bf16.mxu0 %v2505
    %3437 = vmatpush2.bf16.msra.mxu0 %v2504
    %3438 = vmatprep.subr.bf16.mxu0 %v2501
    %3439 = vmatpush2.bf16.msra.mxu0 %v2500
    %3440 = vmatprep.mubr.bf16.mxu0 %v543
    %3441 = vmatmul.mubr.bf16.gmra.mxu0 %v542
    %v3442 = vpop.f32.mrf.mxu0
    %v3443 = vadd.f32 %v3400, %v3442
    %v3444 = vpop.f32.mrf.mxu0
    %v3445 = vadd.f32 %v3402, %v3444
    %v3446 = vpop.f32.mrf.mxu0
    %v3447 = vadd.f32 %v3404, %v3446
    %v3448 = vpop.f32.mrf.mxu0
    %v3449 = vadd.f32 %v3406, %v3448
    %3450 = vdwg.mxu0
    %3451 = vmatprep.subr.bf16.mxu0 %v2561
    %3452 = vmatpush1.bf16.msra.mxu0 %v2560
    %3453 = vmatprep.subr.bf16.mxu0 %v2557
    %3454 = vmatpush1.bf16.msra.mxu0 %v2556
    %3455 = vmatprep.subr.bf16.mxu0 %v2553
    %3456 = vmatpush1.bf16.msra.mxu0 %v2552
    %3457 = vmatprep.subr.bf16.mxu0 %v2549
    %3458 = vmatpush1.bf16.msra.mxu0 %v2548
    %3459 = vmatprep.subr.bf16.mxu0 %v2545
    %3460 = vmatpush1.bf16.msra.mxu0 %v2544
    %3461 = vmatprep.subr.bf16.mxu0 %v2541
    %3462 = vmatpush1.bf16.msra.mxu0 %v2540
    %3463 = vmatprep.subr.bf16.mxu0 %v2537
    %3464 = vmatpush1.bf16.msra.mxu0 %v2536
    %3465 = vmatprep.subr.bf16.mxu0 %v2533
    %3466 = vmatpush1.bf16.msra.mxu0 %v2532
    %3467 = vmatprep.subr.bf16.mxu0 %v2593
    %3468 = vmatpush2.bf16.msra.mxu0 %v2592
    %3469 = vmatprep.subr.bf16.mxu0 %v2589
    %3470 = vmatpush2.bf16.msra.mxu0 %v2588
    %3471 = vmatprep.subr.bf16.mxu0 %v2585
    %3472 = vmatpush2.bf16.msra.mxu0 %v2584
    %3473 = vmatprep.subr.bf16.mxu0 %v2581
    %3474 = vmatpush2.bf16.msra.mxu0 %v2580
    %3475 = vmatprep.subr.bf16.mxu0 %v2577
    %3476 = vmatpush2.bf16.msra.mxu0 %v2576
    %3477 = vmatprep.subr.bf16.mxu0 %v2573
    %3478 = vmatpush2.bf16.msra.mxu0 %v2572
    %3479 = vmatprep.subr.bf16.mxu0 %v2569
    %3480 = vmatpush2.bf16.msra.mxu0 %v2568
    %3481 = vmatprep.subr.bf16.mxu0 %v2565
    %3482 = vmatpush2.bf16.msra.mxu0 %v2564
    %3483 = vmatprep.mubr.bf16.mxu0 %v545
    %3484 = vmatmul.mubr.bf16.gmra.mxu0 %v544
    %v3485 = vpop.f32.mrf.mxu0
    %v3486 = vadd.f32 %v3443, %v3485
    %v3487 = vpop.f32.mrf.mxu0
    %v3488 = vadd.f32 %v3445, %v3487
    %v3489 = vpop.f32.mrf.mxu0
    %v3490 = vadd.f32 %v3447, %v3489
    %v3491 = vpop.f32.mrf.mxu0
    %v3492 = vadd.f32 %v3449, %v3491
    %3493 = vdwg.mxu0
    %v3622 = vunpack.c.l.b16 %v546
    %v3623 = vunpack.c.h.b16 %v546
    %v3624 = vunpack.c.l.b16 %v547
    %v3625 = vunpack.c.h.b16 %v547
    %v3626 = vunpack.c.l.b16 %v548
    %v3627 = vunpack.c.h.b16 %v548
    %v3628 = vunpack.c.l.b16 %v549
    %v3629 = vunpack.c.h.b16 %v549
    %v3630 = vunpack.c.l.b16 %v550
    %v3631 = vunpack.c.h.b16 %v550
    %v3632 = vunpack.c.l.b16 %v551
    %v3633 = vunpack.c.h.b16 %v551
    %v3634 = vunpack.c.l.b16 %v552
    %v3635 = vunpack.c.h.b16 %v552
    %v3636 = vunpack.c.l.b16 %v553
    %v3637 = vunpack.c.h.b16 %v553
    %v3638 = vunpack.c.l.b16 %v554
    %v3639 = vunpack.c.h.b16 %v554
    %v3640 = vunpack.c.l.b16 %v555
    %v3641 = vunpack.c.h.b16 %v555
    %v3642 = vunpack.c.l.b16 %v556
    %v3643 = vunpack.c.h.b16 %v556
    %v3644 = vunpack.c.l.b16 %v557
    %v3645 = vunpack.c.h.b16 %v557
    %v3646 = vunpack.c.l.b16 %v558
    %v3647 = vunpack.c.h.b16 %v558
    %v3648 = vunpack.c.l.b16 %v559
    %v3649 = vunpack.c.h.b16 %v559
    %v3650 = vunpack.c.l.b16 %v560
    %v3651 = vunpack.c.h.b16 %v560
    %v3652 = vunpack.c.l.b16 %v561
    %v3653 = vunpack.c.h.b16 %v561
    %v3654 = vunpack.c.l.b16 %v562
    %v3655 = vunpack.c.h.b16 %v562
    %v3656 = vunpack.c.l.b16 %v563
    %v3657 = vunpack.c.h.b16 %v563
    %v3658 = vunpack.c.l.b16 %v564
    %v3659 = vunpack.c.h.b16 %v564
    %v3660 = vunpack.c.l.b16 %v565
    %v3661 = vunpack.c.h.b16 %v565
    %v3662 = vunpack.c.l.b16 %v566
    %v3663 = vunpack.c.h.b16 %v566
    %v3664 = vunpack.c.l.b16 %v567
    %v3665 = vunpack.c.h.b16 %v567
    %v3666 = vunpack.c.l.b16 %v568
    %v3667 = vunpack.c.h.b16 %v568
    %v3668 = vunpack.c.l.b16 %v569
    %v3669 = vunpack.c.h.b16 %v569
    %v3670 = vunpack.c.l.b16 %v570
    %v3671 = vunpack.c.h.b16 %v570
    %v3672 = vunpack.c.l.b16 %v571
    %v3673 = vunpack.c.h.b16 %v571
    %v3674 = vunpack.c.l.b16 %v572
    %v3675 = vunpack.c.h.b16 %v572
    %v3676 = vunpack.c.l.b16 %v573
    %v3677 = vunpack.c.h.b16 %v573
    %v3678 = vunpack.c.l.b16 %v574
    %v3679 = vunpack.c.h.b16 %v574
    %v3680 = vunpack.c.l.b16 %v575
    %v3681 = vunpack.c.h.b16 %v575
    %v3682 = vunpack.c.l.b16 %v576
    %v3683 = vunpack.c.h.b16 %v576
    %v3684 = vunpack.c.l.b16 %v577
    %v3685 = vunpack.c.h.b16 %v577
    %v3686 = vunpack.c.l.b16 %v578
    %v3687 = vunpack.c.h.b16 %v578
    %v3688 = vunpack.c.l.b16 %v579
    %v3689 = vunpack.c.h.b16 %v579
    %v3690 = vunpack.c.l.b16 %v580
    %v3691 = vunpack.c.h.b16 %v580
    %v3692 = vunpack.c.l.b16 %v581
    %v3693 = vunpack.c.h.b16 %v581
    %v3694 = vunpack.c.l.b16 %v582
    %v3695 = vunpack.c.h.b16 %v582
    %v3696 = vunpack.c.l.b16 %v583
    %v3697 = vunpack.c.h.b16 %v583
    %v3698 = vunpack.c.l.b16 %v584
    %v3699 = vunpack.c.h.b16 %v584
    %v3700 = vunpack.c.l.b16 %v585
    %v3701 = vunpack.c.h.b16 %v585
    %v3702 = vunpack.c.l.b16 %v586
    %v3703 = vunpack.c.h.b16 %v586
    %v3704 = vunpack.c.l.b16 %v587
    %v3705 = vunpack.c.h.b16 %v587
    %v3706 = vunpack.c.l.b16 %v588
    %v3707 = vunpack.c.h.b16 %v588
    %v3708 = vunpack.c.l.b16 %v589
    %v3709 = vunpack.c.h.b16 %v589
    %v3710 = vunpack.c.l.b16 %v590
    %v3711 = vunpack.c.h.b16 %v590
    %v3712 = vunpack.c.l.b16 %v591
    %v3713 = vunpack.c.h.b16 %v591
    %v3714 = vunpack.c.l.b16 %v592
    %v3715 = vunpack.c.h.b16 %v592
    %v3716 = vunpack.c.l.b16 %v593
    %v3717 = vunpack.c.h.b16 %v593
    %v3718 = vunpack.c.l.b16 %v594
    %v3719 = vunpack.c.h.b16 %v594
    %v3720 = vunpack.c.l.b16 %v595
    %v3721 = vunpack.c.h.b16 %v595
    %v3722 = vunpack.c.l.b16 %v596
    %v3723 = vunpack.c.h.b16 %v596
    %v3724 = vunpack.c.l.b16 %v597
    %v3725 = vunpack.c.h.b16 %v597
    %v3726 = vunpack.c.l.b16 %v598
    %v3727 = vunpack.c.h.b16 %v598
    %v3728 = vunpack.c.l.b16 %v599
    %v3729 = vunpack.c.h.b16 %v599
    %v3730 = vunpack.c.l.b16 %v600
    %v3731 = vunpack.c.h.b16 %v600
    %v3732 = vunpack.c.l.b16 %v601
    %v3733 = vunpack.c.h.b16 %v601
    %v3734 = vunpack.c.l.b16 %v602
    %v3735 = vunpack.c.h.b16 %v602
    %v3736 = vunpack.c.l.b16 %v603
    %v3737 = vunpack.c.h.b16 %v603
    %v3738 = vunpack.c.l.b16 %v604
    %v3739 = vunpack.c.h.b16 %v604
    %v3740 = vunpack.c.l.b16 %v605
    %v3741 = vunpack.c.h.b16 %v605
    %v3742 = vunpack.c.l.b16 %v606
    %v3743 = vunpack.c.h.b16 %v606
    %v3744 = vunpack.c.l.b16 %v607
    %v3745 = vunpack.c.h.b16 %v607
    %v3746 = vunpack.c.l.b16 %v608
    %v3747 = vunpack.c.h.b16 %v608
    %v3748 = vunpack.c.l.b16 %v609
    %v3749 = vunpack.c.h.b16 %v609
    %v3750 = vunpack.c.l.b16 %v610
    %v3751 = vunpack.c.h.b16 %v610
    %v3752 = vunpack.c.l.b16 %v611
    %v3753 = vunpack.c.h.b16 %v611
    %v3754 = vunpack.c.l.b16 %v612
    %v3755 = vunpack.c.h.b16 %v612
    %v3756 = vunpack.c.l.b16 %v613
    %v3757 = vunpack.c.h.b16 %v613
    %v3758 = vunpack.c.l.b16 %v614
    %v3759 = vunpack.c.h.b16 %v614
    %v3760 = vunpack.c.l.b16 %v615
    %v3761 = vunpack.c.h.b16 %v615
    %v3762 = vunpack.c.l.b16 %v616
    %v3763 = vunpack.c.h.b16 %v616
    %v3764 = vunpack.c.l.b16 %v617
    %v3765 = vunpack.c.h.b16 %v617
    %v3766 = vunpack.c.l.b16 %v618
    %v3767 = vunpack.c.h.b16 %v618
    %v3768 = vunpack.c.l.b16 %v619
    %v3769 = vunpack.c.h.b16 %v619
    %v3770 = vunpack.c.l.b16 %v620
    %v3771 = vunpack.c.h.b16 %v620
    %v3772 = vunpack.c.l.b16 %v621
    %v3773 = vunpack.c.h.b16 %v621
    %v3774 = vunpack.c.l.b16 %v622
    %v3775 = vunpack.c.h.b16 %v622
    %v3776 = vunpack.c.l.b16 %v623
    %v3777 = vunpack.c.h.b16 %v623
    %v3778 = vunpack.c.l.b16 %v624
    %v3779 = vunpack.c.h.b16 %v624
    %v3780 = vunpack.c.l.b16 %v625
    %v3781 = vunpack.c.h.b16 %v625
    %v3782 = vunpack.c.l.b16 %v626
    %v3783 = vunpack.c.h.b16 %v626
    %v3784 = vunpack.c.l.b16 %v627
    %v3785 = vunpack.c.h.b16 %v627
    %v3786 = vunpack.c.l.b16 %v628
    %v3787 = vunpack.c.h.b16 %v628
    %v3788 = vunpack.c.l.b16 %v629
    %v3789 = vunpack.c.h.b16 %v629
    %v3790 = vunpack.c.l.b16 %v630
    %v3791 = vunpack.c.h.b16 %v630
    %v3792 = vunpack.c.l.b16 %v631
    %v3793 = vunpack.c.h.b16 %v631
    %v3794 = vunpack.c.l.b16 %v632
    %v3795 = vunpack.c.h.b16 %v632
    %v3796 = vunpack.c.l.b16 %v633
    %v3797 = vunpack.c.h.b16 %v633
    %v3798 = vunpack.c.l.b16 %v634
    %v3799 = vunpack.c.h.b16 %v634
    %v3800 = vunpack.c.l.b16 %v635
    %v3801 = vunpack.c.h.b16 %v635
    %v3802 = vunpack.c.l.b16 %v636
    %v3803 = vunpack.c.h.b16 %v636
    %v3804 = vunpack.c.l.b16 %v637
    %v3805 = vunpack.c.h.b16 %v637
    %v3806 = vunpack.c.l.b16 %v638
    %v3807 = vunpack.c.h.b16 %v638
    %v3808 = vunpack.c.l.b16 %v639
    %v3809 = vunpack.c.h.b16 %v639
    %v3810 = vunpack.c.l.b16 %v640
    %v3811 = vunpack.c.h.b16 %v640
    %v3812 = vunpack.c.l.b16 %v641
    %v3813 = vunpack.c.h.b16 %v641
    %v3814 = vunpack.c.l.b16 %v642
    %v3815 = vunpack.c.h.b16 %v642
    %v3816 = vunpack.c.l.b16 %v643
    %v3817 = vunpack.c.h.b16 %v643
    %v3818 = vunpack.c.l.b16 %v644
    %v3819 = vunpack.c.h.b16 %v644
    %v3820 = vunpack.c.l.b16 %v645
    %v3821 = vunpack.c.h.b16 %v645
    %v3822 = vunpack.c.l.b16 %v646
    %v3823 = vunpack.c.h.b16 %v646
    %v3824 = vunpack.c.l.b16 %v647
    %v3825 = vunpack.c.h.b16 %v647
    %v3826 = vunpack.c.l.b16 %v648
    %v3827 = vunpack.c.h.b16 %v648
    %v3828 = vunpack.c.l.b16 %v649
    %v3829 = vunpack.c.h.b16 %v649
    %v3830 = vunpack.c.l.b16 %v650
    %v3831 = vunpack.c.h.b16 %v650
    %v3832 = vunpack.c.l.b16 %v651
    %v3833 = vunpack.c.h.b16 %v651
    %v3834 = vunpack.c.l.b16 %v652
    %v3835 = vunpack.c.h.b16 %v652
    %v3836 = vunpack.c.l.b16 %v653
    %v3837 = vunpack.c.h.b16 %v653
    %v3838 = vunpack.c.l.b16 %v654
    %v3839 = vunpack.c.h.b16 %v654
    %v3840 = vunpack.c.l.b16 %v655
    %v3841 = vunpack.c.h.b16 %v655
    %v3842 = vunpack.c.l.b16 %v656
    %v3843 = vunpack.c.h.b16 %v656
    %v3844 = vunpack.c.l.b16 %v657
    %v3845 = vunpack.c.h.b16 %v657
    %v3846 = vunpack.c.l.b16 %v658
    %v3847 = vunpack.c.h.b16 %v658
    %v3848 = vunpack.c.l.b16 %v659
    %v3849 = vunpack.c.h.b16 %v659
    %v3850 = vunpack.c.l.b16 %v660
    %v3851 = vunpack.c.h.b16 %v660
    %v3852 = vunpack.c.l.b16 %v661
    %v3853 = vunpack.c.h.b16 %v661
    %v3854 = vunpack.c.l.b16 %v662
    %v3855 = vunpack.c.h.b16 %v662
    %v3856 = vunpack.c.l.b16 %v663
    %v3857 = vunpack.c.h.b16 %v663
    %v3858 = vunpack.c.l.b16 %v664
    %v3859 = vunpack.c.h.b16 %v664
    %v3860 = vunpack.c.l.b16 %v665
    %v3861 = vunpack.c.h.b16 %v665
    %v3862 = vunpack.c.l.b16 %v666
    %v3863 = vunpack.c.h.b16 %v666
    %v3864 = vunpack.c.l.b16 %v667
    %v3865 = vunpack.c.h.b16 %v667
    %v3866 = vunpack.c.l.b16 %v668
    %v3867 = vunpack.c.h.b16 %v668
    %v3868 = vunpack.c.l.b16 %v669
    %v3869 = vunpack.c.h.b16 %v669
    %v3870 = vunpack.c.l.b16 %v670
    %v3871 = vunpack.c.h.b16 %v670
    %v3872 = vunpack.c.l.b16 %v671
    %v3873 = vunpack.c.h.b16 %v671
    %v3874 = vunpack.c.l.b16 %v672
    %v3875 = vunpack.c.h.b16 %v672
    %v3876 = vunpack.c.l.b16 %v673
    %v3877 = vunpack.c.h.b16 %v673
    %v3878 = vpack.c.b16 %v3626, %v3622
    %v3879 = vpack.c.b16 %v3627, %v3623
    %v3880 = vpack.c.b16 %v3628, %v3624
    %v3881 = vpack.c.b16 %v3629, %v3625
    %v3882 = vpack.c.b16 %v3634, %v3630
    %v3883 = vpack.c.b16 %v3635, %v3631
    %v3884 = vpack.c.b16 %v3636, %v3632
    %v3885 = vpack.c.b16 %v3637, %v3633
    %v3886 = vpack.c.b16 %v3642, %v3638
    %v3887 = vpack.c.b16 %v3643, %v3639
    %v3888 = vpack.c.b16 %v3644, %v3640
    %v3889 = vpack.c.b16 %v3645, %v3641
    %v3890 = vpack.c.b16 %v3650, %v3646
    %v3891 = vpack.c.b16 %v3651, %v3647
    %v3892 = vpack.c.b16 %v3652, %v3648
    %v3893 = vpack.c.b16 %v3653, %v3649
    %v3894 = vpack.c.b16 %v3658, %v3654
    %v3895 = vpack.c.b16 %v3659, %v3655
    %v3896 = vpack.c.b16 %v3660, %v3656
    %v3897 = vpack.c.b16 %v3661, %v3657
    %v3898 = vpack.c.b16 %v3666, %v3662
    %v3899 = vpack.c.b16 %v3667, %v3663
    %v3900 = vpack.c.b16 %v3668, %v3664
    %v3901 = vpack.c.b16 %v3669, %v3665
    %v3902 = vpack.c.b16 %v3674, %v3670
    %v3903 = vpack.c.b16 %v3675, %v3671
    %v3904 = vpack.c.b16 %v3676, %v3672
    %v3905 = vpack.c.b16 %v3677, %v3673
    %v3906 = vpack.c.b16 %v3682, %v3678
    %v3907 = vpack.c.b16 %v3683, %v3679
    %v3908 = vpack.c.b16 %v3684, %v3680
    %v3909 = vpack.c.b16 %v3685, %v3681
    %v3910 = vpack.c.b16 %v3690, %v3686
    %v3911 = vpack.c.b16 %v3691, %v3687
    %v3912 = vpack.c.b16 %v3692, %v3688
    %v3913 = vpack.c.b16 %v3693, %v3689
    %v3914 = vpack.c.b16 %v3698, %v3694
    %v3915 = vpack.c.b16 %v3699, %v3695
    %v3916 = vpack.c.b16 %v3700, %v3696
    %v3917 = vpack.c.b16 %v3701, %v3697
    %v3918 = vpack.c.b16 %v3706, %v3702
    %v3919 = vpack.c.b16 %v3707, %v3703
    %v3920 = vpack.c.b16 %v3708, %v3704
    %v3921 = vpack.c.b16 %v3709, %v3705
    %v3922 = vpack.c.b16 %v3714, %v3710
    %v3923 = vpack.c.b16 %v3715, %v3711
    %v3924 = vpack.c.b16 %v3716, %v3712
    %v3925 = vpack.c.b16 %v3717, %v3713
    %v3926 = vpack.c.b16 %v3722, %v3718
    %v3927 = vpack.c.b16 %v3723, %v3719
    %v3928 = vpack.c.b16 %v3724, %v3720
    %v3929 = vpack.c.b16 %v3725, %v3721
    %v3930 = vpack.c.b16 %v3730, %v3726
    %v3931 = vpack.c.b16 %v3731, %v3727
    %v3932 = vpack.c.b16 %v3732, %v3728
    %v3933 = vpack.c.b16 %v3733, %v3729
    %v3934 = vpack.c.b16 %v3738, %v3734
    %v3935 = vpack.c.b16 %v3739, %v3735
    %v3936 = vpack.c.b16 %v3740, %v3736
    %v3937 = vpack.c.b16 %v3741, %v3737
    %v3938 = vpack.c.b16 %v3746, %v3742
    %v3939 = vpack.c.b16 %v3747, %v3743
    %v3940 = vpack.c.b16 %v3748, %v3744
    %v3941 = vpack.c.b16 %v3749, %v3745
    %v3942 = vpack.c.b16 %v3754, %v3750
    %v3943 = vpack.c.b16 %v3755, %v3751
    %v3944 = vpack.c.b16 %v3756, %v3752
    %v3945 = vpack.c.b16 %v3757, %v3753
    %v3946 = vpack.c.b16 %v3762, %v3758
    %v3947 = vpack.c.b16 %v3763, %v3759
    %v3948 = vpack.c.b16 %v3764, %v3760
    %v3949 = vpack.c.b16 %v3765, %v3761
    %v3950 = vpack.c.b16 %v3770, %v3766
    %v3951 = vpack.c.b16 %v3771, %v3767
    %v3952 = vpack.c.b16 %v3772, %v3768
    %v3953 = vpack.c.b16 %v3773, %v3769
    %v3954 = vpack.c.b16 %v3778, %v3774
    %v3955 = vpack.c.b16 %v3779, %v3775
    %v3956 = vpack.c.b16 %v3780, %v3776
    %v3957 = vpack.c.b16 %v3781, %v3777
    %v3958 = vpack.c.b16 %v3786, %v3782
    %v3959 = vpack.c.b16 %v3787, %v3783
    %v3960 = vpack.c.b16 %v3788, %v3784
    %v3961 = vpack.c.b16 %v3789, %v3785
    %v3962 = vpack.c.b16 %v3794, %v3790
    %v3963 = vpack.c.b16 %v3795, %v3791
    %v3964 = vpack.c.b16 %v3796, %v3792
    %v3965 = vpack.c.b16 %v3797, %v3793
    %v3966 = vpack.c.b16 %v3802, %v3798
    %v3967 = vpack.c.b16 %v3803, %v3799
    %v3968 = vpack.c.b16 %v3804, %v3800
    %v3969 = vpack.c.b16 %v3805, %v3801
    %v3970 = vpack.c.b16 %v3810, %v3806
    %v3971 = vpack.c.b16 %v3811, %v3807
    %v3972 = vpack.c.b16 %v3812, %v3808
    %v3973 = vpack.c.b16 %v3813, %v3809
    %v3974 = vpack.c.b16 %v3818, %v3814
    %v3975 = vpack.c.b16 %v3819, %v3815
    %v3976 = vpack.c.b16 %v3820, %v3816
    %v3977 = vpack.c.b16 %v3821, %v3817
    %v3978 = vpack.c.b16 %v3826, %v3822
    %v3979 = vpack.c.b16 %v3827, %v3823
    %v3980 = vpack.c.b16 %v3828, %v3824
    %v3981 = vpack.c.b16 %v3829, %v3825
    %v3982 = vpack.c.b16 %v3834, %v3830
    %v3983 = vpack.c.b16 %v3835, %v3831
    %v3984 = vpack.c.b16 %v3836, %v3832
    %v3985 = vpack.c.b16 %v3837, %v3833
    %v3986 = vpack.c.b16 %v3842, %v3838
    %v3987 = vpack.c.b16 %v3843, %v3839
    %v3988 = vpack.c.b16 %v3844, %v3840
    %v3989 = vpack.c.b16 %v3845, %v3841
    %v3990 = vpack.c.b16 %v3850, %v3846
    %v3991 = vpack.c.b16 %v3851, %v3847
    %v3992 = vpack.c.b16 %v3852, %v3848
    %v3993 = vpack.c.b16 %v3853, %v3849
    %v3994 = vpack.c.b16 %v3858, %v3854
    %v3995 = vpack.c.b16 %v3859, %v3855
    %v3996 = vpack.c.b16 %v3860, %v3856
    %v3997 = vpack.c.b16 %v3861, %v3857
    %v3998 = vpack.c.b16 %v3866, %v3862
    %v3999 = vpack.c.b16 %v3867, %v3863
    %v4000 = vpack.c.b16 %v3868, %v3864
    %v4001 = vpack.c.b16 %v3869, %v3865
    %v4002 = vpack.c.b16 %v3874, %v3870
    %v4003 = vpack.c.b16 %v3875, %v3871
    %v4004 = vpack.c.b16 %v3876, %v3872
    %v4005 = vpack.c.b16 %v3877, %v3873
    %4134 = vmatprep.subr.bf16.mxu0 %v3907
    %4135 = vmatpush1.bf16.msra.mxu0 %v3906
    %4136 = vmatprep.subr.bf16.mxu0 %v3903
    %4137 = vmatpush1.bf16.msra.mxu0 %v3902
    %4138 = vmatprep.subr.bf16.mxu0 %v3899
    %4139 = vmatpush1.bf16.msra.mxu0 %v3898
    %4140 = vmatprep.subr.bf16.mxu0 %v3895
    %4141 = vmatpush1.bf16.msra.mxu0 %v3894
    %4142 = vmatprep.subr.bf16.mxu0 %v3891
    %4143 = vmatpush1.bf16.msra.mxu0 %v3890
    %4144 = vmatprep.subr.bf16.mxu0 %v3887
    %4145 = vmatpush1.bf16.msra.mxu0 %v3886
    %4146 = vmatprep.subr.bf16.mxu0 %v3883
    %4147 = vmatpush1.bf16.msra.mxu0 %v3882
    %4148 = vmatprep.subr.bf16.mxu0 %v3879
    %4149 = vmatpush1.bf16.msra.mxu0 %v3878
    %4150 = vmatprep.subr.bf16.mxu0 %v3939
    %4151 = vmatpush2.bf16.msra.mxu0 %v3938
    %4152 = vmatprep.subr.bf16.mxu0 %v3935
    %4153 = vmatpush2.bf16.msra.mxu0 %v3934
    %4154 = vmatprep.subr.bf16.mxu0 %v3931
    %4155 = vmatpush2.bf16.msra.mxu0 %v3930
    %4156 = vmatprep.subr.bf16.mxu0 %v3927
    %4157 = vmatpush2.bf16.msra.mxu0 %v3926
    %4158 = vmatprep.subr.bf16.mxu0 %v3923
    %4159 = vmatpush2.bf16.msra.mxu0 %v3922
    %4160 = vmatprep.subr.bf16.mxu0 %v3919
    %4161 = vmatpush2.bf16.msra.mxu0 %v3918
    %4162 = vmatprep.subr.bf16.mxu0 %v3915
    %4163 = vmatpush2.bf16.msra.mxu0 %v3914
    %4164 = vmatprep.subr.bf16.mxu0 %v3911
    %4165 = vmatpush2.bf16.msra.mxu0 %v3910
    %4166 = vmatprep.mubr.bf16.mxu0 %v507
    %4167 = vmatmul.mubr.bf16.gmra.mxu0 %v506
    %v4168 = vpop.f32.mrf.mxu0
    %v4169 = vadd.f32 %v3228, %v4168
    %v4170 = vpop.f32.mrf.mxu0
    %v4171 = vadd.f32 %v3230, %v4170
    %v4172 = vpop.f32.mrf.mxu0
    %v4173 = vadd.f32 %v3232, %v4172
    %v4174 = vpop.f32.mrf.mxu0
    %v4175 = vadd.f32 %v3234, %v4174
    %4176 = vdwg.mxu0
    %4177 = vmatprep.subr.bf16.mxu0 %v3971
    %4178 = vmatpush1.bf16.msra.mxu0 %v3970
    %4179 = vmatprep.subr.bf16.mxu0 %v3967
    %4180 = vmatpush1.bf16.msra.mxu0 %v3966
    %4181 = vmatprep.subr.bf16.mxu0 %v3963
    %4182 = vmatpush1.bf16.msra.mxu0 %v3962
    %4183 = vmatprep.subr.bf16.mxu0 %v3959
    %4184 = vmatpush1.bf16.msra.mxu0 %v3958
    %4185 = vmatprep.subr.bf16.mxu0 %v3955
    %4186 = vmatpush1.bf16.msra.mxu0 %v3954
    %4187 = vmatprep.subr.bf16.mxu0 %v3951
    %4188 = vmatpush1.bf16.msra.mxu0 %v3950
    %4189 = vmatprep.subr.bf16.mxu0 %v3947
    %4190 = vmatpush1.bf16.msra.mxu0 %v3946
    %4191 = vmatprep.subr.bf16.mxu0 %v3943
    %4192 = vmatpush1.bf16.msra.mxu0 %v3942
    %4193 = vmatprep.subr.bf16.mxu0 %v4003
    %4194 = vmatpush2.bf16.msra.mxu0 %v4002
    %4195 = vmatprep.subr.bf16.mxu0 %v3999
    %4196 = vmatpush2.bf16.msra.mxu0 %v3998
    %4197 = vmatprep.subr.bf16.mxu0 %v3995
    %4198 = vmatpush2.bf16.msra.mxu0 %v3994
    %4199 = vmatprep.subr.bf16.mxu0 %v3991
    %4200 = vmatpush2.bf16.msra.mxu0 %v3990
    %4201 = vmatprep.subr.bf16.mxu0 %v3987
    %4202 = vmatpush2.bf16.msra.mxu0 %v3986
    %4203 = vmatprep.subr.bf16.mxu0 %v3983
    %4204 = vmatpush2.bf16.msra.mxu0 %v3982
    %4205 = vmatprep.subr.bf16.mxu0 %v3979
    %4206 = vmatpush2.bf16.msra.mxu0 %v3978
    %4207 = vmatprep.subr.bf16.mxu0 %v3975
    %4208 = vmatpush2.bf16.msra.mxu0 %v3974
    %4209 = vmatprep.mubr.bf16.mxu0 %v509
    %4210 = vmatmul.mubr.bf16.gmra.mxu0 %v508
    %v4211 = vpop.f32.mrf.mxu0
    %v4212 = vadd.f32 %v4169, %v4211
    %v4213 = vpop.f32.mrf.mxu0
    %v4214 = vadd.f32 %v4171, %v4213
    %v4215 = vpop.f32.mrf.mxu0
    %v4216 = vadd.f32 %v4173, %v4215
    %v4217 = vpop.f32.mrf.mxu0
    %v4218 = vadd.f32 %v4175, %v4217
    %4219 = vdwg.mxu0
    %4220 = vmatprep.subr.bf16.mxu0 %v3909
    %4221 = vmatpush1.bf16.msra.mxu0 %v3908
    %4222 = vmatprep.subr.bf16.mxu0 %v3905
    %4223 = vmatpush1.bf16.msra.mxu0 %v3904
    %4224 = vmatprep.subr.bf16.mxu0 %v3901
    %4225 = vmatpush1.bf16.msra.mxu0 %v3900
    %4226 = vmatprep.subr.bf16.mxu0 %v3897
    %4227 = vmatpush1.bf16.msra.mxu0 %v3896
    %4228 = vmatprep.subr.bf16.mxu0 %v3893
    %4229 = vmatpush1.bf16.msra.mxu0 %v3892
    %4230 = vmatprep.subr.bf16.mxu0 %v3889
    %4231 = vmatpush1.bf16.msra.mxu0 %v3888
    %4232 = vmatprep.subr.bf16.mxu0 %v3885
    %4233 = vmatpush1.bf16.msra.mxu0 %v3884
    %4234 = vmatprep.subr.bf16.mxu0 %v3881
    %4235 = vmatpush1.bf16.msra.mxu0 %v3880
    %4236 = vmatprep.subr.bf16.mxu0 %v3941
    %4237 = vmatpush2.bf16.msra.mxu0 %v3940
    %4238 = vmatprep.subr.bf16.mxu0 %v3937
    %4239 = vmatpush2.bf16.msra.mxu0 %v3936
    %4240 = vmatprep.subr.bf16.mxu0 %v3933
    %4241 = vmatpush2.bf16.msra.mxu0 %v3932
    %4242 = vmatprep.subr.bf16.mxu0 %v3929
    %4243 = vmatpush2.bf16.msra.mxu0 %v3928
    %4244 = vmatprep.subr.bf16.mxu0 %v3925
    %4245 = vmatpush2.bf16.msra.mxu0 %v3924
    %4246 = vmatprep.subr.bf16.mxu0 %v3921
    %4247 = vmatpush2.bf16.msra.mxu0 %v3920
    %4248 = vmatprep.subr.bf16.mxu0 %v3917
    %4249 = vmatpush2.bf16.msra.mxu0 %v3916
    %4250 = vmatprep.subr.bf16.mxu0 %v3913
    %4251 = vmatpush2.bf16.msra.mxu0 %v3912
    %4252 = vmatprep.mubr.bf16.mxu0 %v507
    %4253 = vmatmul.mubr.bf16.gmra.mxu0 %v506
    %v4254 = vpop.f32.mrf.mxu0
    %v4255 = vadd.f32 %v3486, %v4254
    %v4256 = vpop.f32.mrf.mxu0
    %v4257 = vadd.f32 %v3488, %v4256
    %v4258 = vpop.f32.mrf.mxu0
    %v4259 = vadd.f32 %v3490, %v4258
    %v4260 = vpop.f32.mrf.mxu0
    %v4261 = vadd.f32 %v3492, %v4260
    %4262 = vdwg.mxu0
    %4263 = vmatprep.subr.bf16.mxu0 %v3973
    %4264 = vmatpush1.bf16.msra.mxu0 %v3972
    %4265 = vmatprep.subr.bf16.mxu0 %v3969
    %4266 = vmatpush1.bf16.msra.mxu0 %v3968
    %4267 = vmatprep.subr.bf16.mxu0 %v3965
    %4268 = vmatpush1.bf16.msra.mxu0 %v3964
    %4269 = vmatprep.subr.bf16.mxu0 %v3961
    %4270 = vmatpush1.bf16.msra.mxu0 %v3960
    %4271 = vmatprep.subr.bf16.mxu0 %v3957
    %4272 = vmatpush1.bf16.msra.mxu0 %v3956
    %4273 = vmatprep.subr.bf16.mxu0 %v3953
    %4274 = vmatpush1.bf16.msra.mxu0 %v3952
    %4275 = vmatprep.subr.bf16.mxu0 %v3949
    %4276 = vmatpush1.bf16.msra.mxu0 %v3948
    %4277 = vmatprep.subr.bf16.mxu0 %v3945
    %4278 = vmatpush1.bf16.msra.mxu0 %v3944
    %4279 = vmatprep.subr.bf16.mxu0 %v4005
    %4280 = vmatpush2.bf16.msra.mxu0 %v4004
    %4281 = vmatprep.subr.bf16.mxu0 %v4001
    %4282 = vmatpush2.bf16.msra.mxu0 %v4000
    %4283 = vmatprep.subr.bf16.mxu0 %v3997
    %4284 = vmatpush2.bf16.msra.mxu0 %v3996
    %4285 = vmatprep.subr.bf16.mxu0 %v3993
    %4286 = vmatpush2.bf16.msra.mxu0 %v3992
    %4287 = vmatprep.subr.bf16.mxu0 %v3989
    %4288 = vmatpush2.bf16.msra.mxu0 %v3988
    %4289 = vmatprep.subr.bf16.mxu0 %v3985
    %4290 = vmatpush2.bf16.msra.mxu0 %v3984
    %4291 = vmatprep.subr.bf16.mxu0 %v3981
    %4292 = vmatpush2.bf16.msra.mxu0 %v3980
    %4293 = vmatprep.subr.bf16.mxu0 %v3977
    %4294 = vmatpush2.bf16.msra.mxu0 %v3976
    %4295 = vmatprep.mubr.bf16.mxu0 %v509
    %4296 = vmatmul.mubr.bf16.gmra.mxu0 %v508
    %v4297 = vpop.f32.mrf.mxu0
    %v4298 = vadd.f32 %v4255, %v4297
    %v4299 = vpop.f32.mrf.mxu0
    %v4300 = vadd.f32 %v4257, %v4299
    %v4301 = vpop.f32.mrf.mxu0
    %v4302 = vadd.f32 %v4259, %v4301
    %v4303 = vpop.f32.mrf.mxu0
    %v4304 = vadd.f32 %v4261, %v4303
    %4305 = vdwg.mxu0
    %v4306 = vld [vmem:[#allocation15] sm:$0xf]
    %v4308 = vlaneseq
    %v4309 = vshrl.u32 %v4308, 7
    %v4310 = vsub.s32 0, %v4309
    %v4311 = vrot.slane %v4306, %v4310
    %v4312 = vlaneseq
    %v4313 = vshrl.u32 %v4312, 7
    %v4314 = vsub.s32 1, %v4313
    %v4315 = vrot.slane %v4306, %v4314
    %v4316 = vlaneseq
    %v4317 = vshrl.u32 %v4316, 7
    %v4318 = vsub.s32 2, %v4317
    %v4319 = vrot.slane %v4306, %v4318
    %v4320 = vlaneseq
    %v4321 = vshrl.u32 %v4320, 7
    %v4322 = vsub.s32 3, %v4321
    %v4323 = vrot.slane %v4306, %v4322
    %v4328 = vadd.f32 %v4212, %v4311
    %v4329 = vadd.f32 %v4214, %v4315
    %v4330 = vadd.f32 %v4298, %v4319
    %v4331 = vadd.f32 %v4300, %v4323
    %v4332 = vadd.f32 %v4216, %v4311
    %v4333 = vadd.f32 %v4218, %v4315
    %v4334 = vadd.f32 %v4302, %v4319
    %v4335 = vadd.f32 %v4304, %v4323
    %v4336 = vld [vmem:[#allocation16] sm:$0xf]
    %v4337 = vld [vmem:[#allocation18] sm:$0xf]
    %v4338 = vadd.f32 %v4328, %v4329
    %v4339 = vadd.f32 %v4338, %v4330
    %v4340 = vadd.f32 %v4339, %v4331
    %4341 = vadd.xlane.f32.xlu0 %v4340
    %v4342 = vpop.xlane.xlu0 %4341
    %v4343 = vadd.f32 %v4332, %v4333
    %v4344 = vadd.f32 %v4343, %v4334
    %v4345 = vadd.f32 %v4344, %v4335
    %4346 = vadd.xlane.f32.xlu0 %v4345
    %v4347 = vpop.xlane.xlu0 %4346
    %v4348 = vrcp.pop 512.0
    %v4349 = vmul.f32 %v4342, %v4348
    %v4350 = vmul.f32 %v4347, %v4348
    %v4351 = vsub.f32 %v4328, %v4349
    %v4352 = vsub.f32 %v4329, %v4349
    %v4353 = vsub.f32 %v4330, %v4349
    %v4354 = vsub.f32 %v4331, %v4349
    %v4355 = vsub.f32 %v4332, %v4350
    %v4356 = vsub.f32 %v4333, %v4350
    %v4357 = vsub.f32 %v4334, %v4350
    %v4358 = vsub.f32 %v4335, %v4350
    %v4359 = vmul.f32 %v4351, %v4351
    %v4360 = vmul.f32 %v4352, %v4352
    %v4361 = vmul.f32 %v4353, %v4353
    %v4362 = vmul.f32 %v4354, %v4354
    %v4363 = vmul.f32 %v4355, %v4355
    %v4364 = vmul.f32 %v4356, %v4356
    %v4365 = vmul.f32 %v4357, %v4357
    %v4366 = vmul.f32 %v4358, %v4358
    %v4367 = vadd.f32 %v4359, %v4360
    %v4368 = vadd.f32 %v4367, %v4361
    %v4369 = vadd.f32 %v4368, %v4362
    %4370 = vadd.xlane.f32.xlu0 %v4369
    %v4371 = vpop.xlane.xlu0 %4370
    %v4372 = vadd.f32 %v4363, %v4364
    %v4373 = vadd.f32 %v4372, %v4365
    %v4374 = vadd.f32 %v4373, %v4366
    %4375 = vadd.xlane.f32.xlu0 %v4374
    %v4376 = vpop.xlane.xlu0 %4375
    %v4377 = vmul.f32 %v4371, %v4348
    %v4378 = vmul.f32 %v4376, %v4348
    %v4379 = vadd.f32 %v4377, 1e-05
    %v4380 = vadd.f32 %v4378, 1e-05
    %v4381 = vrsqrt.pop %v4379
    %v4382 = vrsqrt.pop %v4380
    %v4383 = vmul.f32 %v4351, %v4381
    %v4384 = vmul.f32 %v4352, %v4381
    %v4385 = vmul.f32 %v4353, %v4381
    %v4386 = vmul.f32 %v4354, %v4381
    %v4387 = vmul.f32 %v4355, %v4382
    %v4388 = vmul.f32 %v4356, %v4382
    %v4389 = vmul.f32 %v4357, %v4382
    %v4390 = vmul.f32 %v4358, %v4382
    %v4392 = vlaneseq
    %v4393 = vshrl.u32 %v4392, 7
    %v4394 = vsub.s32 0, %v4393
    %v4395 = vrot.slane %v4336, %v4394
    %v4396 = vlaneseq
    %v4397 = vshrl.u32 %v4396, 7
    %v4398 = vsub.s32 1, %v4397
    %v4399 = vrot.slane %v4336, %v4398
    %v4400 = vlaneseq
    %v4401 = vshrl.u32 %v4400, 7
    %v4402 = vsub.s32 2, %v4401
    %v4403 = vrot.slane %v4336, %v4402
    %v4404 = vlaneseq
    %v4405 = vshrl.u32 %v4404, 7
    %v4406 = vsub.s32 3, %v4405
    %v4407 = vrot.slane %v4336, %v4406
    %v4412 = vmul.f32 %v4383, %v4395
    %v4413 = vmul.f32 %v4384, %v4399
    %v4414 = vmul.f32 %v4385, %v4403
    %v4415 = vmul.f32 %v4386, %v4407
    %v4416 = vmul.f32 %v4387, %v4395
    %v4417 = vmul.f32 %v4388, %v4399
    %v4418 = vmul.f32 %v4389, %v4403
    %v4419 = vmul.f32 %v4390, %v4407
    %v4421 = vlaneseq
    %v4422 = vshrl.u32 %v4421, 7
    %v4423 = vsub.s32 0, %v4422
    %v4424 = vrot.slane %v4337, %v4423
    %v4425 = vlaneseq
    %v4426 = vshrl.u32 %v4425, 7
    %v4427 = vsub.s32 1, %v4426
    %v4428 = vrot.slane %v4337, %v4427
    %v4429 = vlaneseq
    %v4430 = vshrl.u32 %v4429, 7
    %v4431 = vsub.s32 2, %v4430
    %v4432 = vrot.slane %v4337, %v4431
    %v4433 = vlaneseq
    %v4434 = vshrl.u32 %v4433, 7
    %v4435 = vsub.s32 3, %v4434
    %v4436 = vrot.slane %v4337, %v4435
    %v4441 = vadd.f32 %v4412, %v4424
    %v4442 = vadd.f32 %v4413, %v4428
    %v4443 = vadd.f32 %v4414, %v4432
    %v4444 = vadd.f32 %v4415, %v4436
    %v4445 = vadd.f32 %v4416, %v4424
    %v4446 = vadd.f32 %v4417, %v4428
    %v4447 = vadd.f32 %v4418, %v4432
    %v4448 = vadd.f32 %v4419, %v4436
    %v4449 = vmax.f32 %v4441, 0.0
    %v4450 = vmax.f32 %v4442, 0.0
    %v4451 = vmax.f32 %v4443, 0.0
    %v4452 = vmax.f32 %v4444, 0.0
    %v4453 = vmax.f32 %v4445, 0.0
    %v4454 = vmax.f32 %v4446, 0.0
    %v4455 = vmax.f32 %v4447, 0.0
    %v4456 = vmax.f32 %v4448, 0.0
    %v4457 = vpack.c.bf16 %v4453, %v4449
    %v4458 = vpack.c.bf16 %v4454, %v4450
    %v4459 = vpack.c.bf16 %v4455, %v4451
    %v4460 = vpack.c.bf16 %v4456, %v4452
    %v4461 = vld [vmem:[#allocation19] sm:$0xff]
    %v4462 = vld [vmem:[#allocation19 + $0x8] sm:$0xff]
    %v4463 = vld [vmem:[#allocation19 + $0x10] sm:$0xff]
    %v4464 = vld [vmem:[#allocation19 + $0x18] sm:$0xff]
    %v4465 = vld [vmem:[#allocation19 + $0x20] sm:$0xff]
    %v4466 = vld [vmem:[#allocation19 + $0x28] sm:$0xff]
    %v4467 = vld [vmem:[#allocation19 + $0x30] sm:$0xff]
    %v4468 = vld [vmem:[#allocation19 + $0x38] sm:$0xff]
    %v4469 = vld [vmem:[#allocation19 + $0x40] sm:$0xff]
    %v4470 = vld [vmem:[#allocation19 + $0x48] sm:$0xff]
    %v4471 = vld [vmem:[#allocation19 + $0x50] sm:$0xff]
    %v4472 = vld [vmem:[#allocation19 + $0x58] sm:$0xff]
    %v4473 = vld [vmem:[#allocation19 + $0x60] sm:$0xff]
    %v4474 = vld [vmem:[#allocation19 + $0x68] sm:$0xff]
    %v4475 = vld [vmem:[#allocation19 + $0x70] sm:$0xff]
    %v4476 = vld [vmem:[#allocation19 + $0x78] sm:$0xff]
    %v4477 = vld [vmem:[#allocation19 + $0x80] sm:$0xff]
    %v4478 = vld [vmem:[#allocation19 + $0x88] sm:$0xff]
    %v4479 = vld [vmem:[#allocation19 + $0x90] sm:$0xff]
    %v4480 = vld [vmem:[#allocation19 + $0x98] sm:$0xff]
    %v4481 = vld [vmem:[#allocation19 + $0xa0] sm:$0xff]
    %v4482 = vld [vmem:[#allocation19 + $0xa8] sm:$0xff]
    %v4483 = vld [vmem:[#allocation19 + $0xb0] sm:$0xff]
    %v4484 = vld [vmem:[#allocation19 + $0xb8] sm:$0xff]
    %v4485 = vld [vmem:[#allocation19 + $0xc0] sm:$0xff]
    %v4486 = vld [vmem:[#allocation19 + $0xc8] sm:$0xff]
    %v4487 = vld [vmem:[#allocation19 + $0xd0] sm:$0xff]
    %v4488 = vld [vmem:[#allocation19 + $0xd8] sm:$0xff]
    %v4489 = vld [vmem:[#allocation19 + $0xe0] sm:$0xff]
    %v4490 = vld [vmem:[#allocation19 + $0xe8] sm:$0xff]
    %v4491 = vld [vmem:[#allocation19 + $0xf0] sm:$0xff]
    %v4492 = vld [vmem:[#allocation19 + $0xf8] sm:$0xff]
    %v4493 = vld [vmem:[#allocation19 + $0x100] sm:$0xff]
    %v4494 = vld [vmem:[#allocation19 + $0x108] sm:$0xff]
    %v4495 = vld [vmem:[#allocation19 + $0x110] sm:$0xff]
    %v4496 = vld [vmem:[#allocation19 + $0x118] sm:$0xff]
    %v4497 = vld [vmem:[#allocation19 + $0x120] sm:$0xff]
    %v4498 = vld [vmem:[#allocation19 + $0x128] sm:$0xff]
    %v4499 = vld [vmem:[#allocation19 + $0x130] sm:$0xff]
    %v4500 = vld [vmem:[#allocation19 + $0x138] sm:$0xff]
    %v4501 = vld [vmem:[#allocation19 + $0x140] sm:$0xff]
    %v4502 = vld [vmem:[#allocation19 + $0x148] sm:$0xff]
    %v4503 = vld [vmem:[#allocation19 + $0x150] sm:$0xff]
    %v4504 = vld [vmem:[#allocation19 + $0x158] sm:$0xff]
    %v4505 = vld [vmem:[#allocation19 + $0x160] sm:$0xff]
    %v4506 = vld [vmem:[#allocation19 + $0x168] sm:$0xff]
    %v4507 = vld [vmem:[#allocation19 + $0x170] sm:$0xff]
    %v4508 = vld [vmem:[#allocation19 + $0x178] sm:$0xff]
    %v4509 = vld [vmem:[#allocation19 + $0x180] sm:$0xff]
    %v4510 = vld [vmem:[#allocation19 + $0x188] sm:$0xff]
    %v4511 = vld [vmem:[#allocation19 + $0x190] sm:$0xff]
    %v4512 = vld [vmem:[#allocation19 + $0x198] sm:$0xff]
    %v4513 = vld [vmem:[#allocation19 + $0x1a0] sm:$0xff]
    %v4514 = vld [vmem:[#allocation19 + $0x1a8] sm:$0xff]
    %v4515 = vld [vmem:[#allocation19 + $0x1b0] sm:$0xff]
    %v4516 = vld [vmem:[#allocation19 + $0x1b8] sm:$0xff]
    %v4517 = vld [vmem:[#allocation19 + $0x1c0] sm:$0xff]
    %v4518 = vld [vmem:[#allocation19 + $0x1c8] sm:$0xff]
    %v4519 = vld [vmem:[#allocation19 + $0x1d0] sm:$0xff]
    %v4520 = vld [vmem:[#allocation19 + $0x1d8] sm:$0xff]
    %v4521 = vld [vmem:[#allocation19 + $0x1e0] sm:$0xff]
    %v4522 = vld [vmem:[#allocation19 + $0x1e8] sm:$0xff]
    %v4523 = vld [vmem:[#allocation19 + $0x1f0] sm:$0xff]
    %v4524 = vld [vmem:[#allocation19 + $0x1f8] sm:$0xff]
    %v4525 = vld [vmem:[#allocation21] sm:$0x3]
    %v4527 = vlaneseq
    %v4528 = vshrl.u32 %v4527, 7
    %v4529 = vsub.s32 0, %v4528
    %v4530 = vrot.slane %v4525, %v4529
    %v4531 = vlaneseq
    %v4532 = vshrl.u32 %v4531, 7
    %v4533 = vsub.s32 1, %v4532
    %v4534 = vrot.slane %v4525, %v4533
    %v4601 = vunpack.c.l.b16 %v4461
    %v4602 = vunpack.c.h.b16 %v4461
    %v4603 = vunpack.c.l.b16 %v4462
    %v4604 = vunpack.c.h.b16 %v4462
    %v4605 = vunpack.c.l.b16 %v4463
    %v4606 = vunpack.c.h.b16 %v4463
    %v4607 = vunpack.c.l.b16 %v4464
    %v4608 = vunpack.c.h.b16 %v4464
    %v4609 = vunpack.c.l.b16 %v4465
    %v4610 = vunpack.c.h.b16 %v4465
    %v4611 = vunpack.c.l.b16 %v4466
    %v4612 = vunpack.c.h.b16 %v4466
    %v4613 = vunpack.c.l.b16 %v4467
    %v4614 = vunpack.c.h.b16 %v4467
    %v4615 = vunpack.c.l.b16 %v4468
    %v4616 = vunpack.c.h.b16 %v4468
    %v4617 = vunpack.c.l.b16 %v4469
    %v4618 = vunpack.c.h.b16 %v4469
    %v4619 = vunpack.c.l.b16 %v4470
    %v4620 = vunpack.c.h.b16 %v4470
    %v4621 = vunpack.c.l.b16 %v4471
    %v4622 = vunpack.c.h.b16 %v4471
    %v4623 = vunpack.c.l.b16 %v4472
    %v4624 = vunpack.c.h.b16 %v4472
    %v4625 = vunpack.c.l.b16 %v4473
    %v4626 = vunpack.c.h.b16 %v4473
    %v4627 = vunpack.c.l.b16 %v4474
    %v4628 = vunpack.c.h.b16 %v4474
    %v4629 = vunpack.c.l.b16 %v4475
    %v4630 = vunpack.c.h.b16 %v4475
    %v4631 = vunpack.c.l.b16 %v4476
    %v4632 = vunpack.c.h.b16 %v4476
    %v4633 = vunpack.c.l.b16 %v4477
    %v4634 = vunpack.c.h.b16 %v4477
    %v4635 = vunpack.c.l.b16 %v4478
    %v4636 = vunpack.c.h.b16 %v4478
    %v4637 = vunpack.c.l.b16 %v4479
    %v4638 = vunpack.c.h.b16 %v4479
    %v4639 = vunpack.c.l.b16 %v4480
    %v4640 = vunpack.c.h.b16 %v4480
    %v4641 = vunpack.c.l.b16 %v4481
    %v4642 = vunpack.c.h.b16 %v4481
    %v4643 = vunpack.c.l.b16 %v4482
    %v4644 = vunpack.c.h.b16 %v4482
    %v4645 = vunpack.c.l.b16 %v4483
    %v4646 = vunpack.c.h.b16 %v4483
    %v4647 = vunpack.c.l.b16 %v4484
    %v4648 = vunpack.c.h.b16 %v4484
    %v4649 = vunpack.c.l.b16 %v4485
    %v4650 = vunpack.c.h.b16 %v4485
    %v4651 = vunpack.c.l.b16 %v4486
    %v4652 = vunpack.c.h.b16 %v4486
    %v4653 = vunpack.c.l.b16 %v4487
    %v4654 = vunpack.c.h.b16 %v4487
    %v4655 = vunpack.c.l.b16 %v4488
    %v4656 = vunpack.c.h.b16 %v4488
    %v4657 = vunpack.c.l.b16 %v4489
    %v4658 = vunpack.c.h.b16 %v4489
    %v4659 = vunpack.c.l.b16 %v4490
    %v4660 = vunpack.c.h.b16 %v4490
    %v4661 = vunpack.c.l.b16 %v4491
    %v4662 = vunpack.c.h.b16 %v4491
    %v4663 = vunpack.c.l.b16 %v4492
    %v4664 = vunpack.c.h.b16 %v4492
    %v4665 = vunpack.c.l.b16 %v4493
    %v4666 = vunpack.c.h.b16 %v4493
    %v4667 = vunpack.c.l.b16 %v4494
    %v4668 = vunpack.c.h.b16 %v4494
    %v4669 = vunpack.c.l.b16 %v4495
    %v4670 = vunpack.c.h.b16 %v4495
    %v4671 = vunpack.c.l.b16 %v4496
    %v4672 = vunpack.c.h.b16 %v4496
    %v4673 = vunpack.c.l.b16 %v4497
    %v4674 = vunpack.c.h.b16 %v4497
    %v4675 = vunpack.c.l.b16 %v4498
    %v4676 = vunpack.c.h.b16 %v4498
    %v4677 = vunpack.c.l.b16 %v4499
    %v4678 = vunpack.c.h.b16 %v4499
    %v4679 = vunpack.c.l.b16 %v4500
    %v4680 = vunpack.c.h.b16 %v4500
    %v4681 = vunpack.c.l.b16 %v4501
    %v4682 = vunpack.c.h.b16 %v4501
    %v4683 = vunpack.c.l.b16 %v4502
    %v4684 = vunpack.c.h.b16 %v4502
    %v4685 = vunpack.c.l.b16 %v4503
    %v4686 = vunpack.c.h.b16 %v4503
    %v4687 = vunpack.c.l.b16 %v4504
    %v4688 = vunpack.c.h.b16 %v4504
    %v4689 = vunpack.c.l.b16 %v4505
    %v4690 = vunpack.c.h.b16 %v4505
    %v4691 = vunpack.c.l.b16 %v4506
    %v4692 = vunpack.c.h.b16 %v4506
    %v4693 = vunpack.c.l.b16 %v4507
    %v4694 = vunpack.c.h.b16 %v4507
    %v4695 = vunpack.c.l.b16 %v4508
    %v4696 = vunpack.c.h.b16 %v4508
    %v4697 = vunpack.c.l.b16 %v4509
    %v4698 = vunpack.c.h.b16 %v4509
    %v4699 = vunpack.c.l.b16 %v4510
    %v4700 = vunpack.c.h.b16 %v4510
    %v4701 = vunpack.c.l.b16 %v4511
    %v4702 = vunpack.c.h.b16 %v4511
    %v4703 = vunpack.c.l.b16 %v4512
    %v4704 = vunpack.c.h.b16 %v4512
    %v4705 = vunpack.c.l.b16 %v4513
    %v4706 = vunpack.c.h.b16 %v4513
    %v4707 = vunpack.c.l.b16 %v4514
    %v4708 = vunpack.c.h.b16 %v4514
    %v4709 = vunpack.c.l.b16 %v4515
    %v4710 = vunpack.c.h.b16 %v4515
    %v4711 = vunpack.c.l.b16 %v4516
    %v4712 = vunpack.c.h.b16 %v4516
    %v4713 = vunpack.c.l.b16 %v4517
    %v4714 = vunpack.c.h.b16 %v4517
    %v4715 = vunpack.c.l.b16 %v4518
    %v4716 = vunpack.c.h.b16 %v4518
    %v4717 = vunpack.c.l.b16 %v4519
    %v4718 = vunpack.c.h.b16 %v4519
    %v4719 = vunpack.c.l.b16 %v4520
    %v4720 = vunpack.c.h.b16 %v4520
    %v4721 = vunpack.c.l.b16 %v4521
    %v4722 = vunpack.c.h.b16 %v4521
    %v4723 = vunpack.c.l.b16 %v4522
    %v4724 = vunpack.c.h.b16 %v4522
    %v4725 = vunpack.c.l.b16 %v4523
    %v4726 = vunpack.c.h.b16 %v4523
    %v4727 = vunpack.c.l.b16 %v4524
    %v4728 = vunpack.c.h.b16 %v4524
    %v4729 = vpack.c.b16 %v4603, %v4601
    %v4730 = vpack.c.b16 %v4604, %v4602
    %v4731 = vpack.c.b16 %v4607, %v4605
    %v4732 = vpack.c.b16 %v4608, %v4606
    %v4733 = vpack.c.b16 %v4611, %v4609
    %v4734 = vpack.c.b16 %v4612, %v4610
    %v4735 = vpack.c.b16 %v4615, %v4613
    %v4736 = vpack.c.b16 %v4616, %v4614
    %v4737 = vpack.c.b16 %v4619, %v4617
    %v4738 = vpack.c.b16 %v4620, %v4618
    %v4739 = vpack.c.b16 %v4623, %v4621
    %v4740 = vpack.c.b16 %v4624, %v4622
    %v4741 = vpack.c.b16 %v4627, %v4625
    %v4742 = vpack.c.b16 %v4628, %v4626
    %v4743 = vpack.c.b16 %v4631, %v4629
    %v4744 = vpack.c.b16 %v4632, %v4630
    %v4745 = vpack.c.b16 %v4635, %v4633
    %v4746 = vpack.c.b16 %v4636, %v4634
    %v4747 = vpack.c.b16 %v4639, %v4637
    %v4748 = vpack.c.b16 %v4640, %v4638
    %v4749 = vpack.c.b16 %v4643, %v4641
    %v4750 = vpack.c.b16 %v4644, %v4642
    %v4751 = vpack.c.b16 %v4647, %v4645
    %v4752 = vpack.c.b16 %v4648, %v4646
    %v4753 = vpack.c.b16 %v4651, %v4649
    %v4754 = vpack.c.b16 %v4652, %v4650
    %v4755 = vpack.c.b16 %v4655, %v4653
    %v4756 = vpack.c.b16 %v4656, %v4654
    %v4757 = vpack.c.b16 %v4659, %v4657
    %v4758 = vpack.c.b16 %v4660, %v4658
    %v4759 = vpack.c.b16 %v4663, %v4661
    %v4760 = vpack.c.b16 %v4664, %v4662
    %v4761 = vpack.c.b16 %v4667, %v4665
    %v4762 = vpack.c.b16 %v4668, %v4666
    %v4763 = vpack.c.b16 %v4671, %v4669
    %v4764 = vpack.c.b16 %v4672, %v4670
    %v4765 = vpack.c.b16 %v4675, %v4673
    %v4766 = vpack.c.b16 %v4676, %v4674
    %v4767 = vpack.c.b16 %v4679, %v4677
    %v4768 = vpack.c.b16 %v4680, %v4678
    %v4769 = vpack.c.b16 %v4683, %v4681
    %v4770 = vpack.c.b16 %v4684, %v4682
    %v4771 = vpack.c.b16 %v4687, %v4685
    %v4772 = vpack.c.b16 %v4688, %v4686
    %v4773 = vpack.c.b16 %v4691, %v4689
    %v4774 = vpack.c.b16 %v4692, %v4690
    %v4775 = vpack.c.b16 %v4695, %v4693
    %v4776 = vpack.c.b16 %v4696, %v4694
    %v4777 = vpack.c.b16 %v4699, %v4697
    %v4778 = vpack.c.b16 %v4700, %v4698
    %v4779 = vpack.c.b16 %v4703, %v4701
    %v4780 = vpack.c.b16 %v4704, %v4702
    %v4781 = vpack.c.b16 %v4707, %v4705
    %v4782 = vpack.c.b16 %v4708, %v4706
    %v4783 = vpack.c.b16 %v4711, %v4709
    %v4784 = vpack.c.b16 %v4712, %v4710
    %v4785 = vpack.c.b16 %v4715, %v4713
    %v4786 = vpack.c.b16 %v4716, %v4714
    %v4787 = vpack.c.b16 %v4719, %v4717
    %v4788 = vpack.c.b16 %v4720, %v4718
    %v4789 = vpack.c.b16 %v4723, %v4721
    %v4790 = vpack.c.b16 %v4724, %v4722
    %v4791 = vpack.c.b16 %v4727, %v4725
    %v4792 = vpack.c.b16 %v4728, %v4726
    %4857 = vmatprep.subr.bf16.mxu0 %v4744
    %4858 = vmatpush1.bf16.msra.mxu0 %v4743
    %4859 = vmatprep.subr.bf16.mxu0 %v4742
    %4860 = vmatpush1.bf16.msra.mxu0 %v4741
    %4861 = vmatprep.subr.bf16.mxu0 %v4740
    %4862 = vmatpush1.bf16.msra.mxu0 %v4739
    %4863 = vmatprep.subr.bf16.mxu0 %v4738
    %4864 = vmatpush1.bf16.msra.mxu0 %v4737
    %4865 = vmatprep.subr.bf16.mxu0 %v4736
    %4866 = vmatpush1.bf16.msra.mxu0 %v4735
    %4867 = vmatprep.subr.bf16.mxu0 %v4734
    %4868 = vmatpush1.bf16.msra.mxu0 %v4733
    %4869 = vmatprep.subr.bf16.mxu0 %v4732
    %4870 = vmatpush1.bf16.msra.mxu0 %v4731
    %4871 = vmatprep.subr.bf16.mxu0 %v4730
    %4872 = vmatpush1.bf16.msra.mxu0 %v4729
    %4873 = vmatprep.subr.bf16.mxu0 %v4760
    %4874 = vmatpush2.bf16.msra.mxu0 %v4759
    %4875 = vmatprep.subr.bf16.mxu0 %v4758
    %4876 = vmatpush2.bf16.msra.mxu0 %v4757
    %4877 = vmatprep.subr.bf16.mxu0 %v4756
    %4878 = vmatpush2.bf16.msra.mxu0 %v4755
    %4879 = vmatprep.subr.bf16.mxu0 %v4754
    %4880 = vmatpush2.bf16.msra.mxu0 %v4753
    %4881 = vmatprep.subr.bf16.mxu0 %v4752
    %4882 = vmatpush2.bf16.msra.mxu0 %v4751
    %4883 = vmatprep.subr.bf16.mxu0 %v4750
    %4884 = vmatpush2.bf16.msra.mxu0 %v4749
    %4885 = vmatprep.subr.bf16.mxu0 %v4748
    %4886 = vmatpush2.bf16.msra.mxu0 %v4747
    %4887 = vmatprep.subr.bf16.mxu0 %v4746
    %4888 = vmatpush2.bf16.msra.mxu0 %v4745
    %4889 = vmatprep.mubr.bf16.mxu0 %v4458
    %4890 = vmatmul.mubr.bf16.gmra.mxu0 %v4457
    %v4891 = vpop.f32.mrf.mxu0
    %v4892 = vadd.f32 %v4530, %v4891
    %v4893 = vpop.f32.mrf.mxu0
    %v4894 = vadd.f32 %v4534, %v4893
    %v4895 = vpop.f32.mrf.mxu0
    %v4896 = vadd.f32 %v4530, %v4895
    %v4897 = vpop.f32.mrf.mxu0
    %v4898 = vadd.f32 %v4534, %v4897
    %4899 = vdwg.mxu0
    %4900 = vmatprep.subr.bf16.mxu0 %v4776
    %4901 = vmatpush1.bf16.msra.mxu0 %v4775
    %4902 = vmatprep.subr.bf16.mxu0 %v4774
    %4903 = vmatpush1.bf16.msra.mxu0 %v4773
    %4904 = vmatprep.subr.bf16.mxu0 %v4772
    %4905 = vmatpush1.bf16.msra.mxu0 %v4771
    %4906 = vmatprep.subr.bf16.mxu0 %v4770
    %4907 = vmatpush1.bf16.msra.mxu0 %v4769
    %4908 = vmatprep.subr.bf16.mxu0 %v4768
    %4909 = vmatpush1.bf16.msra.mxu0 %v4767
    %4910 = vmatprep.subr.bf16.mxu0 %v4766
    %4911 = vmatpush1.bf16.msra.mxu0 %v4765
    %4912 = vmatprep.subr.bf16.mxu0 %v4764
    %4913 = vmatpush1.bf16.msra.mxu0 %v4763
    %4914 = vmatprep.subr.bf16.mxu0 %v4762
    %4915 = vmatpush1.bf16.msra.mxu0 %v4761
    %4916 = vmatprep.subr.bf16.mxu0 %v4792
    %4917 = vmatpush2.bf16.msra.mxu0 %v4791
    %4918 = vmatprep.subr.bf16.mxu0 %v4790
    %4919 = vmatpush2.bf16.msra.mxu0 %v4789
    %4920 = vmatprep.subr.bf16.mxu0 %v4788
    %4921 = vmatpush2.bf16.msra.mxu0 %v4787
    %4922 = vmatprep.subr.bf16.mxu0 %v4786
    %4923 = vmatpush2.bf16.msra.mxu0 %v4785
    %4924 = vmatprep.subr.bf16.mxu0 %v4784
    %4925 = vmatpush2.bf16.msra.mxu0 %v4783
    %4926 = vmatprep.subr.bf16.mxu0 %v4782
    %4927 = vmatpush2.bf16.msra.mxu0 %v4781
    %4928 = vmatprep.subr.bf16.mxu0 %v4780
    %4929 = vmatpush2.bf16.msra.mxu0 %v4779
    %4930 = vmatprep.subr.bf16.mxu0 %v4778
    %4931 = vmatpush2.bf16.msra.mxu0 %v4777
    %4932 = vmatprep.mubr.bf16.mxu0 %v4460
    %4933 = vmatmul.mubr.bf16.gmra.mxu0 %v4459
    %v4934 = vpop.f32.mrf.mxu0
    %v4935 = vadd.f32 %v4892, %v4934
    %v4936 = vpop.f32.mrf.mxu0
    %v4937 = vadd.f32 %v4894, %v4936
    %v4938 = vpop.f32.mrf.mxu0
    %v4939 = vadd.f32 %v4896, %v4938
    %v4940 = vpop.f32.mrf.mxu0
    %v4941 = vadd.f32 %v4898, %v4940
    %4942 = vdwg.mxu0
    %v4943 = vld [vmem:[#allocation22] sm:$0x3]
    %v4944 = vld [vmem:[#allocation24] sm:$0x3]
    %v4945 = vadd.f32 %v4935, %v4937
    %4946 = vadd.xlane.f32.xlu0 %v4945
    %v4947 = vpop.xlane.xlu0 %4946
    %v4948 = vadd.f32 %v4939, %v4941
    %4949 = vadd.xlane.f32.xlu0 %v4948
    %v4950 = vpop.xlane.xlu0 %4949
    %v4951 = vrcp.pop 256.0
    %v4952 = vmul.f32 %v4947, %v4951
    %v4953 = vmul.f32 %v4950, %v4951
    %v4954 = vsub.f32 %v4935, %v4952
    %v4955 = vsub.f32 %v4937, %v4952
    %v4956 = vsub.f32 %v4939, %v4953
    %v4957 = vsub.f32 %v4941, %v4953
    %v4958 = vmul.f32 %v4954, %v4954
    %v4959 = vmul.f32 %v4955, %v4955
    %v4960 = vmul.f32 %v4956, %v4956
    %v4961 = vmul.f32 %v4957, %v4957
    %v4962 = vadd.f32 %v4958, %v4959
    %4963 = vadd.xlane.f32.xlu0 %v4962
    %v4964 = vpop.xlane.xlu0 %4963
    %v4965 = vadd.f32 %v4960, %v4961
    %4966 = vadd.xlane.f32.xlu0 %v4965
    %v4967 = vpop.xlane.xlu0 %4966
    %v4968 = vmul.f32 %v4964, %v4951
    %v4969 = vmul.f32 %v4967, %v4951
    %v4970 = vadd.f32 %v4968, 1e-05
    %v4971 = vadd.f32 %v4969, 1e-05
    %v4972 = vrsqrt.pop %v4970
    %v4973 = vrsqrt.pop %v4971
    %v4974 = vmul.f32 %v4954, %v4972
    %v4975 = vmul.f32 %v4955, %v4972
    %v4976 = vmul.f32 %v4956, %v4973
    %v4977 = vmul.f32 %v4957, %v4973
    %v4979 = vlaneseq
    %v4980 = vshrl.u32 %v4979, 7
    %v4981 = vsub.s32 0, %v4980
    %v4982 = vrot.slane %v4943, %v4981
    %v4983 = vlaneseq
    %v4984 = vshrl.u32 %v4983, 7
    %v4985 = vsub.s32 1, %v4984
    %v4986 = vrot.slane %v4943, %v4985
    %v4989 = vmul.f32 %v4974, %v4982
    %v4990 = vmul.f32 %v4975, %v4986
    %v4991 = vmul.f32 %v4976, %v4982
    %v4992 = vmul.f32 %v4977, %v4986
    %v4994 = vlaneseq
    %v4995 = vshrl.u32 %v4994, 7
    %v4996 = vsub.s32 0, %v4995
    %v4997 = vrot.slane %v4944, %v4996
    %v4998 = vlaneseq
    %v4999 = vshrl.u32 %v4998, 7
    %v5000 = vsub.s32 1, %v4999
    %v5001 = vrot.slane %v4944, %v5000
    %v5004 = vadd.f32 %v4989, %v4997
    %v5005 = vadd.f32 %v4990, %v5001
    %v5006 = vadd.f32 %v4991, %v4997
    %v5007 = vadd.f32 %v4992, %v5001
    %v5008 = vmax.f32 %v5004, 0.0
    %v5009 = vmax.f32 %v5005, 0.0
    %v5010 = vmax.f32 %v5006, 0.0
    %v5011 = vmax.f32 %v5007, 0.0
    %v5012 = vpack.c.bf16 %v5010, %v5008
    %v5013 = vpack.c.bf16 %v5011, %v5009
    %v5014 = vld [vmem:[#allocation25] sm:$0xff]
    %v5015 = vld [vmem:[#allocation25 + $0x8] sm:$0xff]
    %v5016 = vld [vmem:[#allocation25 + $0x10] sm:$0xff]
    %v5017 = vld [vmem:[#allocation25 + $0x18] sm:$0xff]
    %v5018 = vld [vmem:[#allocation25 + $0x20] sm:$0xff]
    %v5019 = vld [vmem:[#allocation25 + $0x28] sm:$0xff]
    %v5020 = vld [vmem:[#allocation25 + $0x30] sm:$0xff]
    %v5021 = vld [vmem:[#allocation25 + $0x38] sm:$0xff]
    %v5022 = vld [vmem:[#allocation25 + $0x40] sm:$0xff]
    %v5023 = vld [vmem:[#allocation25 + $0x48] sm:$0xff]
    %v5024 = vld [vmem:[#allocation25 + $0x50] sm:$0xff]
    %v5025 = vld [vmem:[#allocation25 + $0x58] sm:$0xff]
    %v5026 = vld [vmem:[#allocation25 + $0x60] sm:$0xff]
    %v5027 = vld [vmem:[#allocation25 + $0x68] sm:$0xff]
    %v5028 = vld [vmem:[#allocation25 + $0x70] sm:$0xff]
    %v5029 = vld [vmem:[#allocation25 + $0x78] sm:$0xff]
    %v5030 = vld [vmem:[#allocation25 + $0x80] sm:$0xff]
    %v5031 = vld [vmem:[#allocation25 + $0x88] sm:$0xff]
    %v5032 = vld [vmem:[#allocation25 + $0x90] sm:$0xff]
    %v5033 = vld [vmem:[#allocation25 + $0x98] sm:$0xff]
    %v5034 = vld [vmem:[#allocation25 + $0xa0] sm:$0xff]
    %v5035 = vld [vmem:[#allocation25 + $0xa8] sm:$0xff]
    %v5036 = vld [vmem:[#allocation25 + $0xb0] sm:$0xff]
    %v5037 = vld [vmem:[#allocation25 + $0xb8] sm:$0xff]
    %v5038 = vld [vmem:[#allocation25 + $0xc0] sm:$0xff]
    %v5039 = vld [vmem:[#allocation25 + $0xc8] sm:$0xff]
    %v5040 = vld [vmem:[#allocation25 + $0xd0] sm:$0xff]
    %v5041 = vld [vmem:[#allocation25 + $0xd8] sm:$0xff]
    %v5042 = vld [vmem:[#allocation25 + $0xe0] sm:$0xff]
    %v5043 = vld [vmem:[#allocation25 + $0xe8] sm:$0xff]
    %v5044 = vld [vmem:[#allocation25 + $0xf0] sm:$0xff]
    %v5045 = vld [vmem:[#allocation25 + $0xf8] sm:$0xff]
    %v5046 = vld [vmem:[#allocation27] sm:$0x3]
    %v5048 = vlaneseq
    %v5049 = vshrl.u32 %v5048, 7
    %v5050 = vsub.s32 0, %v5049
    %v5051 = vrot.slane %v5046, %v5050
    %v5052 = vlaneseq
    %v5053 = vshrl.u32 %v5052, 7
    %v5054 = vsub.s32 1, %v5053
    %v5055 = vrot.slane %v5046, %v5054
    %v5090 = vunpack.c.l.b16 %v5014
    %v5091 = vunpack.c.h.b16 %v5014
    %v5092 = vunpack.c.l.b16 %v5015
    %v5093 = vunpack.c.h.b16 %v5015
    %v5094 = vunpack.c.l.b16 %v5016
    %v5095 = vunpack.c.h.b16 %v5016
    %v5096 = vunpack.c.l.b16 %v5017
    %v5097 = vunpack.c.h.b16 %v5017
    %v5098 = vunpack.c.l.b16 %v5018
    %v5099 = vunpack.c.h.b16 %v5018
    %v5100 = vunpack.c.l.b16 %v5019
    %v5101 = vunpack.c.h.b16 %v5019
    %v5102 = vunpack.c.l.b16 %v5020
    %v5103 = vunpack.c.h.b16 %v5020
    %v5104 = vunpack.c.l.b16 %v5021
    %v5105 = vunpack.c.h.b16 %v5021
    %v5106 = vunpack.c.l.b16 %v5022
    %v5107 = vunpack.c.h.b16 %v5022
    %v5108 = vunpack.c.l.b16 %v5023
    %v5109 = vunpack.c.h.b16 %v5023
    %v5110 = vunpack.c.l.b16 %v5024
    %v5111 = vunpack.c.h.b16 %v5024
    %v5112 = vunpack.c.l.b16 %v5025
    %v5113 = vunpack.c.h.b16 %v5025
    %v5114 = vunpack.c.l.b16 %v5026
    %v5115 = vunpack.c.h.b16 %v5026
    %v5116 = vunpack.c.l.b16 %v5027
    %v5117 = vunpack.c.h.b16 %v5027
    %v5118 = vunpack.c.l.b16 %v5028
    %v5119 = vunpack.c.h.b16 %v5028
    %v5120 = vunpack.c.l.b16 %v5029
    %v5121 = vunpack.c.h.b16 %v5029
    %v5122 = vunpack.c.l.b16 %v5030
    %v5123 = vunpack.c.h.b16 %v5030
    %v5124 = vunpack.c.l.b16 %v5031
    %v5125 = vunpack.c.h.b16 %v5031
    %v5126 = vunpack.c.l.b16 %v5032
    %v5127 = vunpack.c.h.b16 %v5032
    %v5128 = vunpack.c.l.b16 %v5033
    %v5129 = vunpack.c.h.b16 %v5033
    %v5130 = vunpack.c.l.b16 %v5034
    %v5131 = vunpack.c.h.b16 %v5034
    %v5132 = vunpack.c.l.b16 %v5035
    %v5133 = vunpack.c.h.b16 %v5035
    %v5134 = vunpack.c.l.b16 %v5036
    %v5135 = vunpack.c.h.b16 %v5036
    %v5136 = vunpack.c.l.b16 %v5037
    %v5137 = vunpack.c.h.b16 %v5037
    %v5138 = vunpack.c.l.b16 %v5038
    %v5139 = vunpack.c.h.b16 %v5038
    %v5140 = vunpack.c.l.b16 %v5039
    %v5141 = vunpack.c.h.b16 %v5039
    %v5142 = vunpack.c.l.b16 %v5040
    %v5143 = vunpack.c.h.b16 %v5040
    %v5144 = vunpack.c.l.b16 %v5041
    %v5145 = vunpack.c.h.b16 %v5041
    %v5146 = vunpack.c.l.b16 %v5042
    %v5147 = vunpack.c.h.b16 %v5042
    %v5148 = vunpack.c.l.b16 %v5043
    %v5149 = vunpack.c.h.b16 %v5043
    %v5150 = vunpack.c.l.b16 %v5044
    %v5151 = vunpack.c.h.b16 %v5044
    %v5152 = vunpack.c.l.b16 %v5045
    %v5153 = vunpack.c.h.b16 %v5045
    %v5154 = vpack.c.b16 %v5092, %v5090
    %v5155 = vpack.c.b16 %v5093, %v5091
    %v5156 = vpack.c.b16 %v5096, %v5094
    %v5157 = vpack.c.b16 %v5097, %v5095
    %v5158 = vpack.c.b16 %v5100, %v5098
    %v5159 = vpack.c.b16 %v5101, %v5099
    %v5160 = vpack.c.b16 %v5104, %v5102
    %v5161 = vpack.c.b16 %v5105, %v5103
    %v5162 = vpack.c.b16 %v5108, %v5106
    %v5163 = vpack.c.b16 %v5109, %v5107
    %v5164 = vpack.c.b16 %v5112, %v5110
    %v5165 = vpack.c.b16 %v5113, %v5111
    %v5166 = vpack.c.b16 %v5116, %v5114
    %v5167 = vpack.c.b16 %v5117, %v5115
    %v5168 = vpack.c.b16 %v5120, %v5118
    %v5169 = vpack.c.b16 %v5121, %v5119
    %v5170 = vpack.c.b16 %v5124, %v5122
    %v5171 = vpack.c.b16 %v5125, %v5123
    %v5172 = vpack.c.b16 %v5128, %v5126
    %v5173 = vpack.c.b16 %v5129, %v5127
    %v5174 = vpack.c.b16 %v5132, %v5130
    %v5175 = vpack.c.b16 %v5133, %v5131
    %v5176 = vpack.c.b16 %v5136, %v5134
    %v5177 = vpack.c.b16 %v5137, %v5135
    %v5178 = vpack.c.b16 %v5140, %v5138
    %v5179 = vpack.c.b16 %v5141, %v5139
    %v5180 = vpack.c.b16 %v5144, %v5142
    %v5181 = vpack.c.b16 %v5145, %v5143
    %v5182 = vpack.c.b16 %v5148, %v5146
    %v5183 = vpack.c.b16 %v5149, %v5147
    %v5184 = vpack.c.b16 %v5152, %v5150
    %v5185 = vpack.c.b16 %v5153, %v5151
    %5218 = vmatprep.subr.bf16.mxu0 %v5169
    %5219 = vmatpush1.bf16.msra.mxu0 %v5168
    %5220 = vmatprep.subr.bf16.mxu0 %v5167
    %5221 = vmatpush1.bf16.msra.mxu0 %v5166
    %5222 = vmatprep.subr.bf16.mxu0 %v5165
    %5223 = vmatpush1.bf16.msra.mxu0 %v5164
    %5224 = vmatprep.subr.bf16.mxu0 %v5163
    %5225 = vmatpush1.bf16.msra.mxu0 %v5162
    %5226 = vmatprep.subr.bf16.mxu0 %v5161
    %5227 = vmatpush1.bf16.msra.mxu0 %v5160
    %5228 = vmatprep.subr.bf16.mxu0 %v5159
    %5229 = vmatpush1.bf16.msra.mxu0 %v5158
    %5230 = vmatprep.subr.bf16.mxu0 %v5157
    %5231 = vmatpush1.bf16.msra.mxu0 %v5156
    %5232 = vmatprep.subr.bf16.mxu0 %v5155
    %5233 = vmatpush1.bf16.msra.mxu0 %v5154
    %5234 = vmatprep.subr.bf16.mxu0 %v5185
    %5235 = vmatpush2.bf16.msra.mxu0 %v5184
    %5236 = vmatprep.subr.bf16.mxu0 %v5183
    %5237 = vmatpush2.bf16.msra.mxu0 %v5182
    %5238 = vmatprep.subr.bf16.mxu0 %v5181
    %5239 = vmatpush2.bf16.msra.mxu0 %v5180
    %5240 = vmatprep.subr.bf16.mxu0 %v5179
    %5241 = vmatpush2.bf16.msra.mxu0 %v5178
    %5242 = vmatprep.subr.bf16.mxu0 %v5177
    %5243 = vmatpush2.bf16.msra.mxu0 %v5176
    %5244 = vmatprep.subr.bf16.mxu0 %v5175
    %5245 = vmatpush2.bf16.msra.mxu0 %v5174
    %5246 = vmatprep.subr.bf16.mxu0 %v5173
    %5247 = vmatpush2.bf16.msra.mxu0 %v5172
    %5248 = vmatprep.subr.bf16.mxu0 %v5171
    %5249 = vmatpush2.bf16.msra.mxu0 %v5170
    %5250 = vmatprep.mubr.bf16.mxu0 %v5013
    %5251 = vmatmul.mubr.bf16.gmra.mxu0 %v5012
    %v5252 = vpop.f32.mrf.mxu0
    %v5253 = vadd.f32 %v5051, %v5252
    %v5254 = vpop.f32.mrf.mxu0
    %v5255 = vadd.f32 %v5055, %v5254
    %v5256 = vpop.f32.mrf.mxu0
    %v5257 = vadd.f32 %v5051, %v5256
    %v5258 = vpop.f32.mrf.mxu0
    %v5259 = vadd.f32 %v5055, %v5258
    %5260 = vdwg.mxu0
    %v5261 = vld [vmem:[#allocation28] sm:$0x3]
    %v5262 = vld [vmem:[#allocation30] sm:$0x3]
    %v5263 = vadd.f32 %v5253, %v5255
    %5264 = vadd.xlane.f32.xlu0 %v5263
    %v5265 = vpop.xlane.xlu0 %5264
    %v5266 = vadd.f32 %v5257, %v5259
    %5267 = vadd.xlane.f32.xlu0 %v5266
    %v5268 = vpop.xlane.xlu0 %5267
    %v5269 = vmul.f32 %v5265, %v4951
    %v5270 = vmul.f32 %v5268, %v4951
    %v5271 = vsub.f32 %v5253, %v5269
    %v5272 = vsub.f32 %v5255, %v5269
    %v5273 = vsub.f32 %v5257, %v5270
    %v5274 = vsub.f32 %v5259, %v5270
    %v5275 = vmul.f32 %v5271, %v5271
    %v5276 = vmul.f32 %v5272, %v5272
    %v5277 = vmul.f32 %v5273, %v5273
    %v5278 = vmul.f32 %v5274, %v5274
    %v5279 = vadd.f32 %v5275, %v5276
    %5280 = vadd.xlane.f32.xlu0 %v5279
    %v5281 = vpop.xlane.xlu0 %5280
    %v5282 = vadd.f32 %v5277, %v5278
    %5283 = vadd.xlane.f32.xlu0 %v5282
    %v5284 = vpop.xlane.xlu0 %5283
    %v5285 = vmul.f32 %v5281, %v4951
    %v5286 = vmul.f32 %v5284, %v4951
    %v5287 = vadd.f32 %v5285, 1e-05
    %v5288 = vadd.f32 %v5286, 1e-05
    %v5289 = vrsqrt.pop %v5287
    %v5290 = vrsqrt.pop %v5288
    %v5291 = vmul.f32 %v5271, %v5289
    %v5292 = vmul.f32 %v5272, %v5289
    %v5293 = vmul.f32 %v5273, %v5290
    %v5294 = vmul.f32 %v5274, %v5290
    %v5296 = vlaneseq
    %v5297 = vshrl.u32 %v5296, 7
    %v5298 = vsub.s32 0, %v5297
    %v5299 = vrot.slane %v5261, %v5298
    %v5300 = vlaneseq
    %v5301 = vshrl.u32 %v5300, 7
    %v5302 = vsub.s32 1, %v5301
    %v5303 = vrot.slane %v5261, %v5302
    %v5306 = vmul.f32 %v5291, %v5299
    %v5307 = vmul.f32 %v5292, %v5303
    %v5308 = vmul.f32 %v5293, %v5299
    %v5309 = vmul.f32 %v5294, %v5303
    %v5311 = vlaneseq
    %v5312 = vshrl.u32 %v5311, 7
    %v5313 = vsub.s32 0, %v5312
    %v5314 = vrot.slane %v5262, %v5313
    %v5315 = vlaneseq
    %v5316 = vshrl.u32 %v5315, 7
    %v5317 = vsub.s32 1, %v5316
    %v5318 = vrot.slane %v5262, %v5317
    %v5321 = vadd.f32 %v5306, %v5314
    %v5322 = vadd.f32 %v5307, %v5318
    %v5323 = vadd.f32 %v5308, %v5314
    %v5324 = vadd.f32 %v5309, %v5318
    %v5325 = vmax.f32 %v5321, 0.0
    %v5326 = vmax.f32 %v5322, 0.0
    %v5327 = vmax.f32 %v5323, 0.0
    %v5328 = vmax.f32 %v5324, 0.0
    %v5329 = vpack.c.bf16 %v5327, %v5325
    %v5330 = vpack.c.bf16 %v5328, %v5326
    %v5331 = vld [vmem:[#allocation31] sm:$0xff]
    %v5332 = vld [vmem:[#allocation31 + $0x8] sm:$0xff]
    %v5333 = vld [vmem:[#allocation31 + $0x10] sm:$0xff]
    %v5334 = vld [vmem:[#allocation31 + $0x18] sm:$0xff]
    %v5335 = vld [vmem:[#allocation31 + $0x20] sm:$0xff]
    %v5336 = vld [vmem:[#allocation31 + $0x28] sm:$0xff]
    %v5337 = vld [vmem:[#allocation31 + $0x30] sm:$0xff]
    %v5338 = vld [vmem:[#allocation31 + $0x38] sm:$0xff]
    %v5339 = vld [vmem:[#allocation31 + $0x40] sm:$0xff]
    %v5340 = vld [vmem:[#allocation31 + $0x48] sm:$0xff]
    %v5341 = vld [vmem:[#allocation31 + $0x50] sm:$0xff]
    %v5342 = vld [vmem:[#allocation31 + $0x58] sm:$0xff]
    %v5343 = vld [vmem:[#allocation31 + $0x60] sm:$0xff]
    %v5344 = vld [vmem:[#allocation31 + $0x68] sm:$0xff]
    %v5345 = vld [vmem:[#allocation31 + $0x70] sm:$0xff]
    %v5346 = vld [vmem:[#allocation31 + $0x78] sm:$0xff]
    %v5347 = vld [vmem:[#allocation31 + $0x80] sm:$0xff]
    %v5348 = vld [vmem:[#allocation31 + $0x88] sm:$0xff]
    %v5349 = vld [vmem:[#allocation31 + $0x90] sm:$0xff]
    %v5350 = vld [vmem:[#allocation31 + $0x98] sm:$0xff]
    %v5351 = vld [vmem:[#allocation31 + $0xa0] sm:$0xff]
    %v5352 = vld [vmem:[#allocation31 + $0xa8] sm:$0xff]
    %v5353 = vld [vmem:[#allocation31 + $0xb0] sm:$0xff]
    %v5354 = vld [vmem:[#allocation31 + $0xb8] sm:$0xff]
    %v5355 = vld [vmem:[#allocation31 + $0xc0] sm:$0xff]
    %v5356 = vld [vmem:[#allocation31 + $0xc8] sm:$0xff]
    %v5357 = vld [vmem:[#allocation31 + $0xd0] sm:$0xff]
    %v5358 = vld [vmem:[#allocation31 + $0xd8] sm:$0xff]
    %v5359 = vld [vmem:[#allocation31 + $0xe0] sm:$0xff]
    %v5360 = vld [vmem:[#allocation31 + $0xe8] sm:$0xff]
    %v5361 = vld [vmem:[#allocation31 + $0xf0] sm:$0xff]
    %v5362 = vld [vmem:[#allocation31 + $0xf8] sm:$0xff]
    %v5363 = vld [vmem:[#allocation31 + $0x100] sm:$0xff]
    %v5364 = vld [vmem:[#allocation31 + $0x108] sm:$0xff]
    %v5365 = vld [vmem:[#allocation31 + $0x110] sm:$0xff]
    %v5366 = vld [vmem:[#allocation31 + $0x118] sm:$0xff]
    %v5367 = vld [vmem:[#allocation31 + $0x120] sm:$0xff]
    %v5368 = vld [vmem:[#allocation31 + $0x128] sm:$0xff]
    %v5369 = vld [vmem:[#allocation31 + $0x130] sm:$0xff]
    %v5370 = vld [vmem:[#allocation31 + $0x138] sm:$0xff]
    %v5371 = vld [vmem:[#allocation31 + $0x140] sm:$0xff]
    %v5372 = vld [vmem:[#allocation31 + $0x148] sm:$0xff]
    %v5373 = vld [vmem:[#allocation31 + $0x150] sm:$0xff]
    %v5374 = vld [vmem:[#allocation31 + $0x158] sm:$0xff]
    %v5375 = vld [vmem:[#allocation31 + $0x160] sm:$0xff]
    %v5376 = vld [vmem:[#allocation31 + $0x168] sm:$0xff]
    %v5377 = vld [vmem:[#allocation31 + $0x170] sm:$0xff]
    %v5378 = vld [vmem:[#allocation31 + $0x178] sm:$0xff]
    %v5379 = vld [vmem:[#allocation31 + $0x180] sm:$0xff]
    %v5380 = vld [vmem:[#allocation31 + $0x188] sm:$0xff]
    %v5381 = vld [vmem:[#allocation31 + $0x190] sm:$0xff]
    %v5382 = vld [vmem:[#allocation31 + $0x198] sm:$0xff]
    %v5383 = vld [vmem:[#allocation31 + $0x1a0] sm:$0xff]
    %v5384 = vld [vmem:[#allocation31 + $0x1a8] sm:$0xff]
    %v5385 = vld [vmem:[#allocation31 + $0x1b0] sm:$0xff]
    %v5386 = vld [vmem:[#allocation31 + $0x1b8] sm:$0xff]
    %v5387 = vld [vmem:[#allocation31 + $0x1c0] sm:$0xff]
    %v5388 = vld [vmem:[#allocation31 + $0x1c8] sm:$0xff]
    %v5389 = vld [vmem:[#allocation31 + $0x1d0] sm:$0xff]
    %v5390 = vld [vmem:[#allocation31 + $0x1d8] sm:$0xff]
    %v5391 = vld [vmem:[#allocation31 + $0x1e0] sm:$0xff]
    %v5392 = vld [vmem:[#allocation31 + $0x1e8] sm:$0xff]
    %v5393 = vld [vmem:[#allocation31 + $0x1f0] sm:$0xff]
    %v5394 = vld [vmem:[#allocation31 + $0x1f8] sm:$0xff]
    %v5395 = vld [vmem:[#allocation33] sm:$0xf]
    %v5397 = vlaneseq
    %v5398 = vshrl.u32 %v5397, 7
    %v5399 = vsub.s32 0, %v5398
    %v5400 = vrot.slane %v5395, %v5399
    %v5401 = vlaneseq
    %v5402 = vshrl.u32 %v5401, 7
    %v5403 = vsub.s32 1, %v5402
    %v5404 = vrot.slane %v5395, %v5403
    %v5405 = vlaneseq
    %v5406 = vshrl.u32 %v5405, 7
    %v5407 = vsub.s32 2, %v5406
    %v5408 = vrot.slane %v5395, %v5407
    %v5409 = vlaneseq
    %v5410 = vshrl.u32 %v5409, 7
    %v5411 = vsub.s32 3, %v5410
    %v5412 = vrot.slane %v5395, %v5411
    %v5481 = vunpack.c.l.b16 %v5331
    %v5482 = vunpack.c.h.b16 %v5331
    %v5483 = vunpack.c.l.b16 %v5332
    %v5484 = vunpack.c.h.b16 %v5332
    %v5485 = vunpack.c.l.b16 %v5333
    %v5486 = vunpack.c.h.b16 %v5333
    %v5487 = vunpack.c.l.b16 %v5334
    %v5488 = vunpack.c.h.b16 %v5334
    %v5489 = vunpack.c.l.b16 %v5335
    %v5490 = vunpack.c.h.b16 %v5335
    %v5491 = vunpack.c.l.b16 %v5336
    %v5492 = vunpack.c.h.b16 %v5336
    %v5493 = vunpack.c.l.b16 %v5337
    %v5494 = vunpack.c.h.b16 %v5337
    %v5495 = vunpack.c.l.b16 %v5338
    %v5496 = vunpack.c.h.b16 %v5338
    %v5497 = vunpack.c.l.b16 %v5339
    %v5498 = vunpack.c.h.b16 %v5339
    %v5499 = vunpack.c.l.b16 %v5340
    %v5500 = vunpack.c.h.b16 %v5340
    %v5501 = vunpack.c.l.b16 %v5341
    %v5502 = vunpack.c.h.b16 %v5341
    %v5503 = vunpack.c.l.b16 %v5342
    %v5504 = vunpack.c.h.b16 %v5342
    %v5505 = vunpack.c.l.b16 %v5343
    %v5506 = vunpack.c.h.b16 %v5343
    %v5507 = vunpack.c.l.b16 %v5344
    %v5508 = vunpack.c.h.b16 %v5344
    %v5509 = vunpack.c.l.b16 %v5345
    %v5510 = vunpack.c.h.b16 %v5345
    %v5511 = vunpack.c.l.b16 %v5346
    %v5512 = vunpack.c.h.b16 %v5346
    %v5513 = vunpack.c.l.b16 %v5347
    %v5514 = vunpack.c.h.b16 %v5347
    %v5515 = vunpack.c.l.b16 %v5348
    %v5516 = vunpack.c.h.b16 %v5348
    %v5517 = vunpack.c.l.b16 %v5349
    %v5518 = vunpack.c.h.b16 %v5349
    %v5519 = vunpack.c.l.b16 %v5350
    %v5520 = vunpack.c.h.b16 %v5350
    %v5521 = vunpack.c.l.b16 %v5351
    %v5522 = vunpack.c.h.b16 %v5351
    %v5523 = vunpack.c.l.b16 %v5352
    %v5524 = vunpack.c.h.b16 %v5352
    %v5525 = vunpack.c.l.b16 %v5353
    %v5526 = vunpack.c.h.b16 %v5353
    %v5527 = vunpack.c.l.b16 %v5354
    %v5528 = vunpack.c.h.b16 %v5354
    %v5529 = vunpack.c.l.b16 %v5355
    %v5530 = vunpack.c.h.b16 %v5355
    %v5531 = vunpack.c.l.b16 %v5356
    %v5532 = vunpack.c.h.b16 %v5356
    %v5533 = vunpack.c.l.b16 %v5357
    %v5534 = vunpack.c.h.b16 %v5357
    %v5535 = vunpack.c.l.b16 %v5358
    %v5536 = vunpack.c.h.b16 %v5358
    %v5537 = vunpack.c.l.b16 %v5359
    %v5538 = vunpack.c.h.b16 %v5359
    %v5539 = vunpack.c.l.b16 %v5360
    %v5540 = vunpack.c.h.b16 %v5360
    %v5541 = vunpack.c.l.b16 %v5361
    %v5542 = vunpack.c.h.b16 %v5361
    %v5543 = vunpack.c.l.b16 %v5362
    %v5544 = vunpack.c.h.b16 %v5362
    %v5545 = vunpack.c.l.b16 %v5363
    %v5546 = vunpack.c.h.b16 %v5363
    %v5547 = vunpack.c.l.b16 %v5364
    %v5548 = vunpack.c.h.b16 %v5364
    %v5549 = vunpack.c.l.b16 %v5365
    %v5550 = vunpack.c.h.b16 %v5365
    %v5551 = vunpack.c.l.b16 %v5366
    %v5552 = vunpack.c.h.b16 %v5366
    %v5553 = vunpack.c.l.b16 %v5367
    %v5554 = vunpack.c.h.b16 %v5367
    %v5555 = vunpack.c.l.b16 %v5368
    %v5556 = vunpack.c.h.b16 %v5368
    %v5557 = vunpack.c.l.b16 %v5369
    %v5558 = vunpack.c.h.b16 %v5369
    %v5559 = vunpack.c.l.b16 %v5370
    %v5560 = vunpack.c.h.b16 %v5370
    %v5561 = vunpack.c.l.b16 %v5371
    %v5562 = vunpack.c.h.b16 %v5371
    %v5563 = vunpack.c.l.b16 %v5372
    %v5564 = vunpack.c.h.b16 %v5372
    %v5565 = vunpack.c.l.b16 %v5373
    %v5566 = vunpack.c.h.b16 %v5373
    %v5567 = vunpack.c.l.b16 %v5374
    %v5568 = vunpack.c.h.b16 %v5374
    %v5569 = vunpack.c.l.b16 %v5375
    %v5570 = vunpack.c.h.b16 %v5375
    %v5571 = vunpack.c.l.b16 %v5376
    %v5572 = vunpack.c.h.b16 %v5376
    %v5573 = vunpack.c.l.b16 %v5377
    %v5574 = vunpack.c.h.b16 %v5377
    %v5575 = vunpack.c.l.b16 %v5378
    %v5576 = vunpack.c.h.b16 %v5378
    %v5577 = vunpack.c.l.b16 %v5379
    %v5578 = vunpack.c.h.b16 %v5379
    %v5579 = vunpack.c.l.b16 %v5380
    %v5580 = vunpack.c.h.b16 %v5380
    %v5581 = vunpack.c.l.b16 %v5381
    %v5582 = vunpack.c.h.b16 %v5381
    %v5583 = vunpack.c.l.b16 %v5382
    %v5584 = vunpack.c.h.b16 %v5382
    %v5585 = vunpack.c.l.b16 %v5383
    %v5586 = vunpack.c.h.b16 %v5383
    %v5587 = vunpack.c.l.b16 %v5384
    %v5588 = vunpack.c.h.b16 %v5384
    %v5589 = vunpack.c.l.b16 %v5385
    %v5590 = vunpack.c.h.b16 %v5385
    %v5591 = vunpack.c.l.b16 %v5386
    %v5592 = vunpack.c.h.b16 %v5386
    %v5593 = vunpack.c.l.b16 %v5387
    %v5594 = vunpack.c.h.b16 %v5387
    %v5595 = vunpack.c.l.b16 %v5388
    %v5596 = vunpack.c.h.b16 %v5388
    %v5597 = vunpack.c.l.b16 %v5389
    %v5598 = vunpack.c.h.b16 %v5389
    %v5599 = vunpack.c.l.b16 %v5390
    %v5600 = vunpack.c.h.b16 %v5390
    %v5601 = vunpack.c.l.b16 %v5391
    %v5602 = vunpack.c.h.b16 %v5391
    %v5603 = vunpack.c.l.b16 %v5392
    %v5604 = vunpack.c.h.b16 %v5392
    %v5605 = vunpack.c.l.b16 %v5393
    %v5606 = vunpack.c.h.b16 %v5393
    %v5607 = vunpack.c.l.b16 %v5394
    %v5608 = vunpack.c.h.b16 %v5394
    %v5609 = vpack.c.b16 %v5485, %v5481
    %v5610 = vpack.c.b16 %v5486, %v5482
    %v5611 = vpack.c.b16 %v5487, %v5483
    %v5612 = vpack.c.b16 %v5488, %v5484
    %v5613 = vpack.c.b16 %v5493, %v5489
    %v5614 = vpack.c.b16 %v5494, %v5490
    %v5615 = vpack.c.b16 %v5495, %v5491
    %v5616 = vpack.c.b16 %v5496, %v5492
    %v5617 = vpack.c.b16 %v5501, %v5497
    %v5618 = vpack.c.b16 %v5502, %v5498
    %v5619 = vpack.c.b16 %v5503, %v5499
    %v5620 = vpack.c.b16 %v5504, %v5500
    %v5621 = vpack.c.b16 %v5509, %v5505
    %v5622 = vpack.c.b16 %v5510, %v5506
    %v5623 = vpack.c.b16 %v5511, %v5507
    %v5624 = vpack.c.b16 %v5512, %v5508
    %v5625 = vpack.c.b16 %v5517, %v5513
    %v5626 = vpack.c.b16 %v5518, %v5514
    %v5627 = vpack.c.b16 %v5519, %v5515
    %v5628 = vpack.c.b16 %v5520, %v5516
    %v5629 = vpack.c.b16 %v5525, %v5521
    %v5630 = vpack.c.b16 %v5526, %v5522
    %v5631 = vpack.c.b16 %v5527, %v5523
    %v5632 = vpack.c.b16 %v5528, %v5524
    %v5633 = vpack.c.b16 %v5533, %v5529
    %v5634 = vpack.c.b16 %v5534, %v5530
    %v5635 = vpack.c.b16 %v5535, %v5531
    %v5636 = vpack.c.b16 %v5536, %v5532
    %v5637 = vpack.c.b16 %v5541, %v5537
    %v5638 = vpack.c.b16 %v5542, %v5538
    %v5639 = vpack.c.b16 %v5543, %v5539
    %v5640 = vpack.c.b16 %v5544, %v5540
    %v5641 = vpack.c.b16 %v5549, %v5545
    %v5642 = vpack.c.b16 %v5550, %v5546
    %v5643 = vpack.c.b16 %v5551, %v5547
    %v5644 = vpack.c.b16 %v5552, %v5548
    %v5645 = vpack.c.b16 %v5557, %v5553
    %v5646 = vpack.c.b16 %v5558, %v5554
    %v5647 = vpack.c.b16 %v5559, %v5555
    %v5648 = vpack.c.b16 %v5560, %v5556
    %v5649 = vpack.c.b16 %v5565, %v5561
    %v5650 = vpack.c.b16 %v5566, %v5562
    %v5651 = vpack.c.b16 %v5567, %v5563
    %v5652 = vpack.c.b16 %v5568, %v5564
    %v5653 = vpack.c.b16 %v5573, %v5569
    %v5654 = vpack.c.b16 %v5574, %v5570
    %v5655 = vpack.c.b16 %v5575, %v5571
    %v5656 = vpack.c.b16 %v5576, %v5572
    %v5657 = vpack.c.b16 %v5581, %v5577
    %v5658 = vpack.c.b16 %v5582, %v5578
    %v5659 = vpack.c.b16 %v5583, %v5579
    %v5660 = vpack.c.b16 %v5584, %v5580
    %v5661 = vpack.c.b16 %v5589, %v5585
    %v5662 = vpack.c.b16 %v5590, %v5586
    %v5663 = vpack.c.b16 %v5591, %v5587
    %v5664 = vpack.c.b16 %v5592, %v5588
    %v5665 = vpack.c.b16 %v5597, %v5593
    %v5666 = vpack.c.b16 %v5598, %v5594
    %v5667 = vpack.c.b16 %v5599, %v5595
    %v5668 = vpack.c.b16 %v5600, %v5596
    %v5669 = vpack.c.b16 %v5605, %v5601
    %v5670 = vpack.c.b16 %v5606, %v5602
    %v5671 = vpack.c.b16 %v5607, %v5603
    %v5672 = vpack.c.b16 %v5608, %v5604
    %5737 = vmatprep.subr.bf16.mxu0 %v5638
    %5738 = vmatpush1.bf16.msra.mxu0 %v5637
    %5739 = vmatprep.subr.bf16.mxu0 %v5634
    %5740 = vmatpush1.bf16.msra.mxu0 %v5633
    %5741 = vmatprep.subr.bf16.mxu0 %v5630
    %5742 = vmatpush1.bf16.msra.mxu0 %v5629
    %5743 = vmatprep.subr.bf16.mxu0 %v5626
    %5744 = vmatpush1.bf16.msra.mxu0 %v5625
    %5745 = vmatprep.subr.bf16.mxu0 %v5622
    %5746 = vmatpush1.bf16.msra.mxu0 %v5621
    %5747 = vmatprep.subr.bf16.mxu0 %v5618
    %5748 = vmatpush1.bf16.msra.mxu0 %v5617
    %5749 = vmatprep.subr.bf16.mxu0 %v5614
    %5750 = vmatpush1.bf16.msra.mxu0 %v5613
    %5751 = vmatprep.subr.bf16.mxu0 %v5610
    %5752 = vmatpush1.bf16.msra.mxu0 %v5609
    %5753 = vmatprep.subr.bf16.mxu0 %v5670
    %5754 = vmatpush2.bf16.msra.mxu0 %v5669
    %5755 = vmatprep.subr.bf16.mxu0 %v5666
    %5756 = vmatpush2.bf16.msra.mxu0 %v5665
    %5757 = vmatprep.subr.bf16.mxu0 %v5662
    %5758 = vmatpush2.bf16.msra.mxu0 %v5661
    %5759 = vmatprep.subr.bf16.mxu0 %v5658
    %5760 = vmatpush2.bf16.msra.mxu0 %v5657
    %5761 = vmatprep.subr.bf16.mxu0 %v5654
    %5762 = vmatpush2.bf16.msra.mxu0 %v5653
    %5763 = vmatprep.subr.bf16.mxu0 %v5650
    %5764 = vmatpush2.bf16.msra.mxu0 %v5649
    %5765 = vmatprep.subr.bf16.mxu0 %v5646
    %5766 = vmatpush2.bf16.msra.mxu0 %v5645
    %5767 = vmatprep.subr.bf16.mxu0 %v5642
    %5768 = vmatpush2.bf16.msra.mxu0 %v5641
    %5769 = vmatprep.mubr.bf16.mxu0 %v5330
    %5770 = vmatmul.mubr.bf16.gmra.mxu0 %v5329
    %v5771 = vpop.f32.mrf.mxu0
    %v5772 = vadd.f32 %v5400, %v5771
    %v5773 = vpop.f32.mrf.mxu0
    %v5774 = vadd.f32 %v5404, %v5773
    %v5775 = vpop.f32.mrf.mxu0
    %v5776 = vadd.f32 %v5400, %v5775
    %v5777 = vpop.f32.mrf.mxu0
    %v5778 = vadd.f32 %v5404, %v5777
    %5779 = vdwg.mxu0
    %5780 = vmatprep.subr.bf16.mxu0 %v5640
    %5781 = vmatpush1.bf16.msra.mxu0 %v5639
    %5782 = vmatprep.subr.bf16.mxu0 %v5636
    %5783 = vmatpush1.bf16.msra.mxu0 %v5635
    %5784 = vmatprep.subr.bf16.mxu0 %v5632
    %5785 = vmatpush1.bf16.msra.mxu0 %v5631
    %5786 = vmatprep.subr.bf16.mxu0 %v5628
    %5787 = vmatpush1.bf16.msra.mxu0 %v5627
    %5788 = vmatprep.subr.bf16.mxu0 %v5624
    %5789 = vmatpush1.bf16.msra.mxu0 %v5623
    %5790 = vmatprep.subr.bf16.mxu0 %v5620
    %5791 = vmatpush1.bf16.msra.mxu0 %v5619
    %5792 = vmatprep.subr.bf16.mxu0 %v5616
    %5793 = vmatpush1.bf16.msra.mxu0 %v5615
    %5794 = vmatprep.subr.bf16.mxu0 %v5612
    %5795 = vmatpush1.bf16.msra.mxu0 %v5611
    %5796 = vmatprep.subr.bf16.mxu0 %v5672
    %5797 = vmatpush2.bf16.msra.mxu0 %v5671
    %5798 = vmatprep.subr.bf16.mxu0 %v5668
    %5799 = vmatpush2.bf16.msra.mxu0 %v5667
    %5800 = vmatprep.subr.bf16.mxu0 %v5664
    %5801 = vmatpush2.bf16.msra.mxu0 %v5663
    %5802 = vmatprep.subr.bf16.mxu0 %v5660
    %5803 = vmatpush2.bf16.msra.mxu0 %v5659
    %5804 = vmatprep.subr.bf16.mxu0 %v5656
    %5805 = vmatpush2.bf16.msra.mxu0 %v5655
    %5806 = vmatprep.subr.bf16.mxu0 %v5652
    %5807 = vmatpush2.bf16.msra.mxu0 %v5651
    %5808 = vmatprep.subr.bf16.mxu0 %v5648
    %5809 = vmatpush2.bf16.msra.mxu0 %v5647
    %5810 = vmatprep.subr.bf16.mxu0 %v5644
    %5811 = vmatpush2.bf16.msra.mxu0 %v5643
    %5812 = vmatprep.mubr.bf16.mxu0 %v5330
    %5813 = vmatmul.mubr.bf16.gmra.mxu0 %v5329
    %v5814 = vpop.f32.mrf.mxu0
    %v5815 = vadd.f32 %v5408, %v5814
    %v5816 = vpop.f32.mrf.mxu0
    %v5817 = vadd.f32 %v5412, %v5816
    %v5818 = vpop.f32.mrf.mxu0
    %v5819 = vadd.f32 %v5408, %v5818
    %v5820 = vpop.f32.mrf.mxu0
    %v5821 = vadd.f32 %v5412, %v5820
    %5822 = vdwg.mxu0
    %5823 = vst [vmem:[%s65] sm:$0xff] %v5772
    %5824 = vst [vmem:[%s65 + $0x8] sm:$0xff] %v5774
    %5825 = vst [vmem:[%s65 + $0x10] sm:$0xff] %v5815
    %5826 = vst [vmem:[%s65 + $0x18] sm:$0xff] %v5817
    %5827 = vst [vmem:[%s65 + $0x20] sm:$0xff] %v5776
    %5828 = vst [vmem:[%s65 + $0x28] sm:$0xff] %v5778
    %5829 = vst [vmem:[%s65 + $0x30] sm:$0xff] %v5819
    %5830 = vst [vmem:[%s65 + $0x38] sm:$0xff] %v5821
    %v5831 = vmul.f32 %v5815, 0.5
    %v5832 = vmul.f32 %v5817, 0.5
    %v5833 = vmul.f32 %v5819, 0.5
    %v5834 = vmul.f32 %v5821, 0.5
    %v5835 = vmul.f32 %v5831, 1.442695
    %v5836 = vpow.pop %v5835
    %v5837 = vmul.f32 %v5832, 1.442695
    %v5838 = vpow.pop %v5837
    %v5839 = vmul.f32 %v5833, 1.442695
    %v5840 = vpow.pop %v5839
    %v5841 = vmul.f32 %v5834, 1.442695
    %v5842 = vpow.pop %v5841
    %v5843 = vld [vmem:[#allocation12] sm:$0xff]
    %v5844 = vld [vmem:[#allocation12 + $0x8] sm:$0xff]
    %v5845 = vld [vmem:[#allocation12 + $0x10] sm:$0xff]
    %v5846 = vld [vmem:[#allocation12 + $0x18] sm:$0xff]
    %v5847 = vmul.f32 %v5843, %v5836
    %v5848 = vmul.f32 %v5844, %v5838
    %v5849 = vmul.f32 %v5845, %v5840
    %v5850 = vmul.f32 %v5846, %v5842
    %v5851 = vadd.f32 %v5772, %v5847
    %v5852 = vadd.f32 %v5774, %v5848
    %v5853 = vadd.f32 %v5776, %v5849
    %v5854 = vadd.f32 %v5778, %v5850
    %v5855 = vpack.c.bf16 %v5853, %v5851
    %v5856 = vpack.c.bf16 %v5854, %v5852
    %s5857 = smul.u32 4, 224
    %s5858 = smul.u32 %s5857, 4
    %s5859 = sshll.u32 %s5858, 4
    %5860 = dma.done [#allocation6], %s5859
    %v5861 = vld [vmem:[#allocation2] sm:$0xff]
    %v5862 = vld [vmem:[#allocation2 + $0x8] sm:$0xff]
    %v5863 = vld [vmem:[#allocation2 + $0x10] sm:$0xff]
    %v5864 = vld [vmem:[#allocation2 + $0x18] sm:$0xff]
    %v5865 = vld [vmem:[#allocation2 + $0x20] sm:$0xff]
    %v5866 = vld [vmem:[#allocation2 + $0x28] sm:$0xff]
    %v5867 = vld [vmem:[#allocation2 + $0x30] sm:$0xff]
    %v5868 = vld [vmem:[#allocation2 + $0x38] sm:$0xff]
    %v5869 = vld [vmem:[#allocation2 + $0x40] sm:$0xff]
    %v5870 = vld [vmem:[#allocation2 + $0x48] sm:$0xff]
    %v5871 = vld [vmem:[#allocation2 + $0x50] sm:$0xff]
    %v5872 = vld [vmem:[#allocation2 + $0x58] sm:$0xff]
    %v5873 = vld [vmem:[#allocation2 + $0x60] sm:$0xff]
    %v5874 = vld [vmem:[#allocation2 + $0x68] sm:$0xff]
    %v5875 = vld [vmem:[#allocation2 + $0x70] sm:$0xff]
    %v5876 = vld [vmem:[#allocation2 + $0x78] sm:$0xff]
    %v5877 = vld [vmem:[#allocation2 + $0x80] sm:$0xff]
    %v5878 = vld [vmem:[#allocation2 + $0x88] sm:$0xff]
    %v5879 = vld [vmem:[#allocation2 + $0x90] sm:$0xff]
    %v5880 = vld [vmem:[#allocation2 + $0x98] sm:$0xff]
    %v5881 = vld [vmem:[#allocation2 + $0xa0] sm:$0xff]
    %v5882 = vld [vmem:[#allocation2 + $0xa8] sm:$0xff]
    %v5883 = vld [vmem:[#allocation2 + $0xb0] sm:$0xff]
    %v5884 = vld [vmem:[#allocation2 + $0xb8] sm:$0xff]
    %v5885 = vld [vmem:[#allocation2 + $0xc0] sm:$0xff]
    %v5886 = vld [vmem:[#allocation2 + $0xc8] sm:$0xff]
    %v5887 = vld [vmem:[#allocation2 + $0xd0] sm:$0xff]
    %v5888 = vld [vmem:[#allocation2 + $0xd8] sm:$0xff]
    %v5889 = vld [vmem:[#allocation2 + $0xe0] sm:$0xff]
    %v5890 = vld [vmem:[#allocation2 + $0xe8] sm:$0xff]
    %v5891 = vld [vmem:[#allocation2 + $0xf0] sm:$0xff]
    %v5892 = vld [vmem:[#allocation2 + $0xf8] sm:$0xff]
    %v5893 = vld [vmem:[#allocation2 + $0x100] sm:$0xff]
    %v5894 = vld [vmem:[#allocation2 + $0x108] sm:$0xff]
    %v5895 = vld [vmem:[#allocation2 + $0x110] sm:$0xff]
    %v5896 = vld [vmem:[#allocation2 + $0x118] sm:$0xff]
    %v5897 = vld [vmem:[#allocation2 + $0x120] sm:$0xff]
    %v5898 = vld [vmem:[#allocation2 + $0x128] sm:$0xff]
    %v5899 = vld [vmem:[#allocation2 + $0x130] sm:$0xff]
    %v5900 = vld [vmem:[#allocation2 + $0x138] sm:$0xff]
    %v5901 = vld [vmem:[#allocation2 + $0x140] sm:$0xff]
    %v5902 = vld [vmem:[#allocation2 + $0x148] sm:$0xff]
    %v5903 = vld [vmem:[#allocation2 + $0x150] sm:$0xff]
    %v5904 = vld [vmem:[#allocation2 + $0x158] sm:$0xff]
    %v5905 = vld [vmem:[#allocation2 + $0x160] sm:$0xff]
    %v5906 = vld [vmem:[#allocation2 + $0x168] sm:$0xff]
    %v5907 = vld [vmem:[#allocation2 + $0x170] sm:$0xff]
    %v5908 = vld [vmem:[#allocation2 + $0x178] sm:$0xff]
    %v5909 = vld [vmem:[#allocation2 + $0x180] sm:$0xff]
    %v5910 = vld [vmem:[#allocation2 + $0x188] sm:$0xff]
    %v5911 = vld [vmem:[#allocation2 + $0x190] sm:$0xff]
    %v5912 = vld [vmem:[#allocation2 + $0x198] sm:$0xff]
    %v5913 = vld [vmem:[#allocation2 + $0x1a0] sm:$0xff]
    %v5914 = vld [vmem:[#allocation2 + $0x1a8] sm:$0xff]
    %v5915 = vld [vmem:[#allocation2 + $0x1b0] sm:$0xff]
    %v5916 = vld [vmem:[#allocation2 + $0x1b8] sm:$0xff]
    %v5917 = vld [vmem:[#allocation2 + $0x1c0] sm:$0xff]
    %v5918 = vld [vmem:[#allocation2 + $0x1c8] sm:$0xff]
    %v5919 = vld [vmem:[#allocation2 + $0x1d0] sm:$0xff]
    %v5920 = vld [vmem:[#allocation2 + $0x1d8] sm:$0xff]
    %v5921 = vld [vmem:[#allocation2 + $0x1e0] sm:$0xff]
    %v5922 = vld [vmem:[#allocation2 + $0x1e8] sm:$0xff]
    %v5923 = vld [vmem:[#allocation2 + $0x1f0] sm:$0xff]
    %v5924 = vld [vmem:[#allocation2 + $0x1f8] sm:$0xff]
    %v5925 = vld [vmem:[#allocation2 + $0x200] sm:$0xff]
    %v5926 = vld [vmem:[#allocation2 + $0x208] sm:$0xff]
    %v5927 = vld [vmem:[#allocation2 + $0x210] sm:$0xff]
    %v5928 = vld [vmem:[#allocation2 + $0x218] sm:$0xff]
    %v5929 = vld [vmem:[#allocation2 + $0x220] sm:$0xff]
    %v5930 = vld [vmem:[#allocation2 + $0x228] sm:$0xff]
    %v5931 = vld [vmem:[#allocation2 + $0x230] sm:$0xff]
    %v5932 = vld [vmem:[#allocation2 + $0x238] sm:$0xff]
    %v5933 = vld [vmem:[#allocation2 + $0x240] sm:$0xff]
    %v5934 = vld [vmem:[#allocation2 + $0x248] sm:$0xff]
    %v5935 = vld [vmem:[#allocation2 + $0x250] sm:$0xff]
    %v5936 = vld [vmem:[#allocation2 + $0x258] sm:$0xff]
    %v5937 = vld [vmem:[#allocation2 + $0x260] sm:$0xff]
    %v5938 = vld [vmem:[#allocation2 + $0x268] sm:$0xff]
    %v5939 = vld [vmem:[#allocation2 + $0x270] sm:$0xff]
    %v5940 = vld [vmem:[#allocation2 + $0x278] sm:$0xff]
    %v5941 = vld [vmem:[#allocation2 + $0x280] sm:$0xff]
    %v5942 = vld [vmem:[#allocation2 + $0x288] sm:$0xff]
    %v5943 = vld [vmem:[#allocation2 + $0x290] sm:$0xff]
    %v5944 = vld [vmem:[#allocation2 + $0x298] sm:$0xff]
    %v5945 = vld [vmem:[#allocation2 + $0x2a0] sm:$0xff]
    %v5946 = vld [vmem:[#allocation2 + $0x2a8] sm:$0xff]
    %v5947 = vld [vmem:[#allocation2 + $0x2b0] sm:$0xff]
    %v5948 = vld [vmem:[#allocation2 + $0x2b8] sm:$0xff]
    %v5949 = vld [vmem:[#allocation2 + $0x2c0] sm:$0xff]
    %v5950 = vld [vmem:[#allocation2 + $0x2c8] sm:$0xff]
    %v5951 = vld [vmem:[#allocation2 + $0x2d0] sm:$0xff]
    %v5952 = vld [vmem:[#allocation2 + $0x2d8] sm:$0xff]
    %v5953 = vld [vmem:[#allocation2 + $0x2e0] sm:$0xff]
    %v5954 = vld [vmem:[#allocation2 + $0x2e8] sm:$0xff]
    %v5955 = vld [vmem:[#allocation2 + $0x2f0] sm:$0xff]
    %v5956 = vld [vmem:[#allocation2 + $0x2f8] sm:$0xff]
    %v5957 = vld [vmem:[#allocation2 + $0x300] sm:$0xff]
    %v5958 = vld [vmem:[#allocation2 + $0x308] sm:$0xff]
    %v5959 = vld [vmem:[#allocation2 + $0x310] sm:$0xff]
    %v5960 = vld [vmem:[#allocation2 + $0x318] sm:$0xff]
    %v5961 = vld [vmem:[#allocation2 + $0x320] sm:$0xff]
    %v5962 = vld [vmem:[#allocation2 + $0x328] sm:$0xff]
    %v5963 = vld [vmem:[#allocation2 + $0x330] sm:$0xff]
    %v5964 = vld [vmem:[#allocation2 + $0x338] sm:$0xff]
    %v5965 = vld [vmem:[#allocation2 + $0x340] sm:$0xff]
    %v5966 = vld [vmem:[#allocation2 + $0x348] sm:$0xff]
    %v5967 = vld [vmem:[#allocation2 + $0x350] sm:$0xff]
    %v5968 = vld [vmem:[#allocation2 + $0x358] sm:$0xff]
    %v5969 = vld [vmem:[#allocation2 + $0x360] sm:$0xff]
    %v5970 = vld [vmem:[#allocation2 + $0x368] sm:$0xff]
    %v5971 = vld [vmem:[#allocation2 + $0x370] sm:$0xff]
    %v5972 = vld [vmem:[#allocation2 + $0x378] sm:$0xff]
    %v5973 = vld [vmem:[#allocation2 + $0x380] sm:$0xff]
    %v5974 = vld [vmem:[#allocation2 + $0x388] sm:$0xff]
    %v5975 = vld [vmem:[#allocation2 + $0x390] sm:$0xff]
    %v5976 = vld [vmem:[#allocation2 + $0x398] sm:$0xff]
    %v5977 = vld [vmem:[#allocation2 + $0x3a0] sm:$0xff]
    %v5978 = vld [vmem:[#allocation2 + $0x3a8] sm:$0xff]
    %v5979 = vld [vmem:[#allocation2 + $0x3b0] sm:$0xff]
    %v5980 = vld [vmem:[#allocation2 + $0x3b8] sm:$0xff]
    %v5981 = vld [vmem:[#allocation2 + $0x3c0] sm:$0xff]
    %v5982 = vld [vmem:[#allocation2 + $0x3c8] sm:$0xff]
    %v5983 = vld [vmem:[#allocation2 + $0x3d0] sm:$0xff]
    %v5984 = vld [vmem:[#allocation2 + $0x3d8] sm:$0xff]
    %v5985 = vld [vmem:[#allocation2 + $0x3e0] sm:$0xff]
    %v5986 = vld [vmem:[#allocation2 + $0x3e8] sm:$0xff]
    %v5987 = vld [vmem:[#allocation2 + $0x3f0] sm:$0xff]
    %v5988 = vld [vmem:[#allocation2 + $0x3f8] sm:$0xff]
    %v5989 = vld [vmem:[#allocation2 + $0x400] sm:$0xff]
    %v5990 = vld [vmem:[#allocation2 + $0x408] sm:$0xff]
    %v5991 = vld [vmem:[#allocation2 + $0x410] sm:$0xff]
    %v5992 = vld [vmem:[#allocation2 + $0x418] sm:$0xff]
    %v5993 = vld [vmem:[#allocation2 + $0x420] sm:$0xff]
    %v5994 = vld [vmem:[#allocation2 + $0x428] sm:$0xff]
    %v5995 = vld [vmem:[#allocation2 + $0x430] sm:$0xff]
    %v5996 = vld [vmem:[#allocation2 + $0x438] sm:$0xff]
    %v5997 = vld [vmem:[#allocation2 + $0x440] sm:$0xff]
    %v5998 = vld [vmem:[#allocation2 + $0x448] sm:$0xff]
    %v5999 = vld [vmem:[#allocation2 + $0x450] sm:$0xff]
    %v6000 = vld [vmem:[#allocation2 + $0x458] sm:$0xff]
    %v6001 = vld [vmem:[#allocation2 + $0x460] sm:$0xff]
    %v6002 = vld [vmem:[#allocation2 + $0x468] sm:$0xff]
    %v6003 = vld [vmem:[#allocation2 + $0x470] sm:$0xff]
    %v6004 = vld [vmem:[#allocation2 + $0x478] sm:$0xff]
    %v6005 = vld [vmem:[#allocation2 + $0x480] sm:$0xff]
    %v6006 = vld [vmem:[#allocation2 + $0x488] sm:$0xff]
    %v6007 = vld [vmem:[#allocation2 + $0x490] sm:$0xff]
    %v6008 = vld [vmem:[#allocation2 + $0x498] sm:$0xff]
    %v6009 = vld [vmem:[#allocation2 + $0x4a0] sm:$0xff]
    %v6010 = vld [vmem:[#allocation2 + $0x4a8] sm:$0xff]
    %v6011 = vld [vmem:[#allocation2 + $0x4b0] sm:$0xff]
    %v6012 = vld [vmem:[#allocation2 + $0x4b8] sm:$0xff]
    %v6013 = vld [vmem:[#allocation2 + $0x4c0] sm:$0xff]
    %v6014 = vld [vmem:[#allocation2 + $0x4c8] sm:$0xff]
    %v6015 = vld [vmem:[#allocation2 + $0x4d0] sm:$0xff]
    %v6016 = vld [vmem:[#allocation2 + $0x4d8] sm:$0xff]
    %v6017 = vld [vmem:[#allocation2 + $0x4e0] sm:$0xff]
    %v6018 = vld [vmem:[#allocation2 + $0x4e8] sm:$0xff]
    %v6019 = vld [vmem:[#allocation2 + $0x4f0] sm:$0xff]
    %v6020 = vld [vmem:[#allocation2 + $0x4f8] sm:$0xff]
    %v6021 = vld [vmem:[#allocation2 + $0x500] sm:$0xff]
    %v6022 = vld [vmem:[#allocation2 + $0x508] sm:$0xff]
    %v6023 = vld [vmem:[#allocation2 + $0x510] sm:$0xff]
    %v6024 = vld [vmem:[#allocation2 + $0x518] sm:$0xff]
    %v6025 = vld [vmem:[#allocation2 + $0x520] sm:$0xff]
    %v6026 = vld [vmem:[#allocation2 + $0x528] sm:$0xff]
    %v6027 = vld [vmem:[#allocation2 + $0x530] sm:$0xff]
    %v6028 = vld [vmem:[#allocation2 + $0x538] sm:$0xff]
    %v6029 = vld [vmem:[#allocation2 + $0x540] sm:$0xff]
    %v6030 = vld [vmem:[#allocation2 + $0x548] sm:$0xff]
    %v6031 = vld [vmem:[#allocation2 + $0x550] sm:$0xff]
    %v6032 = vld [vmem:[#allocation2 + $0x558] sm:$0xff]
    %v6033 = vld [vmem:[#allocation2 + $0x560] sm:$0xff]
    %v6034 = vld [vmem:[#allocation2 + $0x568] sm:$0xff]
    %v6035 = vld [vmem:[#allocation2 + $0x570] sm:$0xff]
    %v6036 = vld [vmem:[#allocation2 + $0x578] sm:$0xff]
    %v6037 = vld [vmem:[#allocation2 + $0x580] sm:$0xff]
    %v6038 = vld [vmem:[#allocation2 + $0x588] sm:$0xff]
    %v6039 = vld [vmem:[#allocation2 + $0x590] sm:$0xff]
    %v6040 = vld [vmem:[#allocation2 + $0x598] sm:$0xff]
    %v6041 = vld [vmem:[#allocation2 + $0x5a0] sm:$0xff]
    %v6042 = vld [vmem:[#allocation2 + $0x5a8] sm:$0xff]
    %v6043 = vld [vmem:[#allocation2 + $0x5b0] sm:$0xff]
    %v6044 = vld [vmem:[#allocation2 + $0x5b8] sm:$0xff]
    %v6045 = vld [vmem:[#allocation2 + $0x5c0] sm:$0xff]
    %v6046 = vld [vmem:[#allocation2 + $0x5c8] sm:$0xff]
    %v6047 = vld [vmem:[#allocation2 + $0x5d0] sm:$0xff]
    %v6048 = vld [vmem:[#allocation2 + $0x5d8] sm:$0xff]
    %v6049 = vld [vmem:[#allocation2 + $0x5e0] sm:$0xff]
    %v6050 = vld [vmem:[#allocation2 + $0x5e8] sm:$0xff]
    %v6051 = vld [vmem:[#allocation2 + $0x5f0] sm:$0xff]
    %v6052 = vld [vmem:[#allocation2 + $0x5f8] sm:$0xff]
    %v6053 = vld [vmem:[#allocation2 + $0x600] sm:$0xff]
    %v6054 = vld [vmem:[#allocation2 + $0x608] sm:$0xff]
    %v6055 = vld [vmem:[#allocation2 + $0x610] sm:$0xff]
    %v6056 = vld [vmem:[#allocation2 + $0x618] sm:$0xff]
    %v6057 = vld [vmem:[#allocation2 + $0x620] sm:$0xff]
    %v6058 = vld [vmem:[#allocation2 + $0x628] sm:$0xff]
    %v6059 = vld [vmem:[#allocation2 + $0x630] sm:$0xff]
    %v6060 = vld [vmem:[#allocation2 + $0x638] sm:$0xff]
    %v6061 = vld [vmem:[#allocation2 + $0x640] sm:$0xff]
    %v6062 = vld [vmem:[#allocation2 + $0x648] sm:$0xff]
    %v6063 = vld [vmem:[#allocation2 + $0x650] sm:$0xff]
    %v6064 = vld [vmem:[#allocation2 + $0x658] sm:$0xff]
    %v6065 = vld [vmem:[#allocation2 + $0x660] sm:$0xff]
    %v6066 = vld [vmem:[#allocation2 + $0x668] sm:$0xff]
    %v6067 = vld [vmem:[#allocation2 + $0x670] sm:$0xff]
    %v6068 = vld [vmem:[#allocation2 + $0x678] sm:$0xff]
    %v6069 = vld [vmem:[#allocation2 + $0x680] sm:$0xff]
    %v6070 = vld [vmem:[#allocation2 + $0x688] sm:$0xff]
    %v6071 = vld [vmem:[#allocation2 + $0x690] sm:$0xff]
    %v6072 = vld [vmem:[#allocation2 + $0x698] sm:$0xff]
    %v6073 = vld [vmem:[#allocation2 + $0x6a0] sm:$0xff]
    %v6074 = vld [vmem:[#allocation2 + $0x6a8] sm:$0xff]
    %v6075 = vld [vmem:[#allocation2 + $0x6b0] sm:$0xff]
    %v6076 = vld [vmem:[#allocation2 + $0x6b8] sm:$0xff]
    %v6077 = vld [vmem:[#allocation2 + $0x6c0] sm:$0xff]
    %v6078 = vld [vmem:[#allocation2 + $0x6c8] sm:$0xff]
    %v6079 = vld [vmem:[#allocation2 + $0x6d0] sm:$0xff]
    %v6080 = vld [vmem:[#allocation2 + $0x6d8] sm:$0xff]
    %v6081 = vld [vmem:[#allocation2 + $0x6e0] sm:$0xff]
    %v6082 = vld [vmem:[#allocation2 + $0x6e8] sm:$0xff]
    %v6083 = vld [vmem:[#allocation2 + $0x6f0] sm:$0xff]
    %v6084 = vld [vmem:[#allocation2 + $0x6f8] sm:$0xff]
    %v6085 = vld [vmem:[#allocation2 + $0x700] sm:$0xff]
    %v6086 = vld [vmem:[#allocation2 + $0x708] sm:$0xff]
    %v6087 = vld [vmem:[#allocation2 + $0x710] sm:$0xff]
    %v6088 = vld [vmem:[#allocation2 + $0x718] sm:$0xff]
    %v6089 = vld [vmem:[#allocation2 + $0x720] sm:$0xff]
    %v6090 = vld [vmem:[#allocation2 + $0x728] sm:$0xff]
    %v6091 = vld [vmem:[#allocation2 + $0x730] sm:$0xff]
    %v6092 = vld [vmem:[#allocation2 + $0x738] sm:$0xff]
    %v6093 = vld [vmem:[#allocation2 + $0x740] sm:$0xff]
    %v6094 = vld [vmem:[#allocation2 + $0x748] sm:$0xff]
    %v6095 = vld [vmem:[#allocation2 + $0x750] sm:$0xff]
    %v6096 = vld [vmem:[#allocation2 + $0x758] sm:$0xff]
    %v6097 = vld [vmem:[#allocation2 + $0x760] sm:$0xff]
    %v6098 = vld [vmem:[#allocation2 + $0x768] sm:$0xff]
    %v6099 = vld [vmem:[#allocation2 + $0x770] sm:$0xff]
    %v6100 = vld [vmem:[#allocation2 + $0x778] sm:$0xff]
    %v6101 = vld [vmem:[#allocation2 + $0x780] sm:$0xff]
    %v6102 = vld [vmem:[#allocation2 + $0x788] sm:$0xff]
    %v6103 = vld [vmem:[#allocation2 + $0x790] sm:$0xff]
    %v6104 = vld [vmem:[#allocation2 + $0x798] sm:$0xff]
    %v6105 = vld [vmem:[#allocation2 + $0x7a0] sm:$0xff]
    %v6106 = vld [vmem:[#allocation2 + $0x7a8] sm:$0xff]
    %v6107 = vld [vmem:[#allocation2 + $0x7b0] sm:$0xff]
    %v6108 = vld [vmem:[#allocation2 + $0x7b8] sm:$0xff]
    %v6109 = vld [vmem:[#allocation2 + $0x7c0] sm:$0xff]
    %v6110 = vld [vmem:[#allocation2 + $0x7c8] sm:$0xff]
    %v6111 = vld [vmem:[#allocation2 + $0x7d0] sm:$0xff]
    %v6112 = vld [vmem:[#allocation2 + $0x7d8] sm:$0xff]
    %v6113 = vld [vmem:[#allocation2 + $0x7e0] sm:$0xff]
    %v6114 = vld [vmem:[#allocation2 + $0x7e8] sm:$0xff]
    %v6115 = vld [vmem:[#allocation2 + $0x7f0] sm:$0xff]
    %v6116 = vld [vmem:[#allocation2 + $0x7f8] sm:$0xff]
    %v6117 = vld [vmem:[#allocation2 + $0x800] sm:$0xff]
    %v6118 = vld [vmem:[#allocation2 + $0x808] sm:$0xff]
    %v6119 = vld [vmem:[#allocation2 + $0x810] sm:$0xff]
    %v6120 = vld [vmem:[#allocation2 + $0x818] sm:$0xff]
    %v6121 = vld [vmem:[#allocation2 + $0x820] sm:$0xff]
    %v6122 = vld [vmem:[#allocation2 + $0x828] sm:$0xff]
    %v6123 = vld [vmem:[#allocation2 + $0x830] sm:$0xff]
    %v6124 = vld [vmem:[#allocation2 + $0x838] sm:$0xff]
    %v6125 = vld [vmem:[#allocation2 + $0x840] sm:$0xff]
    %v6126 = vld [vmem:[#allocation2 + $0x848] sm:$0xff]
    %v6127 = vld [vmem:[#allocation2 + $0x850] sm:$0xff]
    %v6128 = vld [vmem:[#allocation2 + $0x858] sm:$0xff]
    %v6129 = vld [vmem:[#allocation2 + $0x860] sm:$0xff]
    %v6130 = vld [vmem:[#allocation2 + $0x868] sm:$0xff]
    %v6131 = vld [vmem:[#allocation2 + $0x870] sm:$0xff]
    %v6132 = vld [vmem:[#allocation2 + $0x878] sm:$0xff]
    %v6133 = vld [vmem:[#allocation2 + $0x880] sm:$0xff]
    %v6134 = vld [vmem:[#allocation2 + $0x888] sm:$0xff]
    %v6135 = vld [vmem:[#allocation2 + $0x890] sm:$0xff]
    %v6136 = vld [vmem:[#allocation2 + $0x898] sm:$0xff]
    %v6137 = vld [vmem:[#allocation2 + $0x8a0] sm:$0xff]
    %v6138 = vld [vmem:[#allocation2 + $0x8a8] sm:$0xff]
    %v6139 = vld [vmem:[#allocation2 + $0x8b0] sm:$0xff]
    %v6140 = vld [vmem:[#allocation2 + $0x8b8] sm:$0xff]
    %v6141 = vld [vmem:[#allocation2 + $0x8c0] sm:$0xff]
    %v6142 = vld [vmem:[#allocation2 + $0x8c8] sm:$0xff]
    %v6143 = vld [vmem:[#allocation2 + $0x8d0] sm:$0xff]
    %v6144 = vld [vmem:[#allocation2 + $0x8d8] sm:$0xff]
    %v6145 = vld [vmem:[#allocation2 + $0x8e0] sm:$0xff]
    %v6146 = vld [vmem:[#allocation2 + $0x8e8] sm:$0xff]
    %v6147 = vld [vmem:[#allocation2 + $0x8f0] sm:$0xff]
    %v6148 = vld [vmem:[#allocation2 + $0x8f8] sm:$0xff]
    %v6149 = vld [vmem:[#allocation2 + $0x900] sm:$0xff]
    %v6150 = vld [vmem:[#allocation2 + $0x908] sm:$0xff]
    %v6151 = vld [vmem:[#allocation2 + $0x910] sm:$0xff]
    %v6152 = vld [vmem:[#allocation2 + $0x918] sm:$0xff]
    %v6153 = vld [vmem:[#allocation2 + $0x920] sm:$0xff]
    %v6154 = vld [vmem:[#allocation2 + $0x928] sm:$0xff]
    %v6155 = vld [vmem:[#allocation2 + $0x930] sm:$0xff]
    %v6156 = vld [vmem:[#allocation2 + $0x938] sm:$0xff]
    %v6157 = vld [vmem:[#allocation2 + $0x940] sm:$0xff]
    %v6158 = vld [vmem:[#allocation2 + $0x948] sm:$0xff]
    %v6159 = vld [vmem:[#allocation2 + $0x950] sm:$0xff]
    %v6160 = vld [vmem:[#allocation2 + $0x958] sm:$0xff]
    %v6161 = vld [vmem:[#allocation2 + $0x960] sm:$0xff]
    %v6162 = vld [vmem:[#allocation2 + $0x968] sm:$0xff]
    %v6163 = vld [vmem:[#allocation2 + $0x970] sm:$0xff]
    %v6164 = vld [vmem:[#allocation2 + $0x978] sm:$0xff]
    %v6165 = vld [vmem:[#allocation2 + $0x980] sm:$0xff]
    %v6166 = vld [vmem:[#allocation2 + $0x988] sm:$0xff]
    %v6167 = vld [vmem:[#allocation2 + $0x990] sm:$0xff]
    %v6168 = vld [vmem:[#allocation2 + $0x998] sm:$0xff]
    %v6169 = vld [vmem:[#allocation2 + $0x9a0] sm:$0xff]
    %v6170 = vld [vmem:[#allocation2 + $0x9a8] sm:$0xff]
    %v6171 = vld [vmem:[#allocation2 + $0x9b0] sm:$0xff]
    %v6172 = vld [vmem:[#allocation2 + $0x9b8] sm:$0xff]
    %v6173 = vld [vmem:[#allocation2 + $0x9c0] sm:$0xff]
    %v6174 = vld [vmem:[#allocation2 + $0x9c8] sm:$0xff]
    %v6175 = vld [vmem:[#allocation2 + $0x9d0] sm:$0xff]
    %v6176 = vld [vmem:[#allocation2 + $0x9d8] sm:$0xff]
    %v6177 = vld [vmem:[#allocation2 + $0x9e0] sm:$0xff]
    %v6178 = vld [vmem:[#allocation2 + $0x9e8] sm:$0xff]
    %v6179 = vld [vmem:[#allocation2 + $0x9f0] sm:$0xff]
    %v6180 = vld [vmem:[#allocation2 + $0x9f8] sm:$0xff]
    %v6181 = vld [vmem:[#allocation2 + $0xa00] sm:$0xff]
    %v6182 = vld [vmem:[#allocation2 + $0xa08] sm:$0xff]
    %v6183 = vld [vmem:[#allocation2 + $0xa10] sm:$0xff]
    %v6184 = vld [vmem:[#allocation2 + $0xa18] sm:$0xff]
    %v6185 = vld [vmem:[#allocation2 + $0xa20] sm:$0xff]
    %v6186 = vld [vmem:[#allocation2 + $0xa28] sm:$0xff]
    %v6187 = vld [vmem:[#allocation2 + $0xa30] sm:$0xff]
    %v6188 = vld [vmem:[#allocation2 + $0xa38] sm:$0xff]
    %v6189 = vld [vmem:[#allocation2 + $0xa40] sm:$0xff]
    %v6190 = vld [vmem:[#allocation2 + $0xa48] sm:$0xff]
    %v6191 = vld [vmem:[#allocation2 + $0xa50] sm:$0xff]
    %v6192 = vld [vmem:[#allocation2 + $0xa58] sm:$0xff]
    %v6193 = vld [vmem:[#allocation2 + $0xa60] sm:$0xff]
    %v6194 = vld [vmem:[#allocation2 + $0xa68] sm:$0xff]
    %v6195 = vld [vmem:[#allocation2 + $0xa70] sm:$0xff]
    %v6196 = vld [vmem:[#allocation2 + $0xa78] sm:$0xff]
    %v6197 = vld [vmem:[#allocation2 + $0xa80] sm:$0xff]
    %v6198 = vld [vmem:[#allocation2 + $0xa88] sm:$0xff]
    %v6199 = vld [vmem:[#allocation2 + $0xa90] sm:$0xff]
    %v6200 = vld [vmem:[#allocation2 + $0xa98] sm:$0xff]
    %v6201 = vld [vmem:[#allocation2 + $0xaa0] sm:$0xff]
    %v6202 = vld [vmem:[#allocation2 + $0xaa8] sm:$0xff]
    %v6203 = vld [vmem:[#allocation2 + $0xab0] sm:$0xff]
    %v6204 = vld [vmem:[#allocation2 + $0xab8] sm:$0xff]
    %v6205 = vld [vmem:[#allocation2 + $0xac0] sm:$0xff]
    %v6206 = vld [vmem:[#allocation2 + $0xac8] sm:$0xff]
    %v6207 = vld [vmem:[#allocation2 + $0xad0] sm:$0xff]
    %v6208 = vld [vmem:[#allocation2 + $0xad8] sm:$0xff]
    %v6209 = vld [vmem:[#allocation2 + $0xae0] sm:$0xff]
    %v6210 = vld [vmem:[#allocation2 + $0xae8] sm:$0xff]
    %v6211 = vld [vmem:[#allocation2 + $0xaf0] sm:$0xff]
    %v6212 = vld [vmem:[#allocation2 + $0xaf8] sm:$0xff]
    %v6213 = vld [vmem:[#allocation2 + $0xb00] sm:$0xff]
    %v6214 = vld [vmem:[#allocation2 + $0xb08] sm:$0xff]
    %v6215 = vld [vmem:[#allocation2 + $0xb10] sm:$0xff]
    %v6216 = vld [vmem:[#allocation2 + $0xb18] sm:$0xff]
    %v6217 = vld [vmem:[#allocation2 + $0xb20] sm:$0xff]
    %v6218 = vld [vmem:[#allocation2 + $0xb28] sm:$0xff]
    %v6219 = vld [vmem:[#allocation2 + $0xb30] sm:$0xff]
    %v6220 = vld [vmem:[#allocation2 + $0xb38] sm:$0xff]
    %v6221 = vld [vmem:[#allocation2 + $0xb40] sm:$0xff]
    %v6222 = vld [vmem:[#allocation2 + $0xb48] sm:$0xff]
    %v6223 = vld [vmem:[#allocation2 + $0xb50] sm:$0xff]
    %v6224 = vld [vmem:[#allocation2 + $0xb58] sm:$0xff]
    %v6225 = vld [vmem:[#allocation2 + $0xb60] sm:$0xff]
    %v6226 = vld [vmem:[#allocation2 + $0xb68] sm:$0xff]
    %v6227 = vld [vmem:[#allocation2 + $0xb70] sm:$0xff]
    %v6228 = vld [vmem:[#allocation2 + $0xb78] sm:$0xff]
    %v6229 = vld [vmem:[#allocation2 + $0xb80] sm:$0xff]
    %v6230 = vld [vmem:[#allocation2 + $0xb88] sm:$0xff]
    %v6231 = vld [vmem:[#allocation2 + $0xb90] sm:$0xff]
    %v6232 = vld [vmem:[#allocation2 + $0xb98] sm:$0xff]
    %v6233 = vld [vmem:[#allocation2 + $0xba0] sm:$0xff]
    %v6234 = vld [vmem:[#allocation2 + $0xba8] sm:$0xff]
    %v6235 = vld [vmem:[#allocation2 + $0xbb0] sm:$0xff]
    %v6236 = vld [vmem:[#allocation2 + $0xbb8] sm:$0xff]
    %v6237 = vld [vmem:[#allocation2 + $0xbc0] sm:$0xff]
    %v6238 = vld [vmem:[#allocation2 + $0xbc8] sm:$0xff]
    %v6239 = vld [vmem:[#allocation2 + $0xbd0] sm:$0xff]
    %v6240 = vld [vmem:[#allocation2 + $0xbd8] sm:$0xff]
    %v6241 = vld [vmem:[#allocation2 + $0xbe0] sm:$0xff]
    %v6242 = vld [vmem:[#allocation2 + $0xbe8] sm:$0xff]
    %v6243 = vld [vmem:[#allocation2 + $0xbf0] sm:$0xff]
    %v6244 = vld [vmem:[#allocation2 + $0xbf8] sm:$0xff]
    %v6245 = vld [vmem:[#allocation2 + $0xc00] sm:$0xff]
    %v6246 = vld [vmem:[#allocation2 + $0xc08] sm:$0xff]
    %v6247 = vld [vmem:[#allocation2 + $0xc10] sm:$0xff]
    %v6248 = vld [vmem:[#allocation2 + $0xc18] sm:$0xff]
    %v6249 = vld [vmem:[#allocation2 + $0xc20] sm:$0xff]
    %v6250 = vld [vmem:[#allocation2 + $0xc28] sm:$0xff]
    %v6251 = vld [vmem:[#allocation2 + $0xc30] sm:$0xff]
    %v6252 = vld [vmem:[#allocation2 + $0xc38] sm:$0xff]
    %v6253 = vld [vmem:[#allocation2 + $0xc40] sm:$0xff]
    %v6254 = vld [vmem:[#allocation2 + $0xc48] sm:$0xff]
    %v6255 = vld [vmem:[#allocation2 + $0xc50] sm:$0xff]
    %v6256 = vld [vmem:[#allocation2 + $0xc58] sm:$0xff]
    %v6257 = vld [vmem:[#allocation2 + $0xc60] sm:$0xff]
    %v6258 = vld [vmem:[#allocation2 + $0xc68] sm:$0xff]
    %v6259 = vld [vmem:[#allocation2 + $0xc70] sm:$0xff]
    %v6260 = vld [vmem:[#allocation2 + $0xc78] sm:$0xff]
    %v6261 = vld [vmem:[#allocation2 + $0xc80] sm:$0xff]
    %v6262 = vld [vmem:[#allocation2 + $0xc88] sm:$0xff]
    %v6263 = vld [vmem:[#allocation2 + $0xc90] sm:$0xff]
    %v6264 = vld [vmem:[#allocation2 + $0xc98] sm:$0xff]
    %v6265 = vld [vmem:[#allocation2 + $0xca0] sm:$0xff]
    %v6266 = vld [vmem:[#allocation2 + $0xca8] sm:$0xff]
    %v6267 = vld [vmem:[#allocation2 + $0xcb0] sm:$0xff]
    %v6268 = vld [vmem:[#allocation2 + $0xcb8] sm:$0xff]
    %v6269 = vld [vmem:[#allocation2 + $0xcc0] sm:$0xff]
    %v6270 = vld [vmem:[#allocation2 + $0xcc8] sm:$0xff]
    %v6271 = vld [vmem:[#allocation2 + $0xcd0] sm:$0xff]
    %v6272 = vld [vmem:[#allocation2 + $0xcd8] sm:$0xff]
    %v6273 = vld [vmem:[#allocation2 + $0xce0] sm:$0xff]
    %v6274 = vld [vmem:[#allocation2 + $0xce8] sm:$0xff]
    %v6275 = vld [vmem:[#allocation2 + $0xcf0] sm:$0xff]
    %v6276 = vld [vmem:[#allocation2 + $0xcf8] sm:$0xff]
    %v6277 = vld [vmem:[#allocation2 + $0xd00] sm:$0xff]
    %v6278 = vld [vmem:[#allocation2 + $0xd08] sm:$0xff]
    %v6279 = vld [vmem:[#allocation2 + $0xd10] sm:$0xff]
    %v6280 = vld [vmem:[#allocation2 + $0xd18] sm:$0xff]
    %v6281 = vld [vmem:[#allocation2 + $0xd20] sm:$0xff]
    %v6282 = vld [vmem:[#allocation2 + $0xd28] sm:$0xff]
    %v6283 = vld [vmem:[#allocation2 + $0xd30] sm:$0xff]
    %v6284 = vld [vmem:[#allocation2 + $0xd38] sm:$0xff]
    %v6285 = vld [vmem:[#allocation2 + $0xd40] sm:$0xff]
    %v6286 = vld [vmem:[#allocation2 + $0xd48] sm:$0xff]
    %v6287 = vld [vmem:[#allocation2 + $0xd50] sm:$0xff]
    %v6288 = vld [vmem:[#allocation2 + $0xd58] sm:$0xff]
    %v6289 = vld [vmem:[#allocation2 + $0xd60] sm:$0xff]
    %v6290 = vld [vmem:[#allocation2 + $0xd68] sm:$0xff]
    %v6291 = vld [vmem:[#allocation2 + $0xd70] sm:$0xff]
    %v6292 = vld [vmem:[#allocation2 + $0xd78] sm:$0xff]
    %v6293 = vld [vmem:[#allocation2 + $0xd80] sm:$0xff]
    %v6294 = vld [vmem:[#allocation2 + $0xd88] sm:$0xff]
    %v6295 = vld [vmem:[#allocation2 + $0xd90] sm:$0xff]
    %v6296 = vld [vmem:[#allocation2 + $0xd98] sm:$0xff]
    %v6297 = vld [vmem:[#allocation2 + $0xda0] sm:$0xff]
    %v6298 = vld [vmem:[#allocation2 + $0xda8] sm:$0xff]
    %v6299 = vld [vmem:[#allocation2 + $0xdb0] sm:$0xff]
    %v6300 = vld [vmem:[#allocation2 + $0xdb8] sm:$0xff]
    %v6301 = vld [vmem:[#allocation2 + $0xdc0] sm:$0xff]
    %v6302 = vld [vmem:[#allocation2 + $0xdc8] sm:$0xff]
    %v6303 = vld [vmem:[#allocation2 + $0xdd0] sm:$0xff]
    %v6304 = vld [vmem:[#allocation2 + $0xdd8] sm:$0xff]
    %v6305 = vld [vmem:[#allocation2 + $0xde0] sm:$0xff]
    %v6306 = vld [vmem:[#allocation2 + $0xde8] sm:$0xff]
    %v6307 = vld [vmem:[#allocation2 + $0xdf0] sm:$0xff]
    %v6308 = vld [vmem:[#allocation2 + $0xdf8] sm:$0xff]
    %v6693 = vunpack.c.l.b16 %v5925
    %v6694 = vunpack.c.h.b16 %v5925
    %v6695 = vunpack.c.l.b16 %v5926
    %v6696 = vunpack.c.h.b16 %v5926
    %v6697 = vunpack.c.l.b16 %v5927
    %v6698 = vunpack.c.h.b16 %v5927
    %v6699 = vunpack.c.l.b16 %v5928
    %v6700 = vunpack.c.h.b16 %v5928
    %v6701 = vunpack.c.l.b16 %v5929
    %v6702 = vunpack.c.h.b16 %v5929
    %v6703 = vunpack.c.l.b16 %v5930
    %v6704 = vunpack.c.h.b16 %v5930
    %v6705 = vunpack.c.l.b16 %v5931
    %v6706 = vunpack.c.h.b16 %v5931
    %v6707 = vunpack.c.l.b16 %v5932
    %v6708 = vunpack.c.h.b16 %v5932
    %v6709 = vunpack.c.l.b16 %v5933
    %v6710 = vunpack.c.h.b16 %v5933
    %v6711 = vunpack.c.l.b16 %v5934
    %v6712 = vunpack.c.h.b16 %v5934
    %v6713 = vunpack.c.l.b16 %v5935
    %v6714 = vunpack.c.h.b16 %v5935
    %v6715 = vunpack.c.l.b16 %v5936
    %v6716 = vunpack.c.h.b16 %v5936
    %v6717 = vunpack.c.l.b16 %v5937
    %v6718 = vunpack.c.h.b16 %v5937
    %v6719 = vunpack.c.l.b16 %v5938
    %v6720 = vunpack.c.h.b16 %v5938
    %v6721 = vunpack.c.l.b16 %v5939
    %v6722 = vunpack.c.h.b16 %v5939
    %v6723 = vunpack.c.l.b16 %v5940
    %v6724 = vunpack.c.h.b16 %v5940
    %v6725 = vunpack.c.l.b16 %v5941
    %v6726 = vunpack.c.h.b16 %v5941
    %v6727 = vunpack.c.l.b16 %v5942
    %v6728 = vunpack.c.h.b16 %v5942
    %v6729 = vunpack.c.l.b16 %v5943
    %v6730 = vunpack.c.h.b16 %v5943
    %v6731 = vunpack.c.l.b16 %v5944
    %v6732 = vunpack.c.h.b16 %v5944
    %v6733 = vunpack.c.l.b16 %v5945
    %v6734 = vunpack.c.h.b16 %v5945
    %v6735 = vunpack.c.l.b16 %v5946
    %v6736 = vunpack.c.h.b16 %v5946
    %v6737 = vunpack.c.l.b16 %v5947
    %v6738 = vunpack.c.h.b16 %v5947
    %v6739 = vunpack.c.l.b16 %v5948
    %v6740 = vunpack.c.h.b16 %v5948
    %v6741 = vunpack.c.l.b16 %v5949
    %v6742 = vunpack.c.h.b16 %v5949
    %v6743 = vunpack.c.l.b16 %v5950
    %v6744 = vunpack.c.h.b16 %v5950
    %v6745 = vunpack.c.l.b16 %v5951
    %v6746 = vunpack.c.h.b16 %v5951
    %v6747 = vunpack.c.l.b16 %v5952
    %v6748 = vunpack.c.h.b16 %v5952
    %v6749 = vunpack.c.l.b16 %v5953
    %v6750 = vunpack.c.h.b16 %v5953
    %v6751 = vunpack.c.l.b16 %v5954
    %v6752 = vunpack.c.h.b16 %v5954
    %v6753 = vunpack.c.l.b16 %v5955
    %v6754 = vunpack.c.h.b16 %v5955
    %v6755 = vunpack.c.l.b16 %v5956
    %v6756 = vunpack.c.h.b16 %v5956
    %v6757 = vunpack.c.l.b16 %v5957
    %v6758 = vunpack.c.h.b16 %v5957
    %v6759 = vunpack.c.l.b16 %v5958
    %v6760 = vunpack.c.h.b16 %v5958
    %v6761 = vunpack.c.l.b16 %v5959
    %v6762 = vunpack.c.h.b16 %v5959
    %v6763 = vunpack.c.l.b16 %v5960
    %v6764 = vunpack.c.h.b16 %v5960
    %v6765 = vunpack.c.l.b16 %v5961
    %v6766 = vunpack.c.h.b16 %v5961
    %v6767 = vunpack.c.l.b16 %v5962
    %v6768 = vunpack.c.h.b16 %v5962
    %v6769 = vunpack.c.l.b16 %v5963
    %v6770 = vunpack.c.h.b16 %v5963
    %v6771 = vunpack.c.l.b16 %v5964
    %v6772 = vunpack.c.h.b16 %v5964
    %v6773 = vunpack.c.l.b16 %v5965
    %v6774 = vunpack.c.h.b16 %v5965
    %v6775 = vunpack.c.l.b16 %v5966
    %v6776 = vunpack.c.h.b16 %v5966
    %v6777 = vunpack.c.l.b16 %v5967
    %v6778 = vunpack.c.h.b16 %v5967
    %v6779 = vunpack.c.l.b16 %v5968
    %v6780 = vunpack.c.h.b16 %v5968
    %v6781 = vunpack.c.l.b16 %v5969
    %v6782 = vunpack.c.h.b16 %v5969
    %v6783 = vunpack.c.l.b16 %v5970
    %v6784 = vunpack.c.h.b16 %v5970
    %v6785 = vunpack.c.l.b16 %v5971
    %v6786 = vunpack.c.h.b16 %v5971
    %v6787 = vunpack.c.l.b16 %v5972
    %v6788 = vunpack.c.h.b16 %v5972
    %v6789 = vunpack.c.l.b16 %v5973
    %v6790 = vunpack.c.h.b16 %v5973
    %v6791 = vunpack.c.l.b16 %v5974
    %v6792 = vunpack.c.h.b16 %v5974
    %v6793 = vunpack.c.l.b16 %v5975
    %v6794 = vunpack.c.h.b16 %v5975
    %v6795 = vunpack.c.l.b16 %v5976
    %v6796 = vunpack.c.h.b16 %v5976
    %v6797 = vunpack.c.l.b16 %v5977
    %v6798 = vunpack.c.h.b16 %v5977
    %v6799 = vunpack.c.l.b16 %v5978
    %v6800 = vunpack.c.h.b16 %v5978
    %v6801 = vunpack.c.l.b16 %v5979
    %v6802 = vunpack.c.h.b16 %v5979
    %v6803 = vunpack.c.l.b16 %v5980
    %v6804 = vunpack.c.h.b16 %v5980
    %v6805 = vunpack.c.l.b16 %v5981
    %v6806 = vunpack.c.h.b16 %v5981
    %v6807 = vunpack.c.l.b16 %v5982
    %v6808 = vunpack.c.h.b16 %v5982
    %v6809 = vunpack.c.l.b16 %v5983
    %v6810 = vunpack.c.h.b16 %v5983
    %v6811 = vunpack.c.l.b16 %v5984
    %v6812 = vunpack.c.h.b16 %v5984
    %v6813 = vunpack.c.l.b16 %v5985
    %v6814 = vunpack.c.h.b16 %v5985
    %v6815 = vunpack.c.l.b16 %v5986
    %v6816 = vunpack.c.h.b16 %v5986
    %v6817 = vunpack.c.l.b16 %v5987
    %v6818 = vunpack.c.h.b16 %v5987
    %v6819 = vunpack.c.l.b16 %v5988
    %v6820 = vunpack.c.h.b16 %v5988
    %v6821 = vunpack.c.l.b16 %v5989
    %v6822 = vunpack.c.h.b16 %v5989
    %v6823 = vunpack.c.l.b16 %v5990
    %v6824 = vunpack.c.h.b16 %v5990
    %v6825 = vunpack.c.l.b16 %v5991
    %v6826 = vunpack.c.h.b16 %v5991
    %v6827 = vunpack.c.l.b16 %v5992
    %v6828 = vunpack.c.h.b16 %v5992
    %v6829 = vunpack.c.l.b16 %v5993
    %v6830 = vunpack.c.h.b16 %v5993
    %v6831 = vunpack.c.l.b16 %v5994
    %v6832 = vunpack.c.h.b16 %v5994
    %v6833 = vunpack.c.l.b16 %v5995
    %v6834 = vunpack.c.h.b16 %v5995
    %v6835 = vunpack.c.l.b16 %v5996
    %v6836 = vunpack.c.h.b16 %v5996
    %v6837 = vunpack.c.l.b16 %v5997
    %v6838 = vunpack.c.h.b16 %v5997
    %v6839 = vunpack.c.l.b16 %v5998
    %v6840 = vunpack.c.h.b16 %v5998
    %v6841 = vunpack.c.l.b16 %v5999
    %v6842 = vunpack.c.h.b16 %v5999
    %v6843 = vunpack.c.l.b16 %v6000
    %v6844 = vunpack.c.h.b16 %v6000
    %v6845 = vunpack.c.l.b16 %v6001
    %v6846 = vunpack.c.h.b16 %v6001
    %v6847 = vunpack.c.l.b16 %v6002
    %v6848 = vunpack.c.h.b16 %v6002
    %v6849 = vunpack.c.l.b16 %v6003
    %v6850 = vunpack.c.h.b16 %v6003
    %v6851 = vunpack.c.l.b16 %v6004
    %v6852 = vunpack.c.h.b16 %v6004
    %v6853 = vunpack.c.l.b16 %v6005
    %v6854 = vunpack.c.h.b16 %v6005
    %v6855 = vunpack.c.l.b16 %v6006
    %v6856 = vunpack.c.h.b16 %v6006
    %v6857 = vunpack.c.l.b16 %v6007
    %v6858 = vunpack.c.h.b16 %v6007
    %v6859 = vunpack.c.l.b16 %v6008
    %v6860 = vunpack.c.h.b16 %v6008
    %v6861 = vunpack.c.l.b16 %v6009
    %v6862 = vunpack.c.h.b16 %v6009
    %v6863 = vunpack.c.l.b16 %v6010
    %v6864 = vunpack.c.h.b16 %v6010
    %v6865 = vunpack.c.l.b16 %v6011
    %v6866 = vunpack.c.h.b16 %v6011
    %v6867 = vunpack.c.l.b16 %v6012
    %v6868 = vunpack.c.h.b16 %v6012
    %v6869 = vunpack.c.l.b16 %v6013
    %v6870 = vunpack.c.h.b16 %v6013
    %v6871 = vunpack.c.l.b16 %v6014
    %v6872 = vunpack.c.h.b16 %v6014
    %v6873 = vunpack.c.l.b16 %v6015
    %v6874 = vunpack.c.h.b16 %v6015
    %v6875 = vunpack.c.l.b16 %v6016
    %v6876 = vunpack.c.h.b16 %v6016
    %v6877 = vunpack.c.l.b16 %v6017
    %v6878 = vunpack.c.h.b16 %v6017
    %v6879 = vunpack.c.l.b16 %v6018
    %v6880 = vunpack.c.h.b16 %v6018
    %v6881 = vunpack.c.l.b16 %v6019
    %v6882 = vunpack.c.h.b16 %v6019
    %v6883 = vunpack.c.l.b16 %v6020
    %v6884 = vunpack.c.h.b16 %v6020
    %v6885 = vunpack.c.l.b16 %v6021
    %v6886 = vunpack.c.h.b16 %v6021
    %v6887 = vunpack.c.l.b16 %v6022
    %v6888 = vunpack.c.h.b16 %v6022
    %v6889 = vunpack.c.l.b16 %v6023
    %v6890 = vunpack.c.h.b16 %v6023
    %v6891 = vunpack.c.l.b16 %v6024
    %v6892 = vunpack.c.h.b16 %v6024
    %v6893 = vunpack.c.l.b16 %v6025
    %v6894 = vunpack.c.h.b16 %v6025
    %v6895 = vunpack.c.l.b16 %v6026
    %v6896 = vunpack.c.h.b16 %v6026
    %v6897 = vunpack.c.l.b16 %v6027
    %v6898 = vunpack.c.h.b16 %v6027
    %v6899 = vunpack.c.l.b16 %v6028
    %v6900 = vunpack.c.h.b16 %v6028
    %v6901 = vunpack.c.l.b16 %v6029
    %v6902 = vunpack.c.h.b16 %v6029
    %v6903 = vunpack.c.l.b16 %v6030
    %v6904 = vunpack.c.h.b16 %v6030
    %v6905 = vunpack.c.l.b16 %v6031
    %v6906 = vunpack.c.h.b16 %v6031
    %v6907 = vunpack.c.l.b16 %v6032
    %v6908 = vunpack.c.h.b16 %v6032
    %v6909 = vunpack.c.l.b16 %v6033
    %v6910 = vunpack.c.h.b16 %v6033
    %v6911 = vunpack.c.l.b16 %v6034
    %v6912 = vunpack.c.h.b16 %v6034
    %v6913 = vunpack.c.l.b16 %v6035
    %v6914 = vunpack.c.h.b16 %v6035
    %v6915 = vunpack.c.l.b16 %v6036
    %v6916 = vunpack.c.h.b16 %v6036
    %v6917 = vunpack.c.l.b16 %v6037
    %v6918 = vunpack.c.h.b16 %v6037
    %v6919 = vunpack.c.l.b16 %v6038
    %v6920 = vunpack.c.h.b16 %v6038
    %v6921 = vunpack.c.l.b16 %v6039
    %v6922 = vunpack.c.h.b16 %v6039
    %v6923 = vunpack.c.l.b16 %v6040
    %v6924 = vunpack.c.h.b16 %v6040
    %v6925 = vunpack.c.l.b16 %v6041
    %v6926 = vunpack.c.h.b16 %v6041
    %v6927 = vunpack.c.l.b16 %v6042
    %v6928 = vunpack.c.h.b16 %v6042
    %v6929 = vunpack.c.l.b16 %v6043
    %v6930 = vunpack.c.h.b16 %v6043
    %v6931 = vunpack.c.l.b16 %v6044
    %v6932 = vunpack.c.h.b16 %v6044
    %v6933 = vunpack.c.l.b16 %v6045
    %v6934 = vunpack.c.h.b16 %v6045
    %v6935 = vunpack.c.l.b16 %v6046
    %v6936 = vunpack.c.h.b16 %v6046
    %v6937 = vunpack.c.l.b16 %v6047
    %v6938 = vunpack.c.h.b16 %v6047
    %v6939 = vunpack.c.l.b16 %v6048
    %v6940 = vunpack.c.h.b16 %v6048
    %v6941 = vunpack.c.l.b16 %v6049
    %v6942 = vunpack.c.h.b16 %v6049
    %v6943 = vunpack.c.l.b16 %v6050
    %v6944 = vunpack.c.h.b16 %v6050
    %v6945 = vunpack.c.l.b16 %v6051
    %v6946 = vunpack.c.h.b16 %v6051
    %v6947 = vunpack.c.l.b16 %v6052
    %v6948 = vunpack.c.h.b16 %v6052
    %v6949 = vunpack.c.l.b16 %v6053
    %v6950 = vunpack.c.h.b16 %v6053
    %v6951 = vunpack.c.l.b16 %v6054
    %v6952 = vunpack.c.h.b16 %v6054
    %v6953 = vunpack.c.l.b16 %v6055
    %v6954 = vunpack.c.h.b16 %v6055
    %v6955 = vunpack.c.l.b16 %v6056
    %v6956 = vunpack.c.h.b16 %v6056
    %v6957 = vunpack.c.l.b16 %v6057
    %v6958 = vunpack.c.h.b16 %v6057
    %v6959 = vunpack.c.l.b16 %v6058
    %v6960 = vunpack.c.h.b16 %v6058
    %v6961 = vunpack.c.l.b16 %v6059
    %v6962 = vunpack.c.h.b16 %v6059
    %v6963 = vunpack.c.l.b16 %v6060
    %v6964 = vunpack.c.h.b16 %v6060
    %v6965 = vunpack.c.l.b16 %v6061
    %v6966 = vunpack.c.h.b16 %v6061
    %v6967 = vunpack.c.l.b16 %v6062
    %v6968 = vunpack.c.h.b16 %v6062
    %v6969 = vunpack.c.l.b16 %v6063
    %v6970 = vunpack.c.h.b16 %v6063
    %v6971 = vunpack.c.l.b16 %v6064
    %v6972 = vunpack.c.h.b16 %v6064
    %v6973 = vunpack.c.l.b16 %v6065
    %v6974 = vunpack.c.h.b16 %v6065
    %v6975 = vunpack.c.l.b16 %v6066
    %v6976 = vunpack.c.h.b16 %v6066
    %v6977 = vunpack.c.l.b16 %v6067
    %v6978 = vunpack.c.h.b16 %v6067
    %v6979 = vunpack.c.l.b16 %v6068
    %v6980 = vunpack.c.h.b16 %v6068
    %v6981 = vunpack.c.l.b16 %v6069
    %v6982 = vunpack.c.h.b16 %v6069
    %v6983 = vunpack.c.l.b16 %v6070
    %v6984 = vunpack.c.h.b16 %v6070
    %v6985 = vunpack.c.l.b16 %v6071
    %v6986 = vunpack.c.h.b16 %v6071
    %v6987 = vunpack.c.l.b16 %v6072
    %v6988 = vunpack.c.h.b16 %v6072
    %v6989 = vunpack.c.l.b16 %v6073
    %v6990 = vunpack.c.h.b16 %v6073
    %v6991 = vunpack.c.l.b16 %v6074
    %v6992 = vunpack.c.h.b16 %v6074
    %v6993 = vunpack.c.l.b16 %v6075
    %v6994 = vunpack.c.h.b16 %v6075
    %v6995 = vunpack.c.l.b16 %v6076
    %v6996 = vunpack.c.h.b16 %v6076
    %v6997 = vunpack.c.l.b16 %v6077
    %v6998 = vunpack.c.h.b16 %v6077
    %v6999 = vunpack.c.l.b16 %v6078
    %v7000 = vunpack.c.h.b16 %v6078
    %v7001 = vunpack.c.l.b16 %v6079
    %v7002 = vunpack.c.h.b16 %v6079
    %v7003 = vunpack.c.l.b16 %v6080
    %v7004 = vunpack.c.h.b16 %v6080
    %v7005 = vunpack.c.l.b16 %v6081
    %v7006 = vunpack.c.h.b16 %v6081
    %v7007 = vunpack.c.l.b16 %v6082
    %v7008 = vunpack.c.h.b16 %v6082
    %v7009 = vunpack.c.l.b16 %v6083
    %v7010 = vunpack.c.h.b16 %v6083
    %v7011 = vunpack.c.l.b16 %v6084
    %v7012 = vunpack.c.h.b16 %v6084
    %v7013 = vunpack.c.l.b16 %v6085
    %v7014 = vunpack.c.h.b16 %v6085
    %v7015 = vunpack.c.l.b16 %v6086
    %v7016 = vunpack.c.h.b16 %v6086
    %v7017 = vunpack.c.l.b16 %v6087
    %v7018 = vunpack.c.h.b16 %v6087
    %v7019 = vunpack.c.l.b16 %v6088
    %v7020 = vunpack.c.h.b16 %v6088
    %v7021 = vunpack.c.l.b16 %v6089
    %v7022 = vunpack.c.h.b16 %v6089
    %v7023 = vunpack.c.l.b16 %v6090
    %v7024 = vunpack.c.h.b16 %v6090
    %v7025 = vunpack.c.l.b16 %v6091
    %v7026 = vunpack.c.h.b16 %v6091
    %v7027 = vunpack.c.l.b16 %v6092
    %v7028 = vunpack.c.h.b16 %v6092
    %v7029 = vunpack.c.l.b16 %v6093
    %v7030 = vunpack.c.h.b16 %v6093
    %v7031 = vunpack.c.l.b16 %v6094
    %v7032 = vunpack.c.h.b16 %v6094
    %v7033 = vunpack.c.l.b16 %v6095
    %v7034 = vunpack.c.h.b16 %v6095
    %v7035 = vunpack.c.l.b16 %v6096
    %v7036 = vunpack.c.h.b16 %v6096
    %v7037 = vunpack.c.l.b16 %v6097
    %v7038 = vunpack.c.h.b16 %v6097
    %v7039 = vunpack.c.l.b16 %v6098
    %v7040 = vunpack.c.h.b16 %v6098
    %v7041 = vunpack.c.l.b16 %v6099
    %v7042 = vunpack.c.h.b16 %v6099
    %v7043 = vunpack.c.l.b16 %v6100
    %v7044 = vunpack.c.h.b16 %v6100
    %v7045 = vunpack.c.l.b16 %v6101
    %v7046 = vunpack.c.h.b16 %v6101
    %v7047 = vunpack.c.l.b16 %v6102
    %v7048 = vunpack.c.h.b16 %v6102
    %v7049 = vunpack.c.l.b16 %v6103
    %v7050 = vunpack.c.h.b16 %v6103
    %v7051 = vunpack.c.l.b16 %v6104
    %v7052 = vunpack.c.h.b16 %v6104
    %v7053 = vunpack.c.l.b16 %v6105
    %v7054 = vunpack.c.h.b16 %v6105
    %v7055 = vunpack.c.l.b16 %v6106
    %v7056 = vunpack.c.h.b16 %v6106
    %v7057 = vunpack.c.l.b16 %v6107
    %v7058 = vunpack.c.h.b16 %v6107
    %v7059 = vunpack.c.l.b16 %v6108
    %v7060 = vunpack.c.h.b16 %v6108
    %v7061 = vunpack.c.l.b16 %v6109
    %v7062 = vunpack.c.h.b16 %v6109
    %v7063 = vunpack.c.l.b16 %v6110
    %v7064 = vunpack.c.h.b16 %v6110
    %v7065 = vunpack.c.l.b16 %v6111
    %v7066 = vunpack.c.h.b16 %v6111
    %v7067 = vunpack.c.l.b16 %v6112
    %v7068 = vunpack.c.h.b16 %v6112
    %v7069 = vunpack.c.l.b16 %v6113
    %v7070 = vunpack.c.h.b16 %v6113
    %v7071 = vunpack.c.l.b16 %v6114
    %v7072 = vunpack.c.h.b16 %v6114
    %v7073 = vunpack.c.l.b16 %v6115
    %v7074 = vunpack.c.h.b16 %v6115
    %v7075 = vunpack.c.l.b16 %v6116
    %v7076 = vunpack.c.h.b16 %v6116
    %v7077 = vunpack.c.l.b16 %v6117
    %v7078 = vunpack.c.h.b16 %v6117
    %v7079 = vunpack.c.l.b16 %v6118
    %v7080 = vunpack.c.h.b16 %v6118
    %v7081 = vunpack.c.l.b16 %v6119
    %v7082 = vunpack.c.h.b16 %v6119
    %v7083 = vunpack.c.l.b16 %v6120
    %v7084 = vunpack.c.h.b16 %v6120
    %v7085 = vunpack.c.l.b16 %v6121
    %v7086 = vunpack.c.h.b16 %v6121
    %v7087 = vunpack.c.l.b16 %v6122
    %v7088 = vunpack.c.h.b16 %v6122
    %v7089 = vunpack.c.l.b16 %v6123
    %v7090 = vunpack.c.h.b16 %v6123
    %v7091 = vunpack.c.l.b16 %v6124
    %v7092 = vunpack.c.h.b16 %v6124
    %v7093 = vunpack.c.l.b16 %v6125
    %v7094 = vunpack.c.h.b16 %v6125
    %v7095 = vunpack.c.l.b16 %v6126
    %v7096 = vunpack.c.h.b16 %v6126
    %v7097 = vunpack.c.l.b16 %v6127
    %v7098 = vunpack.c.h.b16 %v6127
    %v7099 = vunpack.c.l.b16 %v6128
    %v7100 = vunpack.c.h.b16 %v6128
    %v7101 = vunpack.c.l.b16 %v6129
    %v7102 = vunpack.c.h.b16 %v6129
    %v7103 = vunpack.c.l.b16 %v6130
    %v7104 = vunpack.c.h.b16 %v6130
    %v7105 = vunpack.c.l.b16 %v6131
    %v7106 = vunpack.c.h.b16 %v6131
    %v7107 = vunpack.c.l.b16 %v6132
    %v7108 = vunpack.c.h.b16 %v6132
    %v7109 = vunpack.c.l.b16 %v6133
    %v7110 = vunpack.c.h.b16 %v6133
    %v7111 = vunpack.c.l.b16 %v6134
    %v7112 = vunpack.c.h.b16 %v6134
    %v7113 = vunpack.c.l.b16 %v6135
    %v7114 = vunpack.c.h.b16 %v6135
    %v7115 = vunpack.c.l.b16 %v6136
    %v7116 = vunpack.c.h.b16 %v6136
    %v7117 = vunpack.c.l.b16 %v6137
    %v7118 = vunpack.c.h.b16 %v6137
    %v7119 = vunpack.c.l.b16 %v6138
    %v7120 = vunpack.c.h.b16 %v6138
    %v7121 = vunpack.c.l.b16 %v6139
    %v7122 = vunpack.c.h.b16 %v6139
    %v7123 = vunpack.c.l.b16 %v6140
    %v7124 = vunpack.c.h.b16 %v6140
    %v7125 = vunpack.c.l.b16 %v6141
    %v7126 = vunpack.c.h.b16 %v6141
    %v7127 = vunpack.c.l.b16 %v6142
    %v7128 = vunpack.c.h.b16 %v6142
    %v7129 = vunpack.c.l.b16 %v6143
    %v7130 = vunpack.c.h.b16 %v6143
    %v7131 = vunpack.c.l.b16 %v6144
    %v7132 = vunpack.c.h.b16 %v6144
    %v7133 = vunpack.c.l.b16 %v6145
    %v7134 = vunpack.c.h.b16 %v6145
    %v7135 = vunpack.c.l.b16 %v6146
    %v7136 = vunpack.c.h.b16 %v6146
    %v7137 = vunpack.c.l.b16 %v6147
    %v7138 = vunpack.c.h.b16 %v6147
    %v7139 = vunpack.c.l.b16 %v6148
    %v7140 = vunpack.c.h.b16 %v6148
    %v7141 = vunpack.c.l.b16 %v6149
    %v7142 = vunpack.c.h.b16 %v6149
    %v7143 = vunpack.c.l.b16 %v6150
    %v7144 = vunpack.c.h.b16 %v6150
    %v7145 = vunpack.c.l.b16 %v6151
    %v7146 = vunpack.c.h.b16 %v6151
    %v7147 = vunpack.c.l.b16 %v6152
    %v7148 = vunpack.c.h.b16 %v6152
    %v7149 = vunpack.c.l.b16 %v6153
    %v7150 = vunpack.c.h.b16 %v6153
    %v7151 = vunpack.c.l.b16 %v6154
    %v7152 = vunpack.c.h.b16 %v6154
    %v7153 = vunpack.c.l.b16 %v6155
    %v7154 = vunpack.c.h.b16 %v6155
    %v7155 = vunpack.c.l.b16 %v6156
    %v7156 = vunpack.c.h.b16 %v6156
    %v7157 = vunpack.c.l.b16 %v6157
    %v7158 = vunpack.c.h.b16 %v6157
    %v7159 = vunpack.c.l.b16 %v6158
    %v7160 = vunpack.c.h.b16 %v6158
    %v7161 = vunpack.c.l.b16 %v6159
    %v7162 = vunpack.c.h.b16 %v6159
    %v7163 = vunpack.c.l.b16 %v6160
    %v7164 = vunpack.c.h.b16 %v6160
    %v7165 = vunpack.c.l.b16 %v6161
    %v7166 = vunpack.c.h.b16 %v6161
    %v7167 = vunpack.c.l.b16 %v6162
    %v7168 = vunpack.c.h.b16 %v6162
    %v7169 = vunpack.c.l.b16 %v6163
    %v7170 = vunpack.c.h.b16 %v6163
    %v7171 = vunpack.c.l.b16 %v6164
    %v7172 = vunpack.c.h.b16 %v6164
    %v7173 = vunpack.c.l.b16 %v6165
    %v7174 = vunpack.c.h.b16 %v6165
    %v7175 = vunpack.c.l.b16 %v6166
    %v7176 = vunpack.c.h.b16 %v6166
    %v7177 = vunpack.c.l.b16 %v6167
    %v7178 = vunpack.c.h.b16 %v6167
    %v7179 = vunpack.c.l.b16 %v6168
    %v7180 = vunpack.c.h.b16 %v6168
    %v7181 = vunpack.c.l.b16 %v6169
    %v7182 = vunpack.c.h.b16 %v6169
    %v7183 = vunpack.c.l.b16 %v6170
    %v7184 = vunpack.c.h.b16 %v6170
    %v7185 = vunpack.c.l.b16 %v6171
    %v7186 = vunpack.c.h.b16 %v6171
    %v7187 = vunpack.c.l.b16 %v6172
    %v7188 = vunpack.c.h.b16 %v6172
    %v7189 = vunpack.c.l.b16 %v6173
    %v7190 = vunpack.c.h.b16 %v6173
    %v7191 = vunpack.c.l.b16 %v6174
    %v7192 = vunpack.c.h.b16 %v6174
    %v7193 = vunpack.c.l.b16 %v6175
    %v7194 = vunpack.c.h.b16 %v6175
    %v7195 = vunpack.c.l.b16 %v6176
    %v7196 = vunpack.c.h.b16 %v6176
    %v7197 = vunpack.c.l.b16 %v6177
    %v7198 = vunpack.c.h.b16 %v6177
    %v7199 = vunpack.c.l.b16 %v6178
    %v7200 = vunpack.c.h.b16 %v6178
    %v7201 = vunpack.c.l.b16 %v6179
    %v7202 = vunpack.c.h.b16 %v6179
    %v7203 = vunpack.c.l.b16 %v6180
    %v7204 = vunpack.c.h.b16 %v6180
    %v7205 = vunpack.c.l.b16 %v6181
    %v7206 = vunpack.c.h.b16 %v6181
    %v7207 = vunpack.c.l.b16 %v6182
    %v7208 = vunpack.c.h.b16 %v6182
    %v7209 = vunpack.c.l.b16 %v6183
    %v7210 = vunpack.c.h.b16 %v6183
    %v7211 = vunpack.c.l.b16 %v6184
    %v7212 = vunpack.c.h.b16 %v6184
    %v7213 = vunpack.c.l.b16 %v6185
    %v7214 = vunpack.c.h.b16 %v6185
    %v7215 = vunpack.c.l.b16 %v6186
    %v7216 = vunpack.c.h.b16 %v6186
    %v7217 = vunpack.c.l.b16 %v6187
    %v7218 = vunpack.c.h.b16 %v6187
    %v7219 = vunpack.c.l.b16 %v6188
    %v7220 = vunpack.c.h.b16 %v6188
    %v7221 = vunpack.c.l.b16 %v6189
    %v7222 = vunpack.c.h.b16 %v6189
    %v7223 = vunpack.c.l.b16 %v6190
    %v7224 = vunpack.c.h.b16 %v6190
    %v7225 = vunpack.c.l.b16 %v6191
    %v7226 = vunpack.c.h.b16 %v6191
    %v7227 = vunpack.c.l.b16 %v6192
    %v7228 = vunpack.c.h.b16 %v6192
    %v7229 = vunpack.c.l.b16 %v6193
    %v7230 = vunpack.c.h.b16 %v6193
    %v7231 = vunpack.c.l.b16 %v6194
    %v7232 = vunpack.c.h.b16 %v6194
    %v7233 = vunpack.c.l.b16 %v6195
    %v7234 = vunpack.c.h.b16 %v6195
    %v7235 = vunpack.c.l.b16 %v6196
    %v7236 = vunpack.c.h.b16 %v6196
    %v7237 = vunpack.c.l.b16 %v6197
    %v7238 = vunpack.c.h.b16 %v6197
    %v7239 = vunpack.c.l.b16 %v6198
    %v7240 = vunpack.c.h.b16 %v6198
    %v7241 = vunpack.c.l.b16 %v6199
    %v7242 = vunpack.c.h.b16 %v6199
    %v7243 = vunpack.c.l.b16 %v6200
    %v7244 = vunpack.c.h.b16 %v6200
    %v7245 = vunpack.c.l.b16 %v6201
    %v7246 = vunpack.c.h.b16 %v6201
    %v7247 = vunpack.c.l.b16 %v6202
    %v7248 = vunpack.c.h.b16 %v6202
    %v7249 = vunpack.c.l.b16 %v6203
    %v7250 = vunpack.c.h.b16 %v6203
    %v7251 = vunpack.c.l.b16 %v6204
    %v7252 = vunpack.c.h.b16 %v6204
    %v7253 = vunpack.c.l.b16 %v6205
    %v7254 = vunpack.c.h.b16 %v6205
    %v7255 = vunpack.c.l.b16 %v6206
    %v7256 = vunpack.c.h.b16 %v6206
    %v7257 = vunpack.c.l.b16 %v6207
    %v7258 = vunpack.c.h.b16 %v6207
    %v7259 = vunpack.c.l.b16 %v6208
    %v7260 = vunpack.c.h.b16 %v6208
    %v7261 = vunpack.c.l.b16 %v6209
    %v7262 = vunpack.c.h.b16 %v6209
    %v7263 = vunpack.c.l.b16 %v6210
    %v7264 = vunpack.c.h.b16 %v6210
    %v7265 = vunpack.c.l.b16 %v6211
    %v7266 = vunpack.c.h.b16 %v6211
    %v7267 = vunpack.c.l.b16 %v6212
    %v7268 = vunpack.c.h.b16 %v6212
    %v7269 = vunpack.c.l.b16 %v6213
    %v7270 = vunpack.c.h.b16 %v6213
    %v7271 = vunpack.c.l.b16 %v6214
    %v7272 = vunpack.c.h.b16 %v6214
    %v7273 = vunpack.c.l.b16 %v6215
    %v7274 = vunpack.c.h.b16 %v6215
    %v7275 = vunpack.c.l.b16 %v6216
    %v7276 = vunpack.c.h.b16 %v6216
    %v7277 = vunpack.c.l.b16 %v6217
    %v7278 = vunpack.c.h.b16 %v6217
    %v7279 = vunpack.c.l.b16 %v6218
    %v7280 = vunpack.c.h.b16 %v6218
    %v7281 = vunpack.c.l.b16 %v6219
    %v7282 = vunpack.c.h.b16 %v6219
    %v7283 = vunpack.c.l.b16 %v6220
    %v7284 = vunpack.c.h.b16 %v6220
    %v7285 = vunpack.c.l.b16 %v6221
    %v7286 = vunpack.c.h.b16 %v6221
    %v7287 = vunpack.c.l.b16 %v6222
    %v7288 = vunpack.c.h.b16 %v6222
    %v7289 = vunpack.c.l.b16 %v6223
    %v7290 = vunpack.c.h.b16 %v6223
    %v7291 = vunpack.c.l.b16 %v6224
    %v7292 = vunpack.c.h.b16 %v6224
    %v7293 = vunpack.c.l.b16 %v6225
    %v7294 = vunpack.c.h.b16 %v6225
    %v7295 = vunpack.c.l.b16 %v6226
    %v7296 = vunpack.c.h.b16 %v6226
    %v7297 = vunpack.c.l.b16 %v6227
    %v7298 = vunpack.c.h.b16 %v6227
    %v7299 = vunpack.c.l.b16 %v6228
    %v7300 = vunpack.c.h.b16 %v6228
    %v7301 = vunpack.c.l.b16 %v6229
    %v7302 = vunpack.c.h.b16 %v6229
    %v7303 = vunpack.c.l.b16 %v6230
    %v7304 = vunpack.c.h.b16 %v6230
    %v7305 = vunpack.c.l.b16 %v6231
    %v7306 = vunpack.c.h.b16 %v6231
    %v7307 = vunpack.c.l.b16 %v6232
    %v7308 = vunpack.c.h.b16 %v6232
    %v7309 = vunpack.c.l.b16 %v6233
    %v7310 = vunpack.c.h.b16 %v6233
    %v7311 = vunpack.c.l.b16 %v6234
    %v7312 = vunpack.c.h.b16 %v6234
    %v7313 = vunpack.c.l.b16 %v6235
    %v7314 = vunpack.c.h.b16 %v6235
    %v7315 = vunpack.c.l.b16 %v6236
    %v7316 = vunpack.c.h.b16 %v6236
    %v7317 = vunpack.c.l.b16 %v6237
    %v7318 = vunpack.c.h.b16 %v6237
    %v7319 = vunpack.c.l.b16 %v6238
    %v7320 = vunpack.c.h.b16 %v6238
    %v7321 = vunpack.c.l.b16 %v6239
    %v7322 = vunpack.c.h.b16 %v6239
    %v7323 = vunpack.c.l.b16 %v6240
    %v7324 = vunpack.c.h.b16 %v6240
    %v7325 = vunpack.c.l.b16 %v6241
    %v7326 = vunpack.c.h.b16 %v6241
    %v7327 = vunpack.c.l.b16 %v6242
    %v7328 = vunpack.c.h.b16 %v6242
    %v7329 = vunpack.c.l.b16 %v6243
    %v7330 = vunpack.c.h.b16 %v6243
    %v7331 = vunpack.c.l.b16 %v6244
    %v7332 = vunpack.c.h.b16 %v6244
    %v7333 = vunpack.c.l.b16 %v6245
    %v7334 = vunpack.c.h.b16 %v6245
    %v7335 = vunpack.c.l.b16 %v6246
    %v7336 = vunpack.c.h.b16 %v6246
    %v7337 = vunpack.c.l.b16 %v6247
    %v7338 = vunpack.c.h.b16 %v6247
    %v7339 = vunpack.c.l.b16 %v6248
    %v7340 = vunpack.c.h.b16 %v6248
    %v7341 = vunpack.c.l.b16 %v6249
    %v7342 = vunpack.c.h.b16 %v6249
    %v7343 = vunpack.c.l.b16 %v6250
    %v7344 = vunpack.c.h.b16 %v6250
    %v7345 = vunpack.c.l.b16 %v6251
    %v7346 = vunpack.c.h.b16 %v6251
    %v7347 = vunpack.c.l.b16 %v6252
    %v7348 = vunpack.c.h.b16 %v6252
    %v7349 = vunpack.c.l.b16 %v6253
    %v7350 = vunpack.c.h.b16 %v6253
    %v7351 = vunpack.c.l.b16 %v6254
    %v7352 = vunpack.c.h.b16 %v6254
    %v7353 = vunpack.c.l.b16 %v6255
    %v7354 = vunpack.c.h.b16 %v6255
    %v7355 = vunpack.c.l.b16 %v6256
    %v7356 = vunpack.c.h.b16 %v6256
    %v7357 = vunpack.c.l.b16 %v6257
    %v7358 = vunpack.c.h.b16 %v6257
    %v7359 = vunpack.c.l.b16 %v6258
    %v7360 = vunpack.c.h.b16 %v6258
    %v7361 = vunpack.c.l.b16 %v6259
    %v7362 = vunpack.c.h.b16 %v6259
    %v7363 = vunpack.c.l.b16 %v6260
    %v7364 = vunpack.c.h.b16 %v6260
    %v7365 = vunpack.c.l.b16 %v6261
    %v7366 = vunpack.c.h.b16 %v6261
    %v7367 = vunpack.c.l.b16 %v6262
    %v7368 = vunpack.c.h.b16 %v6262
    %v7369 = vunpack.c.l.b16 %v6263
    %v7370 = vunpack.c.h.b16 %v6263
    %v7371 = vunpack.c.l.b16 %v6264
    %v7372 = vunpack.c.h.b16 %v6264
    %v7373 = vunpack.c.l.b16 %v6265
    %v7374 = vunpack.c.h.b16 %v6265
    %v7375 = vunpack.c.l.b16 %v6266
    %v7376 = vunpack.c.h.b16 %v6266
    %v7377 = vunpack.c.l.b16 %v6267
    %v7378 = vunpack.c.h.b16 %v6267
    %v7379 = vunpack.c.l.b16 %v6268
    %v7380 = vunpack.c.h.b16 %v6268
    %v7381 = vunpack.c.l.b16 %v6269
    %v7382 = vunpack.c.h.b16 %v6269
    %v7383 = vunpack.c.l.b16 %v6270
    %v7384 = vunpack.c.h.b16 %v6270
    %v7385 = vunpack.c.l.b16 %v6271
    %v7386 = vunpack.c.h.b16 %v6271
    %v7387 = vunpack.c.l.b16 %v6272
    %v7388 = vunpack.c.h.b16 %v6272
    %v7389 = vunpack.c.l.b16 %v6273
    %v7390 = vunpack.c.h.b16 %v6273
    %v7391 = vunpack.c.l.b16 %v6274
    %v7392 = vunpack.c.h.b16 %v6274
    %v7393 = vunpack.c.l.b16 %v6275
    %v7394 = vunpack.c.h.b16 %v6275
    %v7395 = vunpack.c.l.b16 %v6276
    %v7396 = vunpack.c.h.b16 %v6276
    %v7397 = vunpack.c.l.b16 %v6277
    %v7398 = vunpack.c.h.b16 %v6277
    %v7399 = vunpack.c.l.b16 %v6278
    %v7400 = vunpack.c.h.b16 %v6278
    %v7401 = vunpack.c.l.b16 %v6279
    %v7402 = vunpack.c.h.b16 %v6279
    %v7403 = vunpack.c.l.b16 %v6280
    %v7404 = vunpack.c.h.b16 %v6280
    %v7405 = vunpack.c.l.b16 %v6281
    %v7406 = vunpack.c.h.b16 %v6281
    %v7407 = vunpack.c.l.b16 %v6282
    %v7408 = vunpack.c.h.b16 %v6282
    %v7409 = vunpack.c.l.b16 %v6283
    %v7410 = vunpack.c.h.b16 %v6283
    %v7411 = vunpack.c.l.b16 %v6284
    %v7412 = vunpack.c.h.b16 %v6284
    %v7413 = vunpack.c.l.b16 %v6285
    %v7414 = vunpack.c.h.b16 %v6285
    %v7415 = vunpack.c.l.b16 %v6286
    %v7416 = vunpack.c.h.b16 %v6286
    %v7417 = vunpack.c.l.b16 %v6287
    %v7418 = vunpack.c.h.b16 %v6287
    %v7419 = vunpack.c.l.b16 %v6288
    %v7420 = vunpack.c.h.b16 %v6288
    %v7421 = vunpack.c.l.b16 %v6289
    %v7422 = vunpack.c.h.b16 %v6289
    %v7423 = vunpack.c.l.b16 %v6290
    %v7424 = vunpack.c.h.b16 %v6290
    %v7425 = vunpack.c.l.b16 %v6291
    %v7426 = vunpack.c.h.b16 %v6291
    %v7427 = vunpack.c.l.b16 %v6292
    %v7428 = vunpack.c.h.b16 %v6292
    %v7429 = vunpack.c.l.b16 %v6293
    %v7430 = vunpack.c.h.b16 %v6293
    %v7431 = vunpack.c.l.b16 %v6294
    %v7432 = vunpack.c.h.b16 %v6294
    %v7433 = vunpack.c.l.b16 %v6295
    %v7434 = vunpack.c.h.b16 %v6295
    %v7435 = vunpack.c.l.b16 %v6296
    %v7436 = vunpack.c.h.b16 %v6296
    %v7437 = vunpack.c.l.b16 %v6297
    %v7438 = vunpack.c.h.b16 %v6297
    %v7439 = vunpack.c.l.b16 %v6298
    %v7440 = vunpack.c.h.b16 %v6298
    %v7441 = vunpack.c.l.b16 %v6299
    %v7442 = vunpack.c.h.b16 %v6299
    %v7443 = vunpack.c.l.b16 %v6300
    %v7444 = vunpack.c.h.b16 %v6300
    %v7445 = vunpack.c.l.b16 %v6301
    %v7446 = vunpack.c.h.b16 %v6301
    %v7447 = vunpack.c.l.b16 %v6302
    %v7448 = vunpack.c.h.b16 %v6302
    %v7449 = vunpack.c.l.b16 %v6303
    %v7450 = vunpack.c.h.b16 %v6303
    %v7451 = vunpack.c.l.b16 %v6304
    %v7452 = vunpack.c.h.b16 %v6304
    %v7453 = vunpack.c.l.b16 %v6305
    %v7454 = vunpack.c.h.b16 %v6305
    %v7455 = vunpack.c.l.b16 %v6306
    %v7456 = vunpack.c.h.b16 %v6306
    %v7457 = vunpack.c.l.b16 %v6307
    %v7458 = vunpack.c.h.b16 %v6307
    %v7459 = vunpack.c.l.b16 %v6308
    %v7460 = vunpack.c.h.b16 %v6308
    %v7461 = vpack.c.b16 %v6697, %v6693
    %v7462 = vpack.c.b16 %v6698, %v6694
    %v7463 = vpack.c.b16 %v6699, %v6695
    %v7464 = vpack.c.b16 %v6700, %v6696
    %v7465 = vpack.c.b16 %v6705, %v6701
    %v7466 = vpack.c.b16 %v6706, %v6702
    %v7467 = vpack.c.b16 %v6707, %v6703
    %v7468 = vpack.c.b16 %v6708, %v6704
    %v7469 = vpack.c.b16 %v6713, %v6709
    %v7470 = vpack.c.b16 %v6714, %v6710
    %v7471 = vpack.c.b16 %v6715, %v6711
    %v7472 = vpack.c.b16 %v6716, %v6712
    %v7473 = vpack.c.b16 %v6721, %v6717
    %v7474 = vpack.c.b16 %v6722, %v6718
    %v7475 = vpack.c.b16 %v6723, %v6719
    %v7476 = vpack.c.b16 %v6724, %v6720
    %v7477 = vpack.c.b16 %v6729, %v6725
    %v7478 = vpack.c.b16 %v6730, %v6726
    %v7479 = vpack.c.b16 %v6731, %v6727
    %v7480 = vpack.c.b16 %v6732, %v6728
    %v7481 = vpack.c.b16 %v6737, %v6733
    %v7482 = vpack.c.b16 %v6738, %v6734
    %v7483 = vpack.c.b16 %v6739, %v6735
    %v7484 = vpack.c.b16 %v6740, %v6736
    %v7485 = vpack.c.b16 %v6745, %v6741
    %v7486 = vpack.c.b16 %v6746, %v6742
    %v7487 = vpack.c.b16 %v6747, %v6743
    %v7488 = vpack.c.b16 %v6748, %v6744
    %v7489 = vpack.c.b16 %v6753, %v6749
    %v7490 = vpack.c.b16 %v6754, %v6750
    %v7491 = vpack.c.b16 %v6755, %v6751
    %v7492 = vpack.c.b16 %v6756, %v6752
    %v7493 = vpack.c.b16 %v6761, %v6757
    %v7494 = vpack.c.b16 %v6762, %v6758
    %v7495 = vpack.c.b16 %v6763, %v6759
    %v7496 = vpack.c.b16 %v6764, %v6760
    %v7497 = vpack.c.b16 %v6769, %v6765
    %v7498 = vpack.c.b16 %v6770, %v6766
    %v7499 = vpack.c.b16 %v6771, %v6767
    %v7500 = vpack.c.b16 %v6772, %v6768
    %v7501 = vpack.c.b16 %v6777, %v6773
    %v7502 = vpack.c.b16 %v6778, %v6774
    %v7503 = vpack.c.b16 %v6779, %v6775
    %v7504 = vpack.c.b16 %v6780, %v6776
    %v7505 = vpack.c.b16 %v6785, %v6781
    %v7506 = vpack.c.b16 %v6786, %v6782
    %v7507 = vpack.c.b16 %v6787, %v6783
    %v7508 = vpack.c.b16 %v6788, %v6784
    %v7509 = vpack.c.b16 %v6793, %v6789
    %v7510 = vpack.c.b16 %v6794, %v6790
    %v7511 = vpack.c.b16 %v6795, %v6791
    %v7512 = vpack.c.b16 %v6796, %v6792
    %v7513 = vpack.c.b16 %v6801, %v6797
    %v7514 = vpack.c.b16 %v6802, %v6798
    %v7515 = vpack.c.b16 %v6803, %v6799
    %v7516 = vpack.c.b16 %v6804, %v6800
    %v7517 = vpack.c.b16 %v6809, %v6805
    %v7518 = vpack.c.b16 %v6810, %v6806
    %v7519 = vpack.c.b16 %v6811, %v6807
    %v7520 = vpack.c.b16 %v6812, %v6808
    %v7521 = vpack.c.b16 %v6817, %v6813
    %v7522 = vpack.c.b16 %v6818, %v6814
    %v7523 = vpack.c.b16 %v6819, %v6815
    %v7524 = vpack.c.b16 %v6820, %v6816
    %v7525 = vpack.c.b16 %v6825, %v6821
    %v7526 = vpack.c.b16 %v6826, %v6822
    %v7527 = vpack.c.b16 %v6827, %v6823
    %v7528 = vpack.c.b16 %v6828, %v6824
    %v7529 = vpack.c.b16 %v6833, %v6829
    %v7530 = vpack.c.b16 %v6834, %v6830
    %v7531 = vpack.c.b16 %v6835, %v6831
    %v7532 = vpack.c.b16 %v6836, %v6832
    %v7533 = vpack.c.b16 %v6841, %v6837
    %v7534 = vpack.c.b16 %v6842, %v6838
    %v7535 = vpack.c.b16 %v6843, %v6839
    %v7536 = vpack.c.b16 %v6844, %v6840
    %v7537 = vpack.c.b16 %v6849, %v6845
    %v7538 = vpack.c.b16 %v6850, %v6846
    %v7539 = vpack.c.b16 %v6851, %v6847
    %v7540 = vpack.c.b16 %v6852, %v6848
    %v7541 = vpack.c.b16 %v6857, %v6853
    %v7542 = vpack.c.b16 %v6858, %v6854
    %v7543 = vpack.c.b16 %v6859, %v6855
    %v7544 = vpack.c.b16 %v6860, %v6856
    %v7545 = vpack.c.b16 %v6865, %v6861
    %v7546 = vpack.c.b16 %v6866, %v6862
    %v7547 = vpack.c.b16 %v6867, %v6863
    %v7548 = vpack.c.b16 %v6868, %v6864
    %v7549 = vpack.c.b16 %v6873, %v6869
    %v7550 = vpack.c.b16 %v6874, %v6870
    %v7551 = vpack.c.b16 %v6875, %v6871
    %v7552 = vpack.c.b16 %v6876, %v6872
    %v7553 = vpack.c.b16 %v6881, %v6877
    %v7554 = vpack.c.b16 %v6882, %v6878
    %v7555 = vpack.c.b16 %v6883, %v6879
    %v7556 = vpack.c.b16 %v6884, %v6880
    %v7557 = vpack.c.b16 %v6889, %v6885
    %v7558 = vpack.c.b16 %v6890, %v6886
    %v7559 = vpack.c.b16 %v6891, %v6887
    %v7560 = vpack.c.b16 %v6892, %v6888
    %v7561 = vpack.c.b16 %v6897, %v6893
    %v7562 = vpack.c.b16 %v6898, %v6894
    %v7563 = vpack.c.b16 %v6899, %v6895
    %v7564 = vpack.c.b16 %v6900, %v6896
    %v7565 = vpack.c.b16 %v6905, %v6901
    %v7566 = vpack.c.b16 %v6906, %v6902
    %v7567 = vpack.c.b16 %v6907, %v6903
    %v7568 = vpack.c.b16 %v6908, %v6904
    %v7569 = vpack.c.b16 %v6913, %v6909
    %v7570 = vpack.c.b16 %v6914, %v6910
    %v7571 = vpack.c.b16 %v6915, %v6911
    %v7572 = vpack.c.b16 %v6916, %v6912
    %v7573 = vpack.c.b16 %v6921, %v6917
    %v7574 = vpack.c.b16 %v6922, %v6918
    %v7575 = vpack.c.b16 %v6923, %v6919
    %v7576 = vpack.c.b16 %v6924, %v6920
    %v7577 = vpack.c.b16 %v6929, %v6925
    %v7578 = vpack.c.b16 %v6930, %v6926
    %v7579 = vpack.c.b16 %v6931, %v6927
    %v7580 = vpack.c.b16 %v6932, %v6928
    %v7581 = vpack.c.b16 %v6937, %v6933
    %v7582 = vpack.c.b16 %v6938, %v6934
    %v7583 = vpack.c.b16 %v6939, %v6935
    %v7584 = vpack.c.b16 %v6940, %v6936
    %v7585 = vpack.c.b16 %v6945, %v6941
    %v7586 = vpack.c.b16 %v6946, %v6942
    %v7587 = vpack.c.b16 %v6947, %v6943
    %v7588 = vpack.c.b16 %v6948, %v6944
    %v7589 = vpack.c.b16 %v6953, %v6949
    %v7590 = vpack.c.b16 %v6954, %v6950
    %v7591 = vpack.c.b16 %v6955, %v6951
    %v7592 = vpack.c.b16 %v6956, %v6952
    %v7593 = vpack.c.b16 %v6961, %v6957
    %v7594 = vpack.c.b16 %v6962, %v6958
    %v7595 = vpack.c.b16 %v6963, %v6959
    %v7596 = vpack.c.b16 %v6964, %v6960
    %v7597 = vpack.c.b16 %v6969, %v6965
    %v7598 = vpack.c.b16 %v6970, %v6966
    %v7599 = vpack.c.b16 %v6971, %v6967
    %v7600 = vpack.c.b16 %v6972, %v6968
    %v7601 = vpack.c.b16 %v6977, %v6973
    %v7602 = vpack.c.b16 %v6978, %v6974
    %v7603 = vpack.c.b16 %v6979, %v6975
    %v7604 = vpack.c.b16 %v6980, %v6976
    %v7605 = vpack.c.b16 %v6985, %v6981
    %v7606 = vpack.c.b16 %v6986, %v6982
    %v7607 = vpack.c.b16 %v6987, %v6983
    %v7608 = vpack.c.b16 %v6988, %v6984
    %v7609 = vpack.c.b16 %v6993, %v6989
    %v7610 = vpack.c.b16 %v6994, %v6990
    %v7611 = vpack.c.b16 %v6995, %v6991
    %v7612 = vpack.c.b16 %v6996, %v6992
    %v7613 = vpack.c.b16 %v7001, %v6997
    %v7614 = vpack.c.b16 %v7002, %v6998
    %v7615 = vpack.c.b16 %v7003, %v6999
    %v7616 = vpack.c.b16 %v7004, %v7000
    %v7617 = vpack.c.b16 %v7009, %v7005
    %v7618 = vpack.c.b16 %v7010, %v7006
    %v7619 = vpack.c.b16 %v7011, %v7007
    %v7620 = vpack.c.b16 %v7012, %v7008
    %v7621 = vpack.c.b16 %v7017, %v7013
    %v7622 = vpack.c.b16 %v7018, %v7014
    %v7623 = vpack.c.b16 %v7019, %v7015
    %v7624 = vpack.c.b16 %v7020, %v7016
    %v7625 = vpack.c.b16 %v7025, %v7021
    %v7626 = vpack.c.b16 %v7026, %v7022
    %v7627 = vpack.c.b16 %v7027, %v7023
    %v7628 = vpack.c.b16 %v7028, %v7024
    %v7629 = vpack.c.b16 %v7033, %v7029
    %v7630 = vpack.c.b16 %v7034, %v7030
    %v7631 = vpack.c.b16 %v7035, %v7031
    %v7632 = vpack.c.b16 %v7036, %v7032
    %v7633 = vpack.c.b16 %v7041, %v7037
    %v7634 = vpack.c.b16 %v7042, %v7038
    %v7635 = vpack.c.b16 %v7043, %v7039
    %v7636 = vpack.c.b16 %v7044, %v7040
    %v7637 = vpack.c.b16 %v7049, %v7045
    %v7638 = vpack.c.b16 %v7050, %v7046
    %v7639 = vpack.c.b16 %v7051, %v7047
    %v7640 = vpack.c.b16 %v7052, %v7048
    %v7641 = vpack.c.b16 %v7057, %v7053
    %v7642 = vpack.c.b16 %v7058, %v7054
    %v7643 = vpack.c.b16 %v7059, %v7055
    %v7644 = vpack.c.b16 %v7060, %v7056
    %v7645 = vpack.c.b16 %v7065, %v7061
    %v7646 = vpack.c.b16 %v7066, %v7062
    %v7647 = vpack.c.b16 %v7067, %v7063
    %v7648 = vpack.c.b16 %v7068, %v7064
    %v7649 = vpack.c.b16 %v7073, %v7069
    %v7650 = vpack.c.b16 %v7074, %v7070
    %v7651 = vpack.c.b16 %v7075, %v7071
    %v7652 = vpack.c.b16 %v7076, %v7072
    %v7653 = vpack.c.b16 %v7081, %v7077
    %v7654 = vpack.c.b16 %v7082, %v7078
    %v7655 = vpack.c.b16 %v7083, %v7079
    %v7656 = vpack.c.b16 %v7084, %v7080
    %v7657 = vpack.c.b16 %v7089, %v7085
    %v7658 = vpack.c.b16 %v7090, %v7086
    %v7659 = vpack.c.b16 %v7091, %v7087
    %v7660 = vpack.c.b16 %v7092, %v7088
    %v7661 = vpack.c.b16 %v7097, %v7093
    %v7662 = vpack.c.b16 %v7098, %v7094
    %v7663 = vpack.c.b16 %v7099, %v7095
    %v7664 = vpack.c.b16 %v7100, %v7096
    %v7665 = vpack.c.b16 %v7105, %v7101
    %v7666 = vpack.c.b16 %v7106, %v7102
    %v7667 = vpack.c.b16 %v7107, %v7103
    %v7668 = vpack.c.b16 %v7108, %v7104
    %v7669 = vpack.c.b16 %v7113, %v7109
    %v7670 = vpack.c.b16 %v7114, %v7110
    %v7671 = vpack.c.b16 %v7115, %v7111
    %v7672 = vpack.c.b16 %v7116, %v7112
    %v7673 = vpack.c.b16 %v7121, %v7117
    %v7674 = vpack.c.b16 %v7122, %v7118
    %v7675 = vpack.c.b16 %v7123, %v7119
    %v7676 = vpack.c.b16 %v7124, %v7120
    %v7677 = vpack.c.b16 %v7129, %v7125
    %v7678 = vpack.c.b16 %v7130, %v7126
    %v7679 = vpack.c.b16 %v7131, %v7127
    %v7680 = vpack.c.b16 %v7132, %v7128
    %v7681 = vpack.c.b16 %v7137, %v7133
    %v7682 = vpack.c.b16 %v7138, %v7134
    %v7683 = vpack.c.b16 %v7139, %v7135
    %v7684 = vpack.c.b16 %v7140, %v7136
    %v7685 = vpack.c.b16 %v7145, %v7141
    %v7686 = vpack.c.b16 %v7146, %v7142
    %v7687 = vpack.c.b16 %v7147, %v7143
    %v7688 = vpack.c.b16 %v7148, %v7144
    %v7689 = vpack.c.b16 %v7153, %v7149
    %v7690 = vpack.c.b16 %v7154, %v7150
    %v7691 = vpack.c.b16 %v7155, %v7151
    %v7692 = vpack.c.b16 %v7156, %v7152
    %v7693 = vpack.c.b16 %v7161, %v7157
    %v7694 = vpack.c.b16 %v7162, %v7158
    %v7695 = vpack.c.b16 %v7163, %v7159
    %v7696 = vpack.c.b16 %v7164, %v7160
    %v7697 = vpack.c.b16 %v7169, %v7165
    %v7698 = vpack.c.b16 %v7170, %v7166
    %v7699 = vpack.c.b16 %v7171, %v7167
    %v7700 = vpack.c.b16 %v7172, %v7168
    %v7701 = vpack.c.b16 %v7177, %v7173
    %v7702 = vpack.c.b16 %v7178, %v7174
    %v7703 = vpack.c.b16 %v7179, %v7175
    %v7704 = vpack.c.b16 %v7180, %v7176
    %v7705 = vpack.c.b16 %v7185, %v7181
    %v7706 = vpack.c.b16 %v7186, %v7182
    %v7707 = vpack.c.b16 %v7187, %v7183
    %v7708 = vpack.c.b16 %v7188, %v7184
    %v7709 = vpack.c.b16 %v7193, %v7189
    %v7710 = vpack.c.b16 %v7194, %v7190
    %v7711 = vpack.c.b16 %v7195, %v7191
    %v7712 = vpack.c.b16 %v7196, %v7192
    %v7713 = vpack.c.b16 %v7201, %v7197
    %v7714 = vpack.c.b16 %v7202, %v7198
    %v7715 = vpack.c.b16 %v7203, %v7199
    %v7716 = vpack.c.b16 %v7204, %v7200
    %v7717 = vpack.c.b16 %v7209, %v7205
    %v7718 = vpack.c.b16 %v7210, %v7206
    %v7719 = vpack.c.b16 %v7211, %v7207
    %v7720 = vpack.c.b16 %v7212, %v7208
    %v7721 = vpack.c.b16 %v7217, %v7213
    %v7722 = vpack.c.b16 %v7218, %v7214
    %v7723 = vpack.c.b16 %v7219, %v7215
    %v7724 = vpack.c.b16 %v7220, %v7216
    %v7725 = vpack.c.b16 %v7225, %v7221
    %v7726 = vpack.c.b16 %v7226, %v7222
    %v7727 = vpack.c.b16 %v7227, %v7223
    %v7728 = vpack.c.b16 %v7228, %v7224
    %v7729 = vpack.c.b16 %v7233, %v7229
    %v7730 = vpack.c.b16 %v7234, %v7230
    %v7731 = vpack.c.b16 %v7235, %v7231
    %v7732 = vpack.c.b16 %v7236, %v7232
    %v7733 = vpack.c.b16 %v7241, %v7237
    %v7734 = vpack.c.b16 %v7242, %v7238
    %v7735 = vpack.c.b16 %v7243, %v7239
    %v7736 = vpack.c.b16 %v7244, %v7240
    %v7737 = vpack.c.b16 %v7249, %v7245
    %v7738 = vpack.c.b16 %v7250, %v7246
    %v7739 = vpack.c.b16 %v7251, %v7247
    %v7740 = vpack.c.b16 %v7252, %v7248
    %v7741 = vpack.c.b16 %v7257, %v7253
    %v7742 = vpack.c.b16 %v7258, %v7254
    %v7743 = vpack.c.b16 %v7259, %v7255
    %v7744 = vpack.c.b16 %v7260, %v7256
    %v7745 = vpack.c.b16 %v7265, %v7261
    %v7746 = vpack.c.b16 %v7266, %v7262
    %v7747 = vpack.c.b16 %v7267, %v7263
    %v7748 = vpack.c.b16 %v7268, %v7264
    %v7749 = vpack.c.b16 %v7273, %v7269
    %v7750 = vpack.c.b16 %v7274, %v7270
    %v7751 = vpack.c.b16 %v7275, %v7271
    %v7752 = vpack.c.b16 %v7276, %v7272
    %v7753 = vpack.c.b16 %v7281, %v7277
    %v7754 = vpack.c.b16 %v7282, %v7278
    %v7755 = vpack.c.b16 %v7283, %v7279
    %v7756 = vpack.c.b16 %v7284, %v7280
    %v7757 = vpack.c.b16 %v7289, %v7285
    %v7758 = vpack.c.b16 %v7290, %v7286
    %v7759 = vpack.c.b16 %v7291, %v7287
    %v7760 = vpack.c.b16 %v7292, %v7288
    %v7761 = vpack.c.b16 %v7297, %v7293
    %v7762 = vpack.c.b16 %v7298, %v7294
    %v7763 = vpack.c.b16 %v7299, %v7295
    %v7764 = vpack.c.b16 %v7300, %v7296
    %v7765 = vpack.c.b16 %v7305, %v7301
    %v7766 = vpack.c.b16 %v7306, %v7302
    %v7767 = vpack.c.b16 %v7307, %v7303
    %v7768 = vpack.c.b16 %v7308, %v7304
    %v7769 = vpack.c.b16 %v7313, %v7309
    %v7770 = vpack.c.b16 %v7314, %v7310
    %v7771 = vpack.c.b16 %v7315, %v7311
    %v7772 = vpack.c.b16 %v7316, %v7312
    %v7773 = vpack.c.b16 %v7321, %v7317
    %v7774 = vpack.c.b16 %v7322, %v7318
    %v7775 = vpack.c.b16 %v7323, %v7319
    %v7776 = vpack.c.b16 %v7324, %v7320
    %v7777 = vpack.c.b16 %v7329, %v7325
    %v7778 = vpack.c.b16 %v7330, %v7326
    %v7779 = vpack.c.b16 %v7331, %v7327
    %v7780 = vpack.c.b16 %v7332, %v7328
    %v7781 = vpack.c.b16 %v7337, %v7333
    %v7782 = vpack.c.b16 %v7338, %v7334
    %v7783 = vpack.c.b16 %v7339, %v7335
    %v7784 = vpack.c.b16 %v7340, %v7336
    %v7785 = vpack.c.b16 %v7345, %v7341
    %v7786 = vpack.c.b16 %v7346, %v7342
    %v7787 = vpack.c.b16 %v7347, %v7343
    %v7788 = vpack.c.b16 %v7348, %v7344
    %v7789 = vpack.c.b16 %v7353, %v7349
    %v7790 = vpack.c.b16 %v7354, %v7350
    %v7791 = vpack.c.b16 %v7355, %v7351
    %v7792 = vpack.c.b16 %v7356, %v7352
    %v7793 = vpack.c.b16 %v7361, %v7357
    %v7794 = vpack.c.b16 %v7362, %v7358
    %v7795 = vpack.c.b16 %v7363, %v7359
    %v7796 = vpack.c.b16 %v7364, %v7360
    %v7797 = vpack.c.b16 %v7369, %v7365
    %v7798 = vpack.c.b16 %v7370, %v7366
    %v7799 = vpack.c.b16 %v7371, %v7367
    %v7800 = vpack.c.b16 %v7372, %v7368
    %v7801 = vpack.c.b16 %v7377, %v7373
    %v7802 = vpack.c.b16 %v7378, %v7374
    %v7803 = vpack.c.b16 %v7379, %v7375
    %v7804 = vpack.c.b16 %v7380, %v7376
    %v7805 = vpack.c.b16 %v7385, %v7381
    %v7806 = vpack.c.b16 %v7386, %v7382
    %v7807 = vpack.c.b16 %v7387, %v7383
    %v7808 = vpack.c.b16 %v7388, %v7384
    %v7809 = vpack.c.b16 %v7393, %v7389
    %v7810 = vpack.c.b16 %v7394, %v7390
    %v7811 = vpack.c.b16 %v7395, %v7391
    %v7812 = vpack.c.b16 %v7396, %v7392
    %v7813 = vpack.c.b16 %v7401, %v7397
    %v7814 = vpack.c.b16 %v7402, %v7398
    %v7815 = vpack.c.b16 %v7403, %v7399
    %v7816 = vpack.c.b16 %v7404, %v7400
    %v7817 = vpack.c.b16 %v7409, %v7405
    %v7818 = vpack.c.b16 %v7410, %v7406
    %v7819 = vpack.c.b16 %v7411, %v7407
    %v7820 = vpack.c.b16 %v7412, %v7408
    %v7821 = vpack.c.b16 %v7417, %v7413
    %v7822 = vpack.c.b16 %v7418, %v7414
    %v7823 = vpack.c.b16 %v7419, %v7415
    %v7824 = vpack.c.b16 %v7420, %v7416
    %v7825 = vpack.c.b16 %v7425, %v7421
    %v7826 = vpack.c.b16 %v7426, %v7422
    %v7827 = vpack.c.b16 %v7427, %v7423
    %v7828 = vpack.c.b16 %v7428, %v7424
    %v7829 = vpack.c.b16 %v7433, %v7429
    %v7830 = vpack.c.b16 %v7434, %v7430
    %v7831 = vpack.c.b16 %v7435, %v7431
    %v7832 = vpack.c.b16 %v7436, %v7432
    %v7833 = vpack.c.b16 %v7441, %v7437
    %v7834 = vpack.c.b16 %v7442, %v7438
    %v7835 = vpack.c.b16 %v7443, %v7439
    %v7836 = vpack.c.b16 %v7444, %v7440
    %v7837 = vpack.c.b16 %v7449, %v7445
    %v7838 = vpack.c.b16 %v7450, %v7446
    %v7839 = vpack.c.b16 %v7451, %v7447
    %v7840 = vpack.c.b16 %v7452, %v7448
    %v7841 = vpack.c.b16 %v7457, %v7453
    %v7842 = vpack.c.b16 %v7458, %v7454
    %v7843 = vpack.c.b16 %v7459, %v7455
    %v7844 = vpack.c.b16 %v7460, %v7456
    %8229 = vmatprep.subr.bf16.mxu0 %v7490
    %8230 = vmatpush1.bf16.msra.mxu0 %v7489
    %8231 = vmatprep.subr.bf16.mxu0 %v7486
    %8232 = vmatpush1.bf16.msra.mxu0 %v7485
    %8233 = vmatprep.subr.bf16.mxu0 %v7482
    %8234 = vmatpush1.bf16.msra.mxu0 %v7481
    %8235 = vmatprep.subr.bf16.mxu0 %v7478
    %8236 = vmatpush1.bf16.msra.mxu0 %v7477
    %8237 = vmatprep.subr.bf16.mxu0 %v7474
    %8238 = vmatpush1.bf16.msra.mxu0 %v7473
    %8239 = vmatprep.subr.bf16.mxu0 %v7470
    %8240 = vmatpush1.bf16.msra.mxu0 %v7469
    %8241 = vmatprep.subr.bf16.mxu0 %v7466
    %8242 = vmatpush1.bf16.msra.mxu0 %v7465
    %8243 = vmatprep.subr.bf16.mxu0 %v7462
    %8244 = vmatpush1.bf16.msra.mxu0 %v7461
    %8245 = vmatprep.subr.bf16.mxu0 %v7522
    %8246 = vmatpush2.bf16.msra.mxu0 %v7521
    %8247 = vmatprep.subr.bf16.mxu0 %v7518
    %8248 = vmatpush2.bf16.msra.mxu0 %v7517
    %8249 = vmatprep.subr.bf16.mxu0 %v7514
    %8250 = vmatpush2.bf16.msra.mxu0 %v7513
    %8251 = vmatprep.subr.bf16.mxu0 %v7510
    %8252 = vmatpush2.bf16.msra.mxu0 %v7509
    %8253 = vmatprep.subr.bf16.mxu0 %v7506
    %8254 = vmatpush2.bf16.msra.mxu0 %v7505
    %8255 = vmatprep.subr.bf16.mxu0 %v7502
    %8256 = vmatpush2.bf16.msra.mxu0 %v7501
    %8257 = vmatprep.subr.bf16.mxu0 %v7498
    %8258 = vmatpush2.bf16.msra.mxu0 %v7497
    %8259 = vmatprep.subr.bf16.mxu0 %v7494
    %8260 = vmatpush2.bf16.msra.mxu0 %v7493
    %8261 = vmatprep.mubr.bf16.mxu0 %v535
    %8262 = vmatmul.mubr.bf16.gmra.mxu0 %v534
    %v8263 = vpop.f32.mrf.mxu0
    %v8264 = vadd.f32 0.0, %v8263
    %v8265 = vpop.f32.mrf.mxu0
    %v8266 = vadd.f32 0.0, %v8265
    %v8267 = vpop.f32.mrf.mxu0
    %v8268 = vadd.f32 0.0, %v8267
    %v8269 = vpop.f32.mrf.mxu0
    %v8270 = vadd.f32 0.0, %v8269
    %8271 = vdwg.mxu0
    %8272 = vmatprep.subr.bf16.mxu0 %v7554
    %8273 = vmatpush1.bf16.msra.mxu0 %v7553
    %8274 = vmatprep.subr.bf16.mxu0 %v7550
    %8275 = vmatpush1.bf16.msra.mxu0 %v7549
    %8276 = vmatprep.subr.bf16.mxu0 %v7546
    %8277 = vmatpush1.bf16.msra.mxu0 %v7545
    %8278 = vmatprep.subr.bf16.mxu0 %v7542
    %8279 = vmatpush1.bf16.msra.mxu0 %v7541
    %8280 = vmatprep.subr.bf16.mxu0 %v7538
    %8281 = vmatpush1.bf16.msra.mxu0 %v7537
    %8282 = vmatprep.subr.bf16.mxu0 %v7534
    %8283 = vmatpush1.bf16.msra.mxu0 %v7533
    %8284 = vmatprep.subr.bf16.mxu0 %v7530
    %8285 = vmatpush1.bf16.msra.mxu0 %v7529
    %8286 = vmatprep.subr.bf16.mxu0 %v7526
    %8287 = vmatpush1.bf16.msra.mxu0 %v7525
    %8288 = vmatprep.subr.bf16.mxu0 %v7586
    %8289 = vmatpush2.bf16.msra.mxu0 %v7585
    %8290 = vmatprep.subr.bf16.mxu0 %v7582
    %8291 = vmatpush2.bf16.msra.mxu0 %v7581
    %8292 = vmatprep.subr.bf16.mxu0 %v7578
    %8293 = vmatpush2.bf16.msra.mxu0 %v7577
    %8294 = vmatprep.subr.bf16.mxu0 %v7574
    %8295 = vmatpush2.bf16.msra.mxu0 %v7573
    %8296 = vmatprep.subr.bf16.mxu0 %v7570
    %8297 = vmatpush2.bf16.msra.mxu0 %v7569
    %8298 = vmatprep.subr.bf16.mxu0 %v7566
    %8299 = vmatpush2.bf16.msra.mxu0 %v7565
    %8300 = vmatprep.subr.bf16.mxu0 %v7562
    %8301 = vmatpush2.bf16.msra.mxu0 %v7561
    %8302 = vmatprep.subr.bf16.mxu0 %v7558
    %8303 = vmatpush2.bf16.msra.mxu0 %v7557
    %8304 = vmatprep.mubr.bf16.mxu0 %v537
    %8305 = vmatmul.mubr.bf16.gmra.mxu0 %v536
    %v8306 = vpop.f32.mrf.mxu0
    %v8307 = vadd.f32 %v8264, %v8306
    %v8308 = vpop.f32.mrf.mxu0
    %v8309 = vadd.f32 %v8266, %v8308
    %v8310 = vpop.f32.mrf.mxu0
    %v8311 = vadd.f32 %v8268, %v8310
    %v8312 = vpop.f32.mrf.mxu0
    %v8313 = vadd.f32 %v8270, %v8312
    %8314 = vdwg.mxu0
    %8315 = vmatprep.subr.bf16.mxu0 %v7618
    %8316 = vmatpush1.bf16.msra.mxu0 %v7617
    %8317 = vmatprep.subr.bf16.mxu0 %v7614
    %8318 = vmatpush1.bf16.msra.mxu0 %v7613
    %8319 = vmatprep.subr.bf16.mxu0 %v7610
    %8320 = vmatpush1.bf16.msra.mxu0 %v7609
    %8321 = vmatprep.subr.bf16.mxu0 %v7606
    %8322 = vmatpush1.bf16.msra.mxu0 %v7605
    %8323 = vmatprep.subr.bf16.mxu0 %v7602
    %8324 = vmatpush1.bf16.msra.mxu0 %v7601
    %8325 = vmatprep.subr.bf16.mxu0 %v7598
    %8326 = vmatpush1.bf16.msra.mxu0 %v7597
    %8327 = vmatprep.subr.bf16.mxu0 %v7594
    %8328 = vmatpush1.bf16.msra.mxu0 %v7593
    %8329 = vmatprep.subr.bf16.mxu0 %v7590
    %8330 = vmatpush1.bf16.msra.mxu0 %v7589
    %8331 = vmatprep.subr.bf16.mxu0 %v7650
    %8332 = vmatpush2.bf16.msra.mxu0 %v7649
    %8333 = vmatprep.subr.bf16.mxu0 %v7646
    %8334 = vmatpush2.bf16.msra.mxu0 %v7645
    %8335 = vmatprep.subr.bf16.mxu0 %v7642
    %8336 = vmatpush2.bf16.msra.mxu0 %v7641
    %8337 = vmatprep.subr.bf16.mxu0 %v7638
    %8338 = vmatpush2.bf16.msra.mxu0 %v7637
    %8339 = vmatprep.subr.bf16.mxu0 %v7634
    %8340 = vmatpush2.bf16.msra.mxu0 %v7633
    %8341 = vmatprep.subr.bf16.mxu0 %v7630
    %8342 = vmatpush2.bf16.msra.mxu0 %v7629
    %8343 = vmatprep.subr.bf16.mxu0 %v7626
    %8344 = vmatpush2.bf16.msra.mxu0 %v7625
    %8345 = vmatprep.subr.bf16.mxu0 %v7622
    %8346 = vmatpush2.bf16.msra.mxu0 %v7621
    %8347 = vmatprep.mubr.bf16.mxu0 %v539
    %8348 = vmatmul.mubr.bf16.gmra.mxu0 %v538
    %v8349 = vpop.f32.mrf.mxu0
    %v8350 = vadd.f32 %v8307, %v8349
    %v8351 = vpop.f32.mrf.mxu0
    %v8352 = vadd.f32 %v8309, %v8351
    %v8353 = vpop.f32.mrf.mxu0
    %v8354 = vadd.f32 %v8311, %v8353
    %v8355 = vpop.f32.mrf.mxu0
    %v8356 = vadd.f32 %v8313, %v8355
    %8357 = vdwg.mxu0
    %8358 = vmatprep.subr.bf16.mxu0 %v7682
    %8359 = vmatpush1.bf16.msra.mxu0 %v7681
    %8360 = vmatprep.subr.bf16.mxu0 %v7678
    %8361 = vmatpush1.bf16.msra.mxu0 %v7677
    %8362 = vmatprep.subr.bf16.mxu0 %v7674
    %8363 = vmatpush1.bf16.msra.mxu0 %v7673
    %8364 = vmatprep.subr.bf16.mxu0 %v7670
    %8365 = vmatpush1.bf16.msra.mxu0 %v7669
    %8366 = vmatprep.subr.bf16.mxu0 %v7666
    %8367 = vmatpush1.bf16.msra.mxu0 %v7665
    %8368 = vmatprep.subr.bf16.mxu0 %v7662
    %8369 = vmatpush1.bf16.msra.mxu0 %v7661
    %8370 = vmatprep.subr.bf16.mxu0 %v7658
    %8371 = vmatpush1.bf16.msra.mxu0 %v7657
    %8372 = vmatprep.subr.bf16.mxu0 %v7654
    %8373 = vmatpush1.bf16.msra.mxu0 %v7653
    %8374 = vmatprep.subr.bf16.mxu0 %v7714
    %8375 = vmatpush2.bf16.msra.mxu0 %v7713
    %8376 = vmatprep.subr.bf16.mxu0 %v7710
    %8377 = vmatpush2.bf16.msra.mxu0 %v7709
    %8378 = vmatprep.subr.bf16.mxu0 %v7706
    %8379 = vmatpush2.bf16.msra.mxu0 %v7705
    %8380 = vmatprep.subr.bf16.mxu0 %v7702
    %8381 = vmatpush2.bf16.msra.mxu0 %v7701
    %8382 = vmatprep.subr.bf16.mxu0 %v7698
    %8383 = vmatpush2.bf16.msra.mxu0 %v7697
    %8384 = vmatprep.subr.bf16.mxu0 %v7694
    %8385 = vmatpush2.bf16.msra.mxu0 %v7693
    %8386 = vmatprep.subr.bf16.mxu0 %v7690
    %8387 = vmatpush2.bf16.msra.mxu0 %v7689
    %8388 = vmatprep.subr.bf16.mxu0 %v7686
    %8389 = vmatpush2.bf16.msra.mxu0 %v7685
    %8390 = vmatprep.mubr.bf16.mxu0 %v541
    %8391 = vmatmul.mubr.bf16.gmra.mxu0 %v540
    %v8392 = vpop.f32.mrf.mxu0
    %v8393 = vadd.f32 %v8350, %v8392
    %v8394 = vpop.f32.mrf.mxu0
    %v8395 = vadd.f32 %v8352, %v8394
    %v8396 = vpop.f32.mrf.mxu0
    %v8397 = vadd.f32 %v8354, %v8396
    %v8398 = vpop.f32.mrf.mxu0
    %v8399 = vadd.f32 %v8356, %v8398
    %8400 = vdwg.mxu0
    %8401 = vmatprep.subr.bf16.mxu0 %v7746
    %8402 = vmatpush1.bf16.msra.mxu0 %v7745
    %8403 = vmatprep.subr.bf16.mxu0 %v7742
    %8404 = vmatpush1.bf16.msra.mxu0 %v7741
    %8405 = vmatprep.subr.bf16.mxu0 %v7738
    %8406 = vmatpush1.bf16.msra.mxu0 %v7737
    %8407 = vmatprep.subr.bf16.mxu0 %v7734
    %8408 = vmatpush1.bf16.msra.mxu0 %v7733
    %8409 = vmatprep.subr.bf16.mxu0 %v7730
    %8410 = vmatpush1.bf16.msra.mxu0 %v7729
    %8411 = vmatprep.subr.bf16.mxu0 %v7726
    %8412 = vmatpush1.bf16.msra.mxu0 %v7725
    %8413 = vmatprep.subr.bf16.mxu0 %v7722
    %8414 = vmatpush1.bf16.msra.mxu0 %v7721
    %8415 = vmatprep.subr.bf16.mxu0 %v7718
    %8416 = vmatpush1.bf16.msra.mxu0 %v7717
    %8417 = vmatprep.subr.bf16.mxu0 %v7778
    %8418 = vmatpush2.bf16.msra.mxu0 %v7777
    %8419 = vmatprep.subr.bf16.mxu0 %v7774
    %8420 = vmatpush2.bf16.msra.mxu0 %v7773
    %8421 = vmatprep.subr.bf16.mxu0 %v7770
    %8422 = vmatpush2.bf16.msra.mxu0 %v7769
    %8423 = vmatprep.subr.bf16.mxu0 %v7766
    %8424 = vmatpush2.bf16.msra.mxu0 %v7765
    %8425 = vmatprep.subr.bf16.mxu0 %v7762
    %8426 = vmatpush2.bf16.msra.mxu0 %v7761
    %8427 = vmatprep.subr.bf16.mxu0 %v7758
    %8428 = vmatpush2.bf16.msra.mxu0 %v7757
    %8429 = vmatprep.subr.bf16.mxu0 %v7754
    %8430 = vmatpush2.bf16.msra.mxu0 %v7753
    %8431 = vmatprep.subr.bf16.mxu0 %v7750
    %8432 = vmatpush2.bf16.msra.mxu0 %v7749
    %8433 = vmatprep.mubr.bf16.mxu0 %v543
    %8434 = vmatmul.mubr.bf16.gmra.mxu0 %v542
    %v8435 = vpop.f32.mrf.mxu0
    %v8436 = vadd.f32 %v8393, %v8435
    %v8437 = vpop.f32.mrf.mxu0
    %v8438 = vadd.f32 %v8395, %v8437
    %v8439 = vpop.f32.mrf.mxu0
    %v8440 = vadd.f32 %v8397, %v8439
    %v8441 = vpop.f32.mrf.mxu0
    %v8442 = vadd.f32 %v8399, %v8441
    %8443 = vdwg.mxu0
    %8444 = vmatprep.subr.bf16.mxu0 %v7810
    %8445 = vmatpush1.bf16.msra.mxu0 %v7809
    %8446 = vmatprep.subr.bf16.mxu0 %v7806
    %8447 = vmatpush1.bf16.msra.mxu0 %v7805
    %8448 = vmatprep.subr.bf16.mxu0 %v7802
    %8449 = vmatpush1.bf16.msra.mxu0 %v7801
    %8450 = vmatprep.subr.bf16.mxu0 %v7798
    %8451 = vmatpush1.bf16.msra.mxu0 %v7797
    %8452 = vmatprep.subr.bf16.mxu0 %v7794
    %8453 = vmatpush1.bf16.msra.mxu0 %v7793
    %8454 = vmatprep.subr.bf16.mxu0 %v7790
    %8455 = vmatpush1.bf16.msra.mxu0 %v7789
    %8456 = vmatprep.subr.bf16.mxu0 %v7786
    %8457 = vmatpush1.bf16.msra.mxu0 %v7785
    %8458 = vmatprep.subr.bf16.mxu0 %v7782
    %8459 = vmatpush1.bf16.msra.mxu0 %v7781
    %8460 = vmatprep.subr.bf16.mxu0 %v7842
    %8461 = vmatpush2.bf16.msra.mxu0 %v7841
    %8462 = vmatprep.subr.bf16.mxu0 %v7838
    %8463 = vmatpush2.bf16.msra.mxu0 %v7837
    %8464 = vmatprep.subr.bf16.mxu0 %v7834
    %8465 = vmatpush2.bf16.msra.mxu0 %v7833
    %8466 = vmatprep.subr.bf16.mxu0 %v7830
    %8467 = vmatpush2.bf16.msra.mxu0 %v7829
    %8468 = vmatprep.subr.bf16.mxu0 %v7826
    %8469 = vmatpush2.bf16.msra.mxu0 %v7825
    %8470 = vmatprep.subr.bf16.mxu0 %v7822
    %8471 = vmatpush2.bf16.msra.mxu0 %v7821
    %8472 = vmatprep.subr.bf16.mxu0 %v7818
    %8473 = vmatpush2.bf16.msra.mxu0 %v7817
    %8474 = vmatprep.subr.bf16.mxu0 %v7814
    %8475 = vmatpush2.bf16.msra.mxu0 %v7813
    %8476 = vmatprep.mubr.bf16.mxu0 %v545
    %8477 = vmatmul.mubr.bf16.gmra.mxu0 %v544
    %v8478 = vpop.f32.mrf.mxu0
    %v8479 = vadd.f32 %v8436, %v8478
    %v8480 = vpop.f32.mrf.mxu0
    %v8481 = vadd.f32 %v8438, %v8480
    %v8482 = vpop.f32.mrf.mxu0
    %v8483 = vadd.f32 %v8440, %v8482
    %v8484 = vpop.f32.mrf.mxu0
    %v8485 = vadd.f32 %v8442, %v8484
    %8486 = vdwg.mxu0
    %8487 = vmatprep.subr.bf16.mxu0 %v7492
    %8488 = vmatpush1.bf16.msra.mxu0 %v7491
    %8489 = vmatprep.subr.bf16.mxu0 %v7488
    %8490 = vmatpush1.bf16.msra.mxu0 %v7487
    %8491 = vmatprep.subr.bf16.mxu0 %v7484
    %8492 = vmatpush1.bf16.msra.mxu0 %v7483
    %8493 = vmatprep.subr.bf16.mxu0 %v7480
    %8494 = vmatpush1.bf16.msra.mxu0 %v7479
    %8495 = vmatprep.subr.bf16.mxu0 %v7476
    %8496 = vmatpush1.bf16.msra.mxu0 %v7475
    %8497 = vmatprep.subr.bf16.mxu0 %v7472
    %8498 = vmatpush1.bf16.msra.mxu0 %v7471
    %8499 = vmatprep.subr.bf16.mxu0 %v7468
    %8500 = vmatpush1.bf16.msra.mxu0 %v7467
    %8501 = vmatprep.subr.bf16.mxu0 %v7464
    %8502 = vmatpush1.bf16.msra.mxu0 %v7463
    %8503 = vmatprep.subr.bf16.mxu0 %v7524
    %8504 = vmatpush2.bf16.msra.mxu0 %v7523
    %8505 = vmatprep.subr.bf16.mxu0 %v7520
    %8506 = vmatpush2.bf16.msra.mxu0 %v7519
    %8507 = vmatprep.subr.bf16.mxu0 %v7516
    %8508 = vmatpush2.bf16.msra.mxu0 %v7515
    %8509 = vmatprep.subr.bf16.mxu0 %v7512
    %8510 = vmatpush2.bf16.msra.mxu0 %v7511
    %8511 = vmatprep.subr.bf16.mxu0 %v7508
    %8512 = vmatpush2.bf16.msra.mxu0 %v7507
    %8513 = vmatprep.subr.bf16.mxu0 %v7504
    %8514 = vmatpush2.bf16.msra.mxu0 %v7503
    %8515 = vmatprep.subr.bf16.mxu0 %v7500
    %8516 = vmatpush2.bf16.msra.mxu0 %v7499
    %8517 = vmatprep.subr.bf16.mxu0 %v7496
    %8518 = vmatpush2.bf16.msra.mxu0 %v7495
    %8519 = vmatprep.mubr.bf16.mxu0 %v535
    %8520 = vmatmul.mubr.bf16.gmra.mxu0 %v534
    %v8521 = vpop.f32.mrf.mxu0
    %v8522 = vadd.f32 0.0, %v8521
    %v8523 = vpop.f32.mrf.mxu0
    %v8524 = vadd.f32 0.0, %v8523
    %v8525 = vpop.f32.mrf.mxu0
    %v8526 = vadd.f32 0.0, %v8525
    %v8527 = vpop.f32.mrf.mxu0
    %v8528 = vadd.f32 0.0, %v8527
    %8529 = vdwg.mxu0
    %8530 = vmatprep.subr.bf16.mxu0 %v7556
    %8531 = vmatpush1.bf16.msra.mxu0 %v7555
    %8532 = vmatprep.subr.bf16.mxu0 %v7552
    %8533 = vmatpush1.bf16.msra.mxu0 %v7551
    %8534 = vmatprep.subr.bf16.mxu0 %v7548
    %8535 = vmatpush1.bf16.msra.mxu0 %v7547
    %8536 = vmatprep.subr.bf16.mxu0 %v7544
    %8537 = vmatpush1.bf16.msra.mxu0 %v7543
    %8538 = vmatprep.subr.bf16.mxu0 %v7540
    %8539 = vmatpush1.bf16.msra.mxu0 %v7539
    %8540 = vmatprep.subr.bf16.mxu0 %v7536
    %8541 = vmatpush1.bf16.msra.mxu0 %v7535
    %8542 = vmatprep.subr.bf16.mxu0 %v7532
    %8543 = vmatpush1.bf16.msra.mxu0 %v7531
    %8544 = vmatprep.subr.bf16.mxu0 %v7528
    %8545 = vmatpush1.bf16.msra.mxu0 %v7527
    %8546 = vmatprep.subr.bf16.mxu0 %v7588
    %8547 = vmatpush2.bf16.msra.mxu0 %v7587
    %8548 = vmatprep.subr.bf16.mxu0 %v7584
    %8549 = vmatpush2.bf16.msra.mxu0 %v7583
    %8550 = vmatprep.subr.bf16.mxu0 %v7580
    %8551 = vmatpush2.bf16.msra.mxu0 %v7579
    %8552 = vmatprep.subr.bf16.mxu0 %v7576
    %8553 = vmatpush2.bf16.msra.mxu0 %v7575
    %8554 = vmatprep.subr.bf16.mxu0 %v7572
    %8555 = vmatpush2.bf16.msra.mxu0 %v7571
    %8556 = vmatprep.subr.bf16.mxu0 %v7568
    %8557 = vmatpush2.bf16.msra.mxu0 %v7567
    %8558 = vmatprep.subr.bf16.mxu0 %v7564
    %8559 = vmatpush2.bf16.msra.mxu0 %v7563
    %8560 = vmatprep.subr.bf16.mxu0 %v7560
    %8561 = vmatpush2.bf16.msra.mxu0 %v7559
    %8562 = vmatprep.mubr.bf16.mxu0 %v537
    %8563 = vmatmul.mubr.bf16.gmra.mxu0 %v536
    %v8564 = vpop.f32.mrf.mxu0
    %v8565 = vadd.f32 %v8522, %v8564
    %v8566 = vpop.f32.mrf.mxu0
    %v8567 = vadd.f32 %v8524, %v8566
    %v8568 = vpop.f32.mrf.mxu0
    %v8569 = vadd.f32 %v8526, %v8568
    %v8570 = vpop.f32.mrf.mxu0
    %v8571 = vadd.f32 %v8528, %v8570
    %8572 = vdwg.mxu0
    %8573 = vmatprep.subr.bf16.mxu0 %v7620
    %8574 = vmatpush1.bf16.msra.mxu0 %v7619
    %8575 = vmatprep.subr.bf16.mxu0 %v7616
    %8576 = vmatpush1.bf16.msra.mxu0 %v7615
    %8577 = vmatprep.subr.bf16.mxu0 %v7612
    %8578 = vmatpush1.bf16.msra.mxu0 %v7611
    %8579 = vmatprep.subr.bf16.mxu0 %v7608
    %8580 = vmatpush1.bf16.msra.mxu0 %v7607
    %8581 = vmatprep.subr.bf16.mxu0 %v7604
    %8582 = vmatpush1.bf16.msra.mxu0 %v7603
    %8583 = vmatprep.subr.bf16.mxu0 %v7600
    %8584 = vmatpush1.bf16.msra.mxu0 %v7599
    %8585 = vmatprep.subr.bf16.mxu0 %v7596
    %8586 = vmatpush1.bf16.msra.mxu0 %v7595
    %8587 = vmatprep.subr.bf16.mxu0 %v7592
    %8588 = vmatpush1.bf16.msra.mxu0 %v7591
    %8589 = vmatprep.subr.bf16.mxu0 %v7652
    %8590 = vmatpush2.bf16.msra.mxu0 %v7651
    %8591 = vmatprep.subr.bf16.mxu0 %v7648
    %8592 = vmatpush2.bf16.msra.mxu0 %v7647
    %8593 = vmatprep.subr.bf16.mxu0 %v7644
    %8594 = vmatpush2.bf16.msra.mxu0 %v7643
    %8595 = vmatprep.subr.bf16.mxu0 %v7640
    %8596 = vmatpush2.bf16.msra.mxu0 %v7639
    %8597 = vmatprep.subr.bf16.mxu0 %v7636
    %8598 = vmatpush2.bf16.msra.mxu0 %v7635
    %8599 = vmatprep.subr.bf16.mxu0 %v7632
    %8600 = vmatpush2.bf16.msra.mxu0 %v7631
    %8601 = vmatprep.subr.bf16.mxu0 %v7628
    %8602 = vmatpush2.bf16.msra.mxu0 %v7627
    %8603 = vmatprep.subr.bf16.mxu0 %v7624
    %8604 = vmatpush2.bf16.msra.mxu0 %v7623
    %8605 = vmatprep.mubr.bf16.mxu0 %v539
    %8606 = vmatmul.mubr.bf16.gmra.mxu0 %v538
    %v8607 = vpop.f32.mrf.mxu0
    %v8608 = vadd.f32 %v8565, %v8607
    %v8609 = vpop.f32.mrf.mxu0
    %v8610 = vadd.f32 %v8567, %v8609
    %v8611 = vpop.f32.mrf.mxu0
    %v8612 = vadd.f32 %v8569, %v8611
    %v8613 = vpop.f32.mrf.mxu0
    %v8614 = vadd.f32 %v8571, %v8613
    %8615 = vdwg.mxu0
    %8616 = vmatprep.subr.bf16.mxu0 %v7684
    %8617 = vmatpush1.bf16.msra.mxu0 %v7683
    %8618 = vmatprep.subr.bf16.mxu0 %v7680
    %8619 = vmatpush1.bf16.msra.mxu0 %v7679
    %8620 = vmatprep.subr.bf16.mxu0 %v7676
    %8621 = vmatpush1.bf16.msra.mxu0 %v7675
    %8622 = vmatprep.subr.bf16.mxu0 %v7672
    %8623 = vmatpush1.bf16.msra.mxu0 %v7671
    %8624 = vmatprep.subr.bf16.mxu0 %v7668
    %8625 = vmatpush1.bf16.msra.mxu0 %v7667
    %8626 = vmatprep.subr.bf16.mxu0 %v7664
    %8627 = vmatpush1.bf16.msra.mxu0 %v7663
    %8628 = vmatprep.subr.bf16.mxu0 %v7660
    %8629 = vmatpush1.bf16.msra.mxu0 %v7659
    %8630 = vmatprep.subr.bf16.mxu0 %v7656
    %8631 = vmatpush1.bf16.msra.mxu0 %v7655
    %8632 = vmatprep.subr.bf16.mxu0 %v7716
    %8633 = vmatpush2.bf16.msra.mxu0 %v7715
    %8634 = vmatprep.subr.bf16.mxu0 %v7712
    %8635 = vmatpush2.bf16.msra.mxu0 %v7711
    %8636 = vmatprep.subr.bf16.mxu0 %v7708
    %8637 = vmatpush2.bf16.msra.mxu0 %v7707
    %8638 = vmatprep.subr.bf16.mxu0 %v7704
    %8639 = vmatpush2.bf16.msra.mxu0 %v7703
    %8640 = vmatprep.subr.bf16.mxu0 %v7700
    %8641 = vmatpush2.bf16.msra.mxu0 %v7699
    %8642 = vmatprep.subr.bf16.mxu0 %v7696
    %8643 = vmatpush2.bf16.msra.mxu0 %v7695
    %8644 = vmatprep.subr.bf16.mxu0 %v7692
    %8645 = vmatpush2.bf16.msra.mxu0 %v7691
    %8646 = vmatprep.subr.bf16.mxu0 %v7688
    %8647 = vmatpush2.bf16.msra.mxu0 %v7687
    %8648 = vmatprep.mubr.bf16.mxu0 %v541
    %8649 = vmatmul.mubr.bf16.gmra.mxu0 %v540
    %v8650 = vpop.f32.mrf.mxu0
    %v8651 = vadd.f32 %v8608, %v8650
    %v8652 = vpop.f32.mrf.mxu0
    %v8653 = vadd.f32 %v8610, %v8652
    %v8654 = vpop.f32.mrf.mxu0
    %v8655 = vadd.f32 %v8612, %v8654
    %v8656 = vpop.f32.mrf.mxu0
    %v8657 = vadd.f32 %v8614, %v8656
    %8658 = vdwg.mxu0
    %8659 = vmatprep.subr.bf16.mxu0 %v7748
    %8660 = vmatpush1.bf16.msra.mxu0 %v7747
    %8661 = vmatprep.subr.bf16.mxu0 %v7744
    %8662 = vmatpush1.bf16.msra.mxu0 %v7743
    %8663 = vmatprep.subr.bf16.mxu0 %v7740
    %8664 = vmatpush1.bf16.msra.mxu0 %v7739
    %8665 = vmatprep.subr.bf16.mxu0 %v7736
    %8666 = vmatpush1.bf16.msra.mxu0 %v7735
    %8667 = vmatprep.subr.bf16.mxu0 %v7732
    %8668 = vmatpush1.bf16.msra.mxu0 %v7731
    %8669 = vmatprep.subr.bf16.mxu0 %v7728
    %8670 = vmatpush1.bf16.msra.mxu0 %v7727
    %8671 = vmatprep.subr.bf16.mxu0 %v7724
    %8672 = vmatpush1.bf16.msra.mxu0 %v7723
    %8673 = vmatprep.subr.bf16.mxu0 %v7720
    %8674 = vmatpush1.bf16.msra.mxu0 %v7719
    %8675 = vmatprep.subr.bf16.mxu0 %v7780
    %8676 = vmatpush2.bf16.msra.mxu0 %v7779
    %8677 = vmatprep.subr.bf16.mxu0 %v7776
    %8678 = vmatpush2.bf16.msra.mxu0 %v7775
    %8679 = vmatprep.subr.bf16.mxu0 %v7772
    %8680 = vmatpush2.bf16.msra.mxu0 %v7771
    %8681 = vmatprep.subr.bf16.mxu0 %v7768
    %8682 = vmatpush2.bf16.msra.mxu0 %v7767
    %8683 = vmatprep.subr.bf16.mxu0 %v7764
    %8684 = vmatpush2.bf16.msra.mxu0 %v7763
    %8685 = vmatprep.subr.bf16.mxu0 %v7760
    %8686 = vmatpush2.bf16.msra.mxu0 %v7759
    %8687 = vmatprep.subr.bf16.mxu0 %v7756
    %8688 = vmatpush2.bf16.msra.mxu0 %v7755
    %8689 = vmatprep.subr.bf16.mxu0 %v7752
    %8690 = vmatpush2.bf16.msra.mxu0 %v7751
    %8691 = vmatprep.mubr.bf16.mxu0 %v543
    %8692 = vmatmul.mubr.bf16.gmra.mxu0 %v542
    %v8693 = vpop.f32.mrf.mxu0
    %v8694 = vadd.f32 %v8651, %v8693
    %v8695 = vpop.f32.mrf.mxu0
    %v8696 = vadd.f32 %v8653, %v8695
    %v8697 = vpop.f32.mrf.mxu0
    %v8698 = vadd.f32 %v8655, %v8697
    %v8699 = vpop.f32.mrf.mxu0
    %v8700 = vadd.f32 %v8657, %v8699
    %8701 = vdwg.mxu0
    %8702 = vmatprep.subr.bf16.mxu0 %v7812
    %8703 = vmatpush1.bf16.msra.mxu0 %v7811
    %8704 = vmatprep.subr.bf16.mxu0 %v7808
    %8705 = vmatpush1.bf16.msra.mxu0 %v7807
    %8706 = vmatprep.subr.bf16.mxu0 %v7804
    %8707 = vmatpush1.bf16.msra.mxu0 %v7803
    %8708 = vmatprep.subr.bf16.mxu0 %v7800
    %8709 = vmatpush1.bf16.msra.mxu0 %v7799
    %8710 = vmatprep.subr.bf16.mxu0 %v7796
    %8711 = vmatpush1.bf16.msra.mxu0 %v7795
    %8712 = vmatprep.subr.bf16.mxu0 %v7792
    %8713 = vmatpush1.bf16.msra.mxu0 %v7791
    %8714 = vmatprep.subr.bf16.mxu0 %v7788
    %8715 = vmatpush1.bf16.msra.mxu0 %v7787
    %8716 = vmatprep.subr.bf16.mxu0 %v7784
    %8717 = vmatpush1.bf16.msra.mxu0 %v7783
    %8718 = vmatprep.subr.bf16.mxu0 %v7844
    %8719 = vmatpush2.bf16.msra.mxu0 %v7843
    %8720 = vmatprep.subr.bf16.mxu0 %v7840
    %8721 = vmatpush2.bf16.msra.mxu0 %v7839
    %8722 = vmatprep.subr.bf16.mxu0 %v7836
    %8723 = vmatpush2.bf16.msra.mxu0 %v7835
    %8724 = vmatprep.subr.bf16.mxu0 %v7832
    %8725 = vmatpush2.bf16.msra.mxu0 %v7831
    %8726 = vmatprep.subr.bf16.mxu0 %v7828
    %8727 = vmatpush2.bf16.msra.mxu0 %v7827
    %8728 = vmatprep.subr.bf16.mxu0 %v7824
    %8729 = vmatpush2.bf16.msra.mxu0 %v7823
    %8730 = vmatprep.subr.bf16.mxu0 %v7820
    %8731 = vmatpush2.bf16.msra.mxu0 %v7819
    %8732 = vmatprep.subr.bf16.mxu0 %v7816
    %8733 = vmatpush2.bf16.msra.mxu0 %v7815
    %8734 = vmatprep.mubr.bf16.mxu0 %v545
    %8735 = vmatmul.mubr.bf16.gmra.mxu0 %v544
    %v8736 = vpop.f32.mrf.mxu0
    %v8737 = vadd.f32 %v8694, %v8736
    %v8738 = vpop.f32.mrf.mxu0
    %v8739 = vadd.f32 %v8696, %v8738
    %v8740 = vpop.f32.mrf.mxu0
    %v8741 = vadd.f32 %v8698, %v8740
    %v8742 = vpop.f32.mrf.mxu0
    %v8743 = vadd.f32 %v8700, %v8742
    %8744 = vdwg.mxu0
    %v8809 = vunpack.c.l.b16 %v5861
    %v8810 = vunpack.c.h.b16 %v5861
    %v8811 = vunpack.c.l.b16 %v5862
    %v8812 = vunpack.c.h.b16 %v5862
    %v8813 = vunpack.c.l.b16 %v5863
    %v8814 = vunpack.c.h.b16 %v5863
    %v8815 = vunpack.c.l.b16 %v5864
    %v8816 = vunpack.c.h.b16 %v5864
    %v8817 = vunpack.c.l.b16 %v5865
    %v8818 = vunpack.c.h.b16 %v5865
    %v8819 = vunpack.c.l.b16 %v5866
    %v8820 = vunpack.c.h.b16 %v5866
    %v8821 = vunpack.c.l.b16 %v5867
    %v8822 = vunpack.c.h.b16 %v5867
    %v8823 = vunpack.c.l.b16 %v5868
    %v8824 = vunpack.c.h.b16 %v5868
    %v8825 = vunpack.c.l.b16 %v5869
    %v8826 = vunpack.c.h.b16 %v5869
    %v8827 = vunpack.c.l.b16 %v5870
    %v8828 = vunpack.c.h.b16 %v5870
    %v8829 = vunpack.c.l.b16 %v5871
    %v8830 = vunpack.c.h.b16 %v5871
    %v8831 = vunpack.c.l.b16 %v5872
    %v8832 = vunpack.c.h.b16 %v5872
    %v8833 = vunpack.c.l.b16 %v5873
    %v8834 = vunpack.c.h.b16 %v5873
    %v8835 = vunpack.c.l.b16 %v5874
    %v8836 = vunpack.c.h.b16 %v5874
    %v8837 = vunpack.c.l.b16 %v5875
    %v8838 = vunpack.c.h.b16 %v5875
    %v8839 = vunpack.c.l.b16 %v5876
    %v8840 = vunpack.c.h.b16 %v5876
    %v8841 = vunpack.c.l.b16 %v5877
    %v8842 = vunpack.c.h.b16 %v5877
    %v8843 = vunpack.c.l.b16 %v5878
    %v8844 = vunpack.c.h.b16 %v5878
    %v8845 = vunpack.c.l.b16 %v5879
    %v8846 = vunpack.c.h.b16 %v5879
    %v8847 = vunpack.c.l.b16 %v5880
    %v8848 = vunpack.c.h.b16 %v5880
    %v8849 = vunpack.c.l.b16 %v5881
    %v8850 = vunpack.c.h.b16 %v5881
    %v8851 = vunpack.c.l.b16 %v5882
    %v8852 = vunpack.c.h.b16 %v5882
    %v8853 = vunpack.c.l.b16 %v5883
    %v8854 = vunpack.c.h.b16 %v5883
    %v8855 = vunpack.c.l.b16 %v5884
    %v8856 = vunpack.c.h.b16 %v5884
    %v8857 = vunpack.c.l.b16 %v5885
    %v8858 = vunpack.c.h.b16 %v5885
    %v8859 = vunpack.c.l.b16 %v5886
    %v8860 = vunpack.c.h.b16 %v5886
    %v8861 = vunpack.c.l.b16 %v5887
    %v8862 = vunpack.c.h.b16 %v5887
    %v8863 = vunpack.c.l.b16 %v5888
    %v8864 = vunpack.c.h.b16 %v5888
    %v8865 = vunpack.c.l.b16 %v5889
    %v8866 = vunpack.c.h.b16 %v5889
    %v8867 = vunpack.c.l.b16 %v5890
    %v8868 = vunpack.c.h.b16 %v5890
    %v8869 = vunpack.c.l.b16 %v5891
    %v8870 = vunpack.c.h.b16 %v5891
    %v8871 = vunpack.c.l.b16 %v5892
    %v8872 = vunpack.c.h.b16 %v5892
    %v8873 = vunpack.c.l.b16 %v5893
    %v8874 = vunpack.c.h.b16 %v5893
    %v8875 = vunpack.c.l.b16 %v5894
    %v8876 = vunpack.c.h.b16 %v5894
    %v8877 = vunpack.c.l.b16 %v5895
    %v8878 = vunpack.c.h.b16 %v5895
    %v8879 = vunpack.c.l.b16 %v5896
    %v8880 = vunpack.c.h.b16 %v5896
    %v8881 = vunpack.c.l.b16 %v5897
    %v8882 = vunpack.c.h.b16 %v5897
    %v8883 = vunpack.c.l.b16 %v5898
    %v8884 = vunpack.c.h.b16 %v5898
    %v8885 = vunpack.c.l.b16 %v5899
    %v8886 = vunpack.c.h.b16 %v5899
    %v8887 = vunpack.c.l.b16 %v5900
    %v8888 = vunpack.c.h.b16 %v5900
    %v8889 = vunpack.c.l.b16 %v5901
    %v8890 = vunpack.c.h.b16 %v5901
    %v8891 = vunpack.c.l.b16 %v5902
    %v8892 = vunpack.c.h.b16 %v5902
    %v8893 = vunpack.c.l.b16 %v5903
    %v8894 = vunpack.c.h.b16 %v5903
    %v8895 = vunpack.c.l.b16 %v5904
    %v8896 = vunpack.c.h.b16 %v5904
    %v8897 = vunpack.c.l.b16 %v5905
    %v8898 = vunpack.c.h.b16 %v5905
    %v8899 = vunpack.c.l.b16 %v5906
    %v8900 = vunpack.c.h.b16 %v5906
    %v8901 = vunpack.c.l.b16 %v5907
    %v8902 = vunpack.c.h.b16 %v5907
    %v8903 = vunpack.c.l.b16 %v5908
    %v8904 = vunpack.c.h.b16 %v5908
    %v8905 = vunpack.c.l.b16 %v5909
    %v8906 = vunpack.c.h.b16 %v5909
    %v8907 = vunpack.c.l.b16 %v5910
    %v8908 = vunpack.c.h.b16 %v5910
    %v8909 = vunpack.c.l.b16 %v5911
    %v8910 = vunpack.c.h.b16 %v5911
    %v8911 = vunpack.c.l.b16 %v5912
    %v8912 = vunpack.c.h.b16 %v5912
    %v8913 = vunpack.c.l.b16 %v5913
    %v8914 = vunpack.c.h.b16 %v5913
    %v8915 = vunpack.c.l.b16 %v5914
    %v8916 = vunpack.c.h.b16 %v5914
    %v8917 = vunpack.c.l.b16 %v5915
    %v8918 = vunpack.c.h.b16 %v5915
    %v8919 = vunpack.c.l.b16 %v5916
    %v8920 = vunpack.c.h.b16 %v5916
    %v8921 = vunpack.c.l.b16 %v5917
    %v8922 = vunpack.c.h.b16 %v5917
    %v8923 = vunpack.c.l.b16 %v5918
    %v8924 = vunpack.c.h.b16 %v5918
    %v8925 = vunpack.c.l.b16 %v5919
    %v8926 = vunpack.c.h.b16 %v5919
    %v8927 = vunpack.c.l.b16 %v5920
    %v8928 = vunpack.c.h.b16 %v5920
    %v8929 = vunpack.c.l.b16 %v5921
    %v8930 = vunpack.c.h.b16 %v5921
    %v8931 = vunpack.c.l.b16 %v5922
    %v8932 = vunpack.c.h.b16 %v5922
    %v8933 = vunpack.c.l.b16 %v5923
    %v8934 = vunpack.c.h.b16 %v5923
    %v8935 = vunpack.c.l.b16 %v5924
    %v8936 = vunpack.c.h.b16 %v5924
    %v8937 = vpack.c.b16 %v8813, %v8809
    %v8938 = vpack.c.b16 %v8814, %v8810
    %v8939 = vpack.c.b16 %v8815, %v8811
    %v8940 = vpack.c.b16 %v8816, %v8812
    %v8941 = vpack.c.b16 %v8821, %v8817
    %v8942 = vpack.c.b16 %v8822, %v8818
    %v8943 = vpack.c.b16 %v8823, %v8819
    %v8944 = vpack.c.b16 %v8824, %v8820
    %v8945 = vpack.c.b16 %v8829, %v8825
    %v8946 = vpack.c.b16 %v8830, %v8826
    %v8947 = vpack.c.b16 %v8831, %v8827
    %v8948 = vpack.c.b16 %v8832, %v8828
    %v8949 = vpack.c.b16 %v8837, %v8833
    %v8950 = vpack.c.b16 %v8838, %v8834
    %v8951 = vpack.c.b16 %v8839, %v8835
    %v8952 = vpack.c.b16 %v8840, %v8836
    %v8953 = vpack.c.b16 %v8845, %v8841
    %v8954 = vpack.c.b16 %v8846, %v8842
    %v8955 = vpack.c.b16 %v8847, %v8843
    %v8956 = vpack.c.b16 %v8848, %v8844
    %v8957 = vpack.c.b16 %v8853, %v8849
    %v8958 = vpack.c.b16 %v8854, %v8850
    %v8959 = vpack.c.b16 %v8855, %v8851
    %v8960 = vpack.c.b16 %v8856, %v8852
    %v8961 = vpack.c.b16 %v8861, %v8857
    %v8962 = vpack.c.b16 %v8862, %v8858
    %v8963 = vpack.c.b16 %v8863, %v8859
    %v8964 = vpack.c.b16 %v8864, %v8860
    %v8965 = vpack.c.b16 %v8869, %v8865
    %v8966 = vpack.c.b16 %v8870, %v8866
    %v8967 = vpack.c.b16 %v8871, %v8867
    %v8968 = vpack.c.b16 %v8872, %v8868
    %v8969 = vpack.c.b16 %v8877, %v8873
    %v8970 = vpack.c.b16 %v8878, %v8874
    %v8971 = vpack.c.b16 %v8879, %v8875
    %v8972 = vpack.c.b16 %v8880, %v8876
    %v8973 = vpack.c.b16 %v8885, %v8881
    %v8974 = vpack.c.b16 %v8886, %v8882
    %v8975 = vpack.c.b16 %v8887, %v8883
    %v8976 = vpack.c.b16 %v8888, %v8884
    %v8977 = vpack.c.b16 %v8893, %v8889
    %v8978 = vpack.c.b16 %v8894, %v8890
    %v8979 = vpack.c.b16 %v8895, %v8891
    %v8980 = vpack.c.b16 %v8896, %v8892
    %v8981 = vpack.c.b16 %v8901, %v8897
    %v8982 = vpack.c.b16 %v8902, %v8898
    %v8983 = vpack.c.b16 %v8903, %v8899
    %v8984 = vpack.c.b16 %v8904, %v8900
    %v8985 = vpack.c.b16 %v8909, %v8905
    %v8986 = vpack.c.b16 %v8910, %v8906
    %v8987 = vpack.c.b16 %v8911, %v8907
    %v8988 = vpack.c.b16 %v8912, %v8908
    %v8989 = vpack.c.b16 %v8917, %v8913
    %v8990 = vpack.c.b16 %v8918, %v8914
    %v8991 = vpack.c.b16 %v8919, %v8915
    %v8992 = vpack.c.b16 %v8920, %v8916
    %v8993 = vpack.c.b16 %v8925, %v8921
    %v8994 = vpack.c.b16 %v8926, %v8922
    %v8995 = vpack.c.b16 %v8927, %v8923
    %v8996 = vpack.c.b16 %v8928, %v8924
    %v8997 = vpack.c.b16 %v8933, %v8929
    %v8998 = vpack.c.b16 %v8934, %v8930
    %v8999 = vpack.c.b16 %v8935, %v8931
    %v9000 = vpack.c.b16 %v8936, %v8932
    %9065 = vmatprep.subr.bf16.mxu0 %v8966
    %9066 = vmatpush1.bf16.msra.mxu0 %v8965
    %9067 = vmatprep.subr.bf16.mxu0 %v8962
    %9068 = vmatpush1.bf16.msra.mxu0 %v8961
    %9069 = vmatprep.subr.bf16.mxu0 %v8958
    %9070 = vmatpush1.bf16.msra.mxu0 %v8957
    %9071 = vmatprep.subr.bf16.mxu0 %v8954
    %9072 = vmatpush1.bf16.msra.mxu0 %v8953
    %9073 = vmatprep.subr.bf16.mxu0 %v8950
    %9074 = vmatpush1.bf16.msra.mxu0 %v8949
    %9075 = vmatprep.subr.bf16.mxu0 %v8946
    %9076 = vmatpush1.bf16.msra.mxu0 %v8945
    %9077 = vmatprep.subr.bf16.mxu0 %v8942
    %9078 = vmatpush1.bf16.msra.mxu0 %v8941
    %9079 = vmatprep.subr.bf16.mxu0 %v8938
    %9080 = vmatpush1.bf16.msra.mxu0 %v8937
    %9081 = vmatprep.subr.bf16.mxu0 %v8998
    %9082 = vmatpush2.bf16.msra.mxu0 %v8997
    %9083 = vmatprep.subr.bf16.mxu0 %v8994
    %9084 = vmatpush2.bf16.msra.mxu0 %v8993
    %9085 = vmatprep.subr.bf16.mxu0 %v8990
    %9086 = vmatpush2.bf16.msra.mxu0 %v8989
    %9087 = vmatprep.subr.bf16.mxu0 %v8986
    %9088 = vmatpush2.bf16.msra.mxu0 %v8985
    %9089 = vmatprep.subr.bf16.mxu0 %v8982
    %9090 = vmatpush2.bf16.msra.mxu0 %v8981
    %9091 = vmatprep.subr.bf16.mxu0 %v8978
    %9092 = vmatpush2.bf16.msra.mxu0 %v8977
    %9093 = vmatprep.subr.bf16.mxu0 %v8974
    %9094 = vmatpush2.bf16.msra.mxu0 %v8973
    %9095 = vmatprep.subr.bf16.mxu0 %v8970
    %9096 = vmatpush2.bf16.msra.mxu0 %v8969
    %9097 = vmatprep.mubr.bf16.mxu0 %v5856
    %9098 = vmatmul.mubr.bf16.gmra.mxu0 %v5855
    %v9099 = vpop.f32.mrf.mxu0
    %v9100 = vadd.f32 %v8479, %v9099
    %v9101 = vpop.f32.mrf.mxu0
    %v9102 = vadd.f32 %v8481, %v9101
    %v9103 = vpop.f32.mrf.mxu0
    %v9104 = vadd.f32 %v8483, %v9103
    %v9105 = vpop.f32.mrf.mxu0
    %v9106 = vadd.f32 %v8485, %v9105
    %9107 = vdwg.mxu0
    %9108 = vmatprep.subr.bf16.mxu0 %v8968
    %9109 = vmatpush1.bf16.msra.mxu0 %v8967
    %9110 = vmatprep.subr.bf16.mxu0 %v8964
    %9111 = vmatpush1.bf16.msra.mxu0 %v8963
    %9112 = vmatprep.subr.bf16.mxu0 %v8960
    %9113 = vmatpush1.bf16.msra.mxu0 %v8959
    %9114 = vmatprep.subr.bf16.mxu0 %v8956
    %9115 = vmatpush1.bf16.msra.mxu0 %v8955
    %9116 = vmatprep.subr.bf16.mxu0 %v8952
    %9117 = vmatpush1.bf16.msra.mxu0 %v8951
    %9118 = vmatprep.subr.bf16.mxu0 %v8948
    %9119 = vmatpush1.bf16.msra.mxu0 %v8947
    %9120 = vmatprep.subr.bf16.mxu0 %v8944
    %9121 = vmatpush1.bf16.msra.mxu0 %v8943
    %9122 = vmatprep.subr.bf16.mxu0 %v8940
    %9123 = vmatpush1.bf16.msra.mxu0 %v8939
    %9124 = vmatprep.subr.bf16.mxu0 %v9000
    %9125 = vmatpush2.bf16.msra.mxu0 %v8999
    %9126 = vmatprep.subr.bf16.mxu0 %v8996
    %9127 = vmatpush2.bf16.msra.mxu0 %v8995
    %9128 = vmatprep.subr.bf16.mxu0 %v8992
    %9129 = vmatpush2.bf16.msra.mxu0 %v8991
    %9130 = vmatprep.subr.bf16.mxu0 %v8988
    %9131 = vmatpush2.bf16.msra.mxu0 %v8987
    %9132 = vmatprep.subr.bf16.mxu0 %v8984
    %9133 = vmatpush2.bf16.msra.mxu0 %v8983
    %9134 = vmatprep.subr.bf16.mxu0 %v8980
    %9135 = vmatpush2.bf16.msra.mxu0 %v8979
    %9136 = vmatprep.subr.bf16.mxu0 %v8976
    %9137 = vmatpush2.bf16.msra.mxu0 %v8975
    %9138 = vmatprep.subr.bf16.mxu0 %v8972
    %9139 = vmatpush2.bf16.msra.mxu0 %v8971
    %9140 = vmatprep.mubr.bf16.mxu0 %v5856
    %9141 = vmatmul.mubr.bf16.gmra.mxu0 %v5855
    %v9142 = vpop.f32.mrf.mxu0
    %v9143 = vadd.f32 %v8737, %v9142
    %v9144 = vpop.f32.mrf.mxu0
    %v9145 = vadd.f32 %v8739, %v9144
    %v9146 = vpop.f32.mrf.mxu0
    %v9147 = vadd.f32 %v8741, %v9146
    %v9148 = vpop.f32.mrf.mxu0
    %v9149 = vadd.f32 %v8743, %v9148
    %9150 = vdwg.mxu0
    %v9151 = vld [vmem:[#allocation34] sm:$0xf]
    %v9153 = vlaneseq
    %v9154 = vshrl.u32 %v9153, 7
    %v9155 = vsub.s32 0, %v9154
    %v9156 = vrot.slane %v9151, %v9155
    %v9157 = vlaneseq
    %v9158 = vshrl.u32 %v9157, 7
    %v9159 = vsub.s32 1, %v9158
    %v9160 = vrot.slane %v9151, %v9159
    %v9161 = vlaneseq
    %v9162 = vshrl.u32 %v9161, 7
    %v9163 = vsub.s32 2, %v9162
    %v9164 = vrot.slane %v9151, %v9163
    %v9165 = vlaneseq
    %v9166 = vshrl.u32 %v9165, 7
    %v9167 = vsub.s32 3, %v9166
    %v9168 = vrot.slane %v9151, %v9167
    %v9173 = vadd.f32 %v9100, %v9156
    %v9174 = vadd.f32 %v9102, %v9160
    %v9175 = vadd.f32 %v9143, %v9164
    %v9176 = vadd.f32 %v9145, %v9168
    %v9177 = vadd.f32 %v9104, %v9156
    %v9178 = vadd.f32 %v9106, %v9160
    %v9179 = vadd.f32 %v9147, %v9164
    %v9180 = vadd.f32 %v9149, %v9168
    %v9181 = vld [vmem:[#allocation36] sm:$0xf]
    %v9182 = vld [vmem:[#allocation37] sm:$0xf]
    %v9183 = vadd.f32 %v9173, %v9174
    %v9184 = vadd.f32 %v9183, %v9175
    %v9185 = vadd.f32 %v9184, %v9176
    %9186 = vadd.xlane.f32.xlu0 %v9185
    %v9187 = vpop.xlane.xlu0 %9186
    %v9188 = vadd.f32 %v9177, %v9178
    %v9189 = vadd.f32 %v9188, %v9179
    %v9190 = vadd.f32 %v9189, %v9180
    %9191 = vadd.xlane.f32.xlu0 %v9190
    %v9192 = vpop.xlane.xlu0 %9191
    %v9193 = vmul.f32 %v9187, %v4348
    %v9194 = vmul.f32 %v9192, %v4348
    %v9195 = vsub.f32 %v9173, %v9193
    %v9196 = vsub.f32 %v9174, %v9193
    %v9197 = vsub.f32 %v9175, %v9193
    %v9198 = vsub.f32 %v9176, %v9193
    %v9199 = vsub.f32 %v9177, %v9194
    %v9200 = vsub.f32 %v9178, %v9194
    %v9201 = vsub.f32 %v9179, %v9194
    %v9202 = vsub.f32 %v9180, %v9194
    %v9203 = vmul.f32 %v9195, %v9195
    %v9204 = vmul.f32 %v9196, %v9196
    %v9205 = vmul.f32 %v9197, %v9197
    %v9206 = vmul.f32 %v9198, %v9198
    %v9207 = vmul.f32 %v9199, %v9199
    %v9208 = vmul.f32 %v9200, %v9200
    %v9209 = vmul.f32 %v9201, %v9201
    %v9210 = vmul.f32 %v9202, %v9202
    %v9211 = vadd.f32 %v9203, %v9204
    %v9212 = vadd.f32 %v9211, %v9205
    %v9213 = vadd.f32 %v9212, %v9206
    %9214 = vadd.xlane.f32.xlu0 %v9213
    %v9215 = vpop.xlane.xlu0 %9214
    %v9216 = vadd.f32 %v9207, %v9208
    %v9217 = vadd.f32 %v9216, %v9209
    %v9218 = vadd.f32 %v9217, %v9210
    %9219 = vadd.xlane.f32.xlu0 %v9218
    %v9220 = vpop.xlane.xlu0 %9219
    %v9221 = vmul.f32 %v9215, %v4348
    %v9222 = vmul.f32 %v9220, %v4348
    %v9223 = vadd.f32 %v9221, 1e-05
    %v9224 = vadd.f32 %v9222, 1e-05
    %v9225 = vrsqrt.pop %v9223
    %v9226 = vrsqrt.pop %v9224
    %v9227 = vmul.f32 %v9195, %v9225
    %v9228 = vmul.f32 %v9196, %v9225
    %v9229 = vmul.f32 %v9197, %v9225
    %v9230 = vmul.f32 %v9198, %v9225
    %v9231 = vmul.f32 %v9199, %v9226
    %v9232 = vmul.f32 %v9200, %v9226
    %v9233 = vmul.f32 %v9201, %v9226
    %v9234 = vmul.f32 %v9202, %v9226
    %v9236 = vlaneseq
    %v9237 = vshrl.u32 %v9236, 7
    %v9238 = vsub.s32 0, %v9237
    %v9239 = vrot.slane %v9181, %v9238
    %v9240 = vlaneseq
    %v9241 = vshrl.u32 %v9240, 7
    %v9242 = vsub.s32 1, %v9241
    %v9243 = vrot.slane %v9181, %v9242
    %v9244 = vlaneseq
    %v9245 = vshrl.u32 %v9244, 7
    %v9246 = vsub.s32 2, %v9245
    %v9247 = vrot.slane %v9181, %v9246
    %v9248 = vlaneseq
    %v9249 = vshrl.u32 %v9248, 7
    %v9250 = vsub.s32 3, %v9249
    %v9251 = vrot.slane %v9181, %v9250
    %v9256 = vmul.f32 %v9227, %v9239
    %v9257 = vmul.f32 %v9228, %v9243
    %v9258 = vmul.f32 %v9229, %v9247
    %v9259 = vmul.f32 %v9230, %v9251
    %v9260 = vmul.f32 %v9231, %v9239
    %v9261 = vmul.f32 %v9232, %v9243
    %v9262 = vmul.f32 %v9233, %v9247
    %v9263 = vmul.f32 %v9234, %v9251
    %v9265 = vlaneseq
    %v9266 = vshrl.u32 %v9265, 7
    %v9267 = vsub.s32 0, %v9266
    %v9268 = vrot.slane %v9182, %v9267
    %v9269 = vlaneseq
    %v9270 = vshrl.u32 %v9269, 7
    %v9271 = vsub.s32 1, %v9270
    %v9272 = vrot.slane %v9182, %v9271
    %v9273 = vlaneseq
    %v9274 = vshrl.u32 %v9273, 7
    %v9275 = vsub.s32 2, %v9274
    %v9276 = vrot.slane %v9182, %v9275
    %v9277 = vlaneseq
    %v9278 = vshrl.u32 %v9277, 7
    %v9279 = vsub.s32 3, %v9278
    %v9280 = vrot.slane %v9182, %v9279
    %v9285 = vadd.f32 %v9256, %v9268
    %v9286 = vadd.f32 %v9257, %v9272
    %v9287 = vadd.f32 %v9258, %v9276
    %v9288 = vadd.f32 %v9259, %v9280
    %v9289 = vadd.f32 %v9260, %v9268
    %v9290 = vadd.f32 %v9261, %v9272
    %v9291 = vadd.f32 %v9262, %v9276
    %v9292 = vadd.f32 %v9263, %v9280
    %v9293 = vmax.f32 %v9285, 0.0
    %v9294 = vmax.f32 %v9286, 0.0
    %v9295 = vmax.f32 %v9287, 0.0
    %v9296 = vmax.f32 %v9288, 0.0
    %v9297 = vmax.f32 %v9289, 0.0
    %v9298 = vmax.f32 %v9290, 0.0
    %v9299 = vmax.f32 %v9291, 0.0
    %v9300 = vmax.f32 %v9292, 0.0
    %s9301 = smul.u32 4, 64
    %s9302 = smul.u32 %s9301, 2
    %s9303 = sshll.u32 %s9302, 4
    %9304 = dma.done %s462, %s9303
    %v9305 = vpack.c.bf16 %v9297, %v9293
    %v9306 = vpack.c.bf16 %v9298, %v9294
    %v9307 = vpack.c.bf16 %v9299, %v9295
    %v9308 = vpack.c.bf16 %v9300, %v9296
    %v9309 = vld [vmem:[#allocation3] sm:$0xff]
    %v9310 = vld [vmem:[#allocation3 + $0x8] sm:$0xff]
    %v9311 = vld [vmem:[#allocation3 + $0x10] sm:$0xff]
    %v9312 = vld [vmem:[#allocation3 + $0x18] sm:$0xff]
    %v9313 = vld [vmem:[#allocation3 + $0x20] sm:$0xff]
    %v9314 = vld [vmem:[#allocation3 + $0x28] sm:$0xff]
    %v9315 = vld [vmem:[#allocation3 + $0x30] sm:$0xff]
    %v9316 = vld [vmem:[#allocation3 + $0x38] sm:$0xff]
    %v9317 = vld [vmem:[#allocation3 + $0x40] sm:$0xff]
    %v9318 = vld [vmem:[#allocation3 + $0x48] sm:$0xff]
    %v9319 = vld [vmem:[#allocation3 + $0x50] sm:$0xff]
    %v9320 = vld [vmem:[#allocation3 + $0x58] sm:$0xff]
    %v9321 = vld [vmem:[#allocation3 + $0x60] sm:$0xff]
    %v9322 = vld [vmem:[#allocation3 + $0x68] sm:$0xff]
    %v9323 = vld [vmem:[#allocation3 + $0x70] sm:$0xff]
    %v9324 = vld [vmem:[#allocation3 + $0x78] sm:$0xff]
    %v9325 = vld [vmem:[#allocation3 + $0x80] sm:$0xff]
    %v9326 = vld [vmem:[#allocation3 + $0x88] sm:$0xff]
    %v9327 = vld [vmem:[#allocation3 + $0x90] sm:$0xff]
    %v9328 = vld [vmem:[#allocation3 + $0x98] sm:$0xff]
    %v9329 = vld [vmem:[#allocation3 + $0xa0] sm:$0xff]
    %v9330 = vld [vmem:[#allocation3 + $0xa8] sm:$0xff]
    %v9331 = vld [vmem:[#allocation3 + $0xb0] sm:$0xff]
    %v9332 = vld [vmem:[#allocation3 + $0xb8] sm:$0xff]
    %v9333 = vld [vmem:[#allocation3 + $0xc0] sm:$0xff]
    %v9334 = vld [vmem:[#allocation3 + $0xc8] sm:$0xff]
    %v9335 = vld [vmem:[#allocation3 + $0xd0] sm:$0xff]
    %v9336 = vld [vmem:[#allocation3 + $0xd8] sm:$0xff]
    %v9337 = vld [vmem:[#allocation3 + $0xe0] sm:$0xff]
    %v9338 = vld [vmem:[#allocation3 + $0xe8] sm:$0xff]
    %v9339 = vld [vmem:[#allocation3 + $0xf0] sm:$0xff]
    %v9340 = vld [vmem:[#allocation3 + $0xf8] sm:$0xff]
    %v9341 = vld [vmem:[#allocation3 + $0x100] sm:$0xff]
    %v9342 = vld [vmem:[#allocation3 + $0x108] sm:$0xff]
    %v9343 = vld [vmem:[#allocation3 + $0x110] sm:$0xff]
    %v9344 = vld [vmem:[#allocation3 + $0x118] sm:$0xff]
    %v9345 = vld [vmem:[#allocation3 + $0x120] sm:$0xff]
    %v9346 = vld [vmem:[#allocation3 + $0x128] sm:$0xff]
    %v9347 = vld [vmem:[#allocation3 + $0x130] sm:$0xff]
    %v9348 = vld [vmem:[#allocation3 + $0x138] sm:$0xff]
    %v9349 = vld [vmem:[#allocation3 + $0x140] sm:$0xff]
    %v9350 = vld [vmem:[#allocation3 + $0x148] sm:$0xff]
    %v9351 = vld [vmem:[#allocation3 + $0x150] sm:$0xff]
    %v9352 = vld [vmem:[#allocation3 + $0x158] sm:$0xff]
    %v9353 = vld [vmem:[#allocation3 + $0x160] sm:$0xff]
    %v9354 = vld [vmem:[#allocation3 + $0x168] sm:$0xff]
    %v9355 = vld [vmem:[#allocation3 + $0x170] sm:$0xff]
    %v9356 = vld [vmem:[#allocation3 + $0x178] sm:$0xff]
    %v9357 = vld [vmem:[#allocation3 + $0x180] sm:$0xff]
    %v9358 = vld [vmem:[#allocation3 + $0x188] sm:$0xff]
    %v9359 = vld [vmem:[#allocation3 + $0x190] sm:$0xff]
    %v9360 = vld [vmem:[#allocation3 + $0x198] sm:$0xff]
    %v9361 = vld [vmem:[#allocation3 + $0x1a0] sm:$0xff]
    %v9362 = vld [vmem:[#allocation3 + $0x1a8] sm:$0xff]
    %v9363 = vld [vmem:[#allocation3 + $0x1b0] sm:$0xff]
    %v9364 = vld [vmem:[#allocation3 + $0x1b8] sm:$0xff]
    %v9365 = vld [vmem:[#allocation3 + $0x1c0] sm:$0xff]
    %v9366 = vld [vmem:[#allocation3 + $0x1c8] sm:$0xff]
    %v9367 = vld [vmem:[#allocation3 + $0x1d0] sm:$0xff]
    %v9368 = vld [vmem:[#allocation3 + $0x1d8] sm:$0xff]
    %v9369 = vld [vmem:[#allocation3 + $0x1e0] sm:$0xff]
    %v9370 = vld [vmem:[#allocation3 + $0x1e8] sm:$0xff]
    %v9371 = vld [vmem:[#allocation3 + $0x1f0] sm:$0xff]
    %v9372 = vld [vmem:[#allocation3 + $0x1f8] sm:$0xff]
    %v9373 = vld [vmem:[#allocation39] sm:$0x3]
    %v9375 = vlaneseq
    %v9376 = vshrl.u32 %v9375, 7
    %v9377 = vsub.s32 0, %v9376
    %v9378 = vrot.slane %v9373, %v9377
    %v9379 = vlaneseq
    %v9380 = vshrl.u32 %v9379, 7
    %v9381 = vsub.s32 1, %v9380
    %v9382 = vrot.slane %v9373, %v9381
    %v9449 = vunpack.c.l.b16 %v9309
    %v9450 = vunpack.c.h.b16 %v9309
    %v9451 = vunpack.c.l.b16 %v9310
    %v9452 = vunpack.c.h.b16 %v9310
    %v9453 = vunpack.c.l.b16 %v9311
    %v9454 = vunpack.c.h.b16 %v9311
    %v9455 = vunpack.c.l.b16 %v9312
    %v9456 = vunpack.c.h.b16 %v9312
    %v9457 = vunpack.c.l.b16 %v9313
    %v9458 = vunpack.c.h.b16 %v9313
    %v9459 = vunpack.c.l.b16 %v9314
    %v9460 = vunpack.c.h.b16 %v9314
    %v9461 = vunpack.c.l.b16 %v9315
    %v9462 = vunpack.c.h.b16 %v9315
    %v9463 = vunpack.c.l.b16 %v9316
    %v9464 = vunpack.c.h.b16 %v9316
    %v9465 = vunpack.c.l.b16 %v9317
    %v9466 = vunpack.c.h.b16 %v9317
    %v9467 = vunpack.c.l.b16 %v9318
    %v9468 = vunpack.c.h.b16 %v9318
    %v9469 = vunpack.c.l.b16 %v9319
    %v9470 = vunpack.c.h.b16 %v9319
    %v9471 = vunpack.c.l.b16 %v9320
    %v9472 = vunpack.c.h.b16 %v9320
    %v9473 = vunpack.c.l.b16 %v9321
    %v9474 = vunpack.c.h.b16 %v9321
    %v9475 = vunpack.c.l.b16 %v9322
    %v9476 = vunpack.c.h.b16 %v9322
    %v9477 = vunpack.c.l.b16 %v9323
    %v9478 = vunpack.c.h.b16 %v9323
    %v9479 = vunpack.c.l.b16 %v9324
    %v9480 = vunpack.c.h.b16 %v9324
    %v9481 = vunpack.c.l.b16 %v9325
    %v9482 = vunpack.c.h.b16 %v9325
    %v9483 = vunpack.c.l.b16 %v9326
    %v9484 = vunpack.c.h.b16 %v9326
    %v9485 = vunpack.c.l.b16 %v9327
    %v9486 = vunpack.c.h.b16 %v9327
    %v9487 = vunpack.c.l.b16 %v9328
    %v9488 = vunpack.c.h.b16 %v9328
    %v9489 = vunpack.c.l.b16 %v9329
    %v9490 = vunpack.c.h.b16 %v9329
    %v9491 = vunpack.c.l.b16 %v9330
    %v9492 = vunpack.c.h.b16 %v9330
    %v9493 = vunpack.c.l.b16 %v9331
    %v9494 = vunpack.c.h.b16 %v9331
    %v9495 = vunpack.c.l.b16 %v9332
    %v9496 = vunpack.c.h.b16 %v9332
    %v9497 = vunpack.c.l.b16 %v9333
    %v9498 = vunpack.c.h.b16 %v9333
    %v9499 = vunpack.c.l.b16 %v9334
    %v9500 = vunpack.c.h.b16 %v9334
    %v9501 = vunpack.c.l.b16 %v9335
    %v9502 = vunpack.c.h.b16 %v9335
    %v9503 = vunpack.c.l.b16 %v9336
    %v9504 = vunpack.c.h.b16 %v9336
    %v9505 = vunpack.c.l.b16 %v9337
    %v9506 = vunpack.c.h.b16 %v9337
    %v9507 = vunpack.c.l.b16 %v9338
    %v9508 = vunpack.c.h.b16 %v9338
    %v9509 = vunpack.c.l.b16 %v9339
    %v9510 = vunpack.c.h.b16 %v9339
    %v9511 = vunpack.c.l.b16 %v9340
    %v9512 = vunpack.c.h.b16 %v9340
    %v9513 = vunpack.c.l.b16 %v9341
    %v9514 = vunpack.c.h.b16 %v9341
    %v9515 = vunpack.c.l.b16 %v9342
    %v9516 = vunpack.c.h.b16 %v9342
    %v9517 = vunpack.c.l.b16 %v9343
    %v9518 = vunpack.c.h.b16 %v9343
    %v9519 = vunpack.c.l.b16 %v9344
    %v9520 = vunpack.c.h.b16 %v9344
    %v9521 = vunpack.c.l.b16 %v9345
    %v9522 = vunpack.c.h.b16 %v9345
    %v9523 = vunpack.c.l.b16 %v9346
    %v9524 = vunpack.c.h.b16 %v9346
    %v9525 = vunpack.c.l.b16 %v9347
    %v9526 = vunpack.c.h.b16 %v9347
    %v9527 = vunpack.c.l.b16 %v9348
    %v9528 = vunpack.c.h.b16 %v9348
    %v9529 = vunpack.c.l.b16 %v9349
    %v9530 = vunpack.c.h.b16 %v9349
    %v9531 = vunpack.c.l.b16 %v9350
    %v9532 = vunpack.c.h.b16 %v9350
    %v9533 = vunpack.c.l.b16 %v9351
    %v9534 = vunpack.c.h.b16 %v9351
    %v9535 = vunpack.c.l.b16 %v9352
    %v9536 = vunpack.c.h.b16 %v9352
    %v9537 = vunpack.c.l.b16 %v9353
    %v9538 = vunpack.c.h.b16 %v9353
    %v9539 = vunpack.c.l.b16 %v9354
    %v9540 = vunpack.c.h.b16 %v9354
    %v9541 = vunpack.c.l.b16 %v9355
    %v9542 = vunpack.c.h.b16 %v9355
    %v9543 = vunpack.c.l.b16 %v9356
    %v9544 = vunpack.c.h.b16 %v9356
    %v9545 = vunpack.c.l.b16 %v9357
    %v9546 = vunpack.c.h.b16 %v9357
    %v9547 = vunpack.c.l.b16 %v9358
    %v9548 = vunpack.c.h.b16 %v9358
    %v9549 = vunpack.c.l.b16 %v9359
    %v9550 = vunpack.c.h.b16 %v9359
    %v9551 = vunpack.c.l.b16 %v9360
    %v9552 = vunpack.c.h.b16 %v9360
    %v9553 = vunpack.c.l.b16 %v9361
    %v9554 = vunpack.c.h.b16 %v9361
    %v9555 = vunpack.c.l.b16 %v9362
    %v9556 = vunpack.c.h.b16 %v9362
    %v9557 = vunpack.c.l.b16 %v9363
    %v9558 = vunpack.c.h.b16 %v9363
    %v9559 = vunpack.c.l.b16 %v9364
    %v9560 = vunpack.c.h.b16 %v9364
    %v9561 = vunpack.c.l.b16 %v9365
    %v9562 = vunpack.c.h.b16 %v9365
    %v9563 = vunpack.c.l.b16 %v9366
    %v9564 = vunpack.c.h.b16 %v9366
    %v9565 = vunpack.c.l.b16 %v9367
    %v9566 = vunpack.c.h.b16 %v9367
    %v9567 = vunpack.c.l.b16 %v9368
    %v9568 = vunpack.c.h.b16 %v9368
    %v9569 = vunpack.c.l.b16 %v9369
    %v9570 = vunpack.c.h.b16 %v9369
    %v9571 = vunpack.c.l.b16 %v9370
    %v9572 = vunpack.c.h.b16 %v9370
    %v9573 = vunpack.c.l.b16 %v9371
    %v9574 = vunpack.c.h.b16 %v9371
    %v9575 = vunpack.c.l.b16 %v9372
    %v9576 = vunpack.c.h.b16 %v9372
    %v9577 = vpack.c.b16 %v9451, %v9449
    %v9578 = vpack.c.b16 %v9452, %v9450
    %v9579 = vpack.c.b16 %v9455, %v9453
    %v9580 = vpack.c.b16 %v9456, %v9454
    %v9581 = vpack.c.b16 %v9459, %v9457
    %v9582 = vpack.c.b16 %v9460, %v9458
    %v9583 = vpack.c.b16 %v9463, %v9461
    %v9584 = vpack.c.b16 %v9464, %v9462
    %v9585 = vpack.c.b16 %v9467, %v9465
    %v9586 = vpack.c.b16 %v9468, %v9466
    %v9587 = vpack.c.b16 %v9471, %v9469
    %v9588 = vpack.c.b16 %v9472, %v9470
    %v9589 = vpack.c.b16 %v9475, %v9473
    %v9590 = vpack.c.b16 %v9476, %v9474
    %v9591 = vpack.c.b16 %v9479, %v9477
    %v9592 = vpack.c.b16 %v9480, %v9478
    %v9593 = vpack.c.b16 %v9483, %v9481
    %v9594 = vpack.c.b16 %v9484, %v9482
    %v9595 = vpack.c.b16 %v9487, %v9485
    %v9596 = vpack.c.b16 %v9488, %v9486
    %v9597 = vpack.c.b16 %v9491, %v9489
    %v9598 = vpack.c.b16 %v9492, %v9490
    %v9599 = vpack.c.b16 %v9495, %v9493
    %v9600 = vpack.c.b16 %v9496, %v9494
    %v9601 = vpack.c.b16 %v9499, %v9497
    %v9602 = vpack.c.b16 %v9500, %v9498
    %v9603 = vpack.c.b16 %v9503, %v9501
    %v9604 = vpack.c.b16 %v9504, %v9502
    %v9605 = vpack.c.b16 %v9507, %v9505
    %v9606 = vpack.c.b16 %v9508, %v9506
    %v9607 = vpack.c.b16 %v9511, %v9509
    %v9608 = vpack.c.b16 %v9512, %v9510
    %v9609 = vpack.c.b16 %v9515, %v9513
    %v9610 = vpack.c.b16 %v9516, %v9514
    %v9611 = vpack.c.b16 %v9519, %v9517
    %v9612 = vpack.c.b16 %v9520, %v9518
    %v9613 = vpack.c.b16 %v9523, %v9521
    %v9614 = vpack.c.b16 %v9524, %v9522
    %v9615 = vpack.c.b16 %v9527, %v9525
    %v9616 = vpack.c.b16 %v9528, %v9526
    %v9617 = vpack.c.b16 %v9531, %v9529
    %v9618 = vpack.c.b16 %v9532, %v9530
    %v9619 = vpack.c.b16 %v9535, %v9533
    %v9620 = vpack.c.b16 %v9536, %v9534
    %v9621 = vpack.c.b16 %v9539, %v9537
    %v9622 = vpack.c.b16 %v9540, %v9538
    %v9623 = vpack.c.b16 %v9543, %v9541
    %v9624 = vpack.c.b16 %v9544, %v9542
    %v9625 = vpack.c.b16 %v9547, %v9545
    %v9626 = vpack.c.b16 %v9548, %v9546
    %v9627 = vpack.c.b16 %v9551, %v9549
    %v9628 = vpack.c.b16 %v9552, %v9550
    %v9629 = vpack.c.b16 %v9555, %v9553
    %v9630 = vpack.c.b16 %v9556, %v9554
    %v9631 = vpack.c.b16 %v9559, %v9557
    %v9632 = vpack.c.b16 %v9560, %v9558
    %v9633 = vpack.c.b16 %v9563, %v9561
    %v9634 = vpack.c.b16 %v9564, %v9562
    %v9635 = vpack.c.b16 %v9567, %v9565
    %v9636 = vpack.c.b16 %v9568, %v9566
    %v9637 = vpack.c.b16 %v9571, %v9569
    %v9638 = vpack.c.b16 %v9572, %v9570
    %v9639 = vpack.c.b16 %v9575, %v9573
    %v9640 = vpack.c.b16 %v9576, %v9574
    %9705 = vmatprep.subr.bf16.mxu0 %v9592
    %9706 = vmatpush1.bf16.msra.mxu0 %v9591
    %9707 = vmatprep.subr.bf16.mxu0 %v9590
    %9708 = vmatpush1.bf16.msra.mxu0 %v9589
    %9709 = vmatprep.subr.bf16.mxu0 %v9588
    %9710 = vmatpush1.bf16.msra.mxu0 %v9587
    %9711 = vmatprep.subr.bf16.mxu0 %v9586
    %9712 = vmatpush1.bf16.msra.mxu0 %v9585
    %9713 = vmatprep.subr.bf16.mxu0 %v9584
    %9714 = vmatpush1.bf16.msra.mxu0 %v9583
    %9715 = vmatprep.subr.bf16.mxu0 %v9582
    %9716 = vmatpush1.bf16.msra.mxu0 %v9581
    %9717 = vmatprep.subr.bf16.mxu0 %v9580
    %9718 = vmatpush1.bf16.msra.mxu0 %v9579
    %9719 = vmatprep.subr.bf16.mxu0 %v9578
    %9720 = vmatpush1.bf16.msra.mxu0 %v9577
    %9721 = vmatprep.subr.bf16.mxu0 %v9608
    %9722 = vmatpush2.bf16.msra.mxu0 %v9607
    %9723 = vmatprep.subr.bf16.mxu0 %v9606
    %9724 = vmatpush2.bf16.msra.mxu0 %v9605
    %9725 = vmatprep.subr.bf16.mxu0 %v9604
    %9726 = vmatpush2.bf16.msra.mxu0 %v9603
    %9727 = vmatprep.subr.bf16.mxu0 %v9602
    %9728 = vmatpush2.bf16.msra.mxu0 %v9601
    %9729 = vmatprep.subr.bf16.mxu0 %v9600
    %9730 = vmatpush2.bf16.msra.mxu0 %v9599
    %9731 = vmatprep.subr.bf16.mxu0 %v9598
    %9732 = vmatpush2.bf16.msra.mxu0 %v9597
    %9733 = vmatprep.subr.bf16.mxu0 %v9596
    %9734 = vmatpush2.bf16.msra.mxu0 %v9595
    %9735 = vmatprep.subr.bf16.mxu0 %v9594
    %9736 = vmatpush2.bf16.msra.mxu0 %v9593
    %9737 = vmatprep.mubr.bf16.mxu0 %v9306
    %9738 = vmatmul.mubr.bf16.gmra.mxu0 %v9305
    %v9739 = vpop.f32.mrf.mxu0
    %v9740 = vadd.f32 %v9378, %v9739
    %v9741 = vpop.f32.mrf.mxu0
    %v9742 = vadd.f32 %v9382, %v9741
    %v9743 = vpop.f32.mrf.mxu0
    %v9744 = vadd.f32 %v9378, %v9743
    %v9745 = vpop.f32.mrf.mxu0
    %v9746 = vadd.f32 %v9382, %v9745
    %9747 = vdwg.mxu0
    %9748 = vmatprep.subr.bf16.mxu0 %v9624
    %9749 = vmatpush1.bf16.msra.mxu0 %v9623
    %9750 = vmatprep.subr.bf16.mxu0 %v9622
    %9751 = vmatpush1.bf16.msra.mxu0 %v9621
    %9752 = vmatprep.subr.bf16.mxu0 %v9620
    %9753 = vmatpush1.bf16.msra.mxu0 %v9619
    %9754 = vmatprep.subr.bf16.mxu0 %v9618
    %9755 = vmatpush1.bf16.msra.mxu0 %v9617
    %9756 = vmatprep.subr.bf16.mxu0 %v9616
    %9757 = vmatpush1.bf16.msra.mxu0 %v9615
    %9758 = vmatprep.subr.bf16.mxu0 %v9614
    %9759 = vmatpush1.bf16.msra.mxu0 %v9613
    %9760 = vmatprep.subr.bf16.mxu0 %v9612
    %9761 = vmatpush1.bf16.msra.mxu0 %v9611
    %9762 = vmatprep.subr.bf16.mxu0 %v9610
    %9763 = vmatpush1.bf16.msra.mxu0 %v9609
    %9764 = vmatprep.subr.bf16.mxu0 %v9640
    %9765 = vmatpush2.bf16.msra.mxu0 %v9639
    %9766 = vmatprep.subr.bf16.mxu0 %v9638
    %9767 = vmatpush2.bf16.msra.mxu0 %v9637
    %9768 = vmatprep.subr.bf16.mxu0 %v9636
    %9769 = vmatpush2.bf16.msra.mxu0 %v9635
    %9770 = vmatprep.subr.bf16.mxu0 %v9634
    %9771 = vmatpush2.bf16.msra.mxu0 %v9633
    %9772 = vmatprep.subr.bf16.mxu0 %v9632
    %9773 = vmatpush2.bf16.msra.mxu0 %v9631
    %9774 = vmatprep.subr.bf16.mxu0 %v9630
    %9775 = vmatpush2.bf16.msra.mxu0 %v9629
    %9776 = vmatprep.subr.bf16.mxu0 %v9628
    %9777 = vmatpush2.bf16.msra.mxu0 %v9627
    %9778 = vmatprep.subr.bf16.mxu0 %v9626
    %9779 = vmatpush2.bf16.msra.mxu0 %v9625
    %9780 = vmatprep.mubr.bf16.mxu0 %v9308
    %9781 = vmatmul.mubr.bf16.gmra.mxu0 %v9307
    %v9782 = vpop.f32.mrf.mxu0
    %v9783 = vadd.f32 %v9740, %v9782
    %v9784 = vpop.f32.mrf.mxu0
    %v9785 = vadd.f32 %v9742, %v9784
    %v9786 = vpop.f32.mrf.mxu0
    %v9787 = vadd.f32 %v9744, %v9786
    %v9788 = vpop.f32.mrf.mxu0
    %v9789 = vadd.f32 %v9746, %v9788
    %9790 = vdwg.mxu0
    %v9791 = vld [vmem:[#allocation40] sm:$0x3]
    %v9792 = vld [vmem:[#allocation42] sm:$0x3]
    %v9793 = vadd.f32 %v9783, %v9785
    %9794 = vadd.xlane.f32.xlu0 %v9793
    %v9795 = vpop.xlane.xlu0 %9794
    %v9796 = vadd.f32 %v9787, %v9789
    %9797 = vadd.xlane.f32.xlu0 %v9796
    %v9798 = vpop.xlane.xlu0 %9797
    %v9799 = vmul.f32 %v9795, %v4951
    %v9800 = vmul.f32 %v9798, %v4951
    %v9801 = vsub.f32 %v9783, %v9799
    %v9802 = vsub.f32 %v9785, %v9799
    %v9803 = vsub.f32 %v9787, %v9800
    %v9804 = vsub.f32 %v9789, %v9800
    %v9805 = vmul.f32 %v9801, %v9801
    %v9806 = vmul.f32 %v9802, %v9802
    %v9807 = vmul.f32 %v9803, %v9803
    %v9808 = vmul.f32 %v9804, %v9804
    %v9809 = vadd.f32 %v9805, %v9806
    %9810 = vadd.xlane.f32.xlu0 %v9809
    %v9811 = vpop.xlane.xlu0 %9810
    %v9812 = vadd.f32 %v9807, %v9808
    %9813 = vadd.xlane.f32.xlu0 %v9812
    %v9814 = vpop.xlane.xlu0 %9813
    %v9815 = vmul.f32 %v9811, %v4951
    %v9816 = vmul.f32 %v9814, %v4951
    %v9817 = vadd.f32 %v9815, 1e-05
    %v9818 = vadd.f32 %v9816, 1e-05
    %v9819 = vrsqrt.pop %v9817
    %v9820 = vrsqrt.pop %v9818
    %v9821 = vmul.f32 %v9801, %v9819
    %v9822 = vmul.f32 %v9802, %v9819
    %v9823 = vmul.f32 %v9803, %v9820
    %v9824 = vmul.f32 %v9804, %v9820
    %v9826 = vlaneseq
    %v9827 = vshrl.u32 %v9826, 7
    %v9828 = vsub.s32 0, %v9827
    %v9829 = vrot.slane %v9791, %v9828
    %v9830 = vlaneseq
    %v9831 = vshrl.u32 %v9830, 7
    %v9832 = vsub.s32 1, %v9831
    %v9833 = vrot.slane %v9791, %v9832
    %v9836 = vmul.f32 %v9821, %v9829
    %v9837 = vmul.f32 %v9822, %v9833
    %v9838 = vmul.f32 %v9823, %v9829
    %v9839 = vmul.f32 %v9824, %v9833
    %v9841 = vlaneseq
    %v9842 = vshrl.u32 %v9841, 7
    %v9843 = vsub.s32 0, %v9842
    %v9844 = vrot.slane %v9792, %v9843
    %v9845 = vlaneseq
    %v9846 = vshrl.u32 %v9845, 7
    %v9847 = vsub.s32 1, %v9846
    %v9848 = vrot.slane %v9792, %v9847
    %v9851 = vadd.f32 %v9836, %v9844
    %v9852 = vadd.f32 %v9837, %v9848
    %v9853 = vadd.f32 %v9838, %v9844
    %v9854 = vadd.f32 %v9839, %v9848
    %v9855 = vmax.f32 %v9851, 0.0
    %v9856 = vmax.f32 %v9852, 0.0
    %v9857 = vmax.f32 %v9853, 0.0
    %v9858 = vmax.f32 %v9854, 0.0
    %s9859 = smul.u32 4, 32
    %s9860 = smul.u32 %s9859, 2
    %s9861 = sshll.u32 %s9860, 4
    %9862 = dma.done %s474, %s9861
    %v9863 = vpack.c.bf16 %v9857, %v9855
    %v9864 = vpack.c.bf16 %v9858, %v9856
    %v9865 = vld [vmem:[#allocation4] sm:$0xff]
    %v9866 = vld [vmem:[#allocation4 + $0x8] sm:$0xff]
    %v9867 = vld [vmem:[#allocation4 + $0x10] sm:$0xff]
    %v9868 = vld [vmem:[#allocation4 + $0x18] sm:$0xff]
    %v9869 = vld [vmem:[#allocation4 + $0x20] sm:$0xff]
    %v9870 = vld [vmem:[#allocation4 + $0x28] sm:$0xff]
    %v9871 = vld [vmem:[#allocation4 + $0x30] sm:$0xff]
    %v9872 = vld [vmem:[#allocation4 + $0x38] sm:$0xff]
    %v9873 = vld [vmem:[#allocation4 + $0x40] sm:$0xff]
    %v9874 = vld [vmem:[#allocation4 + $0x48] sm:$0xff]
    %v9875 = vld [vmem:[#allocation4 + $0x50] sm:$0xff]
    %v9876 = vld [vmem:[#allocation4 + $0x58] sm:$0xff]
    %v9877 = vld [vmem:[#allocation4 + $0x60] sm:$0xff]
    %v9878 = vld [vmem:[#allocation4 + $0x68] sm:$0xff]
    %v9879 = vld [vmem:[#allocation4 + $0x70] sm:$0xff]
    %v9880 = vld [vmem:[#allocation4 + $0x78] sm:$0xff]
    %v9881 = vld [vmem:[#allocation4 + $0x80] sm:$0xff]
    %v9882 = vld [vmem:[#allocation4 + $0x88] sm:$0xff]
    %v9883 = vld [vmem:[#allocation4 + $0x90] sm:$0xff]
    %v9884 = vld [vmem:[#allocation4 + $0x98] sm:$0xff]
    %v9885 = vld [vmem:[#allocation4 + $0xa0] sm:$0xff]
    %v9886 = vld [vmem:[#allocation4 + $0xa8] sm:$0xff]
    %v9887 = vld [vmem:[#allocation4 + $0xb0] sm:$0xff]
    %v9888 = vld [vmem:[#allocation4 + $0xb8] sm:$0xff]
    %v9889 = vld [vmem:[#allocation4 + $0xc0] sm:$0xff]
    %v9890 = vld [vmem:[#allocation4 + $0xc8] sm:$0xff]
    %v9891 = vld [vmem:[#allocation4 + $0xd0] sm:$0xff]
    %v9892 = vld [vmem:[#allocation4 + $0xd8] sm:$0xff]
    %v9893 = vld [vmem:[#allocation4 + $0xe0] sm:$0xff]
    %v9894 = vld [vmem:[#allocation4 + $0xe8] sm:$0xff]
    %v9895 = vld [vmem:[#allocation4 + $0xf0] sm:$0xff]
    %v9896 = vld [vmem:[#allocation4 + $0xf8] sm:$0xff]
    %v9897 = vld [vmem:[#allocation43] sm:$0x3]
    %v9899 = vlaneseq
    %v9900 = vshrl.u32 %v9899, 7
    %v9901 = vsub.s32 0, %v9900
    %v9902 = vrot.slane %v9897, %v9901
    %v9903 = vlaneseq
    %v9904 = vshrl.u32 %v9903, 7
    %v9905 = vsub.s32 1, %v9904
    %v9906 = vrot.slane %v9897, %v9905
    %v9941 = vunpack.c.l.b16 %v9865
    %v9942 = vunpack.c.h.b16 %v9865
    %v9943 = vunpack.c.l.b16 %v9866
    %v9944 = vunpack.c.h.b16 %v9866
    %v9945 = vunpack.c.l.b16 %v9867
    %v9946 = vunpack.c.h.b16 %v9867
    %v9947 = vunpack.c.l.b16 %v9868
    %v9948 = vunpack.c.h.b16 %v9868
    %v9949 = vunpack.c.l.b16 %v9869
    %v9950 = vunpack.c.h.b16 %v9869
    %v9951 = vunpack.c.l.b16 %v9870
    %v9952 = vunpack.c.h.b16 %v9870
    %v9953 = vunpack.c.l.b16 %v9871
    %v9954 = vunpack.c.h.b16 %v9871
    %v9955 = vunpack.c.l.b16 %v9872
    %v9956 = vunpack.c.h.b16 %v9872
    %v9957 = vunpack.c.l.b16 %v9873
    %v9958 = vunpack.c.h.b16 %v9873
    %v9959 = vunpack.c.l.b16 %v9874
    %v9960 = vunpack.c.h.b16 %v9874
    %v9961 = vunpack.c.l.b16 %v9875
    %v9962 = vunpack.c.h.b16 %v9875
    %v9963 = vunpack.c.l.b16 %v9876
    %v9964 = vunpack.c.h.b16 %v9876
    %v9965 = vunpack.c.l.b16 %v9877
    %v9966 = vunpack.c.h.b16 %v9877
    %v9967 = vunpack.c.l.b16 %v9878
    %v9968 = vunpack.c.h.b16 %v9878
    %v9969 = vunpack.c.l.b16 %v9879
    %v9970 = vunpack.c.h.b16 %v9879
    %v9971 = vunpack.c.l.b16 %v9880
    %v9972 = vunpack.c.h.b16 %v9880
    %v9973 = vunpack.c.l.b16 %v9881
    %v9974 = vunpack.c.h.b16 %v9881
    %v9975 = vunpack.c.l.b16 %v9882
    %v9976 = vunpack.c.h.b16 %v9882
    %v9977 = vunpack.c.l.b16 %v9883
    %v9978 = vunpack.c.h.b16 %v9883
    %v9979 = vunpack.c.l.b16 %v9884
    %v9980 = vunpack.c.h.b16 %v9884
    %v9981 = vunpack.c.l.b16 %v9885
    %v9982 = vunpack.c.h.b16 %v9885
    %v9983 = vunpack.c.l.b16 %v9886
    %v9984 = vunpack.c.h.b16 %v9886
    %v9985 = vunpack.c.l.b16 %v9887
    %v9986 = vunpack.c.h.b16 %v9887
    %v9987 = vunpack.c.l.b16 %v9888
    %v9988 = vunpack.c.h.b16 %v9888
    %v9989 = vunpack.c.l.b16 %v9889
    %v9990 = vunpack.c.h.b16 %v9889
    %v9991 = vunpack.c.l.b16 %v9890
    %v9992 = vunpack.c.h.b16 %v9890
    %v9993 = vunpack.c.l.b16 %v9891
    %v9994 = vunpack.c.h.b16 %v9891
    %v9995 = vunpack.c.l.b16 %v9892
    %v9996 = vunpack.c.h.b16 %v9892
    %v9997 = vunpack.c.l.b16 %v9893
    %v9998 = vunpack.c.h.b16 %v9893
    %v9999 = vunpack.c.l.b16 %v9894
    %v10000 = vunpack.c.h.b16 %v9894
    %v10001 = vunpack.c.l.b16 %v9895
    %v10002 = vunpack.c.h.b16 %v9895
    %v10003 = vunpack.c.l.b16 %v9896
    %v10004 = vunpack.c.h.b16 %v9896
    %v10005 = vpack.c.b16 %v9943, %v9941
    %v10006 = vpack.c.b16 %v9944, %v9942
    %v10007 = vpack.c.b16 %v9947, %v9945
    %v10008 = vpack.c.b16 %v9948, %v9946
    %v10009 = vpack.c.b16 %v9951, %v9949
    %v10010 = vpack.c.b16 %v9952, %v9950
    %v10011 = vpack.c.b16 %v9955, %v9953
    %v10012 = vpack.c.b16 %v9956, %v9954
    %v10013 = vpack.c.b16 %v9959, %v9957
    %v10014 = vpack.c.b16 %v9960, %v9958
    %v10015 = vpack.c.b16 %v9963, %v9961
    %v10016 = vpack.c.b16 %v9964, %v9962
    %v10017 = vpack.c.b16 %v9967, %v9965
    %v10018 = vpack.c.b16 %v9968, %v9966
    %v10019 = vpack.c.b16 %v9971, %v9969
    %v10020 = vpack.c.b16 %v9972, %v9970
    %v10021 = vpack.c.b16 %v9975, %v9973
    %v10022 = vpack.c.b16 %v9976, %v9974
    %v10023 = vpack.c.b16 %v9979, %v9977
    %v10024 = vpack.c.b16 %v9980, %v9978
    %v10025 = vpack.c.b16 %v9983, %v9981
    %v10026 = vpack.c.b16 %v9984, %v9982
    %v10027 = vpack.c.b16 %v9987, %v9985
    %v10028 = vpack.c.b16 %v9988, %v9986
    %v10029 = vpack.c.b16 %v9991, %v9989
    %v10030 = vpack.c.b16 %v9992, %v9990
    %v10031 = vpack.c.b16 %v9995, %v9993
    %v10032 = vpack.c.b16 %v9996, %v9994
    %v10033 = vpack.c.b16 %v9999, %v9997
    %v10034 = vpack.c.b16 %v10000, %v9998
    %v10035 = vpack.c.b16 %v10003, %v10001
    %v10036 = vpack.c.b16 %v10004, %v10002
    %10069 = vmatprep.subr.bf16.mxu0 %v10020
    %10070 = vmatpush1.bf16.msra.mxu0 %v10019
    %10071 = vmatprep.subr.bf16.mxu0 %v10018
    %10072 = vmatpush1.bf16.msra.mxu0 %v10017
    %10073 = vmatprep.subr.bf16.mxu0 %v10016
    %10074 = vmatpush1.bf16.msra.mxu0 %v10015
    %10075 = vmatprep.subr.bf16.mxu0 %v10014
    %10076 = vmatpush1.bf16.msra.mxu0 %v10013
    %10077 = vmatprep.subr.bf16.mxu0 %v10012
    %10078 = vmatpush1.bf16.msra.mxu0 %v10011
    %10079 = vmatprep.subr.bf16.mxu0 %v10010
    %10080 = vmatpush1.bf16.msra.mxu0 %v10009
    %10081 = vmatprep.subr.bf16.mxu0 %v10008
    %10082 = vmatpush1.bf16.msra.mxu0 %v10007
    %10083 = vmatprep.subr.bf16.mxu0 %v10006
    %10084 = vmatpush1.bf16.msra.mxu0 %v10005
    %10085 = vmatprep.subr.bf16.mxu0 %v10036
    %10086 = vmatpush2.bf16.msra.mxu0 %v10035
    %10087 = vmatprep.subr.bf16.mxu0 %v10034
    %10088 = vmatpush2.bf16.msra.mxu0 %v10033
    %10089 = vmatprep.subr.bf16.mxu0 %v10032
    %10090 = vmatpush2.bf16.msra.mxu0 %v10031
    %10091 = vmatprep.subr.bf16.mxu0 %v10030
    %10092 = vmatpush2.bf16.msra.mxu0 %v10029
    %10093 = vmatprep.subr.bf16.mxu0 %v10028
    %10094 = vmatpush2.bf16.msra.mxu0 %v10027
    %10095 = vmatprep.subr.bf16.mxu0 %v10026
    %10096 = vmatpush2.bf16.msra.mxu0 %v10025
    %10097 = vmatprep.subr.bf16.mxu0 %v10024
    %10098 = vmatpush2.bf16.msra.mxu0 %v10023
    %10099 = vmatprep.subr.bf16.mxu0 %v10022
    %10100 = vmatpush2.bf16.msra.mxu0 %v10021
    %10101 = vmatprep.mubr.bf16.mxu0 %v9864
    %10102 = vmatmul.mubr.bf16.gmra.mxu0 %v9863
    %v10103 = vpop.f32.mrf.mxu0
    %v10104 = vadd.f32 %v9902, %v10103
    %v10105 = vpop.f32.mrf.mxu0
    %v10106 = vadd.f32 %v9906, %v10105
    %v10107 = vpop.f32.mrf.mxu0
    %v10108 = vadd.f32 %v9902, %v10107
    %v10109 = vpop.f32.mrf.mxu0
    %v10110 = vadd.f32 %v9906, %v10109
    %10111 = vdwg.mxu0
    %v10112 = vld [vmem:[#allocation45] sm:$0x3]
    %v10113 = vld [vmem:[#allocation46] sm:$0x3]
    %v10114 = vadd.f32 %v10104, %v10106
    %10115 = vadd.xlane.f32.xlu0 %v10114
    %v10116 = vpop.xlane.xlu0 %10115
    %v10117 = vadd.f32 %v10108, %v10110
    %10118 = vadd.xlane.f32.xlu0 %v10117
    %v10119 = vpop.xlane.xlu0 %10118
    %v10120 = vmul.f32 %v10116, %v4951
    %v10121 = vmul.f32 %v10119, %v4951
    %v10122 = vsub.f32 %v10104, %v10120
    %v10123 = vsub.f32 %v10106, %v10120
    %v10124 = vsub.f32 %v10108, %v10121
    %v10125 = vsub.f32 %v10110, %v10121
    %v10126 = vmul.f32 %v10122, %v10122
    %v10127 = vmul.f32 %v10123, %v10123
    %v10128 = vmul.f32 %v10124, %v10124
    %v10129 = vmul.f32 %v10125, %v10125
    %v10130 = vadd.f32 %v10126, %v10127
    %10131 = vadd.xlane.f32.xlu0 %v10130
    %v10132 = vpop.xlane.xlu0 %10131
    %v10133 = vadd.f32 %v10128, %v10129
    %10134 = vadd.xlane.f32.xlu0 %v10133
    %v10135 = vpop.xlane.xlu0 %10134
    %v10136 = vmul.f32 %v10132, %v4951
    %v10137 = vmul.f32 %v10135, %v4951
    %v10138 = vadd.f32 %v10136, 1e-05
    %v10139 = vadd.f32 %v10137, 1e-05
    %v10140 = vrsqrt.pop %v10138
    %v10141 = vrsqrt.pop %v10139
    %v10142 = vmul.f32 %v10122, %v10140
    %v10143 = vmul.f32 %v10123, %v10140
    %v10144 = vmul.f32 %v10124, %v10141
    %v10145 = vmul.f32 %v10125, %v10141
    %v10147 = vlaneseq
    %v10148 = vshrl.u32 %v10147, 7
    %v10149 = vsub.s32 0, %v10148
    %v10150 = vrot.slane %v10112, %v10149
    %v10151 = vlaneseq
    %v10152 = vshrl.u32 %v10151, 7
    %v10153 = vsub.s32 1, %v10152
    %v10154 = vrot.slane %v10112, %v10153
    %v10157 = vmul.f32 %v10142, %v10150
    %v10158 = vmul.f32 %v10143, %v10154
    %v10159 = vmul.f32 %v10144, %v10150
    %v10160 = vmul.f32 %v10145, %v10154
    %v10162 = vlaneseq
    %v10163 = vshrl.u32 %v10162, 7
    %v10164 = vsub.s32 0, %v10163
    %v10165 = vrot.slane %v10113, %v10164
    %v10166 = vlaneseq
    %v10167 = vshrl.u32 %v10166, 7
    %v10168 = vsub.s32 1, %v10167
    %v10169 = vrot.slane %v10113, %v10168
    %v10172 = vadd.f32 %v10157, %v10165
    %v10173 = vadd.f32 %v10158, %v10169
    %v10174 = vadd.f32 %v10159, %v10165
    %v10175 = vadd.f32 %v10160, %v10169
    %v10176 = vmax.f32 %v10172, 0.0
    %v10177 = vmax.f32 %v10173, 0.0
    %v10178 = vmax.f32 %v10174, 0.0
    %v10179 = vmax.f32 %v10175, 0.0
    %s10180 = smul.u32 %s9859, 4
    %s10181 = sshll.u32 %s10180, 4
    %10182 = dma.done %s486, %s10181
    %v10183 = vpack.c.bf16 %v10178, %v10176
    %v10184 = vpack.c.bf16 %v10179, %v10177
    %v10185 = vld [vmem:[#allocation5] sm:$0xff]
    %v10186 = vld [vmem:[#allocation5 + $0x8] sm:$0xff]
    %v10187 = vld [vmem:[#allocation5 + $0x10] sm:$0xff]
    %v10188 = vld [vmem:[#allocation5 + $0x18] sm:$0xff]
    %v10189 = vld [vmem:[#allocation5 + $0x20] sm:$0xff]
    %v10190 = vld [vmem:[#allocation5 + $0x28] sm:$0xff]
    %v10191 = vld [vmem:[#allocation5 + $0x30] sm:$0xff]
    %v10192 = vld [vmem:[#allocation5 + $0x38] sm:$0xff]
    %v10193 = vld [vmem:[#allocation5 + $0x40] sm:$0xff]
    %v10194 = vld [vmem:[#allocation5 + $0x48] sm:$0xff]
    %v10195 = vld [vmem:[#allocation5 + $0x50] sm:$0xff]
    %v10196 = vld [vmem:[#allocation5 + $0x58] sm:$0xff]
    %v10197 = vld [vmem:[#allocation5 + $0x60] sm:$0xff]
    %v10198 = vld [vmem:[#allocation5 + $0x68] sm:$0xff]
    %v10199 = vld [vmem:[#allocation5 + $0x70] sm:$0xff]
    %v10200 = vld [vmem:[#allocation5 + $0x78] sm:$0xff]
    %v10201 = vld [vmem:[#allocation5 + $0x80] sm:$0xff]
    %v10202 = vld [vmem:[#allocation5 + $0x88] sm:$0xff]
    %v10203 = vld [vmem:[#allocation5 + $0x90] sm:$0xff]
    %v10204 = vld [vmem:[#allocation5 + $0x98] sm:$0xff]
    %v10205 = vld [vmem:[#allocation5 + $0xa0] sm:$0xff]
    %v10206 = vld [vmem:[#allocation5 + $0xa8] sm:$0xff]
    %v10207 = vld [vmem:[#allocation5 + $0xb0] sm:$0xff]
    %v10208 = vld [vmem:[#allocation5 + $0xb8] sm:$0xff]
    %v10209 = vld [vmem:[#allocation5 + $0xc0] sm:$0xff]
    %v10210 = vld [vmem:[#allocation5 + $0xc8] sm:$0xff]
    %v10211 = vld [vmem:[#allocation5 + $0xd0] sm:$0xff]
    %v10212 = vld [vmem:[#allocation5 + $0xd8] sm:$0xff]
    %v10213 = vld [vmem:[#allocation5 + $0xe0] sm:$0xff]
    %v10214 = vld [vmem:[#allocation5 + $0xe8] sm:$0xff]
    %v10215 = vld [vmem:[#allocation5 + $0xf0] sm:$0xff]
    %v10216 = vld [vmem:[#allocation5 + $0xf8] sm:$0xff]
    %v10217 = vld [vmem:[#allocation5 + $0x100] sm:$0xff]
    %v10218 = vld [vmem:[#allocation5 + $0x108] sm:$0xff]
    %v10219 = vld [vmem:[#allocation5 + $0x110] sm:$0xff]
    %v10220 = vld [vmem:[#allocation5 + $0x118] sm:$0xff]
    %v10221 = vld [vmem:[#allocation5 + $0x120] sm:$0xff]
    %v10222 = vld [vmem:[#allocation5 + $0x128] sm:$0xff]
    %v10223 = vld [vmem:[#allocation5 + $0x130] sm:$0xff]
    %v10224 = vld [vmem:[#allocation5 + $0x138] sm:$0xff]
    %v10225 = vld [vmem:[#allocation5 + $0x140] sm:$0xff]
    %v10226 = vld [vmem:[#allocation5 + $0x148] sm:$0xff]
    %v10227 = vld [vmem:[#allocation5 + $0x150] sm:$0xff]
    %v10228 = vld [vmem:[#allocation5 + $0x158] sm:$0xff]
    %v10229 = vld [vmem:[#allocation5 + $0x160] sm:$0xff]
    %v10230 = vld [vmem:[#allocation5 + $0x168] sm:$0xff]
    %v10231 = vld [vmem:[#allocation5 + $0x170] sm:$0xff]
    %v10232 = vld [vmem:[#allocation5 + $0x178] sm:$0xff]
    %v10233 = vld [vmem:[#allocation5 + $0x180] sm:$0xff]
    %v10234 = vld [vmem:[#allocation5 + $0x188] sm:$0xff]
    %v10235 = vld [vmem:[#allocation5 + $0x190] sm:$0xff]
    %v10236 = vld [vmem:[#allocation5 + $0x198] sm:$0xff]
    %v10237 = vld [vmem:[#allocation5 + $0x1a0] sm:$0xff]
    %v10238 = vld [vmem:[#allocation5 + $0x1a8] sm:$0xff]
    %v10239 = vld [vmem:[#allocation5 + $0x1b0] sm:$0xff]
    %v10240 = vld [vmem:[#allocation5 + $0x1b8] sm:$0xff]
    %v10241 = vld [vmem:[#allocation5 + $0x1c0] sm:$0xff]
    %v10242 = vld [vmem:[#allocation5 + $0x1c8] sm:$0xff]
    %v10243 = vld [vmem:[#allocation5 + $0x1d0] sm:$0xff]
    %v10244 = vld [vmem:[#allocation5 + $0x1d8] sm:$0xff]
    %v10245 = vld [vmem:[#allocation5 + $0x1e0] sm:$0xff]
    %v10246 = vld [vmem:[#allocation5 + $0x1e8] sm:$0xff]
    %v10247 = vld [vmem:[#allocation5 + $0x1f0] sm:$0xff]
    %v10248 = vld [vmem:[#allocation5 + $0x1f8] sm:$0xff]
    %v10249 = vld [vmem:[#allocation48] sm:$0xf]
    %v10251 = vlaneseq
    %v10252 = vshrl.u32 %v10251, 7
    %v10253 = vsub.s32 0, %v10252
    %v10254 = vrot.slane %v10249, %v10253
    %v10255 = vlaneseq
    %v10256 = vshrl.u32 %v10255, 7
    %v10257 = vsub.s32 1, %v10256
    %v10258 = vrot.slane %v10249, %v10257
    %v10259 = vlaneseq
    %v10260 = vshrl.u32 %v10259, 7
    %v10261 = vsub.s32 2, %v10260
    %v10262 = vrot.slane %v10249, %v10261
    %v10263 = vlaneseq
    %v10264 = vshrl.u32 %v10263, 7
    %v10265 = vsub.s32 3, %v10264
    %v10266 = vrot.slane %v10249, %v10265
    %v10335 = vunpack.c.l.b16 %v10185
    %v10336 = vunpack.c.h.b16 %v10185
    %v10337 = vunpack.c.l.b16 %v10186
    %v10338 = vunpack.c.h.b16 %v10186
    %v10339 = vunpack.c.l.b16 %v10187
    %v10340 = vunpack.c.h.b16 %v10187
    %v10341 = vunpack.c.l.b16 %v10188
    %v10342 = vunpack.c.h.b16 %v10188
    %v10343 = vunpack.c.l.b16 %v10189
    %v10344 = vunpack.c.h.b16 %v10189
    %v10345 = vunpack.c.l.b16 %v10190
    %v10346 = vunpack.c.h.b16 %v10190
    %v10347 = vunpack.c.l.b16 %v10191
    %v10348 = vunpack.c.h.b16 %v10191
    %v10349 = vunpack.c.l.b16 %v10192
    %v10350 = vunpack.c.h.b16 %v10192
    %v10351 = vunpack.c.l.b16 %v10193
    %v10352 = vunpack.c.h.b16 %v10193
    %v10353 = vunpack.c.l.b16 %v10194
    %v10354 = vunpack.c.h.b16 %v10194
    %v10355 = vunpack.c.l.b16 %v10195
    %v10356 = vunpack.c.h.b16 %v10195
    %v10357 = vunpack.c.l.b16 %v10196
    %v10358 = vunpack.c.h.b16 %v10196
    %v10359 = vunpack.c.l.b16 %v10197
    %v10360 = vunpack.c.h.b16 %v10197
    %v10361 = vunpack.c.l.b16 %v10198
    %v10362 = vunpack.c.h.b16 %v10198
    %v10363 = vunpack.c.l.b16 %v10199
    %v10364 = vunpack.c.h.b16 %v10199
    %v10365 = vunpack.c.l.b16 %v10200
    %v10366 = vunpack.c.h.b16 %v10200
    %v10367 = vunpack.c.l.b16 %v10201
    %v10368 = vunpack.c.h.b16 %v10201
    %v10369 = vunpack.c.l.b16 %v10202
    %v10370 = vunpack.c.h.b16 %v10202
    %v10371 = vunpack.c.l.b16 %v10203
    %v10372 = vunpack.c.h.b16 %v10203
    %v10373 = vunpack.c.l.b16 %v10204
    %v10374 = vunpack.c.h.b16 %v10204
    %v10375 = vunpack.c.l.b16 %v10205
    %v10376 = vunpack.c.h.b16 %v10205
    %v10377 = vunpack.c.l.b16 %v10206
    %v10378 = vunpack.c.h.b16 %v10206
    %v10379 = vunpack.c.l.b16 %v10207
    %v10380 = vunpack.c.h.b16 %v10207
    %v10381 = vunpack.c.l.b16 %v10208
    %v10382 = vunpack.c.h.b16 %v10208
    %v10383 = vunpack.c.l.b16 %v10209
    %v10384 = vunpack.c.h.b16 %v10209
    %v10385 = vunpack.c.l.b16 %v10210
    %v10386 = vunpack.c.h.b16 %v10210
    %v10387 = vunpack.c.l.b16 %v10211
    %v10388 = vunpack.c.h.b16 %v10211
    %v10389 = vunpack.c.l.b16 %v10212
    %v10390 = vunpack.c.h.b16 %v10212
    %v10391 = vunpack.c.l.b16 %v10213
    %v10392 = vunpack.c.h.b16 %v10213
    %v10393 = vunpack.c.l.b16 %v10214
    %v10394 = vunpack.c.h.b16 %v10214
    %v10395 = vunpack.c.l.b16 %v10215
    %v10396 = vunpack.c.h.b16 %v10215
    %v10397 = vunpack.c.l.b16 %v10216
    %v10398 = vunpack.c.h.b16 %v10216
    %v10399 = vunpack.c.l.b16 %v10217
    %v10400 = vunpack.c.h.b16 %v10217
    %v10401 = vunpack.c.l.b16 %v10218
    %v10402 = vunpack.c.h.b16 %v10218
    %v10403 = vunpack.c.l.b16 %v10219
    %v10404 = vunpack.c.h.b16 %v10219
    %v10405 = vunpack.c.l.b16 %v10220
    %v10406 = vunpack.c.h.b16 %v10220
    %v10407 = vunpack.c.l.b16 %v10221
    %v10408 = vunpack.c.h.b16 %v10221
    %v10409 = vunpack.c.l.b16 %v10222
    %v10410 = vunpack.c.h.b16 %v10222
    %v10411 = vunpack.c.l.b16 %v10223
    %v10412 = vunpack.c.h.b16 %v10223
    %v10413 = vunpack.c.l.b16 %v10224
    %v10414 = vunpack.c.h.b16 %v10224
    %v10415 = vunpack.c.l.b16 %v10225
    %v10416 = vunpack.c.h.b16 %v10225
    %v10417 = vunpack.c.l.b16 %v10226
    %v10418 = vunpack.c.h.b16 %v10226
    %v10419 = vunpack.c.l.b16 %v10227
    %v10420 = vunpack.c.h.b16 %v10227
    %v10421 = vunpack.c.l.b16 %v10228
    %v10422 = vunpack.c.h.b16 %v10228
    %v10423 = vunpack.c.l.b16 %v10229
    %v10424 = vunpack.c.h.b16 %v10229
    %v10425 = vunpack.c.l.b16 %v10230
    %v10426 = vunpack.c.h.b16 %v10230
    %v10427 = vunpack.c.l.b16 %v10231
    %v10428 = vunpack.c.h.b16 %v10231
    %v10429 = vunpack.c.l.b16 %v10232
    %v10430 = vunpack.c.h.b16 %v10232
    %v10431 = vunpack.c.l.b16 %v10233
    %v10432 = vunpack.c.h.b16 %v10233
    %v10433 = vunpack.c.l.b16 %v10234
    %v10434 = vunpack.c.h.b16 %v10234
    %v10435 = vunpack.c.l.b16 %v10235
    %v10436 = vunpack.c.h.b16 %v10235
    %v10437 = vunpack.c.l.b16 %v10236
    %v10438 = vunpack.c.h.b16 %v10236
    %v10439 = vunpack.c.l.b16 %v10237
    %v10440 = vunpack.c.h.b16 %v10237
    %v10441 = vunpack.c.l.b16 %v10238
    %v10442 = vunpack.c.h.b16 %v10238
    %v10443 = vunpack.c.l.b16 %v10239
    %v10444 = vunpack.c.h.b16 %v10239
    %v10445 = vunpack.c.l.b16 %v10240
    %v10446 = vunpack.c.h.b16 %v10240
    %v10447 = vunpack.c.l.b16 %v10241
    %v10448 = vunpack.c.h.b16 %v10241
    %v10449 = vunpack.c.l.b16 %v10242
    %v10450 = vunpack.c.h.b16 %v10242
    %v10451 = vunpack.c.l.b16 %v10243
    %v10452 = vunpack.c.h.b16 %v10243
    %v10453 = vunpack.c.l.b16 %v10244
    %v10454 = vunpack.c.h.b16 %v10244
    %v10455 = vunpack.c.l.b16 %v10245
    %v10456 = vunpack.c.h.b16 %v10245
    %v10457 = vunpack.c.l.b16 %v10246
    %v10458 = vunpack.c.h.b16 %v10246
    %v10459 = vunpack.c.l.b16 %v10247
    %v10460 = vunpack.c.h.b16 %v10247
    %v10461 = vunpack.c.l.b16 %v10248
    %v10462 = vunpack.c.h.b16 %v10248
    %v10463 = vpack.c.b16 %v10339, %v10335
    %v10464 = vpack.c.b16 %v10340, %v10336
    %v10465 = vpack.c.b16 %v10341, %v10337
    %v10466 = vpack.c.b16 %v10342, %v10338
    %v10467 = vpack.c.b16 %v10347, %v10343
    %v10468 = vpack.c.b16 %v10348, %v10344
    %v10469 = vpack.c.b16 %v10349, %v10345
    %v10470 = vpack.c.b16 %v10350, %v10346
    %v10471 = vpack.c.b16 %v10355, %v10351
    %v10472 = vpack.c.b16 %v10356, %v10352
    %v10473 = vpack.c.b16 %v10357, %v10353
    %v10474 = vpack.c.b16 %v10358, %v10354
    %v10475 = vpack.c.b16 %v10363, %v10359
    %v10476 = vpack.c.b16 %v10364, %v10360
    %v10477 = vpack.c.b16 %v10365, %v10361
    %v10478 = vpack.c.b16 %v10366, %v10362
    %v10479 = vpack.c.b16 %v10371, %v10367
    %v10480 = vpack.c.b16 %v10372, %v10368
    %v10481 = vpack.c.b16 %v10373, %v10369
    %v10482 = vpack.c.b16 %v10374, %v10370
    %v10483 = vpack.c.b16 %v10379, %v10375
    %v10484 = vpack.c.b16 %v10380, %v10376
    %v10485 = vpack.c.b16 %v10381, %v10377
    %v10486 = vpack.c.b16 %v10382, %v10378
    %v10487 = vpack.c.b16 %v10387, %v10383
    %v10488 = vpack.c.b16 %v10388, %v10384
    %v10489 = vpack.c.b16 %v10389, %v10385
    %v10490 = vpack.c.b16 %v10390, %v10386
    %v10491 = vpack.c.b16 %v10395, %v10391
    %v10492 = vpack.c.b16 %v10396, %v10392
    %v10493 = vpack.c.b16 %v10397, %v10393
    %v10494 = vpack.c.b16 %v10398, %v10394
    %v10495 = vpack.c.b16 %v10403, %v10399
    %v10496 = vpack.c.b16 %v10404, %v10400
    %v10497 = vpack.c.b16 %v10405, %v10401
    %v10498 = vpack.c.b16 %v10406, %v10402
    %v10499 = vpack.c.b16 %v10411, %v10407
    %v10500 = vpack.c.b16 %v10412, %v10408
    %v10501 = vpack.c.b16 %v10413, %v10409
    %v10502 = vpack.c.b16 %v10414, %v10410
    %v10503 = vpack.c.b16 %v10419, %v10415
    %v10504 = vpack.c.b16 %v10420, %v10416
    %v10505 = vpack.c.b16 %v10421, %v10417
    %v10506 = vpack.c.b16 %v10422, %v10418
    %v10507 = vpack.c.b16 %v10427, %v10423
    %v10508 = vpack.c.b16 %v10428, %v10424
    %v10509 = vpack.c.b16 %v10429, %v10425
    %v10510 = vpack.c.b16 %v10430, %v10426
    %v10511 = vpack.c.b16 %v10435, %v10431
    %v10512 = vpack.c.b16 %v10436, %v10432
    %v10513 = vpack.c.b16 %v10437, %v10433
    %v10514 = vpack.c.b16 %v10438, %v10434
    %v10515 = vpack.c.b16 %v10443, %v10439
    %v10516 = vpack.c.b16 %v10444, %v10440
    %v10517 = vpack.c.b16 %v10445, %v10441
    %v10518 = vpack.c.b16 %v10446, %v10442
    %v10519 = vpack.c.b16 %v10451, %v10447
    %v10520 = vpack.c.b16 %v10452, %v10448
    %v10521 = vpack.c.b16 %v10453, %v10449
    %v10522 = vpack.c.b16 %v10454, %v10450
    %v10523 = vpack.c.b16 %v10459, %v10455
    %v10524 = vpack.c.b16 %v10460, %v10456
    %v10525 = vpack.c.b16 %v10461, %v10457
    %v10526 = vpack.c.b16 %v10462, %v10458
    %10591 = vmatprep.subr.bf16.mxu0 %v10492
    %10592 = vmatpush1.bf16.msra.mxu0 %v10491
    %10593 = vmatprep.subr.bf16.mxu0 %v10488
    %10594 = vmatpush1.bf16.msra.mxu0 %v10487
    %10595 = vmatprep.subr.bf16.mxu0 %v10484
    %10596 = vmatpush1.bf16.msra.mxu0 %v10483
    %10597 = vmatprep.subr.bf16.mxu0 %v10480
    %10598 = vmatpush1.bf16.msra.mxu0 %v10479
    %10599 = vmatprep.subr.bf16.mxu0 %v10476
    %10600 = vmatpush1.bf16.msra.mxu0 %v10475
    %10601 = vmatprep.subr.bf16.mxu0 %v10472
    %10602 = vmatpush1.bf16.msra.mxu0 %v10471
    %10603 = vmatprep.subr.bf16.mxu0 %v10468
    %10604 = vmatpush1.bf16.msra.mxu0 %v10467
    %10605 = vmatprep.subr.bf16.mxu0 %v10464
    %10606 = vmatpush1.bf16.msra.mxu0 %v10463
    %10607 = vmatprep.subr.bf16.mxu0 %v10524
    %10608 = vmatpush2.bf16.msra.mxu0 %v10523
    %10609 = vmatprep.subr.bf16.mxu0 %v10520
    %10610 = vmatpush2.bf16.msra.mxu0 %v10519
    %10611 = vmatprep.subr.bf16.mxu0 %v10516
    %10612 = vmatpush2.bf16.msra.mxu0 %v10515
    %10613 = vmatprep.subr.bf16.mxu0 %v10512
    %10614 = vmatpush2.bf16.msra.mxu0 %v10511
    %10615 = vmatprep.subr.bf16.mxu0 %v10508
    %10616 = vmatpush2.bf16.msra.mxu0 %v10507
    %10617 = vmatprep.subr.bf16.mxu0 %v10504
    %10618 = vmatpush2.bf16.msra.mxu0 %v10503
    %10619 = vmatprep.subr.bf16.mxu0 %v10500
    %10620 = vmatpush2.bf16.msra.mxu0 %v10499
    %10621 = vmatprep.subr.bf16.mxu0 %v10496
    %10622 = vmatpush2.bf16.msra.mxu0 %v10495
    %10623 = vmatprep.mubr.bf16.mxu0 %v10184
    %10624 = vmatmul.mubr.bf16.gmra.mxu0 %v10183
    %v10625 = vpop.f32.mrf.mxu0
    %v10626 = vadd.f32 %v10254, %v10625
    %v10627 = vpop.f32.mrf.mxu0
    %v10628 = vadd.f32 %v10258, %v10627
    %v10629 = vpop.f32.mrf.mxu0
    %v10630 = vadd.f32 %v10254, %v10629
    %v10631 = vpop.f32.mrf.mxu0
    %v10632 = vadd.f32 %v10258, %v10631
    %10633 = vdwg.mxu0
    %10634 = vmatprep.subr.bf16.mxu0 %v10494
    %10635 = vmatpush1.bf16.msra.mxu0 %v10493
    %10636 = vmatprep.subr.bf16.mxu0 %v10490
    %10637 = vmatpush1.bf16.msra.mxu0 %v10489
    %10638 = vmatprep.subr.bf16.mxu0 %v10486
    %10639 = vmatpush1.bf16.msra.mxu0 %v10485
    %10640 = vmatprep.subr.bf16.mxu0 %v10482
    %10641 = vmatpush1.bf16.msra.mxu0 %v10481
    %10642 = vmatprep.subr.bf16.mxu0 %v10478
    %10643 = vmatpush1.bf16.msra.mxu0 %v10477
    %10644 = vmatprep.subr.bf16.mxu0 %v10474
    %10645 = vmatpush1.bf16.msra.mxu0 %v10473
    %10646 = vmatprep.subr.bf16.mxu0 %v10470
    %10647 = vmatpush1.bf16.msra.mxu0 %v10469
    %10648 = vmatprep.subr.bf16.mxu0 %v10466
    %10649 = vmatpush1.bf16.msra.mxu0 %v10465
    %10650 = vmatprep.subr.bf16.mxu0 %v10526
    %10651 = vmatpush2.bf16.msra.mxu0 %v10525
    %10652 = vmatprep.subr.bf16.mxu0 %v10522
    %10653 = vmatpush2.bf16.msra.mxu0 %v10521
    %10654 = vmatprep.subr.bf16.mxu0 %v10518
    %10655 = vmatpush2.bf16.msra.mxu0 %v10517
    %10656 = vmatprep.subr.bf16.mxu0 %v10514
    %10657 = vmatpush2.bf16.msra.mxu0 %v10513
    %10658 = vmatprep.subr.bf16.mxu0 %v10510
    %10659 = vmatpush2.bf16.msra.mxu0 %v10509
    %10660 = vmatprep.subr.bf16.mxu0 %v10506
    %10661 = vmatpush2.bf16.msra.mxu0 %v10505
    %10662 = vmatprep.subr.bf16.mxu0 %v10502
    %10663 = vmatpush2.bf16.msra.mxu0 %v10501
    %10664 = vmatprep.subr.bf16.mxu0 %v10498
    %10665 = vmatpush2.bf16.msra.mxu0 %v10497
    %10666 = vmatprep.mubr.bf16.mxu0 %v10184
    %10667 = vmatmul.mubr.bf16.gmra.mxu0 %v10183
    %v10668 = vpop.f32.mrf.mxu0
    %v10669 = vadd.f32 %v10262, %v10668
    %v10670 = vpop.f32.mrf.mxu0
    %v10671 = vadd.f32 %v10266, %v10670
    %v10672 = vpop.f32.mrf.mxu0
    %v10673 = vadd.f32 %v10262, %v10672
    %v10674 = vpop.f32.mrf.mxu0
    %v10675 = vadd.f32 %v10266, %v10674
    %10676 = vdwg.mxu0
    %10677 = vst [vmem:[#allocation49] sm:$0xff] %v10626
    %10678 = vst [vmem:[#allocation49 + $0x8] sm:$0xff] %v10628
    %10679 = vst [vmem:[#allocation49 + $0x10] sm:$0xff] %v10669
    %10680 = vst [vmem:[#allocation49 + $0x18] sm:$0xff] %v10671
    %10681 = vst [vmem:[#allocation49 + $0x20] sm:$0xff] %v10630
    %10682 = vst [vmem:[#allocation49 + $0x28] sm:$0xff] %v10632
    %10683 = vst [vmem:[#allocation49 + $0x30] sm:$0xff] %v10673
    %10684 = vst [vmem:[#allocation49 + $0x38] sm:$0xff] %v10675
    // Predicated region
    $region234: #{cvae_forward.1} parent=1 // pred_check
      _
    $region235: #{cvae_forward.1} parent=1 // pred_check_branch
      %10686 = sbr.rel (0) target = $region237
    $region236: #{cvae_forward.1} parent=1 // pred_region
      %s10688 = ssub.s32 1024, 1024
      %10689 = vsyncadd [#allocation9], %s10688
      %s10690 = sshll.u32 [#allocation49], 4
      %s10691 = int_to_ptr.vmem [resolvable:$true] %s10690
      %10696 = dma.vmem_to_hbm [thread:$0]  %s10691, 1024, %s63, [#allocation9], 512, 512, 32
    $region237: #{cvae_forward.1} parent=1 // pred_fallthru
      _
    // Predicated region
    $region238: #{cvae_forward.1} parent=1 // pred_check
      _
    $region239: #{cvae_forward.1} parent=1 // pred_check_branch
      %10698 = sbr.rel (0) target = $region241
    $region240: #{cvae_forward.1} parent=1 // pred_region
      _
    $region241: #{cvae_forward.1} parent=1 // pred_fallthru
      _
    // Predicated region
    $region242: #{cvae_forward.1} parent=1 // pred_check
      _
    $region243: #{cvae_forward.1} parent=1 // pred_check_branch
      %10700 = sbr.rel (0) target = $region245
    $region244: #{cvae_forward.1} parent=1 // pred_region
      %10701 = dma.done [#allocation9], 1024
    $region245: #{cvae_forward.1} parent=1 // pred_fallthru
      _
    // Predicated region
    $region246: #{cvae_forward.1} parent=1 // pred_check
      _
    $region247: #{cvae_forward.1} parent=1 // pred_check_branch
      %10703 = sbr.rel (0) target = $region249
    $region248: #{cvae_forward.1} parent=1 // pred_region
      _
    $region249: #{cvae_forward.1} parent=1 // pred_fallthru
      _
    %10704 = vsyncpa [#allocation8], 1
    %10705 = vsyncpa [#allocation11], 1
    %10706 = vsyncpa [#allocation14], 1
    %10707 = vsyncpa [#allocation17], 1
    %10708 = vsyncpa [#allocation20], 1
    %10709 = vsyncpa [#allocation23], 1
    %10710 = vsyncpa [#allocation26], 1
    %10711 = vsyncpa [#allocation29], 1
    %10712 = vsyncpa [#allocation32], 1
    %10713 = vsyncpa [#allocation35], 1
    %10714 = vsyncpa [#allocation38], 1
    %10715 = vsyncpa [#allocation41], 1
    %10716 = vsyncpa [#allocation44], 1
    %10717 = vsyncpa [#allocation47], 1
    %10718 = vsyncpa [#allocation9], 1
  %10719 = vsyncmov [#allocation6]
  %s10720 = vpop.sfrf %10719
  %p10721 = scmp.eq.s32.totalorder %s10720, 0
  %p10722 = pneg %p10721
  %10724 = shalt.err (%p10722)
  %s10725 = scalar_lea.sflag [#allocation6], 1
  %10726 = vsyncmov %s10725
  %s10727 = vpop.sfrf %10726
  %p10728 = scmp.eq.s32.totalorder %s10727, 0
  %p10729 = pneg %p10728
  %10731 = shalt.err (%p10729)
  %s10732 = scalar_lea.sflag [#allocation6], 2
  %10733 = vsyncmov %s10732
  %s10734 = vpop.sfrf %10733
  %p10735 = scmp.eq.s32.totalorder %s10734, 0
  %p10736 = pneg %p10735
  %10738 = shalt.err (%p10736)
  %s10739 = scalar_lea.sflag [#allocation6], 3
  %10740 = vsyncmov %s10739
  %s10741 = vpop.sfrf %10740
  %p10742 = scmp.eq.s32.totalorder %s10741, 0
  %p10743 = pneg %p10742
  %10745 = shalt.err (%p10743)

</llo_original>
